<compile_context>
chip_gen: v6e
topology: v6e:2x2x1
jax: 0.10.0
libtpu: 0.0.40
codegen_flags: <defaults>
</compile_context>

<pallas_src>
import jax
import jax.numpy as jnp
from jax.experimental import pallas as pl
from jax.experimental.pallas import tpu as pltpu

BN_EPS = 1e-5

# Tile targets (sized so the live [Bt*tn, 2048] f32 activation + double-buffered
# bf16 weights stay well under 32 MiB of VMEM — safe on v5e/v6e/v7x).
_BT_TARGET = 8     # batch elements per grid step
_TN_TARGET = 128   # points per grid step


def _pick_tile(total, target):
    """Largest multiple-of-8 divisor of `total` that is <= target, else `total`."""
    if total <= target:
        return total
    d = (target // 8) * 8
    while d >= 8:
        if total % d == 0:
            return d
        d -= 8
    return total


# ---------------------------------------------------------------------------
# Pallas kernel: grid = (B/Bt, N/tn).  Axis 0 is parallel over batch tiles,
# axis 1 is an "arbitrary" reduction over point chunks with a running max.
# All weights are small enough to live fully in VMEM.
# ---------------------------------------------------------------------------
def _pointnet_kernel(
    x_ref,                        # [Bt, tn, 3]  f32
    w1_ref, b1_ref,               # conv1 (+bn folded)   [3, C1] f32,  [1, C1]  f32
    w2_ref, b2_ref,               # conv2 (+bn folded)   [C1, C2] bf16, [1, C2] f32
    w3_ref, b3_ref,               # conv3 (+bn folded)   [C2, F] bf16, [1, F]   f32
    wf1_ref, bf1_ref,             # fc1   (+bn1 folded)  [F, 512] bf16, [1, 512] f32
    wf2_ref, bf2_ref,             # fc2   (+bn2 folded)  [512, 256] bf16, [1, 256] f32
    wh_ref, bh_ref,               # fused rot|dir head   [256, 2] f32, [1, 2]    f32
    out_ref,                      # [Bt, 2]  f32   (col 0 = rotation, col 1 = direction)
    acc_ref,                      # [Bt, F]  f32 scratch: running max over points
):
    n = pl.program_id(1)
    bt, tn, _ = x_ref.shape

    @pl.when(n == 0)
    def _():
        acc_ref[...] = jnp.full(acc_ref.shape, -jnp.inf, acc_ref.dtype)

    # Stack the batch tile's points into one [Bt*tn, 3] slab so the encoder
    # matmuls run with a full MXU M dimension.
    x = x_ref[...].reshape(bt * tn, 3)                               # [M, 3] f32

    # --- layer 1 (K=3): three VPU broadcast-FMAs instead of a lane-sparse matmul
    w1 = w1_ref[...]                                                 # [3, C1]
    h = (x[:, 0:1] * w1[0:1, :]
         + x[:, 1:2] * w1[1:2, :]
         + x[:, 2:3] * w1[2:3, :]) + b1_ref[...]
    h = jnp.maximum(h, 0.0)                                          # [M, C1] f32

    # --- layers 2/3: bf16 MXU matmuls, f32 accumulation
    h = jnp.dot(h.astype(jnp.bfloat16), w2_ref[...],
                preferred_element_type=jnp.float32) + b2_ref[...]
    h = jnp.maximum(h, 0.0)                                          # [M, C2] f32
    h = jnp.dot(h.astype(jnp.bfloat16), w3_ref[...],
                preferred_element_type=jnp.float32)                  # [M, F] f32 (bias later)

    # --- running global max-pool over points, per batch element
    for b in range(bt):                                              # bt is small & static
        row_max = jnp.max(h[b * tn:(b + 1) * tn, :], axis=0, keepdims=True)   # [1, F]
        acc_ref[b:b + 1, :] = jnp.maximum(acc_ref[b:b + 1, :], row_max)

    # --- FC head, once per batch tile, on the stacked pooled features
    @pl.when(n == pl.num_programs(1) - 1)
    def _():
        feat = acc_ref[...] + b3_ref[...]          # conv3 bias commutes with the max
        f = jnp.dot(feat.astype(jnp.bfloat16), wf1_ref[...],
                    preferred_element_type=jnp.float32) + bf1_ref[...]
        f = jnp.maximum(f, 0.0)                                      # [Bt, 512]
        f = jnp.dot(f.astype(jnp.bfloat16), wf2_ref[...],
                    preferred_element_type=jnp.float32) + bf2_ref[...]
        f = jnp.maximum(f, 0.0)                                      # [Bt, 256]

        head = jnp.dot(f, wh_ref[...],
                       preferred_element_type=jnp.float32) + bh_ref[...]   # [Bt, 2]
        col = jax.lax.broadcasted_iota(jnp.int32, head.shape, 1)
        # col 0: rotation (identity), col 1: direction (sigmoid)
        out_ref[...] = jnp.where(col == 0, head, jax.nn.sigmoid(head))


# ---------------------------------------------------------------------------
# Wrapper
# ---------------------------------------------------------------------------
def pointnet_rot_dir_double(x, params):
    """x: [B, N, C] float32 (C >= 3). Returns (rotation [B,1], direction [B,1])."""
    B, N, _ = x.shape
    xyz = x[:, :, :3].astype(jnp.float32)     # == permute(0,2,1)[:, :3, :] in our layout

    (w1, b1, w2, b2, w3, b3, wf1, bf1, wf2, bf2, wrot, brot, wdir, bdir) = params

    bf16 = jnp.bfloat16
    # fuse rotation / direction heads into one [256, 2] matmul
    wh = jnp.concatenate([wrot, wdir], axis=1)                       # [256, 2]
    bh = jnp.concatenate([brot, bdir], axis=1)                       # [1, 2]
    kernel_params = (
        w1, b1,                                   # tiny K=3 layer stays f32 (VPU path)
        w2.astype(bf16), b2,
        w3.astype(bf16), b3,
        wf1.astype(bf16), bf1,
        wf2.astype(bf16), bf2,
        wh, bh,                                   # head stays f32 (tiny, precision near sigmoid)
    )

    bt = _pick_tile(B, _BT_TARGET)
    tn = _pick_tile(N, _TN_TARGET)

    c1, c2, feat_dim = w1.shape[1], w2.shape[1], w3.shape[1]
    fc1_dim, fc2_dim = wf1.shape[1], wf2.shape[1]
    flops = (2 * B * N * (3 * c1 + c1 * c2 + c2 * feat_dim)
             + 2 * B * (feat_dim * fc1_dim + fc1_dim * fc2_dim + fc2_dim * 2))
    bytes_accessed = int(
        xyz.size * 4
        + sum(int(p.size) * int(p.dtype.itemsize) for p in kernel_params)
        + B * 2 * 4
    )

    weight_specs = [
        pl.BlockSpec(p.shape, lambda b, n: (0, 0)) for p in kernel_params
    ]

    out = pl.pallas_call(
        _pointnet_kernel,
        out_shape=jax.ShapeDtypeStruct((B, 2), jnp.float32),
        grid=(B // bt, N // tn),
        in_specs=[pl.BlockSpec((bt, tn, 3), lambda b, n: (b, n, 0))] + weight_specs,
        out_specs=pl.BlockSpec((bt, 2), lambda b, n: (b, 0)),
        scratch_shapes=[pltpu.VMEM((bt, feat_dim), jnp.float32)],
        compiler_params=pltpu.CompilerParams(
            dimension_semantics=("parallel", "arbitrary"),
            vmem_limit_bytes=32 << 20,
        ),
        cost_estimate=pl.CostEstimate(
            flops=flops, transcendentals=2 * B, bytes_accessed=bytes_accessed),
    )(xyz, *kernel_params)

    return out[:, 0:1], out[:, 1:2]


# ---------------------------------------------------------------------------
# Deterministic synthetic parameters (with eval-mode BN folded in exactly)
# ---------------------------------------------------------------------------
def _affine_with_bn(key, fan_in, fan_out, w_std):
    kw, kb, kg, kbe, km, kv = jax.random.split(key, 6)
    w = w_std * jax.random.normal(kw, (fan_in, fan_out), jnp.float32)
    b = 0.01 * jax.random.normal(kb, (fan_out,), jnp.float32)
    gamma = 1.0 + 0.1 * jax.random.normal(kg, (fan_out,), jnp.float32)
    beta = 0.1 * jax.random.normal(kbe, (fan_out,), jnp.float32)
    mean = 0.1 * jax.random.normal(km, (fan_out,), jnp.float32)
    var = 1.0 + 0.1 * jnp.abs(jax.random.normal(kv, (fan_out,), jnp.float32))
    scale = gamma / jnp.sqrt(var + BN_EPS)
    shift = beta - mean * scale
    return w * scale[None, :], ((b * scale + shift)[None, :])


def _plain_linear(key, fan_in, fan_out, w_std=0.01):
    kw, kb = jax.random.split(key, 2)
    w = w_std * jax.random.normal(kw, (fan_in, fan_out), jnp.float32)
    b = 0.01 * jax.random.normal(kb, (fan_out,), jnp.float32)[None, :]
    return w, b


def init_params(key, max_feature=2048):
    c1, c2 = 128, 256                       # "double" PointNet encoder widths
    keys = jax.random.split(key, 7)
    w1, b1 = _affine_with_bn(keys[0], 3, c1, w_std=0.1)              # conv1 + bn
    w2, b2 = _affine_with_bn(keys[1], c1, c2, w_std=0.05)            # conv2 + bn
    w3, b3 = _affine_with_bn(keys[2], c2, max_feature, w_std=0.05)   # conv3 + bn
    wf1, bf1 = _affine_with_bn(keys[3], max_feature, 512, w_std=0.01)  # fc1 + bn1
    wf2, bf2 = _affine_with_bn(keys[4], 512, 256, w_std=0.01)        # fc2 + bn2
    wrot, brot = _plain_linear(keys[5], 256, 1)
    wdir, bdir = _plain_linear(keys[6], 256, 1)
    return (w1, b1, w2, b2, w3, b3, wf1, bf1, wf2, bf2, wrot, brot, wdir, bdir)


# ---------------------------------------------------------------------------
# Pure-JAX f32 reference (same math, no Pallas) for a sanity check.
# ---------------------------------------------------------------------------
def reference_forward(x, params):
    (w1, b1, w2, b2, w3, b3, wf1, bf1, wf2, bf2, wrot, brot, wdir, bdir) = params
    xyz = x[:, :, :3].astype(jnp.float32)                  # [B, N, 3]
    h = jnp.maximum(xyz @ w1 + b1, 0.0)
    h = jnp.maximum(h @ w2 + b2, 0.0)
    h = h @ w3 + b3
    feat = jnp.max(h, axis=1)                              # [B, 2048]
    f = jnp.maximum(feat @ wf1 + bf1, 0.0)
    f = jnp.maximum(f @ wf2 + bf2, 0.0)
    rot = f @ wrot + brot
    direction = jax.nn.sigmoid(f @ wdir + bdir)
    return rot, direction


if __name__ == "__main__":
    key = jax.random.PRNGKey(0)
    k_x, k_p = jax.random.split(key)

    B, N, C = 2, 64, 4                       # small shapes; C>=3 exercises the channel slice
    x = jax.random.normal(k_x, (B, N, C), jnp.float32)
    params = init_params(k_p, max_feature=2048)

    rot, direction = pointnet_rot_dir_double(x, params)
    jax.block_until_ready((rot, direction))

    rot_ref, dir_ref = reference_forward(x, params)
    assert rot.shape == (B, 1) and direction.shape == (B, 1)
    # slightly relaxed tolerance: kernel uses bf16 MXU operands (f32 accumulation)
    assert jnp.allclose(rot, rot_ref, rtol=2e-2, atol=2e-2)
    assert jnp.allclose(direction, dir_ref, rtol=2e-2, atol=2e-2)

    print("KERNEL_OK")
</pallas_src>

<mosaic_0001>
module attributes {stable_mosaic.version = 11 : i64} {
  func.func @_pointnet_kernel(%arg0: i32, %arg1: i32, %arg2: memref<2x64x3xf32, #tpu.memory_space<vmem>>, %arg3: memref<3x128xf32, #tpu.memory_space<vmem>>, %arg4: memref<1x128xf32, #tpu.memory_space<vmem>>, %arg5: memref<128x256xbf16, #tpu.memory_space<vmem>>, %arg6: memref<1x256xf32, #tpu.memory_space<vmem>>, %arg7: memref<256x2048xbf16, #tpu.memory_space<vmem>>, %arg8: memref<1x2048xf32, #tpu.memory_space<vmem>>, %arg9: memref<2048x512xbf16, #tpu.memory_space<vmem>>, %arg10: memref<1x512xf32, #tpu.memory_space<vmem>>, %arg11: memref<512x256xbf16, #tpu.memory_space<vmem>>, %arg12: memref<1x256xf32, #tpu.memory_space<vmem>>, %arg13: memref<256x2xf32, #tpu.memory_space<vmem>>, %arg14: memref<1x2xf32, #tpu.memory_space<vmem>>, %arg15: memref<2x2xf32, #tpu.memory_space<vmem>>, %arg16: memref<2x2048xf32, #tpu.memory_space<vmem>>) attributes {dimension_semantics = [#tpu.dimension_semantics<parallel>, #tpu.dimension_semantics<arbitrary>], iteration_bounds = array<i64: 1, 1>, scalar_prefetch = 0 : i64, scratch_operands = 1 : i64, tpu.core_type = #tpu.core_type<tc>, window_params = [{transform_indices = @transform_0, window_bounds = array<i64: 2, 64, 3>}, {pipeline_mode = #tpu.pipeline_mode<synchronous>, transform_indices = @transform_1, window_bounds = array<i64: 3, 128>}, {pipeline_mode = #tpu.pipeline_mode<synchronous>, transform_indices = @transform_2, window_bounds = array<i64: 1, 128>}, {pipeline_mode = #tpu.pipeline_mode<synchronous>, transform_indices = @transform_3, window_bounds = array<i64: 128, 256>}, {pipeline_mode = #tpu.pipeline_mode<synchronous>, transform_indices = @transform_4, window_bounds = array<i64: 1, 256>}, {pipeline_mode = #tpu.pipeline_mode<synchronous>, transform_indices = @transform_5, window_bounds = array<i64: 256, 2048>}, {pipeline_mode = #tpu.pipeline_mode<synchronous>, transform_indices = @transform_6, window_bounds = array<i64: 1, 2048>}, {pipeline_mode = #tpu.pipeline_mode<synchronous>, transform_indices = @transform_7, window_bounds = array<i64: 2048, 512>}, {pipeline_mode = #tpu.pipeline_mode<synchronous>, transform_indices = @transform_8, window_bounds = array<i64: 1, 512>}, {pipeline_mode = #tpu.pipeline_mode<synchronous>, transform_indices = @transform_9, window_bounds = array<i64: 512, 256>}, {pipeline_mode = #tpu.pipeline_mode<synchronous>, transform_indices = @transform_10, window_bounds = array<i64: 1, 256>}, {pipeline_mode = #tpu.pipeline_mode<synchronous>, transform_indices = @transform_11, window_bounds = array<i64: 256, 2>}, {pipeline_mode = #tpu.pipeline_mode<synchronous>, transform_indices = @transform_12, window_bounds = array<i64: 1, 2>}, {transform_indices = @transform_13, window_bounds = array<i64: 2, 2>}]} {
    %c0_i32 = arith.constant 0 : i32
    %0 = arith.cmpi eq, %arg1, %c0_i32 : i32
    %1 = arith.extui %0 : i1 to i32
    %c0_i32_0 = arith.constant 0 : i32
    %2 = arith.cmpi ne, %1, %c0_i32_0 : i32
    scf.if %2 {
      %cst_27 = arith.constant 0xFF800000 : f32
      %54 = vector.broadcast %cst_27 : f32 to vector<2x2048xf32>
      %c0_28 = arith.constant 0 : index
      %c0_29 = arith.constant 0 : index
      %55 = vector.load %arg16[%c0_28, %c0_29] : memref<2x2048xf32, #tpu.memory_space<vmem>>, vector<2x2048xf32>
      tpu.vector_store %arg16[%c0_28, %c0_29], %54 {strides = array<i32>} : memref<2x2048xf32, #tpu.memory_space<vmem>>, vector<2x2048xf32>,
    } else {
    }
    %c0 = arith.constant 0 : index
    %c0_1 = arith.constant 0 : index
    %c0_2 = arith.constant 0 : index
    %3 = vector.load %arg2[%c0, %c0_1, %c0_2] : memref<2x64x3xf32, #tpu.memory_space<vmem>>, vector<2x64x3xf32>
    %4 = vector.shape_cast %3 : vector<2x64x3xf32> to vector<128x3xf32>
    %c0_3 = arith.constant 0 : index
    %c0_4 = arith.constant 0 : index
    %5 = vector.load %arg3[%c0_3, %c0_4] : memref<3x128xf32, #tpu.memory_space<vmem>>, vector<3x128xf32>
    %6 = vector.extract_strided_slice %4 {offsets = [0, 0], sizes = [128, 1], strides = [1, 1]} : vector<128x3xf32> to vector<128x1xf32>
    %7 = vector.extract_strided_slice %5 {offsets = [0, 0], sizes = [1, 128], strides = [1, 1]} : vector<3x128xf32> to vector<1x128xf32>
    %8 = vector.broadcast %6 : vector<128x1xf32> to vector<128x128xf32>
    %9 = vector.broadcast %7 : vector<1x128xf32> to vector<128x128xf32>
    %10 = arith.mulf %8, %9 : vector<128x128xf32>
    %11 = vector.extract_strided_slice %4 {offsets = [0, 1], sizes = [128, 1], strides = [1, 1]} : vector<128x3xf32> to vector<128x1xf32>
    %12 = vector.extract_strided_slice %5 {offsets = [1, 0], sizes = [1, 128], strides = [1, 1]} : vector<3x128xf32> to vector<1x128xf32>
    %13 = vector.broadcast %11 : vector<128x1xf32> to vector<128x128xf32>
    %14 = vector.broadcast %12 : vector<1x128xf32> to vector<128x128xf32>
    %15 = arith.mulf %13, %14 : vector<128x128xf32>
    %16 = arith.addf %10, %15 : vector<128x128xf32>
    %17 = vector.extract_strided_slice %4 {offsets = [0, 2], sizes = [128, 1], strides = [1, 1]} : vector<128x3xf32> to vector<128x1xf32>
    %18 = vector.extract_strided_slice %5 {offsets = [2, 0], sizes = [1, 128], strides = [1, 1]} : vector<3x128xf32> to vector<1x128xf32>
    %19 = vector.broadcast %17 : vector<128x1xf32> to vector<128x128xf32>
    %20 = vector.broadcast %18 : vector<1x128xf32> to vector<128x128xf32>
    %21 = arith.mulf %19, %20 : vector<128x128xf32>
    %22 = arith.addf %16, %21 : vector<128x128xf32>
    %c0_5 = arith.constant 0 : index
    %c0_6 = arith.constant 0 : index
    %23 = vector.load %arg4[%c0_5, %c0_6] : memref<1x128xf32, #tpu.memory_space<vmem>>, vector<1x128xf32>
    %24 = vector.broadcast %23 : vector<1x128xf32> to vector<128x128xf32>
    %25 = arith.addf %22, %24 : vector<128x128xf32>
    %cst = arith.constant 0.000000e+00 : f32
    %26 = vector.broadcast %cst : f32 to vector<128x128xf32>
    %27 = arith.maximumf %25, %26 : vector<128x128xf32>
    %28 = arith.truncf %27 : vector<128x128xf32> to vector<128x128xbf16>
    %c0_7 = arith.constant 0 : index
    %c0_8 = arith.constant 0 : index
    %29 = vector.load %arg5[%c0_7, %c0_8] : memref<128x256xbf16, #tpu.memory_space<vmem>>, vector<128x256xbf16>
    %cst_9 = arith.constant dense<0.000000e+00> : vector<128x256xf32>
    %30 = tpu.matmul %28, %29, %cst_9 {dimension_numbers = #tpu.dot_dimension_numbers<[1], [0], [0], [1], [0, 0, 1, 1], [], []>} : vector<128x128xbf16>, vector<128x256xbf16>, vector<128x256xf32> -> vector<128x256xf32>
    %c0_10 = arith.constant 0 : index
    %c0_11 = arith.constant 0 : index
    %31 = vector.load %arg6[%c0_10, %c0_11] : memref<1x256xf32, #tpu.memory_space<vmem>>, vector<1x256xf32>
    %32 = vector.broadcast %31 : vector<1x256xf32> to vector<128x256xf32>
    %33 = arith.addf %30, %32 : vector<128x256xf32>
    %cst_12 = arith.constant 0.000000e+00 : f32
    %34 = vector.broadcast %cst_12 : f32 to vector<128x256xf32>
    %35 = arith.maximumf %33, %34 : vector<128x256xf32>
    %36 = arith.truncf %35 : vector<128x256xf32> to vector<128x256xbf16>
    %c0_13 = arith.constant 0 : index
    %c0_14 = arith.constant 0 : index
    %37 = vector.load %arg7[%c0_13, %c0_14] : memref<256x2048xbf16, #tpu.memory_space<vmem>>, vector<256x2048xbf16>
    %cst_15 = arith.constant dense<0.000000e+00> : vector<128x2048xf32>
    %38 = tpu.matmul %36, %37, %cst_15 {dimension_numbers = #tpu.dot_dimension_numbers<[1], [0], [0], [1], [0, 0, 1, 1], [], []>} : vector<128x256xbf16>, vector<256x2048xbf16>, vector<128x2048xf32> -> vector<128x2048xf32>
    %39 = vector.extract_strided_slice %38 {offsets = [0, 0], sizes = [64, 2048], strides = [1, 1]} : vector<128x2048xf32> to vector<64x2048xf32>
    %cst_16 = arith.constant dense<0xFF800000> : vector<2048xf32>
    %40 = vector.multi_reduction <maximumf>, %39, %cst_16 [0] : vector<64x2048xf32> to vector<2048xf32>
    %41 = vector.shape_cast %40 : vector<2048xf32> to vector<1x2048xf32>
    %c0_17 = arith.constant 0 : index
    %c0_18 = arith.constant 0 : index
    %42 = vector.load %arg16[%c0_17, %c0_18] : memref<2x2048xf32, #tpu.memory_space<vmem>>, vector<1x2048xf32>
    %43 = arith.maximumf %42, %41 : vector<1x2048xf32>
    %c0_19 = arith.constant 0 : index
    %c0_20 = arith.constant 0 : index
    %44 = vector.load %arg16[%c0_19, %c0_20] : memref<2x2048xf32, #tpu.memory_space<vmem>>, vector<1x2048xf32>
    tpu.vector_store %arg16[%c0_19, %c0_20], %43 {strides = array<i32>} : memref<2x2048xf32, #tpu.memory_space<vmem>>, vector<1x2048xf32>,
    %45 = vector.extract_strided_slice %38 {offsets = [64, 0], sizes = [64, 2048], strides = [1, 1]} : vector<128x2048xf32> to vector<64x2048xf32>
    %cst_21 = arith.constant dense<0xFF800000> : vector<2048xf32>
    %46 = vector.multi_reduction <maximumf>, %45, %cst_21 [0] : vector<64x2048xf32> to vector<2048xf32>
    %47 = vector.shape_cast %46 : vector<2048xf32> to vector<1x2048xf32>
    %c1 = arith.constant 1 : index
    %c0_22 = arith.constant 0 : index
    %48 = vector.load %arg16[%c1, %c0_22] : memref<2x2048xf32, #tpu.memory_space<vmem>>, vector<1x2048xf32>
    %49 = arith.maximumf %48, %47 : vector<1x2048xf32>
    %c1_23 = arith.constant 1 : index
    %c0_24 = arith.constant 0 : index
    %50 = vector.load %arg16[%c1_23, %c0_24] : memref<2x2048xf32, #tpu.memory_space<vmem>>, vector<1x2048xf32>
    tpu.vector_store %arg16[%c1_23, %c0_24], %49 {strides = array<i32>} : memref<2x2048xf32, #tpu.memory_space<vmem>>, vector<1x2048xf32>,
    %c0_i32_25 = arith.constant 0 : i32
    %51 = arith.cmpi eq, %arg1, %c0_i32_25 : i32
    %52 = arith.extui %51 : i1 to i32
    %c0_i32_26 = arith.constant 0 : i32
    %53 = arith.cmpi ne, %52, %c0_i32_26 : i32
    scf.if %53 {
      %c0_27 = arith.constant 0 : index
      %c0_28 = arith.constant 0 : index
      %54 = vector.load %arg16[%c0_27, %c0_28] : memref<2x2048xf32, #tpu.memory_space<vmem>>, vector<2x2048xf32>
      %c0_29 = arith.constant 0 : index
      %c0_30 = arith.constant 0 : index
      %55 = vector.load %arg8[%c0_29, %c0_30] : memref<1x2048xf32, #tpu.memory_space<vmem>>, vector<1x2048xf32>
      %56 = vector.broadcast %55 : vector<1x2048xf32> to vector<2x2048xf32>
      %57 = arith.addf %54, %56 : vector<2x2048xf32>
      %58 = arith.truncf %57 : vector<2x2048xf32> to vector<2x2048xbf16>
      %c0_31 = arith.constant 0 : index
      %c0_32 = arith.constant 0 : index
      %59 = vector.load %arg9[%c0_31, %c0_32] : memref<2048x512xbf16, #tpu.memory_space<vmem>>, vector<2048x512xbf16>
      %cst_33 = arith.constant dense<0.000000e+00> : vector<2x512xf32>
      %60 = tpu.matmul %58, %59, %cst_33 {dimension_numbers = #tpu.dot_dimension_numbers<[1], [0], [0], [1], [0, 0, 1, 1], [], []>} : vector<2x2048xbf16>, vector<2048x512xbf16>, vector<2x512xf32> -> vector<2x512xf32>
      %c0_34 = arith.constant 0 : index
      %c0_35 = arith.constant 0 : index
      %61 = vector.load %arg10[%c0_34, %c0_35] : memref<1x512xf32, #tpu.memory_space<vmem>>, vector<1x512xf32>
      %62 = vector.broadcast %61 : vector<1x512xf32> to vector<2x512xf32>
      %63 = arith.addf %60, %62 : vector<2x512xf32>
      %cst_36 = arith.constant 0.000000e+00 : f32
      %64 = vector.broadcast %cst_36 : f32 to vector<2x512xf32>
      %65 = arith.maximumf %63, %64 : vector<2x512xf32>
      %66 = arith.truncf %65 : vector<2x512xf32> to vector<2x512xbf16>
      %c0_37 = arith.constant 0 : index
      %c0_38 = arith.constant 0 : index
      %67 = vector.load %arg11[%c0_37, %c0_38] : memref<512x256xbf16, #tpu.memory_space<vmem>>, vector<512x256xbf16>
      %cst_39 = arith.constant dense<0.000000e+00> : vector<2x256xf32>
      %68 = tpu.matmul %66, %67, %cst_39 {dimension_numbers = #tpu.dot_dimension_numbers<[1], [0], [0], [1], [0, 0, 1, 1], [], []>} : vector<2x512xbf16>, vector<512x256xbf16>, vector<2x256xf32> -> vector<2x256xf32>
      %c0_40 = arith.constant 0 : index
      %c0_41 = arith.constant 0 : index
      %69 = vector.load %arg12[%c0_40, %c0_41] : memref<1x256xf32, #tpu.memory_space<vmem>>, vector<1x256xf32>
      %70 = vector.broadcast %69 : vector<1x256xf32> to vector<2x256xf32>
      %71 = arith.addf %68, %70 : vector<2x256xf32>
      %cst_42 = arith.constant 0.000000e+00 : f32
      %72 = vector.broadcast %cst_42 : f32 to vector<2x256xf32>
      %73 = arith.maximumf %71, %72 : vector<2x256xf32>
      %c0_43 = arith.constant 0 : index
      %c0_44 = arith.constant 0 : index
      %74 = vector.load %arg13[%c0_43, %c0_44] : memref<256x2xf32, #tpu.memory_space<vmem>>, vector<256x2xf32>
      %cst_45 = arith.constant dense<0.000000e+00> : vector<2x2xf32>
      %75 = tpu.matmul %73, %74, %cst_45 {dimension_numbers = #tpu.dot_dimension_numbers<[1], [0], [0], [1], [0, 0, 1, 1], [], []>} : vector<2x256xf32>, vector<256x2xf32>, vector<2x2xf32> -> vector<2x2xf32>
      %c0_46 = arith.constant 0 : index
      %c0_47 = arith.constant 0 : index
      %76 = vector.load %arg14[%c0_46, %c0_47] : memref<1x2xf32, #tpu.memory_space<vmem>>, vector<1x2xf32>
      %77 = vector.broadcast %76 : vector<1x2xf32> to vector<2x2xf32>
      %78 = arith.addf %75, %77 : vector<2x2xf32>
      %79 = tpu.iota {dimensions = array<i32: 1>} : vector<2x2xi32>
      %c0_i32_48 = arith.constant 0 : i32
      %80 = vector.broadcast %c0_i32_48 : i32 to vector<2x2xi32>
      %81 = arith.cmpi eq, %79, %80 : vector<2x2xi32>
      %82 = arith.negf %78 : vector<2x2xf32>
      %83 = math.exp %82 : vector<2x2xf32>
      %cst_49 = arith.constant 1.000000e+00 : f32
      %84 = vector.broadcast %cst_49 : f32 to vector<2x2xf32>
      %85 = arith.addf %84, %83 : vector<2x2xf32>
      %86 = arith.divf %84, %85 : vector<2x2xf32>
      %87 = arith.select %81, %78, %86 : vector<2x2xi1>, vector<2x2xf32>
      %c0_50 = arith.constant 0 : index
      %c0_51 = arith.constant 0 : index
      %88 = vector.load %arg15[%c0_50, %c0_51] : memref<2x2xf32, #tpu.memory_space<vmem>>, vector<2x2xf32>
      tpu.vector_store %arg15[%c0_50, %c0_51], %87 {strides = array<i32>} : memref<2x2xf32, #tpu.memory_space<vmem>>, vector<2x2xf32>,
    } else {
    }
    return
  }
  func.func @transform_0(%arg0: i32, %arg1: i32) -> (i32, i32, i32) {
    %c0_i32 = arith.constant 0 : i32
    %c0_i32_0 = arith.constant 0 : i32
    return %arg0, %arg1, %c0_i32 : i32, i32, i32
  }
  func.func @transform_1(%arg0: i32, %arg1: i32) -> (i32, i32) {
    %c0_i32 = arith.constant 0 : i32
    %c0_i32_0 = arith.constant 0 : i32
    %c0_i32_1 = arith.constant 0 : i32
    return %c0_i32, %c0_i32_0 : i32, i32
  }
  func.func @transform_2(%arg0: i32, %arg1: i32) -> (i32, i32) {
    %c0_i32 = arith.constant 0 : i32
    %c0_i32_0 = arith.constant 0 : i32
    %c0_i32_1 = arith.constant 0 : i32
    return %c0_i32, %c0_i32_0 : i32, i32
  }
  func.func @transform_3(%arg0: i32, %arg1: i32) -> (i32, i32) {
    %c0_i32 = arith.constant 0 : i32
    %c0_i32_0 = arith.constant 0 : i32
    %c0_i32_1 = arith.constant 0 : i32
    return %c0_i32, %c0_i32_0 : i32, i32
  }
  func.func @transform_4(%arg0: i32, %arg1: i32) -> (i32, i32) {
    %c0_i32 = arith.constant 0 : i32
    %c0_i32_0 = arith.constant 0 : i32
    %c0_i32_1 = arith.constant 0 : i32
    return %c0_i32, %c0_i32_0 : i32, i32
  }
  func.func @transform_5(%arg0: i32, %arg1: i32) -> (i32, i32) {
    %c0_i32 = arith.constant 0 : i32
    %c0_i32_0 = arith.constant 0 : i32
    %c0_i32_1 = arith.constant 0 : i32
    return %c0_i32, %c0_i32_0 : i32, i32
  }
  func.func @transform_6(%arg0: i32, %arg1: i32) -> (i32, i32) {
    %c0_i32 = arith.constant 0 : i32
    %c0_i32_0 = arith.constant 0 : i32
    %c0_i32_1 = arith.constant 0 : i32
    return %c0_i32, %c0_i32_0 : i32, i32
  }
  func.func @transform_7(%arg0: i32, %arg1: i32) -> (i32, i32) {
    %c0_i32 = arith.constant 0 : i32
    %c0_i32_0 = arith.constant 0 : i32
    %c0_i32_1 = arith.constant 0 : i32
    return %c0_i32, %c0_i32_0 : i32, i32
  }
  func.func @transform_8(%arg0: i32, %arg1: i32) -> (i32, i32) {
    %c0_i32 = arith.constant 0 : i32
    %c0_i32_0 = arith.constant 0 : i32
    %c0_i32_1 = arith.constant 0 : i32
    return %c0_i32, %c0_i32_0 : i32, i32
  }
  func.func @transform_9(%arg0: i32, %arg1: i32) -> (i32, i32) {
    %c0_i32 = arith.constant 0 : i32
    %c0_i32_0 = arith.constant 0 : i32
    %c0_i32_1 = arith.constant 0 : i32
    return %c0_i32, %c0_i32_0 : i32, i32
  }
  func.func @transform_10(%arg0: i32, %arg1: i32) -> (i32, i32) {
    %c0_i32 = arith.constant 0 : i32
    %c0_i32_0 = arith.constant 0 : i32
    %c0_i32_1 = arith.constant 0 : i32
    return %c0_i32, %c0_i32_0 : i32, i32
  }
  func.func @transform_11(%arg0: i32, %arg1: i32) -> (i32, i32) {
    %c0_i32 = arith.constant 0 : i32
    %c0_i32_0 = arith.constant 0 : i32
    %c0_i32_1 = arith.constant 0 : i32
    return %c0_i32, %c0_i32_0 : i32, i32
  }
  func.func @transform_12(%arg0: i32, %arg1: i32) -> (i32, i32) {
    %c0_i32 = arith.constant 0 : i32
    %c0_i32_0 = arith.constant 0 : i32
    %c0_i32_1 = arith.constant 0 : i32
    return %c0_i32, %c0_i32_0 : i32, i32
  }
  func.func @transform_13(%arg0: i32, %arg1: i32) -> (i32, i32) {
    %c0_i32 = arith.constant 0 : i32
    %c0_i32_0 = arith.constant 0 : i32
    return %arg0, %c0_i32 : i32, i32
  }
}

</mosaic_0001>

<llo_original>
// kernel: tpu_custom_call.1
$region0: #{tpu_custom_call.1}
  #allocation0 [shape = 'u32[]', space=smem, size = 0x4, offset = 0x4, fixed_abs, tag = 'smem constant byte address 0x4 - core index']
  #allocation1 [shape = 'u32[144,128]{1,0:T(1,128)}', space=vmem, size = 0x12000, scoped, tag = 'internal scratch']
  #allocation2 [shape = 'f32[2,2048]{1,0:T(2,128)}', space=vmem, size = 0x4000, scoped, tag = 'scratch operand']
  %s0 = inlined_call_operand.vmem [shape: f32[2,64,3], index: 0, kind: input, shape index: {}]
  %s1 = inlined_call_operand.hbm [shape: f32[3,128], index: 1, kind: input, shape index: {}]
  %s2 = inlined_call_operand.hbm [shape: f32[1,128], index: 2, kind: input, shape index: {}]
  %s3 = inlined_call_operand.hbm [shape: bf16[128,256], index: 3, kind: input, shape index: {}]
  %s4 = inlined_call_operand.hbm [shape: f32[1,256], index: 4, kind: input, shape index: {}]
  %s5 = inlined_call_operand.hbm [shape: bf16[256,2048], index: 5, kind: input, shape index: {}]
  %s6 = inlined_call_operand.hbm [shape: f32[1,2048], index: 6, kind: input, shape index: {}]
  %s7 = inlined_call_operand.hbm [shape: bf16[2048,512], index: 7, kind: input, shape index: {}]
  %s8 = inlined_call_operand.hbm [shape: f32[1,512], index: 8, kind: input, shape index: {}]
  %s9 = inlined_call_operand.hbm [shape: bf16[512,256], index: 9, kind: input, shape index: {}]
  %s10 = inlined_call_operand.hbm [shape: f32[1,256], index: 10, kind: input, shape index: {}]
  %s11 = inlined_call_operand.vmem [shape: f32[256,2], index: 11, kind: input, shape index: {}]
  %s12 = inlined_call_operand.hbm [shape: f32[1,2], index: 12, kind: input, shape index: {}]
  %s13 = inlined_call_operand.hbm [shape: f32[2,2], index: 13, kind: output, shape index: {}]
  %s14 = sld [smem:[#allocation0]]
  $region114: #{tpu_custom_call.1} parent=0
    _
  %s16 = ssub.s32 1, %s14
  %s17 = scalar_select 0, %s16, %s14
  $region1: #{tpu_custom_call.1} parent=0
    #allocation3 [shape = 'u8[2048]{0}', space=vmem, size = 0x800, scoped, tag = 'input window, operand 1, single buffered']
    #allocation4 [shape = 's32[1]{0}', space=sflag, size = 0x4, scoped, tag = 'scoped memory for tpu_custom_call.1']
    #allocation5 [shape = 's32[1]{0}', space=sflag, size = 0x4, scoped, tag = 'scoped memory for tpu_custom_call.1']
    #allocation6 [shape = 'u8[512]{0}', space=vmem, size = 0x400, scoped, tag = 'input window, operand 2, single buffered']
    #allocation7 [shape = 's32[1]{0}', space=sflag, size = 0x4, scoped, tag = 'scoped memory for tpu_custom_call.1']
    #allocation8 [shape = 'u8[65536]{0}', space=vmem, size = 0x10000, scoped, tag = 'input window, operand 3, single buffered']
    #allocation9 [shape = 'u8[1024]{0}', space=vmem, size = 0x400, scoped, tag = 'input window, operand 4, single buffered']
    #allocation10 [shape = 's32[1]{0}', space=sflag, size = 0x4, scoped, tag = 'scoped memory for tpu_custom_call.1']
    #allocation11 [shape = 'u8[1048576]{0}', space=vmem, size = 0x100000, scoped, tag = 'input window, operand 5, single buffered']
    #allocation12 [shape = 'u8[8192]{0}', space=vmem, size = 0x2000, scoped, tag = 'input window, operand 6, single buffered']
    #allocation13 [shape = 's32[1]{0}', space=sflag, size = 0x4, scoped, tag = 'scoped memory for tpu_custom_call.1']
    #allocation14 [shape = 'u8[2097152]{0}', space=vmem, size = 0x200000, scoped, tag = 'input window, operand 7, single buffered']
    #allocation15 [shape = 'u8[2048]{0}', space=vmem, size = 0x800, scoped, tag = 'input window, operand 8, single buffered']
    #allocation16 [shape = 's32[1]{0}', space=sflag, size = 0x4, scoped, tag = 'scoped memory for tpu_custom_call.1']
    #allocation17 [shape = 'u8[262144]{0}', space=vmem, size = 0x40000, scoped, tag = 'input window, operand 9, single buffered']
    #allocation18 [shape = 'u8[1024]{0}', space=vmem, size = 0x400, scoped, tag = 'input window, operand 10, single buffered']
    #allocation19 [shape = 's32[1]{0}', space=sflag, size = 0x4, scoped, tag = 'scoped memory for tpu_custom_call.1']
    #allocation20 [shape = 'u8[512]{0}', space=vmem, size = 0x400, scoped, tag = 'input window, operand 12, single buffered']
    #allocation21 [shape = 'u8[1024]{0}', space=vmem, size = 0x400, scoped, tag = 'output window, operand 0, single buffered']
    %18 = vsyncpa [#allocation4], 0
    %19 = vsyncpa [#allocation7], 0
    %20 = vsyncpa [#allocation10], 0
    %21 = vsyncpa [#allocation13], 0
    %22 = vsyncpa [#allocation16], 0
    %23 = vsyncpa [#allocation19], 0
    %24 = vsyncpa [#allocation5], 0
    // Predicated region
    $region2: #{tpu_custom_call.1} parent=1 // pred_check
      _
    $region3: #{tpu_custom_call.1} parent=1 // pred_check_branch
      %26 = sbr.rel (0) target = $region5
    $region4: #{tpu_custom_call.1} parent=1 // pred_region
      _
    $region5: #{tpu_custom_call.1} parent=1 // pred_fallthru
      _
    // Predicated region
    $region6: #{tpu_custom_call.1} parent=1 // pred_check
      _
    $region7: #{tpu_custom_call.1} parent=1 // pred_check_branch
      %28 = sbr.rel (0) target = $region9
    $region8: #{tpu_custom_call.1} parent=1 // pred_region
      %s30 = ssub.s32 64, 64
      %31 = vsyncadd [#allocation4], %s30
      %s33 = sshll.u32 [#allocation3], 4
      %s34 = int_to_ptr.vmem [resolvable:$true] %s33
      %36 = dma.hbm_to_vmem [thread:$0]  %s1, 64, %s34, [#allocation4]
    $region9: #{tpu_custom_call.1} parent=1 // pred_fallthru
      _
    // Predicated region
    $region10: #{tpu_custom_call.1} parent=1 // pred_check
      _
    $region11: #{tpu_custom_call.1} parent=1 // pred_check_branch
      %38 = sbr.rel (0) target = $region13
    $region12: #{tpu_custom_call.1} parent=1 // pred_region
      %s40 = ssub.s32 16, 16
      %41 = vsyncadd [#allocation7], %s40
      %s43 = sshll.u32 [#allocation6], 4
      %s44 = int_to_ptr.vmem [resolvable:$true] %s43
      %46 = dma.hbm_to_vmem [thread:$0]  %s2, 16, %s44, [#allocation7]
    $region13: #{tpu_custom_call.1} parent=1 // pred_fallthru
      _
    // Predicated region
    $region14: #{tpu_custom_call.1} parent=1 // pred_check
      _
    $region15: #{tpu_custom_call.1} parent=1 // pred_check_branch
      %48 = sbr.rel (0) target = $region17
    $region16: #{tpu_custom_call.1} parent=1 // pred_region
      %s50 = ssub.s32 2048, 2048
      %51 = vsyncadd [#allocation7], %s50
      %s52 = sshll.u32 [#allocation8], 4
      %s53 = int_to_ptr.vmem [resolvable:$true] %s52
      %58 = dma.hbm_to_vmem [thread:$0]  %s3, 2048, %s53, [#allocation7], 128, 128, 8
    $region17: #{tpu_custom_call.1} parent=1 // pred_fallthru
      _
    // Predicated region
    $region18: #{tpu_custom_call.1} parent=1 // pred_check
      _
    $region19: #{tpu_custom_call.1} parent=1 // pred_check_branch
      %60 = sbr.rel (0) target = $region21
    $region20: #{tpu_custom_call.1} parent=1 // pred_region
      %s62 = ssub.s32 32, 32
      %63 = vsyncadd [#allocation10], %s62
      %s65 = sshll.u32 [#allocation9], 4
      %s66 = int_to_ptr.vmem [resolvable:$true] %s65
      %68 = dma.hbm_to_vmem [thread:$0]  %s4, 32, %s66, [#allocation10]
    $region21: #{tpu_custom_call.1} parent=1 // pred_fallthru
      _
    // Predicated region
    $region22: #{tpu_custom_call.1} parent=1 // pred_check
      _
    $region23: #{tpu_custom_call.1} parent=1 // pred_check_branch
      %70 = sbr.rel (0) target = $region25
    $region24: #{tpu_custom_call.1} parent=1 // pred_region
      %s72 = ssub.s32 32768, 32768
      %73 = vsyncadd [#allocation10], %s72
      %s74 = sshll.u32 [#allocation11], 4
      %s75 = int_to_ptr.vmem [resolvable:$true] %s74
      %80 = dma.hbm_to_vmem [thread:$0]  %s5, 32768, %s75, [#allocation10], 1024, 1024, 64
    $region25: #{tpu_custom_call.1} parent=1 // pred_fallthru
      _
    // Predicated region
    $region26: #{tpu_custom_call.1} parent=1 // pred_check
      _
    $region27: #{tpu_custom_call.1} parent=1 // pred_check_branch
      %82 = sbr.rel (0) target = $region29
    $region28: #{tpu_custom_call.1} parent=1 // pred_region
      %s84 = ssub.s32 256, 256
      %85 = vsyncadd [#allocation13], %s84
      %s87 = sshll.u32 [#allocation12], 4
      %s88 = int_to_ptr.vmem [resolvable:$true] %s87
      %90 = dma.hbm_to_vmem [thread:$0]  %s6, 256, %s88, [#allocation13]
    $region29: #{tpu_custom_call.1} parent=1 // pred_fallthru
      _
    // Predicated region
    $region30: #{tpu_custom_call.1} parent=1 // pred_check
      _
    $region31: #{tpu_custom_call.1} parent=1 // pred_check_branch
      %92 = sbr.rel (0) target = $region33
    $region32: #{tpu_custom_call.1} parent=1 // pred_region
      %s94 = ssub.s32 65536, 65536
      %95 = vsyncadd [#allocation13], %s94
      %s96 = sshll.u32 [#allocation14], 4
      %s97 = int_to_ptr.vmem [resolvable:$true] %s96
      %102 = dma.hbm_to_vmem [thread:$0]  %s7, 65536, %s97, [#allocation13], 256, 256, 16
    $region33: #{tpu_custom_call.1} parent=1 // pred_fallthru
      _
    // Predicated region
    $region34: #{tpu_custom_call.1} parent=1 // pred_check
      _
    $region35: #{tpu_custom_call.1} parent=1 // pred_check_branch
      %104 = sbr.rel (0) target = $region37
    $region36: #{tpu_custom_call.1} parent=1 // pred_region
      %s106 = ssub.s32 64, 64
      %107 = vsyncadd [#allocation16], %s106
      %s109 = sshll.u32 [#allocation15], 4
      %s110 = int_to_ptr.vmem [resolvable:$true] %s109
      %112 = dma.hbm_to_vmem [thread:$0]  %s8, 64, %s110, [#allocation16]
    $region37: #{tpu_custom_call.1} parent=1 // pred_fallthru
      _
    // Predicated region
    $region38: #{tpu_custom_call.1} parent=1 // pred_check
      _
    $region39: #{tpu_custom_call.1} parent=1 // pred_check_branch
      %114 = sbr.rel (0) target = $region41
    $region40: #{tpu_custom_call.1} parent=1 // pred_region
      %s116 = ssub.s32 8192, 8192
      %117 = vsyncadd [#allocation16], %s116
      %s118 = sshll.u32 [#allocation17], 4
      %s119 = int_to_ptr.vmem [resolvable:$true] %s118
      %124 = dma.hbm_to_vmem [thread:$0]  %s9, 8192, %s119, [#allocation16], 128, 128, 8
    $region41: #{tpu_custom_call.1} parent=1 // pred_fallthru
      _
    // Predicated region
    $region42: #{tpu_custom_call.1} parent=1 // pred_check
      _
    $region43: #{tpu_custom_call.1} parent=1 // pred_check_branch
      %126 = sbr.rel (0) target = $region45
    $region44: #{tpu_custom_call.1} parent=1 // pred_region
      %s128 = ssub.s32 32, 32
      %129 = vsyncadd [#allocation19], %s128
      %s131 = sshll.u32 [#allocation18], 4
      %s132 = int_to_ptr.vmem [resolvable:$true] %s131
      %134 = dma.hbm_to_vmem [thread:$0]  %s10, 32, %s132, [#allocation19]
    $region45: #{tpu_custom_call.1} parent=1 // pred_fallthru
      _
    // Predicated region
    $region46: #{tpu_custom_call.1} parent=1 // pred_check
      _
    $region47: #{tpu_custom_call.1} parent=1 // pred_check_branch
      %136 = sbr.rel (0) target = $region49
    $region48: #{tpu_custom_call.1} parent=1 // pred_region
      _
    $region49: #{tpu_custom_call.1} parent=1 // pred_fallthru
      _
    // Predicated region
    $region50: #{tpu_custom_call.1} parent=1 // pred_check
      _
    $region51: #{tpu_custom_call.1} parent=1 // pred_check_branch
      %138 = sbr.rel (0) target = $region53
    $region52: #{tpu_custom_call.1} parent=1 // pred_region
      %s140 = ssub.s32 16, 16
      %141 = vsyncadd [#allocation19], %s140
      %s143 = sshll.u32 [#allocation20], 4
      %s144 = int_to_ptr.vmem [resolvable:$true] %s143
      %146 = dma.hbm_to_vmem [thread:$0]  %s12, 16, %s144, [#allocation19]
    $region53: #{tpu_custom_call.1} parent=1 // pred_fallthru
      _
    // Predicated region
    $region54: #{tpu_custom_call.1} parent=1 // pred_check
      _
    $region55: #{tpu_custom_call.1} parent=1 // pred_check_branch
      %148 = sbr.rel (0) target = $region57
    $region56: #{tpu_custom_call.1} parent=1 // pred_region
      %149 = dma.done [#allocation4], 64
    $region57: #{tpu_custom_call.1} parent=1 // pred_fallthru
      _
    // Predicated region
    $region58: #{tpu_custom_call.1} parent=1 // pred_check
      _
    $region59: #{tpu_custom_call.1} parent=1 // pred_check_branch
      %151 = sbr.rel (0) target = $region61
    $region60: #{tpu_custom_call.1} parent=1 // pred_region
      %152 = dma.done [#allocation7], 16
    $region61: #{tpu_custom_call.1} parent=1 // pred_fallthru
      _
    // Predicated region
    $region62: #{tpu_custom_call.1} parent=1 // pred_check
      _
    $region63: #{tpu_custom_call.1} parent=1 // pred_check_branch
      %154 = sbr.rel (0) target = $region65
    $region64: #{tpu_custom_call.1} parent=1 // pred_region
      %155 = dma.done [#allocation7], 2048
    $region65: #{tpu_custom_call.1} parent=1 // pred_fallthru
      _
    // Predicated region
    $region66: #{tpu_custom_call.1} parent=1 // pred_check
      _
    $region67: #{tpu_custom_call.1} parent=1 // pred_check_branch
      %157 = sbr.rel (0) target = $region69
    $region68: #{tpu_custom_call.1} parent=1 // pred_region
      %158 = dma.done [#allocation10], 32
    $region69: #{tpu_custom_call.1} parent=1 // pred_fallthru
      _
    // Predicated region
    $region70: #{tpu_custom_call.1} parent=1 // pred_check
      _
    $region71: #{tpu_custom_call.1} parent=1 // pred_check_branch
      %160 = sbr.rel (0) target = $region73
    $region72: #{tpu_custom_call.1} parent=1 // pred_region
      %161 = dma.done [#allocation10], 32768
    $region73: #{tpu_custom_call.1} parent=1 // pred_fallthru
      _
    // Predicated region
    $region74: #{tpu_custom_call.1} parent=1 // pred_check
      _
    $region75: #{tpu_custom_call.1} parent=1 // pred_check_branch
      %163 = sbr.rel (0) target = $region77
    $region76: #{tpu_custom_call.1} parent=1 // pred_region
      %164 = dma.done [#allocation13], 256
    $region77: #{tpu_custom_call.1} parent=1 // pred_fallthru
      _
    // Predicated region
    $region78: #{tpu_custom_call.1} parent=1 // pred_check
      _
    $region79: #{tpu_custom_call.1} parent=1 // pred_check_branch
      %166 = sbr.rel (0) target = $region81
    $region80: #{tpu_custom_call.1} parent=1 // pred_region
      %167 = dma.done [#allocation13], 65536
    $region81: #{tpu_custom_call.1} parent=1 // pred_fallthru
      _
    // Predicated region
    $region82: #{tpu_custom_call.1} parent=1 // pred_check
      _
    $region83: #{tpu_custom_call.1} parent=1 // pred_check_branch
      %169 = sbr.rel (0) target = $region85
    $region84: #{tpu_custom_call.1} parent=1 // pred_region
      %170 = dma.done [#allocation16], 64
    $region85: #{tpu_custom_call.1} parent=1 // pred_fallthru
      _
    // Predicated region
    $region86: #{tpu_custom_call.1} parent=1 // pred_check
      _
    $region87: #{tpu_custom_call.1} parent=1 // pred_check_branch
      %172 = sbr.rel (0) target = $region89
    $region88: #{tpu_custom_call.1} parent=1 // pred_region
      %173 = dma.done [#allocation16], 8192
    $region89: #{tpu_custom_call.1} parent=1 // pred_fallthru
      _
    // Predicated region
    $region90: #{tpu_custom_call.1} parent=1 // pred_check
      _
    $region91: #{tpu_custom_call.1} parent=1 // pred_check_branch
      %175 = sbr.rel (0) target = $region93
    $region92: #{tpu_custom_call.1} parent=1 // pred_region
      %176 = dma.done [#allocation19], 32
    $region93: #{tpu_custom_call.1} parent=1 // pred_fallthru
      _
    // Predicated region
    $region94: #{tpu_custom_call.1} parent=1 // pred_check
      _
    $region95: #{tpu_custom_call.1} parent=1 // pred_check_branch
      %178 = sbr.rel (0) target = $region97
    $region96: #{tpu_custom_call.1} parent=1 // pred_region
      %179 = dma.done [#allocation19], 16
    $region97: #{tpu_custom_call.1} parent=1 // pred_fallthru
      _
    %p181 = scmp.eq.s32.totalorder 0, 0
    // Predicated region
    $region98: #{tpu_custom_call.1} parent=1 // pred_check
      %p182 = pneg %p181
    $region99: #{tpu_custom_call.1} parent=1 // pred_check_branch
      %184 = sbr.rel (%p182) target = $region101
    $region100: #{tpu_custom_call.1} parent=1 // pred_region
      %185 = vst [vmem:[#allocation2] sm:$0xff] -inf
      %186 = vst [vmem:[#allocation2 + $0x8] sm:$0xff] -inf
      %187 = vst [vmem:[#allocation2 + $0x10] sm:$0xff] -inf
      %188 = vst [vmem:[#allocation2 + $0x18] sm:$0xff] -inf
    $region101: #{tpu_custom_call.1} parent=1 // pred_fallthru
      _
    %v189 = vld [vmem:[%s0] sm:$0xff]
    %v190 = vld [vmem:[%s0 + $0x8] sm:$0xff]
    %v191 = vld [vmem:[%s0 + $0x10] sm:$0xff]
    %v192 = vld [vmem:[%s0 + $0x18] sm:$0xff]
    %v193 = vld [vmem:[%s0 + $0x20] sm:$0xff]
    %v194 = vld [vmem:[%s0 + $0x28] sm:$0xff]
    %v195 = vld [vmem:[%s0 + $0x30] sm:$0xff]
    %v196 = vld [vmem:[%s0 + $0x38] sm:$0xff]
    %v197 = vld [vmem:[%s0 + $0x40] sm:$0xff]
    %v198 = vld [vmem:[%s0 + $0x48] sm:$0xff]
    %v199 = vld [vmem:[%s0 + $0x50] sm:$0xff]
    %v200 = vld [vmem:[%s0 + $0x58] sm:$0xff]
    %v201 = vld [vmem:[%s0 + $0x60] sm:$0xff]
    %v202 = vld [vmem:[%s0 + $0x68] sm:$0xff]
    %v203 = vld [vmem:[%s0 + $0x70] sm:$0xff]
    %v204 = vld [vmem:[%s0 + $0x78] sm:$0xff]
    %v205 = vld [vmem:[#allocation3] sm:$0x7]
    %207 = vset.pattern.permute.xlu0 0
    %208 = vperm.xlu0 %207, %v189
    %v209 = vpop.permute.xlu0 %208
    %212 = vset.pattern.permute.xlu0 0
    %213 = vperm.xlu0 %212, %v190
    %v214 = vpop.permute.xlu0 %213
    %217 = vset.pattern.permute.xlu0 0
    %218 = vperm.xlu0 %217, %v191
    %v219 = vpop.permute.xlu0 %218
    %222 = vset.pattern.permute.xlu0 0
    %223 = vperm.xlu0 %222, %v192
    %v224 = vpop.permute.xlu0 %223
    %227 = vset.pattern.permute.xlu0 0
    %228 = vperm.xlu0 %227, %v193
    %v229 = vpop.permute.xlu0 %228
    %232 = vset.pattern.permute.xlu0 0
    %233 = vperm.xlu0 %232, %v194
    %v234 = vpop.permute.xlu0 %233
    %237 = vset.pattern.permute.xlu0 0
    %238 = vperm.xlu0 %237, %v195
    %v239 = vpop.permute.xlu0 %238
    %242 = vset.pattern.permute.xlu0 0
    %243 = vperm.xlu0 %242, %v196
    %v244 = vpop.permute.xlu0 %243
    %247 = vset.pattern.permute.xlu0 0
    %248 = vperm.xlu0 %247, %v197
    %v249 = vpop.permute.xlu0 %248
    %252 = vset.pattern.permute.xlu0 0
    %253 = vperm.xlu0 %252, %v198
    %v254 = vpop.permute.xlu0 %253
    %257 = vset.pattern.permute.xlu0 0
    %258 = vperm.xlu0 %257, %v199
    %v259 = vpop.permute.xlu0 %258
    %262 = vset.pattern.permute.xlu0 0
    %263 = vperm.xlu0 %262, %v200
    %v264 = vpop.permute.xlu0 %263
    %267 = vset.pattern.permute.xlu0 0
    %268 = vperm.xlu0 %267, %v201
    %v269 = vpop.permute.xlu0 %268
    %272 = vset.pattern.permute.xlu0 0
    %273 = vperm.xlu0 %272, %v202
    %v274 = vpop.permute.xlu0 %273
    %277 = vset.pattern.permute.xlu0 0
    %278 = vperm.xlu0 %277, %v203
    %v279 = vpop.permute.xlu0 %278
    %282 = vset.pattern.permute.xlu0 0
    %283 = vperm.xlu0 %282, %v204
    %v284 = vpop.permute.xlu0 %283
    %v286 = vlaneseq
    %v287 = vshrl.u32 %v286, 7
    %v288 = vsub.s32 0, %v287
    %v289 = vrot.slane %v205, %v288
    %v290 = vmul.f32 %v209, %v289
    %v291 = vmul.f32 %v214, %v289
    %v292 = vmul.f32 %v219, %v289
    %v293 = vmul.f32 %v224, %v289
    %v294 = vmul.f32 %v229, %v289
    %v295 = vmul.f32 %v234, %v289
    %v296 = vmul.f32 %v239, %v289
    %v297 = vmul.f32 %v244, %v289
    %v298 = vmul.f32 %v249, %v289
    %v299 = vmul.f32 %v254, %v289
    %v300 = vmul.f32 %v259, %v289
    %v301 = vmul.f32 %v264, %v289
    %v302 = vmul.f32 %v269, %v289
    %v303 = vmul.f32 %v274, %v289
    %v304 = vmul.f32 %v279, %v289
    %v305 = vmul.f32 %v284, %v289
    %306 = vset.pattern.permute.xlu0 1
    %307 = vperm.xlu0 %306, %v189
    %v308 = vpop.permute.xlu0 %307
    %310 = vset.pattern.permute.xlu0 1
    %311 = vperm.xlu0 %310, %v190
    %v312 = vpop.permute.xlu0 %311
    %314 = vset.pattern.permute.xlu0 1
    %315 = vperm.xlu0 %314, %v191
    %v316 = vpop.permute.xlu0 %315
    %318 = vset.pattern.permute.xlu0 1
    %319 = vperm.xlu0 %318, %v192
    %v320 = vpop.permute.xlu0 %319
    %322 = vset.pattern.permute.xlu0 1
    %323 = vperm.xlu0 %322, %v193
    %v324 = vpop.permute.xlu0 %323
    %326 = vset.pattern.permute.xlu0 1
    %327 = vperm.xlu0 %326, %v194
    %v328 = vpop.permute.xlu0 %327
    %330 = vset.pattern.permute.xlu0 1
    %331 = vperm.xlu0 %330, %v195
    %v332 = vpop.permute.xlu0 %331
    %334 = vset.pattern.permute.xlu0 1
    %335 = vperm.xlu0 %334, %v196
    %v336 = vpop.permute.xlu0 %335
    %338 = vset.pattern.permute.xlu0 1
    %339 = vperm.xlu0 %338, %v197
    %v340 = vpop.permute.xlu0 %339
    %342 = vset.pattern.permute.xlu0 1
    %343 = vperm.xlu0 %342, %v198
    %v344 = vpop.permute.xlu0 %343
    %346 = vset.pattern.permute.xlu0 1
    %347 = vperm.xlu0 %346, %v199
    %v348 = vpop.permute.xlu0 %347
    %350 = vset.pattern.permute.xlu0 1
    %351 = vperm.xlu0 %350, %v200
    %v352 = vpop.permute.xlu0 %351
    %354 = vset.pattern.permute.xlu0 1
    %355 = vperm.xlu0 %354, %v201
    %v356 = vpop.permute.xlu0 %355
    %358 = vset.pattern.permute.xlu0 1
    %359 = vperm.xlu0 %358, %v202
    %v360 = vpop.permute.xlu0 %359
    %362 = vset.pattern.permute.xlu0 1
    %363 = vperm.xlu0 %362, %v203
    %v364 = vpop.permute.xlu0 %363
    %366 = vset.pattern.permute.xlu0 1
    %367 = vperm.xlu0 %366, %v204
    %v368 = vpop.permute.xlu0 %367
    %v370 = vlaneseq
    %v371 = vshrl.u32 %v370, 7
    %v372 = vsub.s32 1, %v371
    %v373 = vrot.slane %v205, %v372
    %v374 = vmul.f32 %v308, %v373
    %v375 = vmul.f32 %v312, %v373
    %v376 = vmul.f32 %v316, %v373
    %v377 = vmul.f32 %v320, %v373
    %v378 = vmul.f32 %v324, %v373
    %v379 = vmul.f32 %v328, %v373
    %v380 = vmul.f32 %v332, %v373
    %v381 = vmul.f32 %v336, %v373
    %v382 = vmul.f32 %v340, %v373
    %v383 = vmul.f32 %v344, %v373
    %v384 = vmul.f32 %v348, %v373
    %v385 = vmul.f32 %v352, %v373
    %v386 = vmul.f32 %v356, %v373
    %v387 = vmul.f32 %v360, %v373
    %v388 = vmul.f32 %v364, %v373
    %v389 = vmul.f32 %v368, %v373
    %v390 = vadd.f32 %v290, %v374
    %v391 = vadd.f32 %v291, %v375
    %v392 = vadd.f32 %v292, %v376
    %v393 = vadd.f32 %v293, %v377
    %v394 = vadd.f32 %v294, %v378
    %v395 = vadd.f32 %v295, %v379
    %v396 = vadd.f32 %v296, %v380
    %v397 = vadd.f32 %v297, %v381
    %v398 = vadd.f32 %v298, %v382
    %v399 = vadd.f32 %v299, %v383
    %v400 = vadd.f32 %v300, %v384
    %v401 = vadd.f32 %v301, %v385
    %v402 = vadd.f32 %v302, %v386
    %v403 = vadd.f32 %v303, %v387
    %v404 = vadd.f32 %v304, %v388
    %v405 = vadd.f32 %v305, %v389
    %406 = vset.pattern.permute.xlu0 2
    %407 = vperm.xlu0 %406, %v189
    %v408 = vpop.permute.xlu0 %407
    %410 = vset.pattern.permute.xlu0 2
    %411 = vperm.xlu0 %410, %v190
    %v412 = vpop.permute.xlu0 %411
    %414 = vset.pattern.permute.xlu0 2
    %415 = vperm.xlu0 %414, %v191
    %v416 = vpop.permute.xlu0 %415
    %418 = vset.pattern.permute.xlu0 2
    %419 = vperm.xlu0 %418, %v192
    %v420 = vpop.permute.xlu0 %419
    %422 = vset.pattern.permute.xlu0 2
    %423 = vperm.xlu0 %422, %v193
    %v424 = vpop.permute.xlu0 %423
    %426 = vset.pattern.permute.xlu0 2
    %427 = vperm.xlu0 %426, %v194
    %v428 = vpop.permute.xlu0 %427
    %430 = vset.pattern.permute.xlu0 2
    %431 = vperm.xlu0 %430, %v195
    %v432 = vpop.permute.xlu0 %431
    %434 = vset.pattern.permute.xlu0 2
    %435 = vperm.xlu0 %434, %v196
    %v436 = vpop.permute.xlu0 %435
    %438 = vset.pattern.permute.xlu0 2
    %439 = vperm.xlu0 %438, %v197
    %v440 = vpop.permute.xlu0 %439
    %442 = vset.pattern.permute.xlu0 2
    %443 = vperm.xlu0 %442, %v198
    %v444 = vpop.permute.xlu0 %443
    %446 = vset.pattern.permute.xlu0 2
    %447 = vperm.xlu0 %446, %v199
    %v448 = vpop.permute.xlu0 %447
    %450 = vset.pattern.permute.xlu0 2
    %451 = vperm.xlu0 %450, %v200
    %v452 = vpop.permute.xlu0 %451
    %454 = vset.pattern.permute.xlu0 2
    %455 = vperm.xlu0 %454, %v201
    %v456 = vpop.permute.xlu0 %455
    %458 = vset.pattern.permute.xlu0 2
    %459 = vperm.xlu0 %458, %v202
    %v460 = vpop.permute.xlu0 %459
    %462 = vset.pattern.permute.xlu0 2
    %463 = vperm.xlu0 %462, %v203
    %v464 = vpop.permute.xlu0 %463
    %466 = vset.pattern.permute.xlu0 2
    %467 = vperm.xlu0 %466, %v204
    %v468 = vpop.permute.xlu0 %467
    %v470 = vlaneseq
    %v471 = vshrl.u32 %v470, 7
    %v472 = vsub.s32 2, %v471
    %v473 = vrot.slane %v205, %v472
    %v474 = vmul.f32 %v408, %v473
    %v475 = vmul.f32 %v412, %v473
    %v476 = vmul.f32 %v416, %v473
    %v477 = vmul.f32 %v420, %v473
    %v478 = vmul.f32 %v424, %v473
    %v479 = vmul.f32 %v428, %v473
    %v480 = vmul.f32 %v432, %v473
    %v481 = vmul.f32 %v436, %v473
    %v482 = vmul.f32 %v440, %v473
    %v483 = vmul.f32 %v444, %v473
    %v484 = vmul.f32 %v448, %v473
    %v485 = vmul.f32 %v452, %v473
    %v486 = vmul.f32 %v456, %v473
    %v487 = vmul.f32 %v460, %v473
    %v488 = vmul.f32 %v464, %v473
    %v489 = vmul.f32 %v468, %v473
    %v490 = vadd.f32 %v390, %v474
    %v491 = vadd.f32 %v391, %v475
    %v492 = vadd.f32 %v392, %v476
    %v493 = vadd.f32 %v393, %v477
    %v494 = vadd.f32 %v394, %v478
    %v495 = vadd.f32 %v395, %v479
    %v496 = vadd.f32 %v396, %v480
    %v497 = vadd.f32 %v397, %v481
    %v498 = vadd.f32 %v398, %v482
    %v499 = vadd.f32 %v399, %v483
    %v500 = vadd.f32 %v400, %v484
    %v501 = vadd.f32 %v401, %v485
    %v502 = vadd.f32 %v402, %v486
    %v503 = vadd.f32 %v403, %v487
    %v504 = vadd.f32 %v404, %v488
    %v505 = vadd.f32 %v405, %v489
    %v506 = vld [vmem:[#allocation6] sm:$0x1]
    %v508 = vlaneseq
    %v509 = vshrl.u32 %v508, 7
    %v510 = vsub.s32 0, %v509
    %v511 = vrot.slane %v506, %v510
    %v513 = vadd.f32 %v490, %v511
    %v514 = vadd.f32 %v491, %v511
    %v515 = vadd.f32 %v492, %v511
    %v516 = vadd.f32 %v493, %v511
    %v517 = vadd.f32 %v494, %v511
    %v518 = vadd.f32 %v495, %v511
    %v519 = vadd.f32 %v496, %v511
    %v520 = vadd.f32 %v497, %v511
    %v521 = vadd.f32 %v498, %v511
    %v522 = vadd.f32 %v499, %v511
    %v523 = vadd.f32 %v500, %v511
    %v524 = vadd.f32 %v501, %v511
    %v525 = vadd.f32 %v502, %v511
    %v526 = vadd.f32 %v503, %v511
    %v527 = vadd.f32 %v504, %v511
    %v528 = vadd.f32 %v505, %v511
    %v529 = vmax.f32 %v513, 0.0
    %v530 = vmax.f32 %v514, 0.0
    %v531 = vmax.f32 %v515, 0.0
    %v532 = vmax.f32 %v516, 0.0
    %v533 = vmax.f32 %v517, 0.0
    %v534 = vmax.f32 %v518, 0.0
    %v535 = vmax.f32 %v519, 0.0
    %v536 = vmax.f32 %v520, 0.0
    %v537 = vmax.f32 %v521, 0.0
    %v538 = vmax.f32 %v522, 0.0
    %v539 = vmax.f32 %v523, 0.0
    %v540 = vmax.f32 %v524, 0.0
    %v541 = vmax.f32 %v525, 0.0
    %v542 = vmax.f32 %v526, 0.0
    %v543 = vmax.f32 %v527, 0.0
    %v544 = vmax.f32 %v528, 0.0
    %v545 = vpack.c.bf16 %v530, %v529
    %v546 = vpack.c.bf16 %v532, %v531
    %v547 = vpack.c.bf16 %v534, %v533
    %v548 = vpack.c.bf16 %v536, %v535
    %v549 = vpack.c.bf16 %v538, %v537
    %v550 = vpack.c.bf16 %v540, %v539
    %v551 = vpack.c.bf16 %v542, %v541
    %v552 = vpack.c.bf16 %v544, %v543
    %v553 = vld [vmem:[#allocation8] sm:$0xff]
    %v554 = vld [vmem:[#allocation8 + $0x8] sm:$0xff]
    %v555 = vld [vmem:[#allocation8 + $0x10] sm:$0xff]
    %v556 = vld [vmem:[#allocation8 + $0x18] sm:$0xff]
    %v557 = vld [vmem:[#allocation8 + $0x20] sm:$0xff]
    %v558 = vld [vmem:[#allocation8 + $0x28] sm:$0xff]
    %v559 = vld [vmem:[#allocation8 + $0x30] sm:$0xff]
    %v560 = vld [vmem:[#allocation8 + $0x38] sm:$0xff]
    %v561 = vld [vmem:[#allocation8 + $0x40] sm:$0xff]
    %v562 = vld [vmem:[#allocation8 + $0x48] sm:$0xff]
    %v563 = vld [vmem:[#allocation8 + $0x50] sm:$0xff]
    %v564 = vld [vmem:[#allocation8 + $0x58] sm:$0xff]
    %v565 = vld [vmem:[#allocation8 + $0x60] sm:$0xff]
    %v566 = vld [vmem:[#allocation8 + $0x68] sm:$0xff]
    %v567 = vld [vmem:[#allocation8 + $0x70] sm:$0xff]
    %v568 = vld [vmem:[#allocation8 + $0x78] sm:$0xff]
    %v569 = vld [vmem:[#allocation9] sm:$0x3]
    %v571 = vlaneseq
    %v572 = vshrl.u32 %v571, 7
    %v573 = vsub.s32 0, %v572
    %v574 = vrot.slane %v569, %v573
    %v575 = vlaneseq
    %v576 = vshrl.u32 %v575, 7
    %v577 = vsub.s32 1, %v576
    %v578 = vrot.slane %v569, %v577
    %v597 = vunpack.c.l.b16 %v553
    %v598 = vunpack.c.h.b16 %v553
    %v599 = vunpack.c.l.b16 %v554
    %v600 = vunpack.c.h.b16 %v554
    %v601 = vunpack.c.l.b16 %v555
    %v602 = vunpack.c.h.b16 %v555
    %v603 = vunpack.c.l.b16 %v556
    %v604 = vunpack.c.h.b16 %v556
    %v605 = vunpack.c.l.b16 %v557
    %v606 = vunpack.c.h.b16 %v557
    %v607 = vunpack.c.l.b16 %v558
    %v608 = vunpack.c.h.b16 %v558
    %v609 = vunpack.c.l.b16 %v559
    %v610 = vunpack.c.h.b16 %v559
    %v611 = vunpack.c.l.b16 %v560
    %v612 = vunpack.c.h.b16 %v560
    %v613 = vunpack.c.l.b16 %v561
    %v614 = vunpack.c.h.b16 %v561
    %v615 = vunpack.c.l.b16 %v562
    %v616 = vunpack.c.h.b16 %v562
    %v617 = vunpack.c.l.b16 %v563
    %v618 = vunpack.c.h.b16 %v563
    %v619 = vunpack.c.l.b16 %v564
    %v620 = vunpack.c.h.b16 %v564
    %v621 = vunpack.c.l.b16 %v565
    %v622 = vunpack.c.h.b16 %v565
    %v623 = vunpack.c.l.b16 %v566
    %v624 = vunpack.c.h.b16 %v566
    %v625 = vunpack.c.l.b16 %v567
    %v626 = vunpack.c.h.b16 %v567
    %v627 = vunpack.c.l.b16 %v568
    %v628 = vunpack.c.h.b16 %v568
    %v629 = vpack.c.b16 %v599, %v597
    %v630 = vpack.c.b16 %v600, %v598
    %v631 = vpack.c.b16 %v603, %v601
    %v632 = vpack.c.b16 %v604, %v602
    %v633 = vpack.c.b16 %v607, %v605
    %v634 = vpack.c.b16 %v608, %v606
    %v635 = vpack.c.b16 %v611, %v609
    %v636 = vpack.c.b16 %v612, %v610
    %v637 = vpack.c.b16 %v615, %v613
    %v638 = vpack.c.b16 %v616, %v614
    %v639 = vpack.c.b16 %v619, %v617
    %v640 = vpack.c.b16 %v620, %v618
    %v641 = vpack.c.b16 %v623, %v621
    %v642 = vpack.c.b16 %v624, %v622
    %v643 = vpack.c.b16 %v627, %v625
    %v644 = vpack.c.b16 %v628, %v626
    %661 = vmatprep.subr.bf16.mxu0 %v644
    %662 = vmatpush1.bf16.msra.mxu0 %v643
    %663 = vmatprep.subr.bf16.mxu0 %v642
    %664 = vmatpush1.bf16.msra.mxu0 %v641
    %665 = vmatprep.subr.bf16.mxu0 %v640
    %666 = vmatpush1.bf16.msra.mxu0 %v639
    %667 = vmatprep.subr.bf16.mxu0 %v638
    %668 = vmatpush1.bf16.msra.mxu0 %v637
    %669 = vmatprep.subr.bf16.mxu0 %v636
    %670 = vmatpush1.bf16.msra.mxu0 %v635
    %671 = vmatprep.subr.bf16.mxu0 %v634
    %672 = vmatpush1.bf16.msra.mxu0 %v633
    %673 = vmatprep.subr.bf16.mxu0 %v632
    %674 = vmatpush1.bf16.msra.mxu0 %v631
    %675 = vmatprep.subr.bf16.mxu0 %v630
    %676 = vmatpush1.bf16.msra.mxu0 %v629
    %677 = vmatprep.subr.bf16.mxu0 0
    %678 = vmatpush2.bf16.msra.mxu0 0
    %679 = vmatprep.subr.bf16.mxu0 0
    %680 = vmatpush2.bf16.msra.mxu0 0
    %681 = vmatprep.subr.bf16.mxu0 0
    %682 = vmatpush2.bf16.msra.mxu0 0
    %683 = vmatprep.subr.bf16.mxu0 0
    %684 = vmatpush2.bf16.msra.mxu0 0
    %685 = vmatprep.subr.bf16.mxu0 0
    %686 = vmatpush2.bf16.msra.mxu0 0
    %687 = vmatprep.subr.bf16.mxu0 0
    %688 = vmatpush2.bf16.msra.mxu0 0
    %689 = vmatprep.subr.bf16.mxu0 0
    %690 = vmatpush2.bf16.msra.mxu0 0
    %691 = vmatprep.subr.bf16.mxu0 0
    %692 = vmatpush2.bf16.msra.mxu0 0
    %693 = vmatprep.mubr.bf16.mxu0 0
    %694 = vmatmul.mubr.bf16.gmra.mxu0 %v545
    %v695 = vpop.f32.mrf.mxu0
    %v696 = vadd.f32 %v574, %v695
    %v697 = vpop.f32.mrf.mxu0
    %v698 = vadd.f32 %v578, %v697
    %v699 = vpop.f32.mrf.mxu0
    %v700 = vadd.f32 %v574, %v699
    %v701 = vpop.f32.mrf.mxu0
    %v702 = vadd.f32 %v578, %v701
    %703 = vmatprep.mubr.bf16.mxu0 0
    %704 = vmatmul.mubr.bf16.gmra.mxu0 %v546
    %v705 = vpop.f32.mrf.mxu0
    %v706 = vadd.f32 %v574, %v705
    %v707 = vpop.f32.mrf.mxu0
    %v708 = vadd.f32 %v578, %v707
    %v709 = vpop.f32.mrf.mxu0
    %v710 = vadd.f32 %v574, %v709
    %v711 = vpop.f32.mrf.mxu0
    %v712 = vadd.f32 %v578, %v711
    %713 = vmatprep.mubr.bf16.mxu0 0
    %714 = vmatmul.mubr.bf16.gmra.mxu0 %v547
    %v715 = vpop.f32.mrf.mxu0
    %v716 = vadd.f32 %v574, %v715
    %v717 = vpop.f32.mrf.mxu0
    %v718 = vadd.f32 %v578, %v717
    %v719 = vpop.f32.mrf.mxu0
    %v720 = vadd.f32 %v574, %v719
    %v721 = vpop.f32.mrf.mxu0
    %v722 = vadd.f32 %v578, %v721
    %723 = vmatprep.mubr.bf16.mxu0 0
    %724 = vmatmul.mubr.bf16.gmra.mxu0 %v548
    %v725 = vpop.f32.mrf.mxu0
    %v726 = vadd.f32 %v574, %v725
    %v727 = vpop.f32.mrf.mxu0
    %v728 = vadd.f32 %v578, %v727
    %v729 = vpop.f32.mrf.mxu0
    %v730 = vadd.f32 %v574, %v729
    %v731 = vpop.f32.mrf.mxu0
    %v732 = vadd.f32 %v578, %v731
    %733 = vmatprep.mubr.bf16.mxu0 0
    %734 = vmatmul.mubr.bf16.gmra.mxu0 %v549
    %v735 = vpop.f32.mrf.mxu0
    %v736 = vadd.f32 %v574, %v735
    %v737 = vpop.f32.mrf.mxu0
    %v738 = vadd.f32 %v578, %v737
    %v739 = vpop.f32.mrf.mxu0
    %v740 = vadd.f32 %v574, %v739
    %v741 = vpop.f32.mrf.mxu0
    %v742 = vadd.f32 %v578, %v741
    %743 = vmatprep.mubr.bf16.mxu0 0
    %744 = vmatmul.mubr.bf16.gmra.mxu0 %v550
    %v745 = vpop.f32.mrf.mxu0
    %v746 = vadd.f32 %v574, %v745
    %v747 = vpop.f32.mrf.mxu0
    %v748 = vadd.f32 %v578, %v747
    %v749 = vpop.f32.mrf.mxu0
    %v750 = vadd.f32 %v574, %v749
    %v751 = vpop.f32.mrf.mxu0
    %v752 = vadd.f32 %v578, %v751
    %753 = vmatprep.mubr.bf16.mxu0 0
    %754 = vmatmul.mubr.bf16.gmra.mxu0 %v551
    %v755 = vpop.f32.mrf.mxu0
    %v756 = vadd.f32 %v574, %v755
    %v757 = vpop.f32.mrf.mxu0
    %v758 = vadd.f32 %v578, %v757
    %v759 = vpop.f32.mrf.mxu0
    %v760 = vadd.f32 %v574, %v759
    %v761 = vpop.f32.mrf.mxu0
    %v762 = vadd.f32 %v578, %v761
    %763 = vmatprep.mubr.bf16.mxu0 0
    %764 = vmatmul.mubr.bf16.gmra.mxu0 %v552
    %v765 = vpop.f32.mrf.mxu0
    %v766 = vadd.f32 %v574, %v765
    %v767 = vpop.f32.mrf.mxu0
    %v768 = vadd.f32 %v578, %v767
    %v769 = vpop.f32.mrf.mxu0
    %v770 = vadd.f32 %v574, %v769
    %v771 = vpop.f32.mrf.mxu0
    %v772 = vadd.f32 %v578, %v771
    %773 = vdwg.mxu0
    %v774 = vmax.f32 %v696, 0.0
    %v775 = vmax.f32 %v698, 0.0
    %v776 = vmax.f32 %v700, 0.0
    %v777 = vmax.f32 %v702, 0.0
    %v778 = vmax.f32 %v706, 0.0
    %v779 = vmax.f32 %v708, 0.0
    %v780 = vmax.f32 %v710, 0.0
    %v781 = vmax.f32 %v712, 0.0
    %v782 = vmax.f32 %v716, 0.0
    %v783 = vmax.f32 %v718, 0.0
    %v784 = vmax.f32 %v720, 0.0
    %v785 = vmax.f32 %v722, 0.0
    %v786 = vmax.f32 %v726, 0.0
    %v787 = vmax.f32 %v728, 0.0
    %v788 = vmax.f32 %v730, 0.0
    %v789 = vmax.f32 %v732, 0.0
    %v790 = vmax.f32 %v736, 0.0
    %v791 = vmax.f32 %v738, 0.0
    %v792 = vmax.f32 %v740, 0.0
    %v793 = vmax.f32 %v742, 0.0
    %v794 = vmax.f32 %v746, 0.0
    %v795 = vmax.f32 %v748, 0.0
    %v796 = vmax.f32 %v750, 0.0
    %v797 = vmax.f32 %v752, 0.0
    %v798 = vmax.f32 %v756, 0.0
    %v799 = vmax.f32 %v758, 0.0
    %v800 = vmax.f32 %v760, 0.0
    %v801 = vmax.f32 %v762, 0.0
    %v802 = vmax.f32 %v766, 0.0
    %v803 = vmax.f32 %v768, 0.0
    %v804 = vmax.f32 %v770, 0.0
    %v805 = vmax.f32 %v772, 0.0
    %v806 = vpack.c.bf16 %v776, %v774
    %v807 = vpack.c.bf16 %v777, %v775
    %v808 = vpack.c.bf16 %v780, %v778
    %v809 = vpack.c.bf16 %v781, %v779
    %v810 = vpack.c.bf16 %v784, %v782
    %v811 = vpack.c.bf16 %v785, %v783
    %v812 = vpack.c.bf16 %v788, %v786
    %v813 = vpack.c.bf16 %v789, %v787
    %v814 = vpack.c.bf16 %v792, %v790
    %v815 = vpack.c.bf16 %v793, %v791
    %v816 = vpack.c.bf16 %v796, %v794
    %v817 = vpack.c.bf16 %v797, %v795
    %v818 = vpack.c.bf16 %v800, %v798
    %v819 = vpack.c.bf16 %v801, %v799
    %v820 = vpack.c.bf16 %v804, %v802
    %v821 = vpack.c.bf16 %v805, %v803
    %v822 = vld [vmem:[#allocation11] sm:$0xff]
    %v823 = vld [vmem:[#allocation11 + $0x8] sm:$0xff]
    %v824 = vld [vmem:[#allocation11 + $0x10] sm:$0xff]
    %v825 = vld [vmem:[#allocation11 + $0x18] sm:$0xff]
    %v826 = vld [vmem:[#allocation11 + $0x20] sm:$0xff]
    %v827 = vld [vmem:[#allocation11 + $0x28] sm:$0xff]
    %v828 = vld [vmem:[#allocation11 + $0x30] sm:$0xff]
    %v829 = vld [vmem:[#allocation11 + $0x38] sm:$0xff]
    %v830 = vld [vmem:[#allocation11 + $0x40] sm:$0xff]
    %v831 = vld [vmem:[#allocation11 + $0x48] sm:$0xff]
    %v832 = vld [vmem:[#allocation11 + $0x50] sm:$0xff]
    %v833 = vld [vmem:[#allocation11 + $0x58] sm:$0xff]
    %v834 = vld [vmem:[#allocation11 + $0x60] sm:$0xff]
    %v835 = vld [vmem:[#allocation11 + $0x68] sm:$0xff]
    %v836 = vld [vmem:[#allocation11 + $0x70] sm:$0xff]
    %v837 = vld [vmem:[#allocation11 + $0x78] sm:$0xff]
    %v838 = vld [vmem:[#allocation11 + $0x80] sm:$0xff]
    %v839 = vld [vmem:[#allocation11 + $0x88] sm:$0xff]
    %v840 = vld [vmem:[#allocation11 + $0x90] sm:$0xff]
    %v841 = vld [vmem:[#allocation11 + $0x98] sm:$0xff]
    %v842 = vld [vmem:[#allocation11 + $0xa0] sm:$0xff]
    %v843 = vld [vmem:[#allocation11 + $0xa8] sm:$0xff]
    %v844 = vld [vmem:[#allocation11 + $0xb0] sm:$0xff]
    %v845 = vld [vmem:[#allocation11 + $0xb8] sm:$0xff]
    %v846 = vld [vmem:[#allocation11 + $0xc0] sm:$0xff]
    %v847 = vld [vmem:[#allocation11 + $0xc8] sm:$0xff]
    %v848 = vld [vmem:[#allocation11 + $0xd0] sm:$0xff]
    %v849 = vld [vmem:[#allocation11 + $0xd8] sm:$0xff]
    %v850 = vld [vmem:[#allocation11 + $0xe0] sm:$0xff]
    %v851 = vld [vmem:[#allocation11 + $0xe8] sm:$0xff]
    %v852 = vld [vmem:[#allocation11 + $0xf0] sm:$0xff]
    %v853 = vld [vmem:[#allocation11 + $0xf8] sm:$0xff]
    %v854 = vld [vmem:[#allocation11 + $0x100] sm:$0xff]
    %v855 = vld [vmem:[#allocation11 + $0x108] sm:$0xff]
    %v856 = vld [vmem:[#allocation11 + $0x110] sm:$0xff]
    %v857 = vld [vmem:[#allocation11 + $0x118] sm:$0xff]
    %v858 = vld [vmem:[#allocation11 + $0x120] sm:$0xff]
    %v859 = vld [vmem:[#allocation11 + $0x128] sm:$0xff]
    %v860 = vld [vmem:[#allocation11 + $0x130] sm:$0xff]
    %v861 = vld [vmem:[#allocation11 + $0x138] sm:$0xff]
    %v862 = vld [vmem:[#allocation11 + $0x140] sm:$0xff]
    %v863 = vld [vmem:[#allocation11 + $0x148] sm:$0xff]
    %v864 = vld [vmem:[#allocation11 + $0x150] sm:$0xff]
    %v865 = vld [vmem:[#allocation11 + $0x158] sm:$0xff]
    %v866 = vld [vmem:[#allocation11 + $0x160] sm:$0xff]
    %v867 = vld [vmem:[#allocation11 + $0x168] sm:$0xff]
    %v868 = vld [vmem:[#allocation11 + $0x170] sm:$0xff]
    %v869 = vld [vmem:[#allocation11 + $0x178] sm:$0xff]
    %v870 = vld [vmem:[#allocation11 + $0x180] sm:$0xff]
    %v871 = vld [vmem:[#allocation11 + $0x188] sm:$0xff]
    %v872 = vld [vmem:[#allocation11 + $0x190] sm:$0xff]
    %v873 = vld [vmem:[#allocation11 + $0x198] sm:$0xff]
    %v874 = vld [vmem:[#allocation11 + $0x1a0] sm:$0xff]
    %v875 = vld [vmem:[#allocation11 + $0x1a8] sm:$0xff]
    %v876 = vld [vmem:[#allocation11 + $0x1b0] sm:$0xff]
    %v877 = vld [vmem:[#allocation11 + $0x1b8] sm:$0xff]
    %v878 = vld [vmem:[#allocation11 + $0x1c0] sm:$0xff]
    %v879 = vld [vmem:[#allocation11 + $0x1c8] sm:$0xff]
    %v880 = vld [vmem:[#allocation11 + $0x1d0] sm:$0xff]
    %v881 = vld [vmem:[#allocation11 + $0x1d8] sm:$0xff]
    %v882 = vld [vmem:[#allocation11 + $0x1e0] sm:$0xff]
    %v883 = vld [vmem:[#allocation11 + $0x1e8] sm:$0xff]
    %v884 = vld [vmem:[#allocation11 + $0x1f0] sm:$0xff]
    %v885 = vld [vmem:[#allocation11 + $0x1f8] sm:$0xff]
    %v886 = vld [vmem:[#allocation11 + $0x200] sm:$0xff]
    %v887 = vld [vmem:[#allocation11 + $0x208] sm:$0xff]
    %v888 = vld [vmem:[#allocation11 + $0x210] sm:$0xff]
    %v889 = vld [vmem:[#allocation11 + $0x218] sm:$0xff]
    %v890 = vld [vmem:[#allocation11 + $0x220] sm:$0xff]
    %v891 = vld [vmem:[#allocation11 + $0x228] sm:$0xff]
    %v892 = vld [vmem:[#allocation11 + $0x230] sm:$0xff]
    %v893 = vld [vmem:[#allocation11 + $0x238] sm:$0xff]
    %v894 = vld [vmem:[#allocation11 + $0x240] sm:$0xff]
    %v895 = vld [vmem:[#allocation11 + $0x248] sm:$0xff]
    %v896 = vld [vmem:[#allocation11 + $0x250] sm:$0xff]
    %v897 = vld [vmem:[#allocation11 + $0x258] sm:$0xff]
    %v898 = vld [vmem:[#allocation11 + $0x260] sm:$0xff]
    %v899 = vld [vmem:[#allocation11 + $0x268] sm:$0xff]
    %v900 = vld [vmem:[#allocation11 + $0x270] sm:$0xff]
    %v901 = vld [vmem:[#allocation11 + $0x278] sm:$0xff]
    %v902 = vld [vmem:[#allocation11 + $0x280] sm:$0xff]
    %v903 = vld [vmem:[#allocation11 + $0x288] sm:$0xff]
    %v904 = vld [vmem:[#allocation11 + $0x290] sm:$0xff]
    %v905 = vld [vmem:[#allocation11 + $0x298] sm:$0xff]
    %v906 = vld [vmem:[#allocation11 + $0x2a0] sm:$0xff]
    %v907 = vld [vmem:[#allocation11 + $0x2a8] sm:$0xff]
    %v908 = vld [vmem:[#allocation11 + $0x2b0] sm:$0xff]
    %v909 = vld [vmem:[#allocation11 + $0x2b8] sm:$0xff]
    %v910 = vld [vmem:[#allocation11 + $0x2c0] sm:$0xff]
    %v911 = vld [vmem:[#allocation11 + $0x2c8] sm:$0xff]
    %v912 = vld [vmem:[#allocation11 + $0x2d0] sm:$0xff]
    %v913 = vld [vmem:[#allocation11 + $0x2d8] sm:$0xff]
    %v914 = vld [vmem:[#allocation11 + $0x2e0] sm:$0xff]
    %v915 = vld [vmem:[#allocation11 + $0x2e8] sm:$0xff]
    %v916 = vld [vmem:[#allocation11 + $0x2f0] sm:$0xff]
    %v917 = vld [vmem:[#allocation11 + $0x2f8] sm:$0xff]
    %v918 = vld [vmem:[#allocation11 + $0x300] sm:$0xff]
    %v919 = vld [vmem:[#allocation11 + $0x308] sm:$0xff]
    %v920 = vld [vmem:[#allocation11 + $0x310] sm:$0xff]
    %v921 = vld [vmem:[#allocation11 + $0x318] sm:$0xff]
    %v922 = vld [vmem:[#allocation11 + $0x320] sm:$0xff]
    %v923 = vld [vmem:[#allocation11 + $0x328] sm:$0xff]
    %v924 = vld [vmem:[#allocation11 + $0x330] sm:$0xff]
    %v925 = vld [vmem:[#allocation11 + $0x338] sm:$0xff]
    %v926 = vld [vmem:[#allocation11 + $0x340] sm:$0xff]
    %v927 = vld [vmem:[#allocation11 + $0x348] sm:$0xff]
    %v928 = vld [vmem:[#allocation11 + $0x350] sm:$0xff]
    %v929 = vld [vmem:[#allocation11 + $0x358] sm:$0xff]
    %v930 = vld [vmem:[#allocation11 + $0x360] sm:$0xff]
    %v931 = vld [vmem:[#allocation11 + $0x368] sm:$0xff]
    %v932 = vld [vmem:[#allocation11 + $0x370] sm:$0xff]
    %v933 = vld [vmem:[#allocation11 + $0x378] sm:$0xff]
    %v934 = vld [vmem:[#allocation11 + $0x380] sm:$0xff]
    %v935 = vld [vmem:[#allocation11 + $0x388] sm:$0xff]
    %v936 = vld [vmem:[#allocation11 + $0x390] sm:$0xff]
    %v937 = vld [vmem:[#allocation11 + $0x398] sm:$0xff]
    %v938 = vld [vmem:[#allocation11 + $0x3a0] sm:$0xff]
    %v939 = vld [vmem:[#allocation11 + $0x3a8] sm:$0xff]
    %v940 = vld [vmem:[#allocation11 + $0x3b0] sm:$0xff]
    %v941 = vld [vmem:[#allocation11 + $0x3b8] sm:$0xff]
    %v942 = vld [vmem:[#allocation11 + $0x3c0] sm:$0xff]
    %v943 = vld [vmem:[#allocation11 + $0x3c8] sm:$0xff]
    %v944 = vld [vmem:[#allocation11 + $0x3d0] sm:$0xff]
    %v945 = vld [vmem:[#allocation11 + $0x3d8] sm:$0xff]
    %v946 = vld [vmem:[#allocation11 + $0x3e0] sm:$0xff]
    %v947 = vld [vmem:[#allocation11 + $0x3e8] sm:$0xff]
    %v948 = vld [vmem:[#allocation11 + $0x3f0] sm:$0xff]
    %v949 = vld [vmem:[#allocation11 + $0x3f8] sm:$0xff]
    %v950 = vld [vmem:[#allocation11 + $0x400] sm:$0xff]
    %v951 = vld [vmem:[#allocation11 + $0x408] sm:$0xff]
    %v952 = vld [vmem:[#allocation11 + $0x410] sm:$0xff]
    %v953 = vld [vmem:[#allocation11 + $0x418] sm:$0xff]
    %v954 = vld [vmem:[#allocation11 + $0x420] sm:$0xff]
    %v955 = vld [vmem:[#allocation11 + $0x428] sm:$0xff]
    %v956 = vld [vmem:[#allocation11 + $0x430] sm:$0xff]
    %v957 = vld [vmem:[#allocation11 + $0x438] sm:$0xff]
    %v958 = vld [vmem:[#allocation11 + $0x440] sm:$0xff]
    %v959 = vld [vmem:[#allocation11 + $0x448] sm:$0xff]
    %v960 = vld [vmem:[#allocation11 + $0x450] sm:$0xff]
    %v961 = vld [vmem:[#allocation11 + $0x458] sm:$0xff]
    %v962 = vld [vmem:[#allocation11 + $0x460] sm:$0xff]
    %v963 = vld [vmem:[#allocation11 + $0x468] sm:$0xff]
    %v964 = vld [vmem:[#allocation11 + $0x470] sm:$0xff]
    %v965 = vld [vmem:[#allocation11 + $0x478] sm:$0xff]
    %v966 = vld [vmem:[#allocation11 + $0x480] sm:$0xff]
    %v967 = vld [vmem:[#allocation11 + $0x488] sm:$0xff]
    %v968 = vld [vmem:[#allocation11 + $0x490] sm:$0xff]
    %v969 = vld [vmem:[#allocation11 + $0x498] sm:$0xff]
    %v970 = vld [vmem:[#allocation11 + $0x4a0] sm:$0xff]
    %v971 = vld [vmem:[#allocation11 + $0x4a8] sm:$0xff]
    %v972 = vld [vmem:[#allocation11 + $0x4b0] sm:$0xff]
    %v973 = vld [vmem:[#allocation11 + $0x4b8] sm:$0xff]
    %v974 = vld [vmem:[#allocation11 + $0x4c0] sm:$0xff]
    %v975 = vld [vmem:[#allocation11 + $0x4c8] sm:$0xff]
    %v976 = vld [vmem:[#allocation11 + $0x4d0] sm:$0xff]
    %v977 = vld [vmem:[#allocation11 + $0x4d8] sm:$0xff]
    %v978 = vld [vmem:[#allocation11 + $0x4e0] sm:$0xff]
    %v979 = vld [vmem:[#allocation11 + $0x4e8] sm:$0xff]
    %v980 = vld [vmem:[#allocation11 + $0x4f0] sm:$0xff]
    %v981 = vld [vmem:[#allocation11 + $0x4f8] sm:$0xff]
    %v982 = vld [vmem:[#allocation11 + $0x500] sm:$0xff]
    %v983 = vld [vmem:[#allocation11 + $0x508] sm:$0xff]
    %v984 = vld [vmem:[#allocation11 + $0x510] sm:$0xff]
    %v985 = vld [vmem:[#allocation11 + $0x518] sm:$0xff]
    %v986 = vld [vmem:[#allocation11 + $0x520] sm:$0xff]
    %v987 = vld [vmem:[#allocation11 + $0x528] sm:$0xff]
    %v988 = vld [vmem:[#allocation11 + $0x530] sm:$0xff]
    %v989 = vld [vmem:[#allocation11 + $0x538] sm:$0xff]
    %v990 = vld [vmem:[#allocation11 + $0x540] sm:$0xff]
    %v991 = vld [vmem:[#allocation11 + $0x548] sm:$0xff]
    %v992 = vld [vmem:[#allocation11 + $0x550] sm:$0xff]
    %v993 = vld [vmem:[#allocation11 + $0x558] sm:$0xff]
    %v994 = vld [vmem:[#allocation11 + $0x560] sm:$0xff]
    %v995 = vld [vmem:[#allocation11 + $0x568] sm:$0xff]
    %v996 = vld [vmem:[#allocation11 + $0x570] sm:$0xff]
    %v997 = vld [vmem:[#allocation11 + $0x578] sm:$0xff]
    %v998 = vld [vmem:[#allocation11 + $0x580] sm:$0xff]
    %v999 = vld [vmem:[#allocation11 + $0x588] sm:$0xff]
    %v1000 = vld [vmem:[#allocation11 + $0x590] sm:$0xff]
    %v1001 = vld [vmem:[#allocation11 + $0x598] sm:$0xff]
    %v1002 = vld [vmem:[#allocation11 + $0x5a0] sm:$0xff]
    %v1003 = vld [vmem:[#allocation11 + $0x5a8] sm:$0xff]
    %v1004 = vld [vmem:[#allocation11 + $0x5b0] sm:$0xff]
    %v1005 = vld [vmem:[#allocation11 + $0x5b8] sm:$0xff]
    %v1006 = vld [vmem:[#allocation11 + $0x5c0] sm:$0xff]
    %v1007 = vld [vmem:[#allocation11 + $0x5c8] sm:$0xff]
    %v1008 = vld [vmem:[#allocation11 + $0x5d0] sm:$0xff]
    %v1009 = vld [vmem:[#allocation11 + $0x5d8] sm:$0xff]
    %v1010 = vld [vmem:[#allocation11 + $0x5e0] sm:$0xff]
    %v1011 = vld [vmem:[#allocation11 + $0x5e8] sm:$0xff]
    %v1012 = vld [vmem:[#allocation11 + $0x5f0] sm:$0xff]
    %v1013 = vld [vmem:[#allocation11 + $0x5f8] sm:$0xff]
    %v1014 = vld [vmem:[#allocation11 + $0x600] sm:$0xff]
    %v1015 = vld [vmem:[#allocation11 + $0x608] sm:$0xff]
    %v1016 = vld [vmem:[#allocation11 + $0x610] sm:$0xff]
    %v1017 = vld [vmem:[#allocation11 + $0x618] sm:$0xff]
    %v1018 = vld [vmem:[#allocation11 + $0x620] sm:$0xff]
    %v1019 = vld [vmem:[#allocation11 + $0x628] sm:$0xff]
    %v1020 = vld [vmem:[#allocation11 + $0x630] sm:$0xff]
    %v1021 = vld [vmem:[#allocation11 + $0x638] sm:$0xff]
    %v1022 = vld [vmem:[#allocation11 + $0x640] sm:$0xff]
    %v1023 = vld [vmem:[#allocation11 + $0x648] sm:$0xff]
    %v1024 = vld [vmem:[#allocation11 + $0x650] sm:$0xff]
    %v1025 = vld [vmem:[#allocation11 + $0x658] sm:$0xff]
    %v1026 = vld [vmem:[#allocation11 + $0x660] sm:$0xff]
    %v1027 = vld [vmem:[#allocation11 + $0x668] sm:$0xff]
    %v1028 = vld [vmem:[#allocation11 + $0x670] sm:$0xff]
    %v1029 = vld [vmem:[#allocation11 + $0x678] sm:$0xff]
    %v1030 = vld [vmem:[#allocation11 + $0x680] sm:$0xff]
    %v1031 = vld [vmem:[#allocation11 + $0x688] sm:$0xff]
    %v1032 = vld [vmem:[#allocation11 + $0x690] sm:$0xff]
    %v1033 = vld [vmem:[#allocation11 + $0x698] sm:$0xff]
    %v1034 = vld [vmem:[#allocation11 + $0x6a0] sm:$0xff]
    %v1035 = vld [vmem:[#allocation11 + $0x6a8] sm:$0xff]
    %v1036 = vld [vmem:[#allocation11 + $0x6b0] sm:$0xff]
    %v1037 = vld [vmem:[#allocation11 + $0x6b8] sm:$0xff]
    %v1038 = vld [vmem:[#allocation11 + $0x6c0] sm:$0xff]
    %v1039 = vld [vmem:[#allocation11 + $0x6c8] sm:$0xff]
    %v1040 = vld [vmem:[#allocation11 + $0x6d0] sm:$0xff]
    %v1041 = vld [vmem:[#allocation11 + $0x6d8] sm:$0xff]
    %v1042 = vld [vmem:[#allocation11 + $0x6e0] sm:$0xff]
    %v1043 = vld [vmem:[#allocation11 + $0x6e8] sm:$0xff]
    %v1044 = vld [vmem:[#allocation11 + $0x6f0] sm:$0xff]
    %v1045 = vld [vmem:[#allocation11 + $0x6f8] sm:$0xff]
    %v1046 = vld [vmem:[#allocation11 + $0x700] sm:$0xff]
    %v1047 = vld [vmem:[#allocation11 + $0x708] sm:$0xff]
    %v1048 = vld [vmem:[#allocation11 + $0x710] sm:$0xff]
    %v1049 = vld [vmem:[#allocation11 + $0x718] sm:$0xff]
    %v1050 = vld [vmem:[#allocation11 + $0x720] sm:$0xff]
    %v1051 = vld [vmem:[#allocation11 + $0x728] sm:$0xff]
    %v1052 = vld [vmem:[#allocation11 + $0x730] sm:$0xff]
    %v1053 = vld [vmem:[#allocation11 + $0x738] sm:$0xff]
    %v1054 = vld [vmem:[#allocation11 + $0x740] sm:$0xff]
    %v1055 = vld [vmem:[#allocation11 + $0x748] sm:$0xff]
    %v1056 = vld [vmem:[#allocation11 + $0x750] sm:$0xff]
    %v1057 = vld [vmem:[#allocation11 + $0x758] sm:$0xff]
    %v1058 = vld [vmem:[#allocation11 + $0x760] sm:$0xff]
    %v1059 = vld [vmem:[#allocation11 + $0x768] sm:$0xff]
    %v1060 = vld [vmem:[#allocation11 + $0x770] sm:$0xff]
    %v1061 = vld [vmem:[#allocation11 + $0x778] sm:$0xff]
    %v1062 = vld [vmem:[#allocation11 + $0x780] sm:$0xff]
    %v1063 = vld [vmem:[#allocation11 + $0x788] sm:$0xff]
    %v1064 = vld [vmem:[#allocation11 + $0x790] sm:$0xff]
    %v1065 = vld [vmem:[#allocation11 + $0x798] sm:$0xff]
    %v1066 = vld [vmem:[#allocation11 + $0x7a0] sm:$0xff]
    %v1067 = vld [vmem:[#allocation11 + $0x7a8] sm:$0xff]
    %v1068 = vld [vmem:[#allocation11 + $0x7b0] sm:$0xff]
    %v1069 = vld [vmem:[#allocation11 + $0x7b8] sm:$0xff]
    %v1070 = vld [vmem:[#allocation11 + $0x7c0] sm:$0xff]
    %v1071 = vld [vmem:[#allocation11 + $0x7c8] sm:$0xff]
    %v1072 = vld [vmem:[#allocation11 + $0x7d0] sm:$0xff]
    %v1073 = vld [vmem:[#allocation11 + $0x7d8] sm:$0xff]
    %v1074 = vld [vmem:[#allocation11 + $0x7e0] sm:$0xff]
    %v1075 = vld [vmem:[#allocation11 + $0x7e8] sm:$0xff]
    %v1076 = vld [vmem:[#allocation11 + $0x7f0] sm:$0xff]
    %v1077 = vld [vmem:[#allocation11 + $0x7f8] sm:$0xff]
    %v1334 = vunpack.c.l.b16 %v822
    %v1335 = vunpack.c.h.b16 %v822
    %v1336 = vunpack.c.l.b16 %v823
    %v1337 = vunpack.c.h.b16 %v823
    %v1338 = vunpack.c.l.b16 %v824
    %v1339 = vunpack.c.h.b16 %v824
    %v1340 = vunpack.c.l.b16 %v825
    %v1341 = vunpack.c.h.b16 %v825
    %v1342 = vunpack.c.l.b16 %v826
    %v1343 = vunpack.c.h.b16 %v826
    %v1344 = vunpack.c.l.b16 %v827
    %v1345 = vunpack.c.h.b16 %v827
    %v1346 = vunpack.c.l.b16 %v828
    %v1347 = vunpack.c.h.b16 %v828
    %v1348 = vunpack.c.l.b16 %v829
    %v1349 = vunpack.c.h.b16 %v829
    %v1350 = vunpack.c.l.b16 %v830
    %v1351 = vunpack.c.h.b16 %v830
    %v1352 = vunpack.c.l.b16 %v831
    %v1353 = vunpack.c.h.b16 %v831
    %v1354 = vunpack.c.l.b16 %v832
    %v1355 = vunpack.c.h.b16 %v832
    %v1356 = vunpack.c.l.b16 %v833
    %v1357 = vunpack.c.h.b16 %v833
    %v1358 = vunpack.c.l.b16 %v834
    %v1359 = vunpack.c.h.b16 %v834
    %v1360 = vunpack.c.l.b16 %v835
    %v1361 = vunpack.c.h.b16 %v835
    %v1362 = vunpack.c.l.b16 %v836
    %v1363 = vunpack.c.h.b16 %v836
    %v1364 = vunpack.c.l.b16 %v837
    %v1365 = vunpack.c.h.b16 %v837
    %v1366 = vunpack.c.l.b16 %v838
    %v1367 = vunpack.c.h.b16 %v838
    %v1368 = vunpack.c.l.b16 %v839
    %v1369 = vunpack.c.h.b16 %v839
    %v1370 = vunpack.c.l.b16 %v840
    %v1371 = vunpack.c.h.b16 %v840
    %v1372 = vunpack.c.l.b16 %v841
    %v1373 = vunpack.c.h.b16 %v841
    %v1374 = vunpack.c.l.b16 %v842
    %v1375 = vunpack.c.h.b16 %v842
    %v1376 = vunpack.c.l.b16 %v843
    %v1377 = vunpack.c.h.b16 %v843
    %v1378 = vunpack.c.l.b16 %v844
    %v1379 = vunpack.c.h.b16 %v844
    %v1380 = vunpack.c.l.b16 %v845
    %v1381 = vunpack.c.h.b16 %v845
    %v1382 = vunpack.c.l.b16 %v846
    %v1383 = vunpack.c.h.b16 %v846
    %v1384 = vunpack.c.l.b16 %v847
    %v1385 = vunpack.c.h.b16 %v847
    %v1386 = vunpack.c.l.b16 %v848
    %v1387 = vunpack.c.h.b16 %v848
    %v1388 = vunpack.c.l.b16 %v849
    %v1389 = vunpack.c.h.b16 %v849
    %v1390 = vunpack.c.l.b16 %v850
    %v1391 = vunpack.c.h.b16 %v850
    %v1392 = vunpack.c.l.b16 %v851
    %v1393 = vunpack.c.h.b16 %v851
    %v1394 = vunpack.c.l.b16 %v852
    %v1395 = vunpack.c.h.b16 %v852
    %v1396 = vunpack.c.l.b16 %v853
    %v1397 = vunpack.c.h.b16 %v853
    %v1398 = vunpack.c.l.b16 %v854
    %v1399 = vunpack.c.h.b16 %v854
    %v1400 = vunpack.c.l.b16 %v855
    %v1401 = vunpack.c.h.b16 %v855
    %v1402 = vunpack.c.l.b16 %v856
    %v1403 = vunpack.c.h.b16 %v856
    %v1404 = vunpack.c.l.b16 %v857
    %v1405 = vunpack.c.h.b16 %v857
    %v1406 = vunpack.c.l.b16 %v858
    %v1407 = vunpack.c.h.b16 %v858
    %v1408 = vunpack.c.l.b16 %v859
    %v1409 = vunpack.c.h.b16 %v859
    %v1410 = vunpack.c.l.b16 %v860
    %v1411 = vunpack.c.h.b16 %v860
    %v1412 = vunpack.c.l.b16 %v861
    %v1413 = vunpack.c.h.b16 %v861
    %v1414 = vunpack.c.l.b16 %v862
    %v1415 = vunpack.c.h.b16 %v862
    %v1416 = vunpack.c.l.b16 %v863
    %v1417 = vunpack.c.h.b16 %v863
    %v1418 = vunpack.c.l.b16 %v864
    %v1419 = vunpack.c.h.b16 %v864
    %v1420 = vunpack.c.l.b16 %v865
    %v1421 = vunpack.c.h.b16 %v865
    %v1422 = vunpack.c.l.b16 %v866
    %v1423 = vunpack.c.h.b16 %v866
    %v1424 = vunpack.c.l.b16 %v867
    %v1425 = vunpack.c.h.b16 %v867
    %v1426 = vunpack.c.l.b16 %v868
    %v1427 = vunpack.c.h.b16 %v868
    %v1428 = vunpack.c.l.b16 %v869
    %v1429 = vunpack.c.h.b16 %v869
    %v1430 = vunpack.c.l.b16 %v870
    %v1431 = vunpack.c.h.b16 %v870
    %v1432 = vunpack.c.l.b16 %v871
    %v1433 = vunpack.c.h.b16 %v871
    %v1434 = vunpack.c.l.b16 %v872
    %v1435 = vunpack.c.h.b16 %v872
    %v1436 = vunpack.c.l.b16 %v873
    %v1437 = vunpack.c.h.b16 %v873
    %v1438 = vunpack.c.l.b16 %v874
    %v1439 = vunpack.c.h.b16 %v874
    %v1440 = vunpack.c.l.b16 %v875
    %v1441 = vunpack.c.h.b16 %v875
    %v1442 = vunpack.c.l.b16 %v876
    %v1443 = vunpack.c.h.b16 %v876
    %v1444 = vunpack.c.l.b16 %v877
    %v1445 = vunpack.c.h.b16 %v877
    %v1446 = vunpack.c.l.b16 %v878
    %v1447 = vunpack.c.h.b16 %v878
    %v1448 = vunpack.c.l.b16 %v879
    %v1449 = vunpack.c.h.b16 %v879
    %v1450 = vunpack.c.l.b16 %v880
    %v1451 = vunpack.c.h.b16 %v880
    %v1452 = vunpack.c.l.b16 %v881
    %v1453 = vunpack.c.h.b16 %v881
    %v1454 = vunpack.c.l.b16 %v882
    %v1455 = vunpack.c.h.b16 %v882
    %v1456 = vunpack.c.l.b16 %v883
    %v1457 = vunpack.c.h.b16 %v883
    %v1458 = vunpack.c.l.b16 %v884
    %v1459 = vunpack.c.h.b16 %v884
    %v1460 = vunpack.c.l.b16 %v885
    %v1461 = vunpack.c.h.b16 %v885
    %v1462 = vunpack.c.l.b16 %v886
    %v1463 = vunpack.c.h.b16 %v886
    %v1464 = vunpack.c.l.b16 %v887
    %v1465 = vunpack.c.h.b16 %v887
    %v1466 = vunpack.c.l.b16 %v888
    %v1467 = vunpack.c.h.b16 %v888
    %v1468 = vunpack.c.l.b16 %v889
    %v1469 = vunpack.c.h.b16 %v889
    %v1470 = vunpack.c.l.b16 %v890
    %v1471 = vunpack.c.h.b16 %v890
    %v1472 = vunpack.c.l.b16 %v891
    %v1473 = vunpack.c.h.b16 %v891
    %v1474 = vunpack.c.l.b16 %v892
    %v1475 = vunpack.c.h.b16 %v892
    %v1476 = vunpack.c.l.b16 %v893
    %v1477 = vunpack.c.h.b16 %v893
    %v1478 = vunpack.c.l.b16 %v894
    %v1479 = vunpack.c.h.b16 %v894
    %v1480 = vunpack.c.l.b16 %v895
    %v1481 = vunpack.c.h.b16 %v895
    %v1482 = vunpack.c.l.b16 %v896
    %v1483 = vunpack.c.h.b16 %v896
    %v1484 = vunpack.c.l.b16 %v897
    %v1485 = vunpack.c.h.b16 %v897
    %v1486 = vunpack.c.l.b16 %v898
    %v1487 = vunpack.c.h.b16 %v898
    %v1488 = vunpack.c.l.b16 %v899
    %v1489 = vunpack.c.h.b16 %v899
    %v1490 = vunpack.c.l.b16 %v900
    %v1491 = vunpack.c.h.b16 %v900
    %v1492 = vunpack.c.l.b16 %v901
    %v1493 = vunpack.c.h.b16 %v901
    %v1494 = vunpack.c.l.b16 %v902
    %v1495 = vunpack.c.h.b16 %v902
    %v1496 = vunpack.c.l.b16 %v903
    %v1497 = vunpack.c.h.b16 %v903
    %v1498 = vunpack.c.l.b16 %v904
    %v1499 = vunpack.c.h.b16 %v904
    %v1500 = vunpack.c.l.b16 %v905
    %v1501 = vunpack.c.h.b16 %v905
    %v1502 = vunpack.c.l.b16 %v906
    %v1503 = vunpack.c.h.b16 %v906
    %v1504 = vunpack.c.l.b16 %v907
    %v1505 = vunpack.c.h.b16 %v907
    %v1506 = vunpack.c.l.b16 %v908
    %v1507 = vunpack.c.h.b16 %v908
    %v1508 = vunpack.c.l.b16 %v909
    %v1509 = vunpack.c.h.b16 %v909
    %v1510 = vunpack.c.l.b16 %v910
    %v1511 = vunpack.c.h.b16 %v910
    %v1512 = vunpack.c.l.b16 %v911
    %v1513 = vunpack.c.h.b16 %v911
    %v1514 = vunpack.c.l.b16 %v912
    %v1515 = vunpack.c.h.b16 %v912
    %v1516 = vunpack.c.l.b16 %v913
    %v1517 = vunpack.c.h.b16 %v913
    %v1518 = vunpack.c.l.b16 %v914
    %v1519 = vunpack.c.h.b16 %v914
    %v1520 = vunpack.c.l.b16 %v915
    %v1521 = vunpack.c.h.b16 %v915
    %v1522 = vunpack.c.l.b16 %v916
    %v1523 = vunpack.c.h.b16 %v916
    %v1524 = vunpack.c.l.b16 %v917
    %v1525 = vunpack.c.h.b16 %v917
    %v1526 = vunpack.c.l.b16 %v918
    %v1527 = vunpack.c.h.b16 %v918
    %v1528 = vunpack.c.l.b16 %v919
    %v1529 = vunpack.c.h.b16 %v919
    %v1530 = vunpack.c.l.b16 %v920
    %v1531 = vunpack.c.h.b16 %v920
    %v1532 = vunpack.c.l.b16 %v921
    %v1533 = vunpack.c.h.b16 %v921
    %v1534 = vunpack.c.l.b16 %v922
    %v1535 = vunpack.c.h.b16 %v922
    %v1536 = vunpack.c.l.b16 %v923
    %v1537 = vunpack.c.h.b16 %v923
    %v1538 = vunpack.c.l.b16 %v924
    %v1539 = vunpack.c.h.b16 %v924
    %v1540 = vunpack.c.l.b16 %v925
    %v1541 = vunpack.c.h.b16 %v925
    %v1542 = vunpack.c.l.b16 %v926
    %v1543 = vunpack.c.h.b16 %v926
    %v1544 = vunpack.c.l.b16 %v927
    %v1545 = vunpack.c.h.b16 %v927
    %v1546 = vunpack.c.l.b16 %v928
    %v1547 = vunpack.c.h.b16 %v928
    %v1548 = vunpack.c.l.b16 %v929
    %v1549 = vunpack.c.h.b16 %v929
    %v1550 = vunpack.c.l.b16 %v930
    %v1551 = vunpack.c.h.b16 %v930
    %v1552 = vunpack.c.l.b16 %v931
    %v1553 = vunpack.c.h.b16 %v931
    %v1554 = vunpack.c.l.b16 %v932
    %v1555 = vunpack.c.h.b16 %v932
    %v1556 = vunpack.c.l.b16 %v933
    %v1557 = vunpack.c.h.b16 %v933
    %v1558 = vunpack.c.l.b16 %v934
    %v1559 = vunpack.c.h.b16 %v934
    %v1560 = vunpack.c.l.b16 %v935
    %v1561 = vunpack.c.h.b16 %v935
    %v1562 = vunpack.c.l.b16 %v936
    %v1563 = vunpack.c.h.b16 %v936
    %v1564 = vunpack.c.l.b16 %v937
    %v1565 = vunpack.c.h.b16 %v937
    %v1566 = vunpack.c.l.b16 %v938
    %v1567 = vunpack.c.h.b16 %v938
    %v1568 = vunpack.c.l.b16 %v939
    %v1569 = vunpack.c.h.b16 %v939
    %v1570 = vunpack.c.l.b16 %v940
    %v1571 = vunpack.c.h.b16 %v940
    %v1572 = vunpack.c.l.b16 %v941
    %v1573 = vunpack.c.h.b16 %v941
    %v1574 = vunpack.c.l.b16 %v942
    %v1575 = vunpack.c.h.b16 %v942
    %v1576 = vunpack.c.l.b16 %v943
    %v1577 = vunpack.c.h.b16 %v943
    %v1578 = vunpack.c.l.b16 %v944
    %v1579 = vunpack.c.h.b16 %v944
    %v1580 = vunpack.c.l.b16 %v945
    %v1581 = vunpack.c.h.b16 %v945
    %v1582 = vunpack.c.l.b16 %v946
    %v1583 = vunpack.c.h.b16 %v946
    %v1584 = vunpack.c.l.b16 %v947
    %v1585 = vunpack.c.h.b16 %v947
    %v1586 = vunpack.c.l.b16 %v948
    %v1587 = vunpack.c.h.b16 %v948
    %v1588 = vunpack.c.l.b16 %v949
    %v1589 = vunpack.c.h.b16 %v949
    %v1590 = vunpack.c.l.b16 %v950
    %v1591 = vunpack.c.h.b16 %v950
    %v1592 = vunpack.c.l.b16 %v951
    %v1593 = vunpack.c.h.b16 %v951
    %v1594 = vunpack.c.l.b16 %v952
    %v1595 = vunpack.c.h.b16 %v952
    %v1596 = vunpack.c.l.b16 %v953
    %v1597 = vunpack.c.h.b16 %v953
    %v1598 = vunpack.c.l.b16 %v954
    %v1599 = vunpack.c.h.b16 %v954
    %v1600 = vunpack.c.l.b16 %v955
    %v1601 = vunpack.c.h.b16 %v955
    %v1602 = vunpack.c.l.b16 %v956
    %v1603 = vunpack.c.h.b16 %v956
    %v1604 = vunpack.c.l.b16 %v957
    %v1605 = vunpack.c.h.b16 %v957
    %v1606 = vunpack.c.l.b16 %v958
    %v1607 = vunpack.c.h.b16 %v958
    %v1608 = vunpack.c.l.b16 %v959
    %v1609 = vunpack.c.h.b16 %v959
    %v1610 = vunpack.c.l.b16 %v960
    %v1611 = vunpack.c.h.b16 %v960
    %v1612 = vunpack.c.l.b16 %v961
    %v1613 = vunpack.c.h.b16 %v961
    %v1614 = vunpack.c.l.b16 %v962
    %v1615 = vunpack.c.h.b16 %v962
    %v1616 = vunpack.c.l.b16 %v963
    %v1617 = vunpack.c.h.b16 %v963
    %v1618 = vunpack.c.l.b16 %v964
    %v1619 = vunpack.c.h.b16 %v964
    %v1620 = vunpack.c.l.b16 %v965
    %v1621 = vunpack.c.h.b16 %v965
    %v1622 = vunpack.c.l.b16 %v966
    %v1623 = vunpack.c.h.b16 %v966
    %v1624 = vunpack.c.l.b16 %v967
    %v1625 = vunpack.c.h.b16 %v967
    %v1626 = vunpack.c.l.b16 %v968
    %v1627 = vunpack.c.h.b16 %v968
    %v1628 = vunpack.c.l.b16 %v969
    %v1629 = vunpack.c.h.b16 %v969
    %v1630 = vunpack.c.l.b16 %v970
    %v1631 = vunpack.c.h.b16 %v970
    %v1632 = vunpack.c.l.b16 %v971
    %v1633 = vunpack.c.h.b16 %v971
    %v1634 = vunpack.c.l.b16 %v972
    %v1635 = vunpack.c.h.b16 %v972
    %v1636 = vunpack.c.l.b16 %v973
    %v1637 = vunpack.c.h.b16 %v973
    %v1638 = vunpack.c.l.b16 %v974
    %v1639 = vunpack.c.h.b16 %v974
    %v1640 = vunpack.c.l.b16 %v975
    %v1641 = vunpack.c.h.b16 %v975
    %v1642 = vunpack.c.l.b16 %v976
    %v1643 = vunpack.c.h.b16 %v976
    %v1644 = vunpack.c.l.b16 %v977
    %v1645 = vunpack.c.h.b16 %v977
    %v1646 = vunpack.c.l.b16 %v978
    %v1647 = vunpack.c.h.b16 %v978
    %v1648 = vunpack.c.l.b16 %v979
    %v1649 = vunpack.c.h.b16 %v979
    %v1650 = vunpack.c.l.b16 %v980
    %v1651 = vunpack.c.h.b16 %v980
    %v1652 = vunpack.c.l.b16 %v981
    %v1653 = vunpack.c.h.b16 %v981
    %v1654 = vunpack.c.l.b16 %v982
    %v1655 = vunpack.c.h.b16 %v982
    %v1656 = vunpack.c.l.b16 %v983
    %v1657 = vunpack.c.h.b16 %v983
    %v1658 = vunpack.c.l.b16 %v984
    %v1659 = vunpack.c.h.b16 %v984
    %v1660 = vunpack.c.l.b16 %v985
    %v1661 = vunpack.c.h.b16 %v985
    %v1662 = vunpack.c.l.b16 %v986
    %v1663 = vunpack.c.h.b16 %v986
    %v1664 = vunpack.c.l.b16 %v987
    %v1665 = vunpack.c.h.b16 %v987
    %v1666 = vunpack.c.l.b16 %v988
    %v1667 = vunpack.c.h.b16 %v988
    %v1668 = vunpack.c.l.b16 %v989
    %v1669 = vunpack.c.h.b16 %v989
    %v1670 = vunpack.c.l.b16 %v990
    %v1671 = vunpack.c.h.b16 %v990
    %v1672 = vunpack.c.l.b16 %v991
    %v1673 = vunpack.c.h.b16 %v991
    %v1674 = vunpack.c.l.b16 %v992
    %v1675 = vunpack.c.h.b16 %v992
    %v1676 = vunpack.c.l.b16 %v993
    %v1677 = vunpack.c.h.b16 %v993
    %v1678 = vunpack.c.l.b16 %v994
    %v1679 = vunpack.c.h.b16 %v994
    %v1680 = vunpack.c.l.b16 %v995
    %v1681 = vunpack.c.h.b16 %v995
    %v1682 = vunpack.c.l.b16 %v996
    %v1683 = vunpack.c.h.b16 %v996
    %v1684 = vunpack.c.l.b16 %v997
    %v1685 = vunpack.c.h.b16 %v997
    %v1686 = vunpack.c.l.b16 %v998
    %v1687 = vunpack.c.h.b16 %v998
    %v1688 = vunpack.c.l.b16 %v999
    %v1689 = vunpack.c.h.b16 %v999
    %v1690 = vunpack.c.l.b16 %v1000
    %v1691 = vunpack.c.h.b16 %v1000
    %v1692 = vunpack.c.l.b16 %v1001
    %v1693 = vunpack.c.h.b16 %v1001
    %v1694 = vunpack.c.l.b16 %v1002
    %v1695 = vunpack.c.h.b16 %v1002
    %v1696 = vunpack.c.l.b16 %v1003
    %v1697 = vunpack.c.h.b16 %v1003
    %v1698 = vunpack.c.l.b16 %v1004
    %v1699 = vunpack.c.h.b16 %v1004
    %v1700 = vunpack.c.l.b16 %v1005
    %v1701 = vunpack.c.h.b16 %v1005
    %v1702 = vunpack.c.l.b16 %v1006
    %v1703 = vunpack.c.h.b16 %v1006
    %v1704 = vunpack.c.l.b16 %v1007
    %v1705 = vunpack.c.h.b16 %v1007
    %v1706 = vunpack.c.l.b16 %v1008
    %v1707 = vunpack.c.h.b16 %v1008
    %v1708 = vunpack.c.l.b16 %v1009
    %v1709 = vunpack.c.h.b16 %v1009
    %v1710 = vunpack.c.l.b16 %v1010
    %v1711 = vunpack.c.h.b16 %v1010
    %v1712 = vunpack.c.l.b16 %v1011
    %v1713 = vunpack.c.h.b16 %v1011
    %v1714 = vunpack.c.l.b16 %v1012
    %v1715 = vunpack.c.h.b16 %v1012
    %v1716 = vunpack.c.l.b16 %v1013
    %v1717 = vunpack.c.h.b16 %v1013
    %v1718 = vunpack.c.l.b16 %v1014
    %v1719 = vunpack.c.h.b16 %v1014
    %v1720 = vunpack.c.l.b16 %v1015
    %v1721 = vunpack.c.h.b16 %v1015
    %v1722 = vunpack.c.l.b16 %v1016
    %v1723 = vunpack.c.h.b16 %v1016
    %v1724 = vunpack.c.l.b16 %v1017
    %v1725 = vunpack.c.h.b16 %v1017
    %v1726 = vunpack.c.l.b16 %v1018
    %v1727 = vunpack.c.h.b16 %v1018
    %v1728 = vunpack.c.l.b16 %v1019
    %v1729 = vunpack.c.h.b16 %v1019
    %v1730 = vunpack.c.l.b16 %v1020
    %v1731 = vunpack.c.h.b16 %v1020
    %v1732 = vunpack.c.l.b16 %v1021
    %v1733 = vunpack.c.h.b16 %v1021
    %v1734 = vunpack.c.l.b16 %v1022
    %v1735 = vunpack.c.h.b16 %v1022
    %v1736 = vunpack.c.l.b16 %v1023
    %v1737 = vunpack.c.h.b16 %v1023
    %v1738 = vunpack.c.l.b16 %v1024
    %v1739 = vunpack.c.h.b16 %v1024
    %v1740 = vunpack.c.l.b16 %v1025
    %v1741 = vunpack.c.h.b16 %v1025
    %v1742 = vunpack.c.l.b16 %v1026
    %v1743 = vunpack.c.h.b16 %v1026
    %v1744 = vunpack.c.l.b16 %v1027
    %v1745 = vunpack.c.h.b16 %v1027
    %v1746 = vunpack.c.l.b16 %v1028
    %v1747 = vunpack.c.h.b16 %v1028
    %v1748 = vunpack.c.l.b16 %v1029
    %v1749 = vunpack.c.h.b16 %v1029
    %v1750 = vunpack.c.l.b16 %v1030
    %v1751 = vunpack.c.h.b16 %v1030
    %v1752 = vunpack.c.l.b16 %v1031
    %v1753 = vunpack.c.h.b16 %v1031
    %v1754 = vunpack.c.l.b16 %v1032
    %v1755 = vunpack.c.h.b16 %v1032
    %v1756 = vunpack.c.l.b16 %v1033
    %v1757 = vunpack.c.h.b16 %v1033
    %v1758 = vunpack.c.l.b16 %v1034
    %v1759 = vunpack.c.h.b16 %v1034
    %v1760 = vunpack.c.l.b16 %v1035
    %v1761 = vunpack.c.h.b16 %v1035
    %v1762 = vunpack.c.l.b16 %v1036
    %v1763 = vunpack.c.h.b16 %v1036
    %v1764 = vunpack.c.l.b16 %v1037
    %v1765 = vunpack.c.h.b16 %v1037
    %v1766 = vunpack.c.l.b16 %v1038
    %v1767 = vunpack.c.h.b16 %v1038
    %v1768 = vunpack.c.l.b16 %v1039
    %v1769 = vunpack.c.h.b16 %v1039
    %v1770 = vunpack.c.l.b16 %v1040
    %v1771 = vunpack.c.h.b16 %v1040
    %v1772 = vunpack.c.l.b16 %v1041
    %v1773 = vunpack.c.h.b16 %v1041
    %v1774 = vunpack.c.l.b16 %v1042
    %v1775 = vunpack.c.h.b16 %v1042
    %v1776 = vunpack.c.l.b16 %v1043
    %v1777 = vunpack.c.h.b16 %v1043
    %v1778 = vunpack.c.l.b16 %v1044
    %v1779 = vunpack.c.h.b16 %v1044
    %v1780 = vunpack.c.l.b16 %v1045
    %v1781 = vunpack.c.h.b16 %v1045
    %v1782 = vunpack.c.l.b16 %v1046
    %v1783 = vunpack.c.h.b16 %v1046
    %v1784 = vunpack.c.l.b16 %v1047
    %v1785 = vunpack.c.h.b16 %v1047
    %v1786 = vunpack.c.l.b16 %v1048
    %v1787 = vunpack.c.h.b16 %v1048
    %v1788 = vunpack.c.l.b16 %v1049
    %v1789 = vunpack.c.h.b16 %v1049
    %v1790 = vunpack.c.l.b16 %v1050
    %v1791 = vunpack.c.h.b16 %v1050
    %v1792 = vunpack.c.l.b16 %v1051
    %v1793 = vunpack.c.h.b16 %v1051
    %v1794 = vunpack.c.l.b16 %v1052
    %v1795 = vunpack.c.h.b16 %v1052
    %v1796 = vunpack.c.l.b16 %v1053
    %v1797 = vunpack.c.h.b16 %v1053
    %v1798 = vunpack.c.l.b16 %v1054
    %v1799 = vunpack.c.h.b16 %v1054
    %v1800 = vunpack.c.l.b16 %v1055
    %v1801 = vunpack.c.h.b16 %v1055
    %v1802 = vunpack.c.l.b16 %v1056
    %v1803 = vunpack.c.h.b16 %v1056
    %v1804 = vunpack.c.l.b16 %v1057
    %v1805 = vunpack.c.h.b16 %v1057
    %v1806 = vunpack.c.l.b16 %v1058
    %v1807 = vunpack.c.h.b16 %v1058
    %v1808 = vunpack.c.l.b16 %v1059
    %v1809 = vunpack.c.h.b16 %v1059
    %v1810 = vunpack.c.l.b16 %v1060
    %v1811 = vunpack.c.h.b16 %v1060
    %v1812 = vunpack.c.l.b16 %v1061
    %v1813 = vunpack.c.h.b16 %v1061
    %v1814 = vunpack.c.l.b16 %v1062
    %v1815 = vunpack.c.h.b16 %v1062
    %v1816 = vunpack.c.l.b16 %v1063
    %v1817 = vunpack.c.h.b16 %v1063
    %v1818 = vunpack.c.l.b16 %v1064
    %v1819 = vunpack.c.h.b16 %v1064
    %v1820 = vunpack.c.l.b16 %v1065
    %v1821 = vunpack.c.h.b16 %v1065
    %v1822 = vunpack.c.l.b16 %v1066
    %v1823 = vunpack.c.h.b16 %v1066
    %v1824 = vunpack.c.l.b16 %v1067
    %v1825 = vunpack.c.h.b16 %v1067
    %v1826 = vunpack.c.l.b16 %v1068
    %v1827 = vunpack.c.h.b16 %v1068
    %v1828 = vunpack.c.l.b16 %v1069
    %v1829 = vunpack.c.h.b16 %v1069
    %v1830 = vunpack.c.l.b16 %v1070
    %v1831 = vunpack.c.h.b16 %v1070
    %v1832 = vunpack.c.l.b16 %v1071
    %v1833 = vunpack.c.h.b16 %v1071
    %v1834 = vunpack.c.l.b16 %v1072
    %v1835 = vunpack.c.h.b16 %v1072
    %v1836 = vunpack.c.l.b16 %v1073
    %v1837 = vunpack.c.h.b16 %v1073
    %v1838 = vunpack.c.l.b16 %v1074
    %v1839 = vunpack.c.h.b16 %v1074
    %v1840 = vunpack.c.l.b16 %v1075
    %v1841 = vunpack.c.h.b16 %v1075
    %v1842 = vunpack.c.l.b16 %v1076
    %v1843 = vunpack.c.h.b16 %v1076
    %v1844 = vunpack.c.l.b16 %v1077
    %v1845 = vunpack.c.h.b16 %v1077
    %v1846 = vpack.c.b16 %v1350, %v1334
    %v1847 = vpack.c.b16 %v1351, %v1335
    %v1848 = vpack.c.b16 %v1352, %v1336
    %v1849 = vpack.c.b16 %v1353, %v1337
    %v1850 = vpack.c.b16 %v1354, %v1338
    %v1851 = vpack.c.b16 %v1355, %v1339
    %v1852 = vpack.c.b16 %v1356, %v1340
    %v1853 = vpack.c.b16 %v1357, %v1341
    %v1854 = vpack.c.b16 %v1358, %v1342
    %v1855 = vpack.c.b16 %v1359, %v1343
    %v1856 = vpack.c.b16 %v1360, %v1344
    %v1857 = vpack.c.b16 %v1361, %v1345
    %v1858 = vpack.c.b16 %v1362, %v1346
    %v1859 = vpack.c.b16 %v1363, %v1347
    %v1860 = vpack.c.b16 %v1364, %v1348
    %v1861 = vpack.c.b16 %v1365, %v1349
    %v1862 = vpack.c.b16 %v1382, %v1366
    %v1863 = vpack.c.b16 %v1383, %v1367
    %v1864 = vpack.c.b16 %v1384, %v1368
    %v1865 = vpack.c.b16 %v1385, %v1369
    %v1866 = vpack.c.b16 %v1386, %v1370
    %v1867 = vpack.c.b16 %v1387, %v1371
    %v1868 = vpack.c.b16 %v1388, %v1372
    %v1869 = vpack.c.b16 %v1389, %v1373
    %v1870 = vpack.c.b16 %v1390, %v1374
    %v1871 = vpack.c.b16 %v1391, %v1375
    %v1872 = vpack.c.b16 %v1392, %v1376
    %v1873 = vpack.c.b16 %v1393, %v1377
    %v1874 = vpack.c.b16 %v1394, %v1378
    %v1875 = vpack.c.b16 %v1395, %v1379
    %v1876 = vpack.c.b16 %v1396, %v1380
    %v1877 = vpack.c.b16 %v1397, %v1381
    %v1878 = vpack.c.b16 %v1414, %v1398
    %v1879 = vpack.c.b16 %v1415, %v1399
    %v1880 = vpack.c.b16 %v1416, %v1400
    %v1881 = vpack.c.b16 %v1417, %v1401
    %v1882 = vpack.c.b16 %v1418, %v1402
    %v1883 = vpack.c.b16 %v1419, %v1403
    %v1884 = vpack.c.b16 %v1420, %v1404
    %v1885 = vpack.c.b16 %v1421, %v1405
    %v1886 = vpack.c.b16 %v1422, %v1406
    %v1887 = vpack.c.b16 %v1423, %v1407
    %v1888 = vpack.c.b16 %v1424, %v1408
    %v1889 = vpack.c.b16 %v1425, %v1409
    %v1890 = vpack.c.b16 %v1426, %v1410
    %v1891 = vpack.c.b16 %v1427, %v1411
    %v1892 = vpack.c.b16 %v1428, %v1412
    %v1893 = vpack.c.b16 %v1429, %v1413
    %v1894 = vpack.c.b16 %v1446, %v1430
    %v1895 = vpack.c.b16 %v1447, %v1431
    %v1896 = vpack.c.b16 %v1448, %v1432
    %v1897 = vpack.c.b16 %v1449, %v1433
    %v1898 = vpack.c.b16 %v1450, %v1434
    %v1899 = vpack.c.b16 %v1451, %v1435
    %v1900 = vpack.c.b16 %v1452, %v1436
    %v1901 = vpack.c.b16 %v1453, %v1437
    %v1902 = vpack.c.b16 %v1454, %v1438
    %v1903 = vpack.c.b16 %v1455, %v1439
    %v1904 = vpack.c.b16 %v1456, %v1440
    %v1905 = vpack.c.b16 %v1457, %v1441
    %v1906 = vpack.c.b16 %v1458, %v1442
    %v1907 = vpack.c.b16 %v1459, %v1443
    %v1908 = vpack.c.b16 %v1460, %v1444
    %v1909 = vpack.c.b16 %v1461, %v1445
    %v1910 = vpack.c.b16 %v1478, %v1462
    %v1911 = vpack.c.b16 %v1479, %v1463
    %v1912 = vpack.c.b16 %v1480, %v1464
    %v1913 = vpack.c.b16 %v1481, %v1465
    %v1914 = vpack.c.b16 %v1482, %v1466
    %v1915 = vpack.c.b16 %v1483, %v1467
    %v1916 = vpack.c.b16 %v1484, %v1468
    %v1917 = vpack.c.b16 %v1485, %v1469
    %v1918 = vpack.c.b16 %v1486, %v1470
    %v1919 = vpack.c.b16 %v1487, %v1471
    %v1920 = vpack.c.b16 %v1488, %v1472
    %v1921 = vpack.c.b16 %v1489, %v1473
    %v1922 = vpack.c.b16 %v1490, %v1474
    %v1923 = vpack.c.b16 %v1491, %v1475
    %v1924 = vpack.c.b16 %v1492, %v1476
    %v1925 = vpack.c.b16 %v1493, %v1477
    %v1926 = vpack.c.b16 %v1510, %v1494
    %v1927 = vpack.c.b16 %v1511, %v1495
    %v1928 = vpack.c.b16 %v1512, %v1496
    %v1929 = vpack.c.b16 %v1513, %v1497
    %v1930 = vpack.c.b16 %v1514, %v1498
    %v1931 = vpack.c.b16 %v1515, %v1499
    %v1932 = vpack.c.b16 %v1516, %v1500
    %v1933 = vpack.c.b16 %v1517, %v1501
    %v1934 = vpack.c.b16 %v1518, %v1502
    %v1935 = vpack.c.b16 %v1519, %v1503
    %v1936 = vpack.c.b16 %v1520, %v1504
    %v1937 = vpack.c.b16 %v1521, %v1505
    %v1938 = vpack.c.b16 %v1522, %v1506
    %v1939 = vpack.c.b16 %v1523, %v1507
    %v1940 = vpack.c.b16 %v1524, %v1508
    %v1941 = vpack.c.b16 %v1525, %v1509
    %v1942 = vpack.c.b16 %v1542, %v1526
    %v1943 = vpack.c.b16 %v1543, %v1527
    %v1944 = vpack.c.b16 %v1544, %v1528
    %v1945 = vpack.c.b16 %v1545, %v1529
    %v1946 = vpack.c.b16 %v1546, %v1530
    %v1947 = vpack.c.b16 %v1547, %v1531
    %v1948 = vpack.c.b16 %v1548, %v1532
    %v1949 = vpack.c.b16 %v1549, %v1533
    %v1950 = vpack.c.b16 %v1550, %v1534
    %v1951 = vpack.c.b16 %v1551, %v1535
    %v1952 = vpack.c.b16 %v1552, %v1536
    %v1953 = vpack.c.b16 %v1553, %v1537
    %v1954 = vpack.c.b16 %v1554, %v1538
    %v1955 = vpack.c.b16 %v1555, %v1539
    %v1956 = vpack.c.b16 %v1556, %v1540
    %v1957 = vpack.c.b16 %v1557, %v1541
    %v1958 = vpack.c.b16 %v1574, %v1558
    %v1959 = vpack.c.b16 %v1575, %v1559
    %v1960 = vpack.c.b16 %v1576, %v1560
    %v1961 = vpack.c.b16 %v1577, %v1561
    %v1962 = vpack.c.b16 %v1578, %v1562
    %v1963 = vpack.c.b16 %v1579, %v1563
    %v1964 = vpack.c.b16 %v1580, %v1564
    %v1965 = vpack.c.b16 %v1581, %v1565
    %v1966 = vpack.c.b16 %v1582, %v1566
    %v1967 = vpack.c.b16 %v1583, %v1567
    %v1968 = vpack.c.b16 %v1584, %v1568
    %v1969 = vpack.c.b16 %v1585, %v1569
    %v1970 = vpack.c.b16 %v1586, %v1570
    %v1971 = vpack.c.b16 %v1587, %v1571
    %v1972 = vpack.c.b16 %v1588, %v1572
    %v1973 = vpack.c.b16 %v1589, %v1573
    %v1974 = vpack.c.b16 %v1606, %v1590
    %v1975 = vpack.c.b16 %v1607, %v1591
    %v1976 = vpack.c.b16 %v1608, %v1592
    %v1977 = vpack.c.b16 %v1609, %v1593
    %v1978 = vpack.c.b16 %v1610, %v1594
    %v1979 = vpack.c.b16 %v1611, %v1595
    %v1980 = vpack.c.b16 %v1612, %v1596
    %v1981 = vpack.c.b16 %v1613, %v1597
    %v1982 = vpack.c.b16 %v1614, %v1598
    %v1983 = vpack.c.b16 %v1615, %v1599
    %v1984 = vpack.c.b16 %v1616, %v1600
    %v1985 = vpack.c.b16 %v1617, %v1601
    %v1986 = vpack.c.b16 %v1618, %v1602
    %v1987 = vpack.c.b16 %v1619, %v1603
    %v1988 = vpack.c.b16 %v1620, %v1604
    %v1989 = vpack.c.b16 %v1621, %v1605
    %v1990 = vpack.c.b16 %v1638, %v1622
    %v1991 = vpack.c.b16 %v1639, %v1623
    %v1992 = vpack.c.b16 %v1640, %v1624
    %v1993 = vpack.c.b16 %v1641, %v1625
    %v1994 = vpack.c.b16 %v1642, %v1626
    %v1995 = vpack.c.b16 %v1643, %v1627
    %v1996 = vpack.c.b16 %v1644, %v1628
    %v1997 = vpack.c.b16 %v1645, %v1629
    %v1998 = vpack.c.b16 %v1646, %v1630
    %v1999 = vpack.c.b16 %v1647, %v1631
    %v2000 = vpack.c.b16 %v1648, %v1632
    %v2001 = vpack.c.b16 %v1649, %v1633
    %v2002 = vpack.c.b16 %v1650, %v1634
    %v2003 = vpack.c.b16 %v1651, %v1635
    %v2004 = vpack.c.b16 %v1652, %v1636
    %v2005 = vpack.c.b16 %v1653, %v1637
    %v2006 = vpack.c.b16 %v1670, %v1654
    %v2007 = vpack.c.b16 %v1671, %v1655
    %v2008 = vpack.c.b16 %v1672, %v1656
    %v2009 = vpack.c.b16 %v1673, %v1657
    %v2010 = vpack.c.b16 %v1674, %v1658
    %v2011 = vpack.c.b16 %v1675, %v1659
    %v2012 = vpack.c.b16 %v1676, %v1660
    %v2013 = vpack.c.b16 %v1677, %v1661
    %v2014 = vpack.c.b16 %v1678, %v1662
    %v2015 = vpack.c.b16 %v1679, %v1663
    %v2016 = vpack.c.b16 %v1680, %v1664
    %v2017 = vpack.c.b16 %v1681, %v1665
    %v2018 = vpack.c.b16 %v1682, %v1666
    %v2019 = vpack.c.b16 %v1683, %v1667
    %v2020 = vpack.c.b16 %v1684, %v1668
    %v2021 = vpack.c.b16 %v1685, %v1669
    %v2022 = vpack.c.b16 %v1702, %v1686
    %v2023 = vpack.c.b16 %v1703, %v1687
    %v2024 = vpack.c.b16 %v1704, %v1688
    %v2025 = vpack.c.b16 %v1705, %v1689
    %v2026 = vpack.c.b16 %v1706, %v1690
    %v2027 = vpack.c.b16 %v1707, %v1691
    %v2028 = vpack.c.b16 %v1708, %v1692
    %v2029 = vpack.c.b16 %v1709, %v1693
    %v2030 = vpack.c.b16 %v1710, %v1694
    %v2031 = vpack.c.b16 %v1711, %v1695
    %v2032 = vpack.c.b16 %v1712, %v1696
    %v2033 = vpack.c.b16 %v1713, %v1697
    %v2034 = vpack.c.b16 %v1714, %v1698
    %v2035 = vpack.c.b16 %v1715, %v1699
    %v2036 = vpack.c.b16 %v1716, %v1700
    %v2037 = vpack.c.b16 %v1717, %v1701
    %v2038 = vpack.c.b16 %v1734, %v1718
    %v2039 = vpack.c.b16 %v1735, %v1719
    %v2040 = vpack.c.b16 %v1736, %v1720
    %v2041 = vpack.c.b16 %v1737, %v1721
    %v2042 = vpack.c.b16 %v1738, %v1722
    %v2043 = vpack.c.b16 %v1739, %v1723
    %v2044 = vpack.c.b16 %v1740, %v1724
    %v2045 = vpack.c.b16 %v1741, %v1725
    %v2046 = vpack.c.b16 %v1742, %v1726
    %v2047 = vpack.c.b16 %v1743, %v1727
    %v2048 = vpack.c.b16 %v1744, %v1728
    %v2049 = vpack.c.b16 %v1745, %v1729
    %v2050 = vpack.c.b16 %v1746, %v1730
    %v2051 = vpack.c.b16 %v1747, %v1731
    %v2052 = vpack.c.b16 %v1748, %v1732
    %v2053 = vpack.c.b16 %v1749, %v1733
    %v2054 = vpack.c.b16 %v1766, %v1750
    %v2055 = vpack.c.b16 %v1767, %v1751
    %v2056 = vpack.c.b16 %v1768, %v1752
    %v2057 = vpack.c.b16 %v1769, %v1753
    %v2058 = vpack.c.b16 %v1770, %v1754
    %v2059 = vpack.c.b16 %v1771, %v1755
    %v2060 = vpack.c.b16 %v1772, %v1756
    %v2061 = vpack.c.b16 %v1773, %v1757
    %v2062 = vpack.c.b16 %v1774, %v1758
    %v2063 = vpack.c.b16 %v1775, %v1759
    %v2064 = vpack.c.b16 %v1776, %v1760
    %v2065 = vpack.c.b16 %v1777, %v1761
    %v2066 = vpack.c.b16 %v1778, %v1762
    %v2067 = vpack.c.b16 %v1779, %v1763
    %v2068 = vpack.c.b16 %v1780, %v1764
    %v2069 = vpack.c.b16 %v1781, %v1765
    %v2070 = vpack.c.b16 %v1798, %v1782
    %v2071 = vpack.c.b16 %v1799, %v1783
    %v2072 = vpack.c.b16 %v1800, %v1784
    %v2073 = vpack.c.b16 %v1801, %v1785
    %v2074 = vpack.c.b16 %v1802, %v1786
    %v2075 = vpack.c.b16 %v1803, %v1787
    %v2076 = vpack.c.b16 %v1804, %v1788
    %v2077 = vpack.c.b16 %v1805, %v1789
    %v2078 = vpack.c.b16 %v1806, %v1790
    %v2079 = vpack.c.b16 %v1807, %v1791
    %v2080 = vpack.c.b16 %v1808, %v1792
    %v2081 = vpack.c.b16 %v1809, %v1793
    %v2082 = vpack.c.b16 %v1810, %v1794
    %v2083 = vpack.c.b16 %v1811, %v1795
    %v2084 = vpack.c.b16 %v1812, %v1796
    %v2085 = vpack.c.b16 %v1813, %v1797
    %v2086 = vpack.c.b16 %v1830, %v1814
    %v2087 = vpack.c.b16 %v1831, %v1815
    %v2088 = vpack.c.b16 %v1832, %v1816
    %v2089 = vpack.c.b16 %v1833, %v1817
    %v2090 = vpack.c.b16 %v1834, %v1818
    %v2091 = vpack.c.b16 %v1835, %v1819
    %v2092 = vpack.c.b16 %v1836, %v1820
    %v2093 = vpack.c.b16 %v1837, %v1821
    %v2094 = vpack.c.b16 %v1838, %v1822
    %v2095 = vpack.c.b16 %v1839, %v1823
    %v2096 = vpack.c.b16 %v1840, %v1824
    %v2097 = vpack.c.b16 %v1841, %v1825
    %v2098 = vpack.c.b16 %v1842, %v1826
    %v2099 = vpack.c.b16 %v1843, %v1827
    %v2100 = vpack.c.b16 %v1844, %v1828
    %v2101 = vpack.c.b16 %v1845, %v1829
    %2358 = vmatprep.subr.bf16.mxu0 %v1959
    %2359 = vmatpush1.bf16.msra.mxu0 %v1958
    %2360 = vmatprep.subr.bf16.mxu0 %v1943
    %2361 = vmatpush1.bf16.msra.mxu0 %v1942
    %2362 = vmatprep.subr.bf16.mxu0 %v1927
    %2363 = vmatpush1.bf16.msra.mxu0 %v1926
    %2364 = vmatprep.subr.bf16.mxu0 %v1911
    %2365 = vmatpush1.bf16.msra.mxu0 %v1910
    %2366 = vmatprep.subr.bf16.mxu0 %v1895
    %2367 = vmatpush1.bf16.msra.mxu0 %v1894
    %2368 = vmatprep.subr.bf16.mxu0 %v1879
    %2369 = vmatpush1.bf16.msra.mxu0 %v1878
    %2370 = vmatprep.subr.bf16.mxu0 %v1863
    %2371 = vmatpush1.bf16.msra.mxu0 %v1862
    %2372 = vmatprep.subr.bf16.mxu0 %v1847
    %2373 = vmatpush1.bf16.msra.mxu0 %v1846
    %2374 = vmatprep.subr.bf16.mxu0 %v2087
    %2375 = vmatpush2.bf16.msra.mxu0 %v2086
    %2376 = vmatprep.subr.bf16.mxu0 %v2071
    %2377 = vmatpush2.bf16.msra.mxu0 %v2070
    %2378 = vmatprep.subr.bf16.mxu0 %v2055
    %2379 = vmatpush2.bf16.msra.mxu0 %v2054
    %2380 = vmatprep.subr.bf16.mxu0 %v2039
    %2381 = vmatpush2.bf16.msra.mxu0 %v2038
    %2382 = vmatprep.subr.bf16.mxu0 %v2023
    %2383 = vmatpush2.bf16.msra.mxu0 %v2022
    %2384 = vmatprep.subr.bf16.mxu0 %v2007
    %2385 = vmatpush2.bf16.msra.mxu0 %v2006
    %2386 = vmatprep.subr.bf16.mxu0 %v1991
    %2387 = vmatpush2.bf16.msra.mxu0 %v1990
    %2388 = vmatprep.subr.bf16.mxu0 %v1975
    %2389 = vmatpush2.bf16.msra.mxu0 %v1974
    %2390 = vmatprep.mubr.bf16.mxu0 %v807
    %2391 = vmatmul.mubr.bf16.gmra.mxu0 %v806
    %v2392 = vpop.f32.mrf.mxu0
    %v2393 = vadd.f32 0.0, %v2392
    %v2394 = vpop.f32.mrf.mxu0
    %v2395 = vadd.f32 0.0, %v2394
    %v2396 = vpop.f32.mrf.mxu0
    %v2397 = vadd.f32 0.0, %v2396
    %v2398 = vpop.f32.mrf.mxu0
    %v2399 = vadd.f32 0.0, %v2398
    %2400 = vmatprep.mubr.bf16.mxu0 %v809
    %2401 = vmatmul.mubr.bf16.gmra.mxu0 %v808
    %v2402 = vpop.f32.mrf.mxu0
    %v2403 = vadd.f32 0.0, %v2402
    %v2404 = vpop.f32.mrf.mxu0
    %v2405 = vadd.f32 0.0, %v2404
    %v2406 = vpop.f32.mrf.mxu0
    %v2407 = vadd.f32 0.0, %v2406
    %v2408 = vpop.f32.mrf.mxu0
    %v2409 = vadd.f32 0.0, %v2408
    %2410 = vmatprep.mubr.bf16.mxu0 %v811
    %2411 = vmatmul.mubr.bf16.gmra.mxu0 %v810
    %v2412 = vpop.f32.mrf.mxu0
    %v2413 = vadd.f32 0.0, %v2412
    %v2414 = vpop.f32.mrf.mxu0
    %v2415 = vadd.f32 0.0, %v2414
    %v2416 = vpop.f32.mrf.mxu0
    %v2417 = vadd.f32 0.0, %v2416
    %v2418 = vpop.f32.mrf.mxu0
    %v2419 = vadd.f32 0.0, %v2418
    %2420 = vmatprep.mubr.bf16.mxu0 %v813
    %2421 = vmatmul.mubr.bf16.gmra.mxu0 %v812
    %v2422 = vpop.f32.mrf.mxu0
    %v2423 = vadd.f32 0.0, %v2422
    %v2424 = vpop.f32.mrf.mxu0
    %v2425 = vadd.f32 0.0, %v2424
    %v2426 = vpop.f32.mrf.mxu0
    %v2427 = vadd.f32 0.0, %v2426
    %v2428 = vpop.f32.mrf.mxu0
    %v2429 = vadd.f32 0.0, %v2428
    %2430 = vmatprep.mubr.bf16.mxu0 %v815
    %2431 = vmatmul.mubr.bf16.gmra.mxu0 %v814
    %v2432 = vpop.f32.mrf.mxu0
    %v2433 = vadd.f32 0.0, %v2432
    %v2434 = vpop.f32.mrf.mxu0
    %v2435 = vadd.f32 0.0, %v2434
    %v2436 = vpop.f32.mrf.mxu0
    %v2437 = vadd.f32 0.0, %v2436
    %v2438 = vpop.f32.mrf.mxu0
    %v2439 = vadd.f32 0.0, %v2438
    %2440 = vmatprep.mubr.bf16.mxu0 %v817
    %2441 = vmatmul.mubr.bf16.gmra.mxu0 %v816
    %v2442 = vpop.f32.mrf.mxu0
    %v2443 = vadd.f32 0.0, %v2442
    %v2444 = vpop.f32.mrf.mxu0
    %v2445 = vadd.f32 0.0, %v2444
    %v2446 = vpop.f32.mrf.mxu0
    %v2447 = vadd.f32 0.0, %v2446
    %v2448 = vpop.f32.mrf.mxu0
    %v2449 = vadd.f32 0.0, %v2448
    %2450 = vmatprep.mubr.bf16.mxu0 %v819
    %2451 = vmatmul.mubr.bf16.gmra.mxu0 %v818
    %v2452 = vpop.f32.mrf.mxu0
    %v2453 = vadd.f32 0.0, %v2452
    %v2454 = vpop.f32.mrf.mxu0
    %v2455 = vadd.f32 0.0, %v2454
    %v2456 = vpop.f32.mrf.mxu0
    %v2457 = vadd.f32 0.0, %v2456
    %v2458 = vpop.f32.mrf.mxu0
    %v2459 = vadd.f32 0.0, %v2458
    %2460 = vmatprep.mubr.bf16.mxu0 %v821
    %2461 = vmatmul.mubr.bf16.gmra.mxu0 %v820
    %v2462 = vpop.f32.mrf.mxu0
    %v2463 = vadd.f32 0.0, %v2462
    %v2464 = vpop.f32.mrf.mxu0
    %v2465 = vadd.f32 0.0, %v2464
    %v2466 = vpop.f32.mrf.mxu0
    %v2467 = vadd.f32 0.0, %v2466
    %v2468 = vpop.f32.mrf.mxu0
    %v2469 = vadd.f32 0.0, %v2468
    %2470 = vdwg.mxu0
    %2471 = vmatprep.subr.bf16.mxu0 %v1961
    %2472 = vmatpush1.bf16.msra.mxu0 %v1960
    %2473 = vmatprep.subr.bf16.mxu0 %v1945
    %2474 = vmatpush1.bf16.msra.mxu0 %v1944
    %2475 = vmatprep.subr.bf16.mxu0 %v1929
    %2476 = vmatpush1.bf16.msra.mxu0 %v1928
    %2477 = vmatprep.subr.bf16.mxu0 %v1913
    %2478 = vmatpush1.bf16.msra.mxu0 %v1912
    %2479 = vmatprep.subr.bf16.mxu0 %v1897
    %2480 = vmatpush1.bf16.msra.mxu0 %v1896
    %2481 = vmatprep.subr.bf16.mxu0 %v1881
    %2482 = vmatpush1.bf16.msra.mxu0 %v1880
    %2483 = vmatprep.subr.bf16.mxu0 %v1865
    %2484 = vmatpush1.bf16.msra.mxu0 %v1864
    %2485 = vmatprep.subr.bf16.mxu0 %v1849
    %2486 = vmatpush1.bf16.msra.mxu0 %v1848
    %2487 = vmatprep.subr.bf16.mxu0 %v2089
    %2488 = vmatpush2.bf16.msra.mxu0 %v2088
    %2489 = vmatprep.subr.bf16.mxu0 %v2073
    %2490 = vmatpush2.bf16.msra.mxu0 %v2072
    %2491 = vmatprep.subr.bf16.mxu0 %v2057
    %2492 = vmatpush2.bf16.msra.mxu0 %v2056
    %2493 = vmatprep.subr.bf16.mxu0 %v2041
    %2494 = vmatpush2.bf16.msra.mxu0 %v2040
    %2495 = vmatprep.subr.bf16.mxu0 %v2025
    %2496 = vmatpush2.bf16.msra.mxu0 %v2024
    %2497 = vmatprep.subr.bf16.mxu0 %v2009
    %2498 = vmatpush2.bf16.msra.mxu0 %v2008
    %2499 = vmatprep.subr.bf16.mxu0 %v1993
    %2500 = vmatpush2.bf16.msra.mxu0 %v1992
    %2501 = vmatprep.subr.bf16.mxu0 %v1977
    %2502 = vmatpush2.bf16.msra.mxu0 %v1976
    %2503 = vmatprep.mubr.bf16.mxu0 %v807
    %2504 = vmatmul.mubr.bf16.gmra.mxu0 %v806
    %v2505 = vpop.f32.mrf.mxu0
    %v2506 = vadd.f32 0.0, %v2505
    %v2507 = vpop.f32.mrf.mxu0
    %v2508 = vadd.f32 0.0, %v2507
    %v2509 = vpop.f32.mrf.mxu0
    %v2510 = vadd.f32 0.0, %v2509
    %v2511 = vpop.f32.mrf.mxu0
    %v2512 = vadd.f32 0.0, %v2511
    %2513 = vmatprep.mubr.bf16.mxu0 %v809
    %2514 = vmatmul.mubr.bf16.gmra.mxu0 %v808
    %v2515 = vpop.f32.mrf.mxu0
    %v2516 = vadd.f32 0.0, %v2515
    %v2517 = vpop.f32.mrf.mxu0
    %v2518 = vadd.f32 0.0, %v2517
    %v2519 = vpop.f32.mrf.mxu0
    %v2520 = vadd.f32 0.0, %v2519
    %v2521 = vpop.f32.mrf.mxu0
    %v2522 = vadd.f32 0.0, %v2521
    %2523 = vmatprep.mubr.bf16.mxu0 %v811
    %2524 = vmatmul.mubr.bf16.gmra.mxu0 %v810
    %v2525 = vpop.f32.mrf.mxu0
    %v2526 = vadd.f32 0.0, %v2525
    %v2527 = vpop.f32.mrf.mxu0
    %v2528 = vadd.f32 0.0, %v2527
    %v2529 = vpop.f32.mrf.mxu0
    %v2530 = vadd.f32 0.0, %v2529
    %v2531 = vpop.f32.mrf.mxu0
    %v2532 = vadd.f32 0.0, %v2531
    %2533 = vmatprep.mubr.bf16.mxu0 %v813
    %2534 = vmatmul.mubr.bf16.gmra.mxu0 %v812
    %v2535 = vpop.f32.mrf.mxu0
    %v2536 = vadd.f32 0.0, %v2535
    %v2537 = vpop.f32.mrf.mxu0
    %v2538 = vadd.f32 0.0, %v2537
    %v2539 = vpop.f32.mrf.mxu0
    %v2540 = vadd.f32 0.0, %v2539
    %v2541 = vpop.f32.mrf.mxu0
    %v2542 = vadd.f32 0.0, %v2541
    %2543 = vmatprep.mubr.bf16.mxu0 %v815
    %2544 = vmatmul.mubr.bf16.gmra.mxu0 %v814
    %v2545 = vpop.f32.mrf.mxu0
    %v2546 = vadd.f32 0.0, %v2545
    %v2547 = vpop.f32.mrf.mxu0
    %v2548 = vadd.f32 0.0, %v2547
    %v2549 = vpop.f32.mrf.mxu0
    %v2550 = vadd.f32 0.0, %v2549
    %v2551 = vpop.f32.mrf.mxu0
    %v2552 = vadd.f32 0.0, %v2551
    %2553 = vmatprep.mubr.bf16.mxu0 %v817
    %2554 = vmatmul.mubr.bf16.gmra.mxu0 %v816
    %v2555 = vpop.f32.mrf.mxu0
    %v2556 = vadd.f32 0.0, %v2555
    %v2557 = vpop.f32.mrf.mxu0
    %v2558 = vadd.f32 0.0, %v2557
    %v2559 = vpop.f32.mrf.mxu0
    %v2560 = vadd.f32 0.0, %v2559
    %v2561 = vpop.f32.mrf.mxu0
    %v2562 = vadd.f32 0.0, %v2561
    %2563 = vmatprep.mubr.bf16.mxu0 %v819
    %2564 = vmatmul.mubr.bf16.gmra.mxu0 %v818
    %v2565 = vpop.f32.mrf.mxu0
    %v2566 = vadd.f32 0.0, %v2565
    %v2567 = vpop.f32.mrf.mxu0
    %v2568 = vadd.f32 0.0, %v2567
    %v2569 = vpop.f32.mrf.mxu0
    %v2570 = vadd.f32 0.0, %v2569
    %v2571 = vpop.f32.mrf.mxu0
    %v2572 = vadd.f32 0.0, %v2571
    %2573 = vmatprep.mubr.bf16.mxu0 %v821
    %2574 = vmatmul.mubr.bf16.gmra.mxu0 %v820
    %v2575 = vpop.f32.mrf.mxu0
    %v2576 = vadd.f32 0.0, %v2575
    %v2577 = vpop.f32.mrf.mxu0
    %v2578 = vadd.f32 0.0, %v2577
    %v2579 = vpop.f32.mrf.mxu0
    %v2580 = vadd.f32 0.0, %v2579
    %v2581 = vpop.f32.mrf.mxu0
    %v2582 = vadd.f32 0.0, %v2581
    %2583 = vdwg.mxu0
    %2584 = vmatprep.subr.bf16.mxu0 %v1963
    %2585 = vmatpush1.bf16.msra.mxu0 %v1962
    %2586 = vmatprep.subr.bf16.mxu0 %v1947
    %2587 = vmatpush1.bf16.msra.mxu0 %v1946
    %2588 = vmatprep.subr.bf16.mxu0 %v1931
    %2589 = vmatpush1.bf16.msra.mxu0 %v1930
    %2590 = vmatprep.subr.bf16.mxu0 %v1915
    %2591 = vmatpush1.bf16.msra.mxu0 %v1914
    %2592 = vmatprep.subr.bf16.mxu0 %v1899
    %2593 = vmatpush1.bf16.msra.mxu0 %v1898
    %2594 = vmatprep.subr.bf16.mxu0 %v1883
    %2595 = vmatpush1.bf16.msra.mxu0 %v1882
    %2596 = vmatprep.subr.bf16.mxu0 %v1867
    %2597 = vmatpush1.bf16.msra.mxu0 %v1866
    %2598 = vmatprep.subr.bf16.mxu0 %v1851
    %2599 = vmatpush1.bf16.msra.mxu0 %v1850
    %2600 = vmatprep.subr.bf16.mxu0 %v2091
    %2601 = vmatpush2.bf16.msra.mxu0 %v2090
    %2602 = vmatprep.subr.bf16.mxu0 %v2075
    %2603 = vmatpush2.bf16.msra.mxu0 %v2074
    %2604 = vmatprep.subr.bf16.mxu0 %v2059
    %2605 = vmatpush2.bf16.msra.mxu0 %v2058
    %2606 = vmatprep.subr.bf16.mxu0 %v2043
    %2607 = vmatpush2.bf16.msra.mxu0 %v2042
    %2608 = vmatprep.subr.bf16.mxu0 %v2027
    %2609 = vmatpush2.bf16.msra.mxu0 %v2026
    %2610 = vmatprep.subr.bf16.mxu0 %v2011
    %2611 = vmatpush2.bf16.msra.mxu0 %v2010
    %2612 = vmatprep.subr.bf16.mxu0 %v1995
    %2613 = vmatpush2.bf16.msra.mxu0 %v1994
    %2614 = vmatprep.subr.bf16.mxu0 %v1979
    %2615 = vmatpush2.bf16.msra.mxu0 %v1978
    %2616 = vmatprep.mubr.bf16.mxu0 %v807
    %2617 = vmatmul.mubr.bf16.gmra.mxu0 %v806
    %v2618 = vpop.f32.mrf.mxu0
    %v2619 = vadd.f32 0.0, %v2618
    %v2620 = vpop.f32.mrf.mxu0
    %v2621 = vadd.f32 0.0, %v2620
    %v2622 = vpop.f32.mrf.mxu0
    %v2623 = vadd.f32 0.0, %v2622
    %v2624 = vpop.f32.mrf.mxu0
    %v2625 = vadd.f32 0.0, %v2624
    %2626 = vmatprep.mubr.bf16.mxu0 %v809
    %2627 = vmatmul.mubr.bf16.gmra.mxu0 %v808
    %v2628 = vpop.f32.mrf.mxu0
    %v2629 = vadd.f32 0.0, %v2628
    %v2630 = vpop.f32.mrf.mxu0
    %v2631 = vadd.f32 0.0, %v2630
    %v2632 = vpop.f32.mrf.mxu0
    %v2633 = vadd.f32 0.0, %v2632
    %v2634 = vpop.f32.mrf.mxu0
    %v2635 = vadd.f32 0.0, %v2634
    %2636 = vmatprep.mubr.bf16.mxu0 %v811
    %2637 = vmatmul.mubr.bf16.gmra.mxu0 %v810
    %v2638 = vpop.f32.mrf.mxu0
    %v2639 = vadd.f32 0.0, %v2638
    %v2640 = vpop.f32.mrf.mxu0
    %v2641 = vadd.f32 0.0, %v2640
    %v2642 = vpop.f32.mrf.mxu0
    %v2643 = vadd.f32 0.0, %v2642
    %v2644 = vpop.f32.mrf.mxu0
    %v2645 = vadd.f32 0.0, %v2644
    %2646 = vmatprep.mubr.bf16.mxu0 %v813
    %2647 = vmatmul.mubr.bf16.gmra.mxu0 %v812
    %v2648 = vpop.f32.mrf.mxu0
    %v2649 = vadd.f32 0.0, %v2648
    %v2650 = vpop.f32.mrf.mxu0
    %v2651 = vadd.f32 0.0, %v2650
    %v2652 = vpop.f32.mrf.mxu0
    %v2653 = vadd.f32 0.0, %v2652
    %v2654 = vpop.f32.mrf.mxu0
    %v2655 = vadd.f32 0.0, %v2654
    %2656 = vmatprep.mubr.bf16.mxu0 %v815
    %2657 = vmatmul.mubr.bf16.gmra.mxu0 %v814
    %v2658 = vpop.f32.mrf.mxu0
    %v2659 = vadd.f32 0.0, %v2658
    %v2660 = vpop.f32.mrf.mxu0
    %v2661 = vadd.f32 0.0, %v2660
    %v2662 = vpop.f32.mrf.mxu0
    %v2663 = vadd.f32 0.0, %v2662
    %v2664 = vpop.f32.mrf.mxu0
    %v2665 = vadd.f32 0.0, %v2664
    %2666 = vmatprep.mubr.bf16.mxu0 %v817
    %2667 = vmatmul.mubr.bf16.gmra.mxu0 %v816
    %v2668 = vpop.f32.mrf.mxu0
    %v2669 = vadd.f32 0.0, %v2668
    %v2670 = vpop.f32.mrf.mxu0
    %v2671 = vadd.f32 0.0, %v2670
    %v2672 = vpop.f32.mrf.mxu0
    %v2673 = vadd.f32 0.0, %v2672
    %v2674 = vpop.f32.mrf.mxu0
    %v2675 = vadd.f32 0.0, %v2674
    %2676 = vmatprep.mubr.bf16.mxu0 %v819
    %2677 = vmatmul.mubr.bf16.gmra.mxu0 %v818
    %v2678 = vpop.f32.mrf.mxu0
    %v2679 = vadd.f32 0.0, %v2678
    %v2680 = vpop.f32.mrf.mxu0
    %v2681 = vadd.f32 0.0, %v2680
    %v2682 = vpop.f32.mrf.mxu0
    %v2683 = vadd.f32 0.0, %v2682
    %v2684 = vpop.f32.mrf.mxu0
    %v2685 = vadd.f32 0.0, %v2684
    %2686 = vmatprep.mubr.bf16.mxu0 %v821
    %2687 = vmatmul.mubr.bf16.gmra.mxu0 %v820
    %v2688 = vpop.f32.mrf.mxu0
    %v2689 = vadd.f32 0.0, %v2688
    %v2690 = vpop.f32.mrf.mxu0
    %v2691 = vadd.f32 0.0, %v2690
    %v2692 = vpop.f32.mrf.mxu0
    %v2693 = vadd.f32 0.0, %v2692
    %v2694 = vpop.f32.mrf.mxu0
    %v2695 = vadd.f32 0.0, %v2694
    %2696 = vdwg.mxu0
    %2697 = vmatprep.subr.bf16.mxu0 %v1965
    %2698 = vmatpush1.bf16.msra.mxu0 %v1964
    %2699 = vmatprep.subr.bf16.mxu0 %v1949
    %2700 = vmatpush1.bf16.msra.mxu0 %v1948
    %2701 = vmatprep.subr.bf16.mxu0 %v1933
    %2702 = vmatpush1.bf16.msra.mxu0 %v1932
    %2703 = vmatprep.subr.bf16.mxu0 %v1917
    %2704 = vmatpush1.bf16.msra.mxu0 %v1916
    %2705 = vmatprep.subr.bf16.mxu0 %v1901
    %2706 = vmatpush1.bf16.msra.mxu0 %v1900
    %2707 = vmatprep.subr.bf16.mxu0 %v1885
    %2708 = vmatpush1.bf16.msra.mxu0 %v1884
    %2709 = vmatprep.subr.bf16.mxu0 %v1869
    %2710 = vmatpush1.bf16.msra.mxu0 %v1868
    %2711 = vmatprep.subr.bf16.mxu0 %v1853
    %2712 = vmatpush1.bf16.msra.mxu0 %v1852
    %2713 = vmatprep.subr.bf16.mxu0 %v2093
    %2714 = vmatpush2.bf16.msra.mxu0 %v2092
    %2715 = vmatprep.subr.bf16.mxu0 %v2077
    %2716 = vmatpush2.bf16.msra.mxu0 %v2076
    %2717 = vmatprep.subr.bf16.mxu0 %v2061
    %2718 = vmatpush2.bf16.msra.mxu0 %v2060
    %2719 = vmatprep.subr.bf16.mxu0 %v2045
    %2720 = vmatpush2.bf16.msra.mxu0 %v2044
    %2721 = vmatprep.subr.bf16.mxu0 %v2029
    %2722 = vmatpush2.bf16.msra.mxu0 %v2028
    %2723 = vmatprep.subr.bf16.mxu0 %v2013
    %2724 = vmatpush2.bf16.msra.mxu0 %v2012
    %2725 = vmatprep.subr.bf16.mxu0 %v1997
    %2726 = vmatpush2.bf16.msra.mxu0 %v1996
    %2727 = vmatprep.subr.bf16.mxu0 %v1981
    %2728 = vmatpush2.bf16.msra.mxu0 %v1980
    %2729 = vmatprep.mubr.bf16.mxu0 %v807
    %2730 = vmatmul.mubr.bf16.gmra.mxu0 %v806
    %v2731 = vpop.f32.mrf.mxu0
    %v2732 = vadd.f32 0.0, %v2731
    %v2733 = vpop.f32.mrf.mxu0
    %v2734 = vadd.f32 0.0, %v2733
    %v2735 = vpop.f32.mrf.mxu0
    %v2736 = vadd.f32 0.0, %v2735
    %v2737 = vpop.f32.mrf.mxu0
    %v2738 = vadd.f32 0.0, %v2737
    %2739 = vmatprep.mubr.bf16.mxu0 %v809
    %2740 = vmatmul.mubr.bf16.gmra.mxu0 %v808
    %v2741 = vpop.f32.mrf.mxu0
    %v2742 = vadd.f32 0.0, %v2741
    %v2743 = vpop.f32.mrf.mxu0
    %v2744 = vadd.f32 0.0, %v2743
    %v2745 = vpop.f32.mrf.mxu0
    %v2746 = vadd.f32 0.0, %v2745
    %v2747 = vpop.f32.mrf.mxu0
    %v2748 = vadd.f32 0.0, %v2747
    %2749 = vmatprep.mubr.bf16.mxu0 %v811
    %2750 = vmatmul.mubr.bf16.gmra.mxu0 %v810
    %v2751 = vpop.f32.mrf.mxu0
    %v2752 = vadd.f32 0.0, %v2751
    %v2753 = vpop.f32.mrf.mxu0
    %v2754 = vadd.f32 0.0, %v2753
    %v2755 = vpop.f32.mrf.mxu0
    %v2756 = vadd.f32 0.0, %v2755
    %v2757 = vpop.f32.mrf.mxu0
    %v2758 = vadd.f32 0.0, %v2757
    %2759 = vmatprep.mubr.bf16.mxu0 %v813
    %2760 = vmatmul.mubr.bf16.gmra.mxu0 %v812
    %v2761 = vpop.f32.mrf.mxu0
    %v2762 = vadd.f32 0.0, %v2761
    %v2763 = vpop.f32.mrf.mxu0
    %v2764 = vadd.f32 0.0, %v2763
    %v2765 = vpop.f32.mrf.mxu0
    %v2766 = vadd.f32 0.0, %v2765
    %v2767 = vpop.f32.mrf.mxu0
    %v2768 = vadd.f32 0.0, %v2767
    %2769 = vmatprep.mubr.bf16.mxu0 %v815
    %2770 = vmatmul.mubr.bf16.gmra.mxu0 %v814
    %v2771 = vpop.f32.mrf.mxu0
    %v2772 = vadd.f32 0.0, %v2771
    %v2773 = vpop.f32.mrf.mxu0
    %v2774 = vadd.f32 0.0, %v2773
    %v2775 = vpop.f32.mrf.mxu0
    %v2776 = vadd.f32 0.0, %v2775
    %v2777 = vpop.f32.mrf.mxu0
    %v2778 = vadd.f32 0.0, %v2777
    %2779 = vmatprep.mubr.bf16.mxu0 %v817
    %2780 = vmatmul.mubr.bf16.gmra.mxu0 %v816
    %v2781 = vpop.f32.mrf.mxu0
    %v2782 = vadd.f32 0.0, %v2781
    %v2783 = vpop.f32.mrf.mxu0
    %v2784 = vadd.f32 0.0, %v2783
    %v2785 = vpop.f32.mrf.mxu0
    %v2786 = vadd.f32 0.0, %v2785
    %v2787 = vpop.f32.mrf.mxu0
    %v2788 = vadd.f32 0.0, %v2787
    %2789 = vmatprep.mubr.bf16.mxu0 %v819
    %2790 = vmatmul.mubr.bf16.gmra.mxu0 %v818
    %v2791 = vpop.f32.mrf.mxu0
    %v2792 = vadd.f32 0.0, %v2791
    %v2793 = vpop.f32.mrf.mxu0
    %v2794 = vadd.f32 0.0, %v2793
    %v2795 = vpop.f32.mrf.mxu0
    %v2796 = vadd.f32 0.0, %v2795
    %v2797 = vpop.f32.mrf.mxu0
    %v2798 = vadd.f32 0.0, %v2797
    %2799 = vmatprep.mubr.bf16.mxu0 %v821
    %2800 = vmatmul.mubr.bf16.gmra.mxu0 %v820
    %v2801 = vpop.f32.mrf.mxu0
    %v2802 = vadd.f32 0.0, %v2801
    %v2803 = vpop.f32.mrf.mxu0
    %v2804 = vadd.f32 0.0, %v2803
    %v2805 = vpop.f32.mrf.mxu0
    %v2806 = vadd.f32 0.0, %v2805
    %v2807 = vpop.f32.mrf.mxu0
    %v2808 = vadd.f32 0.0, %v2807
    %2809 = vdwg.mxu0
    %2810 = vmatprep.subr.bf16.mxu0 %v1967
    %2811 = vmatpush1.bf16.msra.mxu0 %v1966
    %2812 = vmatprep.subr.bf16.mxu0 %v1951
    %2813 = vmatpush1.bf16.msra.mxu0 %v1950
    %2814 = vmatprep.subr.bf16.mxu0 %v1935
    %2815 = vmatpush1.bf16.msra.mxu0 %v1934
    %2816 = vmatprep.subr.bf16.mxu0 %v1919
    %2817 = vmatpush1.bf16.msra.mxu0 %v1918
    %2818 = vmatprep.subr.bf16.mxu0 %v1903
    %2819 = vmatpush1.bf16.msra.mxu0 %v1902
    %2820 = vmatprep.subr.bf16.mxu0 %v1887
    %2821 = vmatpush1.bf16.msra.mxu0 %v1886
    %2822 = vmatprep.subr.bf16.mxu0 %v1871
    %2823 = vmatpush1.bf16.msra.mxu0 %v1870
    %2824 = vmatprep.subr.bf16.mxu0 %v1855
    %2825 = vmatpush1.bf16.msra.mxu0 %v1854
    %2826 = vmatprep.subr.bf16.mxu0 %v2095
    %2827 = vmatpush2.bf16.msra.mxu0 %v2094
    %2828 = vmatprep.subr.bf16.mxu0 %v2079
    %2829 = vmatpush2.bf16.msra.mxu0 %v2078
    %2830 = vmatprep.subr.bf16.mxu0 %v2063
    %2831 = vmatpush2.bf16.msra.mxu0 %v2062
    %2832 = vmatprep.subr.bf16.mxu0 %v2047
    %2833 = vmatpush2.bf16.msra.mxu0 %v2046
    %2834 = vmatprep.subr.bf16.mxu0 %v2031
    %2835 = vmatpush2.bf16.msra.mxu0 %v2030
    %2836 = vmatprep.subr.bf16.mxu0 %v2015
    %2837 = vmatpush2.bf16.msra.mxu0 %v2014
    %2838 = vmatprep.subr.bf16.mxu0 %v1999
    %2839 = vmatpush2.bf16.msra.mxu0 %v1998
    %2840 = vmatprep.subr.bf16.mxu0 %v1983
    %2841 = vmatpush2.bf16.msra.mxu0 %v1982
    %2842 = vmatprep.mubr.bf16.mxu0 %v807
    %2843 = vmatmul.mubr.bf16.gmra.mxu0 %v806
    %v2844 = vpop.f32.mrf.mxu0
    %v2845 = vadd.f32 0.0, %v2844
    %v2846 = vpop.f32.mrf.mxu0
    %v2847 = vadd.f32 0.0, %v2846
    %v2848 = vpop.f32.mrf.mxu0
    %v2849 = vadd.f32 0.0, %v2848
    %v2850 = vpop.f32.mrf.mxu0
    %v2851 = vadd.f32 0.0, %v2850
    %2852 = vmatprep.mubr.bf16.mxu0 %v809
    %2853 = vmatmul.mubr.bf16.gmra.mxu0 %v808
    %v2854 = vpop.f32.mrf.mxu0
    %v2855 = vadd.f32 0.0, %v2854
    %v2856 = vpop.f32.mrf.mxu0
    %v2857 = vadd.f32 0.0, %v2856
    %v2858 = vpop.f32.mrf.mxu0
    %v2859 = vadd.f32 0.0, %v2858
    %v2860 = vpop.f32.mrf.mxu0
    %v2861 = vadd.f32 0.0, %v2860
    %2862 = vmatprep.mubr.bf16.mxu0 %v811
    %2863 = vmatmul.mubr.bf16.gmra.mxu0 %v810
    %v2864 = vpop.f32.mrf.mxu0
    %v2865 = vadd.f32 0.0, %v2864
    %v2866 = vpop.f32.mrf.mxu0
    %v2867 = vadd.f32 0.0, %v2866
    %v2868 = vpop.f32.mrf.mxu0
    %v2869 = vadd.f32 0.0, %v2868
    %v2870 = vpop.f32.mrf.mxu0
    %v2871 = vadd.f32 0.0, %v2870
    %2872 = vmatprep.mubr.bf16.mxu0 %v813
    %2873 = vmatmul.mubr.bf16.gmra.mxu0 %v812
    %v2874 = vpop.f32.mrf.mxu0
    %v2875 = vadd.f32 0.0, %v2874
    %v2876 = vpop.f32.mrf.mxu0
    %v2877 = vadd.f32 0.0, %v2876
    %v2878 = vpop.f32.mrf.mxu0
    %v2879 = vadd.f32 0.0, %v2878
    %v2880 = vpop.f32.mrf.mxu0
    %v2881 = vadd.f32 0.0, %v2880
    %2882 = vmatprep.mubr.bf16.mxu0 %v815
    %2883 = vmatmul.mubr.bf16.gmra.mxu0 %v814
    %v2884 = vpop.f32.mrf.mxu0
    %v2885 = vadd.f32 0.0, %v2884
    %v2886 = vpop.f32.mrf.mxu0
    %v2887 = vadd.f32 0.0, %v2886
    %v2888 = vpop.f32.mrf.mxu0
    %v2889 = vadd.f32 0.0, %v2888
    %v2890 = vpop.f32.mrf.mxu0
    %v2891 = vadd.f32 0.0, %v2890
    %2892 = vmatprep.mubr.bf16.mxu0 %v817
    %2893 = vmatmul.mubr.bf16.gmra.mxu0 %v816
    %v2894 = vpop.f32.mrf.mxu0
    %v2895 = vadd.f32 0.0, %v2894
    %v2896 = vpop.f32.mrf.mxu0
    %v2897 = vadd.f32 0.0, %v2896
    %v2898 = vpop.f32.mrf.mxu0
    %v2899 = vadd.f32 0.0, %v2898
    %v2900 = vpop.f32.mrf.mxu0
    %v2901 = vadd.f32 0.0, %v2900
    %2902 = vmatprep.mubr.bf16.mxu0 %v819
    %2903 = vmatmul.mubr.bf16.gmra.mxu0 %v818
    %v2904 = vpop.f32.mrf.mxu0
    %v2905 = vadd.f32 0.0, %v2904
    %v2906 = vpop.f32.mrf.mxu0
    %v2907 = vadd.f32 0.0, %v2906
    %v2908 = vpop.f32.mrf.mxu0
    %v2909 = vadd.f32 0.0, %v2908
    %v2910 = vpop.f32.mrf.mxu0
    %v2911 = vadd.f32 0.0, %v2910
    %2912 = vmatprep.mubr.bf16.mxu0 %v821
    %2913 = vmatmul.mubr.bf16.gmra.mxu0 %v820
    %v2914 = vpop.f32.mrf.mxu0
    %v2915 = vadd.f32 0.0, %v2914
    %v2916 = vpop.f32.mrf.mxu0
    %v2917 = vadd.f32 0.0, %v2916
    %v2918 = vpop.f32.mrf.mxu0
    %v2919 = vadd.f32 0.0, %v2918
    %v2920 = vpop.f32.mrf.mxu0
    %v2921 = vadd.f32 0.0, %v2920
    %2922 = vdwg.mxu0
    %2923 = vmatprep.subr.bf16.mxu0 %v1969
    %2924 = vmatpush1.bf16.msra.mxu0 %v1968
    %2925 = vmatprep.subr.bf16.mxu0 %v1953
    %2926 = vmatpush1.bf16.msra.mxu0 %v1952
    %2927 = vmatprep.subr.bf16.mxu0 %v1937
    %2928 = vmatpush1.bf16.msra.mxu0 %v1936
    %2929 = vmatprep.subr.bf16.mxu0 %v1921
    %2930 = vmatpush1.bf16.msra.mxu0 %v1920
    %2931 = vmatprep.subr.bf16.mxu0 %v1905
    %2932 = vmatpush1.bf16.msra.mxu0 %v1904
    %2933 = vmatprep.subr.bf16.mxu0 %v1889
    %2934 = vmatpush1.bf16.msra.mxu0 %v1888
    %2935 = vmatprep.subr.bf16.mxu0 %v1873
    %2936 = vmatpush1.bf16.msra.mxu0 %v1872
    %2937 = vmatprep.subr.bf16.mxu0 %v1857
    %2938 = vmatpush1.bf16.msra.mxu0 %v1856
    %2939 = vmatprep.subr.bf16.mxu0 %v2097
    %2940 = vmatpush2.bf16.msra.mxu0 %v2096
    %2941 = vmatprep.subr.bf16.mxu0 %v2081
    %2942 = vmatpush2.bf16.msra.mxu0 %v2080
    %2943 = vmatprep.subr.bf16.mxu0 %v2065
    %2944 = vmatpush2.bf16.msra.mxu0 %v2064
    %2945 = vmatprep.subr.bf16.mxu0 %v2049
    %2946 = vmatpush2.bf16.msra.mxu0 %v2048
    %2947 = vmatprep.subr.bf16.mxu0 %v2033
    %2948 = vmatpush2.bf16.msra.mxu0 %v2032
    %2949 = vmatprep.subr.bf16.mxu0 %v2017
    %2950 = vmatpush2.bf16.msra.mxu0 %v2016
    %2951 = vmatprep.subr.bf16.mxu0 %v2001
    %2952 = vmatpush2.bf16.msra.mxu0 %v2000
    %2953 = vmatprep.subr.bf16.mxu0 %v1985
    %2954 = vmatpush2.bf16.msra.mxu0 %v1984
    %2955 = vmatprep.mubr.bf16.mxu0 %v807
    %2956 = vmatmul.mubr.bf16.gmra.mxu0 %v806
    %v2957 = vpop.f32.mrf.mxu0
    %v2958 = vadd.f32 0.0, %v2957
    %v2959 = vpop.f32.mrf.mxu0
    %v2960 = vadd.f32 0.0, %v2959
    %v2961 = vpop.f32.mrf.mxu0
    %v2962 = vadd.f32 0.0, %v2961
    %v2963 = vpop.f32.mrf.mxu0
    %v2964 = vadd.f32 0.0, %v2963
    %2965 = vmatprep.mubr.bf16.mxu0 %v809
    %2966 = vmatmul.mubr.bf16.gmra.mxu0 %v808
    %v2967 = vpop.f32.mrf.mxu0
    %v2968 = vadd.f32 0.0, %v2967
    %v2969 = vpop.f32.mrf.mxu0
    %v2970 = vadd.f32 0.0, %v2969
    %v2971 = vpop.f32.mrf.mxu0
    %v2972 = vadd.f32 0.0, %v2971
    %v2973 = vpop.f32.mrf.mxu0
    %v2974 = vadd.f32 0.0, %v2973
    %2975 = vmatprep.mubr.bf16.mxu0 %v811
    %2976 = vmatmul.mubr.bf16.gmra.mxu0 %v810
    %v2977 = vpop.f32.mrf.mxu0
    %v2978 = vadd.f32 0.0, %v2977
    %v2979 = vpop.f32.mrf.mxu0
    %v2980 = vadd.f32 0.0, %v2979
    %v2981 = vpop.f32.mrf.mxu0
    %v2982 = vadd.f32 0.0, %v2981
    %v2983 = vpop.f32.mrf.mxu0
    %v2984 = vadd.f32 0.0, %v2983
    %2985 = vmatprep.mubr.bf16.mxu0 %v813
    %2986 = vmatmul.mubr.bf16.gmra.mxu0 %v812
    %v2987 = vpop.f32.mrf.mxu0
    %v2988 = vadd.f32 0.0, %v2987
    %v2989 = vpop.f32.mrf.mxu0
    %v2990 = vadd.f32 0.0, %v2989
    %v2991 = vpop.f32.mrf.mxu0
    %v2992 = vadd.f32 0.0, %v2991
    %v2993 = vpop.f32.mrf.mxu0
    %v2994 = vadd.f32 0.0, %v2993
    %2995 = vmatprep.mubr.bf16.mxu0 %v815
    %2996 = vmatmul.mubr.bf16.gmra.mxu0 %v814
    %v2997 = vpop.f32.mrf.mxu0
    %v2998 = vadd.f32 0.0, %v2997
    %v2999 = vpop.f32.mrf.mxu0
    %v3000 = vadd.f32 0.0, %v2999
    %v3001 = vpop.f32.mrf.mxu0
    %v3002 = vadd.f32 0.0, %v3001
    %v3003 = vpop.f32.mrf.mxu0
    %v3004 = vadd.f32 0.0, %v3003
    %3005 = vmatprep.mubr.bf16.mxu0 %v817
    %3006 = vmatmul.mubr.bf16.gmra.mxu0 %v816
    %v3007 = vpop.f32.mrf.mxu0
    %v3008 = vadd.f32 0.0, %v3007
    %v3009 = vpop.f32.mrf.mxu0
    %v3010 = vadd.f32 0.0, %v3009
    %v3011 = vpop.f32.mrf.mxu0
    %v3012 = vadd.f32 0.0, %v3011
    %v3013 = vpop.f32.mrf.mxu0
    %v3014 = vadd.f32 0.0, %v3013
    %3015 = vmatprep.mubr.bf16.mxu0 %v819
    %3016 = vmatmul.mubr.bf16.gmra.mxu0 %v818
    %v3017 = vpop.f32.mrf.mxu0
    %v3018 = vadd.f32 0.0, %v3017
    %v3019 = vpop.f32.mrf.mxu0
    %v3020 = vadd.f32 0.0, %v3019
    %v3021 = vpop.f32.mrf.mxu0
    %v3022 = vadd.f32 0.0, %v3021
    %v3023 = vpop.f32.mrf.mxu0
    %v3024 = vadd.f32 0.0, %v3023
    %3025 = vmatprep.mubr.bf16.mxu0 %v821
    %3026 = vmatmul.mubr.bf16.gmra.mxu0 %v820
    %v3027 = vpop.f32.mrf.mxu0
    %v3028 = vadd.f32 0.0, %v3027
    %v3029 = vpop.f32.mrf.mxu0
    %v3030 = vadd.f32 0.0, %v3029
    %v3031 = vpop.f32.mrf.mxu0
    %v3032 = vadd.f32 0.0, %v3031
    %v3033 = vpop.f32.mrf.mxu0
    %v3034 = vadd.f32 0.0, %v3033
    %3035 = vdwg.mxu0
    %3036 = vmatprep.subr.bf16.mxu0 %v1971
    %3037 = vmatpush1.bf16.msra.mxu0 %v1970
    %3038 = vmatprep.subr.bf16.mxu0 %v1955
    %3039 = vmatpush1.bf16.msra.mxu0 %v1954
    %3040 = vmatprep.subr.bf16.mxu0 %v1939
    %3041 = vmatpush1.bf16.msra.mxu0 %v1938
    %3042 = vmatprep.subr.bf16.mxu0 %v1923
    %3043 = vmatpush1.bf16.msra.mxu0 %v1922
    %3044 = vmatprep.subr.bf16.mxu0 %v1907
    %3045 = vmatpush1.bf16.msra.mxu0 %v1906
    %3046 = vmatprep.subr.bf16.mxu0 %v1891
    %3047 = vmatpush1.bf16.msra.mxu0 %v1890
    %3048 = vmatprep.subr.bf16.mxu0 %v1875
    %3049 = vmatpush1.bf16.msra.mxu0 %v1874
    %3050 = vmatprep.subr.bf16.mxu0 %v1859
    %3051 = vmatpush1.bf16.msra.mxu0 %v1858
    %3052 = vmatprep.subr.bf16.mxu0 %v2099
    %3053 = vmatpush2.bf16.msra.mxu0 %v2098
    %3054 = vmatprep.subr.bf16.mxu0 %v2083
    %3055 = vmatpush2.bf16.msra.mxu0 %v2082
    %3056 = vmatprep.subr.bf16.mxu0 %v2067
    %3057 = vmatpush2.bf16.msra.mxu0 %v2066
    %3058 = vmatprep.subr.bf16.mxu0 %v2051
    %3059 = vmatpush2.bf16.msra.mxu0 %v2050
    %3060 = vmatprep.subr.bf16.mxu0 %v2035
    %3061 = vmatpush2.bf16.msra.mxu0 %v2034
    %3062 = vmatprep.subr.bf16.mxu0 %v2019
    %3063 = vmatpush2.bf16.msra.mxu0 %v2018
    %3064 = vmatprep.subr.bf16.mxu0 %v2003
    %3065 = vmatpush2.bf16.msra.mxu0 %v2002
    %3066 = vmatprep.subr.bf16.mxu0 %v1987
    %3067 = vmatpush2.bf16.msra.mxu0 %v1986
    %3068 = vmatprep.mubr.bf16.mxu0 %v807
    %3069 = vmatmul.mubr.bf16.gmra.mxu0 %v806
    %v3070 = vpop.f32.mrf.mxu0
    %v3071 = vadd.f32 0.0, %v3070
    %v3072 = vpop.f32.mrf.mxu0
    %v3073 = vadd.f32 0.0, %v3072
    %v3074 = vpop.f32.mrf.mxu0
    %v3075 = vadd.f32 0.0, %v3074
    %v3076 = vpop.f32.mrf.mxu0
    %v3077 = vadd.f32 0.0, %v3076
    %3078 = vmatprep.mubr.bf16.mxu0 %v809
    %3079 = vmatmul.mubr.bf16.gmra.mxu0 %v808
    %v3080 = vpop.f32.mrf.mxu0
    %v3081 = vadd.f32 0.0, %v3080
    %v3082 = vpop.f32.mrf.mxu0
    %v3083 = vadd.f32 0.0, %v3082
    %v3084 = vpop.f32.mrf.mxu0
    %v3085 = vadd.f32 0.0, %v3084
    %v3086 = vpop.f32.mrf.mxu0
    %v3087 = vadd.f32 0.0, %v3086
    %3088 = vmatprep.mubr.bf16.mxu0 %v811
    %3089 = vmatmul.mubr.bf16.gmra.mxu0 %v810
    %v3090 = vpop.f32.mrf.mxu0
    %v3091 = vadd.f32 0.0, %v3090
    %v3092 = vpop.f32.mrf.mxu0
    %v3093 = vadd.f32 0.0, %v3092
    %v3094 = vpop.f32.mrf.mxu0
    %v3095 = vadd.f32 0.0, %v3094
    %v3096 = vpop.f32.mrf.mxu0
    %v3097 = vadd.f32 0.0, %v3096
    %3098 = vmatprep.mubr.bf16.mxu0 %v813
    %3099 = vmatmul.mubr.bf16.gmra.mxu0 %v812
    %v3100 = vpop.f32.mrf.mxu0
    %v3101 = vadd.f32 0.0, %v3100
    %v3102 = vpop.f32.mrf.mxu0
    %v3103 = vadd.f32 0.0, %v3102
    %v3104 = vpop.f32.mrf.mxu0
    %v3105 = vadd.f32 0.0, %v3104
    %v3106 = vpop.f32.mrf.mxu0
    %v3107 = vadd.f32 0.0, %v3106
    %3108 = vmatprep.mubr.bf16.mxu0 %v815
    %3109 = vmatmul.mubr.bf16.gmra.mxu0 %v814
    %v3110 = vpop.f32.mrf.mxu0
    %v3111 = vadd.f32 0.0, %v3110
    %v3112 = vpop.f32.mrf.mxu0
    %v3113 = vadd.f32 0.0, %v3112
    %v3114 = vpop.f32.mrf.mxu0
    %v3115 = vadd.f32 0.0, %v3114
    %v3116 = vpop.f32.mrf.mxu0
    %v3117 = vadd.f32 0.0, %v3116
    %3118 = vmatprep.mubr.bf16.mxu0 %v817
    %3119 = vmatmul.mubr.bf16.gmra.mxu0 %v816
    %v3120 = vpop.f32.mrf.mxu0
    %v3121 = vadd.f32 0.0, %v3120
    %v3122 = vpop.f32.mrf.mxu0
    %v3123 = vadd.f32 0.0, %v3122
    %v3124 = vpop.f32.mrf.mxu0
    %v3125 = vadd.f32 0.0, %v3124
    %v3126 = vpop.f32.mrf.mxu0
    %v3127 = vadd.f32 0.0, %v3126
    %3128 = vmatprep.mubr.bf16.mxu0 %v819
    %3129 = vmatmul.mubr.bf16.gmra.mxu0 %v818
    %v3130 = vpop.f32.mrf.mxu0
    %v3131 = vadd.f32 0.0, %v3130
    %v3132 = vpop.f32.mrf.mxu0
    %v3133 = vadd.f32 0.0, %v3132
    %v3134 = vpop.f32.mrf.mxu0
    %v3135 = vadd.f32 0.0, %v3134
    %v3136 = vpop.f32.mrf.mxu0
    %v3137 = vadd.f32 0.0, %v3136
    %3138 = vmatprep.mubr.bf16.mxu0 %v821
    %3139 = vmatmul.mubr.bf16.gmra.mxu0 %v820
    %v3140 = vpop.f32.mrf.mxu0
    %v3141 = vadd.f32 0.0, %v3140
    %v3142 = vpop.f32.mrf.mxu0
    %v3143 = vadd.f32 0.0, %v3142
    %v3144 = vpop.f32.mrf.mxu0
    %v3145 = vadd.f32 0.0, %v3144
    %v3146 = vpop.f32.mrf.mxu0
    %v3147 = vadd.f32 0.0, %v3146
    %3148 = vdwg.mxu0
    %3149 = vmatprep.subr.bf16.mxu0 %v1973
    %3150 = vmatpush1.bf16.msra.mxu0 %v1972
    %3151 = vmatprep.subr.bf16.mxu0 %v1957
    %3152 = vmatpush1.bf16.msra.mxu0 %v1956
    %3153 = vmatprep.subr.bf16.mxu0 %v1941
    %3154 = vmatpush1.bf16.msra.mxu0 %v1940
    %3155 = vmatprep.subr.bf16.mxu0 %v1925
    %3156 = vmatpush1.bf16.msra.mxu0 %v1924
    %3157 = vmatprep.subr.bf16.mxu0 %v1909
    %3158 = vmatpush1.bf16.msra.mxu0 %v1908
    %3159 = vmatprep.subr.bf16.mxu0 %v1893
    %3160 = vmatpush1.bf16.msra.mxu0 %v1892
    %3161 = vmatprep.subr.bf16.mxu0 %v1877
    %3162 = vmatpush1.bf16.msra.mxu0 %v1876
    %3163 = vmatprep.subr.bf16.mxu0 %v1861
    %3164 = vmatpush1.bf16.msra.mxu0 %v1860
    %3165 = vmatprep.subr.bf16.mxu0 %v2101
    %3166 = vmatpush2.bf16.msra.mxu0 %v2100
    %3167 = vmatprep.subr.bf16.mxu0 %v2085
    %3168 = vmatpush2.bf16.msra.mxu0 %v2084
    %3169 = vmatprep.subr.bf16.mxu0 %v2069
    %3170 = vmatpush2.bf16.msra.mxu0 %v2068
    %3171 = vmatprep.subr.bf16.mxu0 %v2053
    %3172 = vmatpush2.bf16.msra.mxu0 %v2052
    %3173 = vmatprep.subr.bf16.mxu0 %v2037
    %3174 = vmatpush2.bf16.msra.mxu0 %v2036
    %3175 = vmatprep.subr.bf16.mxu0 %v2021
    %3176 = vmatpush2.bf16.msra.mxu0 %v2020
    %3177 = vmatprep.subr.bf16.mxu0 %v2005
    %3178 = vmatpush2.bf16.msra.mxu0 %v2004
    %3179 = vmatprep.subr.bf16.mxu0 %v1989
    %3180 = vmatpush2.bf16.msra.mxu0 %v1988
    %3181 = vmatprep.mubr.bf16.mxu0 %v807
    %3182 = vmatmul.mubr.bf16.gmra.mxu0 %v806
    %v3183 = vpop.f32.mrf.mxu0
    %v3184 = vadd.f32 0.0, %v3183
    %v3185 = vpop.f32.mrf.mxu0
    %v3186 = vadd.f32 0.0, %v3185
    %v3187 = vpop.f32.mrf.mxu0
    %v3188 = vadd.f32 0.0, %v3187
    %v3189 = vpop.f32.mrf.mxu0
    %v3190 = vadd.f32 0.0, %v3189
    %3191 = vmatprep.mubr.bf16.mxu0 %v809
    %3192 = vmatmul.mubr.bf16.gmra.mxu0 %v808
    %v3193 = vpop.f32.mrf.mxu0
    %v3194 = vadd.f32 0.0, %v3193
    %v3195 = vpop.f32.mrf.mxu0
    %v3196 = vadd.f32 0.0, %v3195
    %v3197 = vpop.f32.mrf.mxu0
    %v3198 = vadd.f32 0.0, %v3197
    %v3199 = vpop.f32.mrf.mxu0
    %v3200 = vadd.f32 0.0, %v3199
    %3201 = vmatprep.mubr.bf16.mxu0 %v811
    %3202 = vmatmul.mubr.bf16.gmra.mxu0 %v810
    %v3203 = vpop.f32.mrf.mxu0
    %v3204 = vadd.f32 0.0, %v3203
    %v3205 = vpop.f32.mrf.mxu0
    %v3206 = vadd.f32 0.0, %v3205
    %v3207 = vpop.f32.mrf.mxu0
    %v3208 = vadd.f32 0.0, %v3207
    %v3209 = vpop.f32.mrf.mxu0
    %v3210 = vadd.f32 0.0, %v3209
    %3211 = vmatprep.mubr.bf16.mxu0 %v813
    %3212 = vmatmul.mubr.bf16.gmra.mxu0 %v812
    %v3213 = vpop.f32.mrf.mxu0
    %v3214 = vadd.f32 0.0, %v3213
    %v3215 = vpop.f32.mrf.mxu0
    %v3216 = vadd.f32 0.0, %v3215
    %v3217 = vpop.f32.mrf.mxu0
    %v3218 = vadd.f32 0.0, %v3217
    %v3219 = vpop.f32.mrf.mxu0
    %v3220 = vadd.f32 0.0, %v3219
    %3221 = vmatprep.mubr.bf16.mxu0 %v815
    %3222 = vmatmul.mubr.bf16.gmra.mxu0 %v814
    %v3223 = vpop.f32.mrf.mxu0
    %v3224 = vadd.f32 0.0, %v3223
    %v3225 = vpop.f32.mrf.mxu0
    %v3226 = vadd.f32 0.0, %v3225
    %v3227 = vpop.f32.mrf.mxu0
    %v3228 = vadd.f32 0.0, %v3227
    %v3229 = vpop.f32.mrf.mxu0
    %v3230 = vadd.f32 0.0, %v3229
    %3231 = vmatprep.mubr.bf16.mxu0 %v817
    %3232 = vmatmul.mubr.bf16.gmra.mxu0 %v816
    %v3233 = vpop.f32.mrf.mxu0
    %v3234 = vadd.f32 0.0, %v3233
    %v3235 = vpop.f32.mrf.mxu0
    %v3236 = vadd.f32 0.0, %v3235
    %v3237 = vpop.f32.mrf.mxu0
    %v3238 = vadd.f32 0.0, %v3237
    %v3239 = vpop.f32.mrf.mxu0
    %v3240 = vadd.f32 0.0, %v3239
    %3241 = vmatprep.mubr.bf16.mxu0 %v819
    %3242 = vmatmul.mubr.bf16.gmra.mxu0 %v818
    %v3243 = vpop.f32.mrf.mxu0
    %v3244 = vadd.f32 0.0, %v3243
    %v3245 = vpop.f32.mrf.mxu0
    %v3246 = vadd.f32 0.0, %v3245
    %v3247 = vpop.f32.mrf.mxu0
    %v3248 = vadd.f32 0.0, %v3247
    %v3249 = vpop.f32.mrf.mxu0
    %v3250 = vadd.f32 0.0, %v3249
    %3251 = vmatprep.mubr.bf16.mxu0 %v821
    %3252 = vmatmul.mubr.bf16.gmra.mxu0 %v820
    %v3253 = vpop.f32.mrf.mxu0
    %v3254 = vadd.f32 0.0, %v3253
    %v3255 = vpop.f32.mrf.mxu0
    %v3256 = vadd.f32 0.0, %v3255
    %v3257 = vpop.f32.mrf.mxu0
    %v3258 = vadd.f32 0.0, %v3257
    %v3259 = vpop.f32.mrf.mxu0
    %v3260 = vadd.f32 0.0, %v3259
    %3261 = vdwg.mxu0
    %v3262 = vmax.f32 %v2393, %v2397
    %v3263 = vmax.f32 %v3262, %v2403
    %v3264 = vmax.f32 %v3263, %v2407
    %v3265 = vmax.f32 %v3264, %v2413
    %v3266 = vmax.f32 %v3265, %v2417
    %v3267 = vmax.f32 %v3266, %v2423
    %v3268 = vmax.f32 %v3267, %v2427
    %v3269 = vrot.slane %v3268, 4
    %v3270 = vmax.f32 %v3268, %v3269
    %v3271 = vrot.slane %v3270, 2
    %v3272 = vmax.f32 %v3270, %v3271
    %v3273 = vrot.slane %v3272, 1
    %v3274 = vmax.f32 %v3272, %v3273
    %v3275 = vmax.f32 %v2395, %v2399
    %v3276 = vmax.f32 %v3275, %v2405
    %v3277 = vmax.f32 %v3276, %v2409
    %v3278 = vmax.f32 %v3277, %v2415
    %v3279 = vmax.f32 %v3278, %v2419
    %v3280 = vmax.f32 %v3279, %v2425
    %v3281 = vmax.f32 %v3280, %v2429
    %v3282 = vrot.slane %v3281, 4
    %v3283 = vmax.f32 %v3281, %v3282
    %v3284 = vrot.slane %v3283, 2
    %v3285 = vmax.f32 %v3283, %v3284
    %v3286 = vrot.slane %v3285, 1
    %v3287 = vmax.f32 %v3285, %v3286
    %v3288 = vmax.f32 %v2506, %v2510
    %v3289 = vmax.f32 %v3288, %v2516
    %v3290 = vmax.f32 %v3289, %v2520
    %v3291 = vmax.f32 %v3290, %v2526
    %v3292 = vmax.f32 %v3291, %v2530
    %v3293 = vmax.f32 %v3292, %v2536
    %v3294 = vmax.f32 %v3293, %v2540
    %v3295 = vrot.slane %v3294, 4
    %v3296 = vmax.f32 %v3294, %v3295
    %v3297 = vrot.slane %v3296, 2
    %v3298 = vmax.f32 %v3296, %v3297
    %v3299 = vrot.slane %v3298, 1
    %v3300 = vmax.f32 %v3298, %v3299
    %v3301 = vmax.f32 %v2508, %v2512
    %v3302 = vmax.f32 %v3301, %v2518
    %v3303 = vmax.f32 %v3302, %v2522
    %v3304 = vmax.f32 %v3303, %v2528
    %v3305 = vmax.f32 %v3304, %v2532
    %v3306 = vmax.f32 %v3305, %v2538
    %v3307 = vmax.f32 %v3306, %v2542
    %v3308 = vrot.slane %v3307, 4
    %v3309 = vmax.f32 %v3307, %v3308
    %v3310 = vrot.slane %v3309, 2
    %v3311 = vmax.f32 %v3309, %v3310
    %v3312 = vrot.slane %v3311, 1
    %v3313 = vmax.f32 %v3311, %v3312
    %v3314 = vmax.f32 %v2619, %v2623
    %v3315 = vmax.f32 %v3314, %v2629
    %v3316 = vmax.f32 %v3315, %v2633
    %v3317 = vmax.f32 %v3316, %v2639
    %v3318 = vmax.f32 %v3317, %v2643
    %v3319 = vmax.f32 %v3318, %v2649
    %v3320 = vmax.f32 %v3319, %v2653
    %v3321 = vrot.slane %v3320, 4
    %v3322 = vmax.f32 %v3320, %v3321
    %v3323 = vrot.slane %v3322, 2
    %v3324 = vmax.f32 %v3322, %v3323
    %v3325 = vrot.slane %v3324, 1
    %v3326 = vmax.f32 %v3324, %v3325
    %v3327 = vmax.f32 %v2621, %v2625
    %v3328 = vmax.f32 %v3327, %v2631
    %v3329 = vmax.f32 %v3328, %v2635
    %v3330 = vmax.f32 %v3329, %v2641
    %v3331 = vmax.f32 %v3330, %v2645
    %v3332 = vmax.f32 %v3331, %v2651
    %v3333 = vmax.f32 %v3332, %v2655
    %v3334 = vrot.slane %v3333, 4
    %v3335 = vmax.f32 %v3333, %v3334
    %v3336 = vrot.slane %v3335, 2
    %v3337 = vmax.f32 %v3335, %v3336
    %v3338 = vrot.slane %v3337, 1
    %v3339 = vmax.f32 %v3337, %v3338
    %v3340 = vmax.f32 %v2732, %v2736
    %v3341 = vmax.f32 %v3340, %v2742
    %v3342 = vmax.f32 %v3341, %v2746
    %v3343 = vmax.f32 %v3342, %v2752
    %v3344 = vmax.f32 %v3343, %v2756
    %v3345 = vmax.f32 %v3344, %v2762
    %v3346 = vmax.f32 %v3345, %v2766
    %v3347 = vrot.slane %v3346, 4
    %v3348 = vmax.f32 %v3346, %v3347
    %v3349 = vrot.slane %v3348, 2
    %v3350 = vmax.f32 %v3348, %v3349
    %v3351 = vrot.slane %v3350, 1
    %v3352 = vmax.f32 %v3350, %v3351
    %v3353 = vmax.f32 %v2734, %v2738
    %v3354 = vmax.f32 %v3353, %v2744
    %v3355 = vmax.f32 %v3354, %v2748
    %v3356 = vmax.f32 %v3355, %v2754
    %v3357 = vmax.f32 %v3356, %v2758
    %v3358 = vmax.f32 %v3357, %v2764
    %v3359 = vmax.f32 %v3358, %v2768
    %v3360 = vrot.slane %v3359, 4
    %v3361 = vmax.f32 %v3359, %v3360
    %v3362 = vrot.slane %v3361, 2
    %v3363 = vmax.f32 %v3361, %v3362
    %v3364 = vrot.slane %v3363, 1
    %v3365 = vmax.f32 %v3363, %v3364
    %v3366 = vmax.f32 %v2845, %v2849
    %v3367 = vmax.f32 %v3366, %v2855
    %v3368 = vmax.f32 %v3367, %v2859
    %v3369 = vmax.f32 %v3368, %v2865
    %v3370 = vmax.f32 %v3369, %v2869
    %v3371 = vmax.f32 %v3370, %v2875
    %v3372 = vmax.f32 %v3371, %v2879
    %v3373 = vrot.slane %v3372, 4
    %v3374 = vmax.f32 %v3372, %v3373
    %v3375 = vrot.slane %v3374, 2
    %v3376 = vmax.f32 %v3374, %v3375
    %v3377 = vrot.slane %v3376, 1
    %v3378 = vmax.f32 %v3376, %v3377
    %v3379 = vmax.f32 %v2847, %v2851
    %v3380 = vmax.f32 %v3379, %v2857
    %v3381 = vmax.f32 %v3380, %v2861
    %v3382 = vmax.f32 %v3381, %v2867
    %v3383 = vmax.f32 %v3382, %v2871
    %v3384 = vmax.f32 %v3383, %v2877
    %v3385 = vmax.f32 %v3384, %v2881
    %v3386 = vrot.slane %v3385, 4
    %v3387 = vmax.f32 %v3385, %v3386
    %v3388 = vrot.slane %v3387, 2
    %v3389 = vmax.f32 %v3387, %v3388
    %v3390 = vrot.slane %v3389, 1
    %v3391 = vmax.f32 %v3389, %v3390
    %v3392 = vmax.f32 %v2958, %v2962
    %v3393 = vmax.f32 %v3392, %v2968
    %v3394 = vmax.f32 %v3393, %v2972
    %v3395 = vmax.f32 %v3394, %v2978
    %v3396 = vmax.f32 %v3395, %v2982
    %v3397 = vmax.f32 %v3396, %v2988
    %v3398 = vmax.f32 %v3397, %v2992
    %v3399 = vrot.slane %v3398, 4
    %v3400 = vmax.f32 %v3398, %v3399
    %v3401 = vrot.slane %v3400, 2
    %v3402 = vmax.f32 %v3400, %v3401
    %v3403 = vrot.slane %v3402, 1
    %v3404 = vmax.f32 %v3402, %v3403
    %v3405 = vmax.f32 %v2960, %v2964
    %v3406 = vmax.f32 %v3405, %v2970
    %v3407 = vmax.f32 %v3406, %v2974
    %v3408 = vmax.f32 %v3407, %v2980
    %v3409 = vmax.f32 %v3408, %v2984
    %v3410 = vmax.f32 %v3409, %v2990
    %v3411 = vmax.f32 %v3410, %v2994
    %v3412 = vrot.slane %v3411, 4
    %v3413 = vmax.f32 %v3411, %v3412
    %v3414 = vrot.slane %v3413, 2
    %v3415 = vmax.f32 %v3413, %v3414
    %v3416 = vrot.slane %v3415, 1
    %v3417 = vmax.f32 %v3415, %v3416
    %v3418 = vmax.f32 %v3071, %v3075
    %v3419 = vmax.f32 %v3418, %v3081
    %v3420 = vmax.f32 %v3419, %v3085
    %v3421 = vmax.f32 %v3420, %v3091
    %v3422 = vmax.f32 %v3421, %v3095
    %v3423 = vmax.f32 %v3422, %v3101
    %v3424 = vmax.f32 %v3423, %v3105
    %v3425 = vrot.slane %v3424, 4
    %v3426 = vmax.f32 %v3424, %v3425
    %v3427 = vrot.slane %v3426, 2
    %v3428 = vmax.f32 %v3426, %v3427
    %v3429 = vrot.slane %v3428, 1
    %v3430 = vmax.f32 %v3428, %v3429
    %v3431 = vmax.f32 %v3073, %v3077
    %v3432 = vmax.f32 %v3431, %v3083
    %v3433 = vmax.f32 %v3432, %v3087
    %v3434 = vmax.f32 %v3433, %v3093
    %v3435 = vmax.f32 %v3434, %v3097
    %v3436 = vmax.f32 %v3435, %v3103
    %v3437 = vmax.f32 %v3436, %v3107
    %v3438 = vrot.slane %v3437, 4
    %v3439 = vmax.f32 %v3437, %v3438
    %v3440 = vrot.slane %v3439, 2
    %v3441 = vmax.f32 %v3439, %v3440
    %v3442 = vrot.slane %v3441, 1
    %v3443 = vmax.f32 %v3441, %v3442
    %v3444 = vmax.f32 %v3184, %v3188
    %v3445 = vmax.f32 %v3444, %v3194
    %v3446 = vmax.f32 %v3445, %v3198
    %v3447 = vmax.f32 %v3446, %v3204
    %v3448 = vmax.f32 %v3447, %v3208
    %v3449 = vmax.f32 %v3448, %v3214
    %v3450 = vmax.f32 %v3449, %v3218
    %v3451 = vrot.slane %v3450, 4
    %v3452 = vmax.f32 %v3450, %v3451
    %v3453 = vrot.slane %v3452, 2
    %v3454 = vmax.f32 %v3452, %v3453
    %v3455 = vrot.slane %v3454, 1
    %v3456 = vmax.f32 %v3454, %v3455
    %v3457 = vmax.f32 %v3186, %v3190
    %v3458 = vmax.f32 %v3457, %v3196
    %v3459 = vmax.f32 %v3458, %v3200
    %v3460 = vmax.f32 %v3459, %v3206
    %v3461 = vmax.f32 %v3460, %v3210
    %v3462 = vmax.f32 %v3461, %v3216
    %v3463 = vmax.f32 %v3462, %v3220
    %v3464 = vrot.slane %v3463, 4
    %v3465 = vmax.f32 %v3463, %v3464
    %v3466 = vrot.slane %v3465, 2
    %v3467 = vmax.f32 %v3465, %v3466
    %v3468 = vrot.slane %v3467, 1
    %v3469 = vmax.f32 %v3467, %v3468
    %v3470 = vld [vmem:[#allocation2] ss:$2 sm:$0xff]
    %s3471 = scalar_lea.vmem [#allocation2], 16
    %v3472 = vld [vmem:[%s3471] ss:$2 sm:$0xff]
    %v3489 = vcombine.low %v3274, %v3287
    %v3490 = vcombine.low %v3300, %v3313
    %v3491 = vcombine.low %v3326, %v3339
    %v3492 = vcombine.low %v3352, %v3365
    %v3494 = vunpack.c.l.s4 1966171168
    %v3495 = vunpack.c.0.s8 %v3494
    %v3496 = vlaneseq
    %v3497 = vshrl.u32 %v3496, 7
    %v3498 = vsub.s32 %v3495, %v3497
    %v3499 = vrot.slane %v3489, %v3498
    %v3501 = vunpack.c.l.s4 1966171168
    %v3502 = vunpack.c.0.s8 %v3501
    %v3503 = vlaneseq
    %v3504 = vshrl.u32 %v3503, 7
    %v3505 = vsub.s32 %v3502, %v3504
    %v3506 = vrot.slane %v3490, %v3505
    %v3508 = vunpack.c.l.s4 1966171168
    %v3509 = vunpack.c.0.s8 %v3508
    %v3510 = vlaneseq
    %v3511 = vshrl.u32 %v3510, 7
    %v3512 = vsub.s32 %v3509, %v3511
    %v3513 = vrot.slane %v3491, %v3512
    %v3515 = vunpack.c.l.s4 1966171168
    %v3516 = vunpack.c.0.s8 %v3515
    %v3517 = vlaneseq
    %v3518 = vshrl.u32 %v3517, 7
    %v3519 = vsub.s32 %v3516, %v3518
    %v3520 = vrot.slane %v3492, %v3519
    %v3521 = vcombine.low %v3499, %v3506
    %v3522 = vcombine.low %v3513, %v3520
    %v3524 = vunpack.c.l.s4 1966171168
    %v3525 = vunpack.c.0.s8 %v3524
    %v3526 = vlaneseq
    %v3527 = vshrl.u32 %v3526, 7
    %v3528 = vsub.s32 %v3525, %v3527
    %v3529 = vrot.slane %v3521, %v3528
    %v3531 = vunpack.c.l.s4 1966171168
    %v3532 = vunpack.c.0.s8 %v3531
    %v3533 = vlaneseq
    %v3534 = vshrl.u32 %v3533, 7
    %v3535 = vsub.s32 %v3532, %v3534
    %v3536 = vrot.slane %v3522, %v3535
    %v3537 = vcombine.low %v3529, %v3536
    %v3538 = vcombine.low %v3378, %v3391
    %v3539 = vcombine.low %v3404, %v3417
    %v3540 = vcombine.low %v3430, %v3443
    %v3541 = vcombine.low %v3456, %v3469
    %v3543 = vunpack.c.l.s4 1966171168
    %v3544 = vunpack.c.0.s8 %v3543
    %v3545 = vlaneseq
    %v3546 = vshrl.u32 %v3545, 7
    %v3547 = vsub.s32 %v3544, %v3546
    %v3548 = vrot.slane %v3538, %v3547
    %v3550 = vunpack.c.l.s4 1966171168
    %v3551 = vunpack.c.0.s8 %v3550
    %v3552 = vlaneseq
    %v3553 = vshrl.u32 %v3552, 7
    %v3554 = vsub.s32 %v3551, %v3553
    %v3555 = vrot.slane %v3539, %v3554
    %v3557 = vunpack.c.l.s4 1966171168
    %v3558 = vunpack.c.0.s8 %v3557
    %v3559 = vlaneseq
    %v3560 = vshrl.u32 %v3559, 7
    %v3561 = vsub.s32 %v3558, %v3560
    %v3562 = vrot.slane %v3540, %v3561
    %v3564 = vunpack.c.l.s4 1966171168
    %v3565 = vunpack.c.0.s8 %v3564
    %v3566 = vlaneseq
    %v3567 = vshrl.u32 %v3566, 7
    %v3568 = vsub.s32 %v3565, %v3567
    %v3569 = vrot.slane %v3541, %v3568
    %v3570 = vcombine.low %v3548, %v3555
    %v3571 = vcombine.low %v3562, %v3569
    %v3573 = vunpack.c.l.s4 1966171168
    %v3574 = vunpack.c.0.s8 %v3573
    %v3575 = vlaneseq
    %v3576 = vshrl.u32 %v3575, 7
    %v3577 = vsub.s32 %v3574, %v3576
    %v3578 = vrot.slane %v3570, %v3577
    %v3580 = vunpack.c.l.s4 1966171168
    %v3581 = vunpack.c.0.s8 %v3580
    %v3582 = vlaneseq
    %v3583 = vshrl.u32 %v3582, 7
    %v3584 = vsub.s32 %v3581, %v3583
    %v3585 = vrot.slane %v3571, %v3584
    %v3586 = vcombine.low %v3578, %v3585
    %v3589 = vmax.f32 %v3470, %v3537
    %v3590 = vmax.f32 %v3472, %v3586
    %3591 = vst [vmem:[#allocation2] ss:$2 sm:$0xff] %v3589
    %3592 = vst [vmem:[%s3471] ss:$2 sm:$0xff] %v3590
    %v3593 = vmax.f32 %v2433, %v2437
    %v3594 = vmax.f32 %v3593, %v2443
    %v3595 = vmax.f32 %v3594, %v2447
    %v3596 = vmax.f32 %v3595, %v2453
    %v3597 = vmax.f32 %v3596, %v2457
    %v3598 = vmax.f32 %v3597, %v2463
    %v3599 = vmax.f32 %v3598, %v2467
    %v3600 = vrot.slane %v3599, 4
    %v3601 = vmax.f32 %v3599, %v3600
    %v3602 = vrot.slane %v3601, 2
    %v3603 = vmax.f32 %v3601, %v3602
    %v3604 = vrot.slane %v3603, 1
    %v3605 = vmax.f32 %v3603, %v3604
    %v3606 = vmax.f32 %v2435, %v2439
    %v3607 = vmax.f32 %v3606, %v2445
    %v3608 = vmax.f32 %v3607, %v2449
    %v3609 = vmax.f32 %v3608, %v2455
    %v3610 = vmax.f32 %v3609, %v2459
    %v3611 = vmax.f32 %v3610, %v2465
    %v3612 = vmax.f32 %v3611, %v2469
    %v3613 = vrot.slane %v3612, 4
    %v3614 = vmax.f32 %v3612, %v3613
    %v3615 = vrot.slane %v3614, 2
    %v3616 = vmax.f32 %v3614, %v3615
    %v3617 = vrot.slane %v3616, 1
    %v3618 = vmax.f32 %v3616, %v3617
    %v3619 = vmax.f32 %v2546, %v2550
    %v3620 = vmax.f32 %v3619, %v2556
    %v3621 = vmax.f32 %v3620, %v2560
    %v3622 = vmax.f32 %v3621, %v2566
    %v3623 = vmax.f32 %v3622, %v2570
    %v3624 = vmax.f32 %v3623, %v2576
    %v3625 = vmax.f32 %v3624, %v2580
    %v3626 = vrot.slane %v3625, 4
    %v3627 = vmax.f32 %v3625, %v3626
    %v3628 = vrot.slane %v3627, 2
    %v3629 = vmax.f32 %v3627, %v3628
    %v3630 = vrot.slane %v3629, 1
    %v3631 = vmax.f32 %v3629, %v3630
    %v3632 = vmax.f32 %v2548, %v2552
    %v3633 = vmax.f32 %v3632, %v2558
    %v3634 = vmax.f32 %v3633, %v2562
    %v3635 = vmax.f32 %v3634, %v2568
    %v3636 = vmax.f32 %v3635, %v2572
    %v3637 = vmax.f32 %v3636, %v2578
    %v3638 = vmax.f32 %v3637, %v2582
    %v3639 = vrot.slane %v3638, 4
    %v3640 = vmax.f32 %v3638, %v3639
    %v3641 = vrot.slane %v3640, 2
    %v3642 = vmax.f32 %v3640, %v3641
    %v3643 = vrot.slane %v3642, 1
    %v3644 = vmax.f32 %v3642, %v3643
    %v3645 = vmax.f32 %v2659, %v2663
    %v3646 = vmax.f32 %v3645, %v2669
    %v3647 = vmax.f32 %v3646, %v2673
    %v3648 = vmax.f32 %v3647, %v2679
    %v3649 = vmax.f32 %v3648, %v2683
    %v3650 = vmax.f32 %v3649, %v2689
    %v3651 = vmax.f32 %v3650, %v2693
    %v3652 = vrot.slane %v3651, 4
    %v3653 = vmax.f32 %v3651, %v3652
    %v3654 = vrot.slane %v3653, 2
    %v3655 = vmax.f32 %v3653, %v3654
    %v3656 = vrot.slane %v3655, 1
    %v3657 = vmax.f32 %v3655, %v3656
    %v3658 = vmax.f32 %v2661, %v2665
    %v3659 = vmax.f32 %v3658, %v2671
    %v3660 = vmax.f32 %v3659, %v2675
    %v3661 = vmax.f32 %v3660, %v2681
    %v3662 = vmax.f32 %v3661, %v2685
    %v3663 = vmax.f32 %v3662, %v2691
    %v3664 = vmax.f32 %v3663, %v2695
    %v3665 = vrot.slane %v3664, 4
    %v3666 = vmax.f32 %v3664, %v3665
    %v3667 = vrot.slane %v3666, 2
    %v3668 = vmax.f32 %v3666, %v3667
    %v3669 = vrot.slane %v3668, 1
    %v3670 = vmax.f32 %v3668, %v3669
    %v3671 = vmax.f32 %v2772, %v2776
    %v3672 = vmax.f32 %v3671, %v2782
    %v3673 = vmax.f32 %v3672, %v2786
    %v3674 = vmax.f32 %v3673, %v2792
    %v3675 = vmax.f32 %v3674, %v2796
    %v3676 = vmax.f32 %v3675, %v2802
    %v3677 = vmax.f32 %v3676, %v2806
    %v3678 = vrot.slane %v3677, 4
    %v3679 = vmax.f32 %v3677, %v3678
    %v3680 = vrot.slane %v3679, 2
    %v3681 = vmax.f32 %v3679, %v3680
    %v3682 = vrot.slane %v3681, 1
    %v3683 = vmax.f32 %v3681, %v3682
    %v3684 = vmax.f32 %v2774, %v2778
    %v3685 = vmax.f32 %v3684, %v2784
    %v3686 = vmax.f32 %v3685, %v2788
    %v3687 = vmax.f32 %v3686, %v2794
    %v3688 = vmax.f32 %v3687, %v2798
    %v3689 = vmax.f32 %v3688, %v2804
    %v3690 = vmax.f32 %v3689, %v2808
    %v3691 = vrot.slane %v3690, 4
    %v3692 = vmax.f32 %v3690, %v3691
    %v3693 = vrot.slane %v3692, 2
    %v3694 = vmax.f32 %v3692, %v3693
    %v3695 = vrot.slane %v3694, 1
    %v3696 = vmax.f32 %v3694, %v3695
    %v3697 = vmax.f32 %v2885, %v2889
    %v3698 = vmax.f32 %v3697, %v2895
    %v3699 = vmax.f32 %v3698, %v2899
    %v3700 = vmax.f32 %v3699, %v2905
    %v3701 = vmax.f32 %v3700, %v2909
    %v3702 = vmax.f32 %v3701, %v2915
    %v3703 = vmax.f32 %v3702, %v2919
    %v3704 = vrot.slane %v3703, 4
    %v3705 = vmax.f32 %v3703, %v3704
    %v3706 = vrot.slane %v3705, 2
    %v3707 = vmax.f32 %v3705, %v3706
    %v3708 = vrot.slane %v3707, 1
    %v3709 = vmax.f32 %v3707, %v3708
    %v3710 = vmax.f32 %v2887, %v2891
    %v3711 = vmax.f32 %v3710, %v2897
    %v3712 = vmax.f32 %v3711, %v2901
    %v3713 = vmax.f32 %v3712, %v2907
    %v3714 = vmax.f32 %v3713, %v2911
    %v3715 = vmax.f32 %v3714, %v2917
    %v3716 = vmax.f32 %v3715, %v2921
    %v3717 = vrot.slane %v3716, 4
    %v3718 = vmax.f32 %v3716, %v3717
    %v3719 = vrot.slane %v3718, 2
    %v3720 = vmax.f32 %v3718, %v3719
    %v3721 = vrot.slane %v3720, 1
    %v3722 = vmax.f32 %v3720, %v3721
    %v3723 = vmax.f32 %v2998, %v3002
    %v3724 = vmax.f32 %v3723, %v3008
    %v3725 = vmax.f32 %v3724, %v3012
    %v3726 = vmax.f32 %v3725, %v3018
    %v3727 = vmax.f32 %v3726, %v3022
    %v3728 = vmax.f32 %v3727, %v3028
    %v3729 = vmax.f32 %v3728, %v3032
    %v3730 = vrot.slane %v3729, 4
    %v3731 = vmax.f32 %v3729, %v3730
    %v3732 = vrot.slane %v3731, 2
    %v3733 = vmax.f32 %v3731, %v3732
    %v3734 = vrot.slane %v3733, 1
    %v3735 = vmax.f32 %v3733, %v3734
    %v3736 = vmax.f32 %v3000, %v3004
    %v3737 = vmax.f32 %v3736, %v3010
    %v3738 = vmax.f32 %v3737, %v3014
    %v3739 = vmax.f32 %v3738, %v3020
    %v3740 = vmax.f32 %v3739, %v3024
    %v3741 = vmax.f32 %v3740, %v3030
    %v3742 = vmax.f32 %v3741, %v3034
    %v3743 = vrot.slane %v3742, 4
    %v3744 = vmax.f32 %v3742, %v3743
    %v3745 = vrot.slane %v3744, 2
    %v3746 = vmax.f32 %v3744, %v3745
    %v3747 = vrot.slane %v3746, 1
    %v3748 = vmax.f32 %v3746, %v3747
    %v3749 = vmax.f32 %v3111, %v3115
    %v3750 = vmax.f32 %v3749, %v3121
    %v3751 = vmax.f32 %v3750, %v3125
    %v3752 = vmax.f32 %v3751, %v3131
    %v3753 = vmax.f32 %v3752, %v3135
    %v3754 = vmax.f32 %v3753, %v3141
    %v3755 = vmax.f32 %v3754, %v3145
    %v3756 = vrot.slane %v3755, 4
    %v3757 = vmax.f32 %v3755, %v3756
    %v3758 = vrot.slane %v3757, 2
    %v3759 = vmax.f32 %v3757, %v3758
    %v3760 = vrot.slane %v3759, 1
    %v3761 = vmax.f32 %v3759, %v3760
    %v3762 = vmax.f32 %v3113, %v3117
    %v3763 = vmax.f32 %v3762, %v3123
    %v3764 = vmax.f32 %v3763, %v3127
    %v3765 = vmax.f32 %v3764, %v3133
    %v3766 = vmax.f32 %v3765, %v3137
    %v3767 = vmax.f32 %v3766, %v3143
    %v3768 = vmax.f32 %v3767, %v3147
    %v3769 = vrot.slane %v3768, 4
    %v3770 = vmax.f32 %v3768, %v3769
    %v3771 = vrot.slane %v3770, 2
    %v3772 = vmax.f32 %v3770, %v3771
    %v3773 = vrot.slane %v3772, 1
    %v3774 = vmax.f32 %v3772, %v3773
    %v3775 = vmax.f32 %v3224, %v3228
    %v3776 = vmax.f32 %v3775, %v3234
    %v3777 = vmax.f32 %v3776, %v3238
    %v3778 = vmax.f32 %v3777, %v3244
    %v3779 = vmax.f32 %v3778, %v3248
    %v3780 = vmax.f32 %v3779, %v3254
    %v3781 = vmax.f32 %v3780, %v3258
    %v3782 = vrot.slane %v3781, 4
    %v3783 = vmax.f32 %v3781, %v3782
    %v3784 = vrot.slane %v3783, 2
    %v3785 = vmax.f32 %v3783, %v3784
    %v3786 = vrot.slane %v3785, 1
    %v3787 = vmax.f32 %v3785, %v3786
    %v3788 = vmax.f32 %v3226, %v3230
    %v3789 = vmax.f32 %v3788, %v3236
    %v3790 = vmax.f32 %v3789, %v3240
    %v3791 = vmax.f32 %v3790, %v3246
    %v3792 = vmax.f32 %v3791, %v3250
    %v3793 = vmax.f32 %v3792, %v3256
    %v3794 = vmax.f32 %v3793, %v3260
    %v3795 = vrot.slane %v3794, 4
    %v3796 = vmax.f32 %v3794, %v3795
    %v3797 = vrot.slane %v3796, 2
    %v3798 = vmax.f32 %v3796, %v3797
    %v3799 = vrot.slane %v3798, 1
    %v3800 = vmax.f32 %v3798, %v3799
    %s3801 = scalar_lea.vmem [#allocation2], 1
    %v3802 = vld [vmem:[%s3801] ss:$2 sm:$0xff]
    %s3803 = scalar_lea.vmem [#allocation2], 17
    %v3804 = vld [vmem:[%s3803] ss:$2 sm:$0xff]
    %v3821 = vcombine.low %v3605, %v3618
    %v3822 = vcombine.low %v3631, %v3644
    %v3823 = vcombine.low %v3657, %v3670
    %v3824 = vcombine.low %v3683, %v3696
    %v3826 = vunpack.c.l.s4 1966171168
    %v3827 = vunpack.c.0.s8 %v3826
    %v3828 = vlaneseq
    %v3829 = vshrl.u32 %v3828, 7
    %v3830 = vsub.s32 %v3827, %v3829
    %v3831 = vrot.slane %v3821, %v3830
    %v3833 = vunpack.c.l.s4 1966171168
    %v3834 = vunpack.c.0.s8 %v3833
    %v3835 = vlaneseq
    %v3836 = vshrl.u32 %v3835, 7
    %v3837 = vsub.s32 %v3834, %v3836
    %v3838 = vrot.slane %v3822, %v3837
    %v3840 = vunpack.c.l.s4 1966171168
    %v3841 = vunpack.c.0.s8 %v3840
    %v3842 = vlaneseq
    %v3843 = vshrl.u32 %v3842, 7
    %v3844 = vsub.s32 %v3841, %v3843
    %v3845 = vrot.slane %v3823, %v3844
    %v3847 = vunpack.c.l.s4 1966171168
    %v3848 = vunpack.c.0.s8 %v3847
    %v3849 = vlaneseq
    %v3850 = vshrl.u32 %v3849, 7
    %v3851 = vsub.s32 %v3848, %v3850
    %v3852 = vrot.slane %v3824, %v3851
    %v3853 = vcombine.low %v3831, %v3838
    %v3854 = vcombine.low %v3845, %v3852
    %v3856 = vunpack.c.l.s4 1966171168
    %v3857 = vunpack.c.0.s8 %v3856
    %v3858 = vlaneseq
    %v3859 = vshrl.u32 %v3858, 7
    %v3860 = vsub.s32 %v3857, %v3859
    %v3861 = vrot.slane %v3853, %v3860
    %v3863 = vunpack.c.l.s4 1966171168
    %v3864 = vunpack.c.0.s8 %v3863
    %v3865 = vlaneseq
    %v3866 = vshrl.u32 %v3865, 7
    %v3867 = vsub.s32 %v3864, %v3866
    %v3868 = vrot.slane %v3854, %v3867
    %v3869 = vcombine.low %v3861, %v3868
    %v3870 = vcombine.low %v3709, %v3722
    %v3871 = vcombine.low %v3735, %v3748
    %v3872 = vcombine.low %v3761, %v3774
    %v3873 = vcombine.low %v3787, %v3800
    %v3875 = vunpack.c.l.s4 1966171168
    %v3876 = vunpack.c.0.s8 %v3875
    %v3877 = vlaneseq
    %v3878 = vshrl.u32 %v3877, 7
    %v3879 = vsub.s32 %v3876, %v3878
    %v3880 = vrot.slane %v3870, %v3879
    %v3882 = vunpack.c.l.s4 1966171168
    %v3883 = vunpack.c.0.s8 %v3882
    %v3884 = vlaneseq
    %v3885 = vshrl.u32 %v3884, 7
    %v3886 = vsub.s32 %v3883, %v3885
    %v3887 = vrot.slane %v3871, %v3886
    %v3889 = vunpack.c.l.s4 1966171168
    %v3890 = vunpack.c.0.s8 %v3889
    %v3891 = vlaneseq
    %v3892 = vshrl.u32 %v3891, 7
    %v3893 = vsub.s32 %v3890, %v3892
    %v3894 = vrot.slane %v3872, %v3893
    %v3896 = vunpack.c.l.s4 1966171168
    %v3897 = vunpack.c.0.s8 %v3896
    %v3898 = vlaneseq
    %v3899 = vshrl.u32 %v3898, 7
    %v3900 = vsub.s32 %v3897, %v3899
    %v3901 = vrot.slane %v3873, %v3900
    %v3902 = vcombine.low %v3880, %v3887
    %v3903 = vcombine.low %v3894, %v3901
    %v3905 = vunpack.c.l.s4 1966171168
    %v3906 = vunpack.c.0.s8 %v3905
    %v3907 = vlaneseq
    %v3908 = vshrl.u32 %v3907, 7
    %v3909 = vsub.s32 %v3906, %v3908
    %v3910 = vrot.slane %v3902, %v3909
    %v3912 = vunpack.c.l.s4 1966171168
    %v3913 = vunpack.c.0.s8 %v3912
    %v3914 = vlaneseq
    %v3915 = vshrl.u32 %v3914, 7
    %v3916 = vsub.s32 %v3913, %v3915
    %v3917 = vrot.slane %v3903, %v3916
    %v3918 = vcombine.low %v3910, %v3917
    %v3921 = vmax.f32 %v3802, %v3869
    %v3922 = vmax.f32 %v3804, %v3918
    %3923 = vst [vmem:[%s3801] ss:$2 sm:$0xff] %v3921
    %3924 = vst [vmem:[%s3803] ss:$2 sm:$0xff] %v3922
    // Predicated region
    $region102: #{tpu_custom_call.1} parent=1 // pred_check
      %p3925 = pneg %p181
    $region103: #{tpu_custom_call.1} parent=1 // pred_check_branch
      %3927 = sbr.rel (%p3925) target = $region105
    $region104: #{tpu_custom_call.1} parent=1 // pred_region
      %v3928 = vld [vmem:[#allocation2] sm:$0xff]
      %v3929 = vld [vmem:[#allocation2 + $0x8] sm:$0xff]
      %v3930 = vld [vmem:[#allocation2 + $0x10] sm:$0xff]
      %v3931 = vld [vmem:[#allocation2 + $0x18] sm:$0xff]
      %v3932 = vld [vmem:[#allocation12] sm:$0xff]
      %v3933 = vld [vmem:[#allocation12 + $0x8] sm:$0xff]
      %v3936 = vlaneseq
      %v3937 = vshrl.u32 %v3936, 7
      %v3938 = vsub.s32 0, %v3937
      %v3939 = vrot.slane %v3932, %v3938
      %v3940 = vlaneseq
      %v3941 = vshrl.u32 %v3940, 7
      %v3942 = vsub.s32 1, %v3941
      %v3943 = vrot.slane %v3932, %v3942
      %v3944 = vlaneseq
      %v3945 = vshrl.u32 %v3944, 7
      %v3946 = vsub.s32 2, %v3945
      %v3947 = vrot.slane %v3932, %v3946
      %v3948 = vlaneseq
      %v3949 = vshrl.u32 %v3948, 7
      %v3950 = vsub.s32 3, %v3949
      %v3951 = vrot.slane %v3932, %v3950
      %v3952 = vlaneseq
      %v3953 = vshrl.u32 %v3952, 7
      %v3954 = vsub.s32 4, %v3953
      %v3955 = vrot.slane %v3932, %v3954
      %v3956 = vlaneseq
      %v3957 = vshrl.u32 %v3956, 7
      %v3958 = vsub.s32 5, %v3957
      %v3959 = vrot.slane %v3932, %v3958
      %v3960 = vlaneseq
      %v3961 = vshrl.u32 %v3960, 7
      %v3962 = vsub.s32 6, %v3961
      %v3963 = vrot.slane %v3932, %v3962
      %v3964 = vlaneseq
      %v3965 = vshrl.u32 %v3964, 7
      %v3966 = vsub.s32 7, %v3965
      %v3967 = vrot.slane %v3932, %v3966
      %v3968 = vlaneseq
      %v3969 = vshrl.u32 %v3968, 7
      %v3970 = vsub.s32 0, %v3969
      %v3971 = vrot.slane %v3933, %v3970
      %v3972 = vlaneseq
      %v3973 = vshrl.u32 %v3972, 7
      %v3974 = vsub.s32 1, %v3973
      %v3975 = vrot.slane %v3933, %v3974
      %v3976 = vlaneseq
      %v3977 = vshrl.u32 %v3976, 7
      %v3978 = vsub.s32 2, %v3977
      %v3979 = vrot.slane %v3933, %v3978
      %v3980 = vlaneseq
      %v3981 = vshrl.u32 %v3980, 7
      %v3982 = vsub.s32 3, %v3981
      %v3983 = vrot.slane %v3933, %v3982
      %v3984 = vlaneseq
      %v3985 = vshrl.u32 %v3984, 7
      %v3986 = vsub.s32 4, %v3985
      %v3987 = vrot.slane %v3933, %v3986
      %v3988 = vlaneseq
      %v3989 = vshrl.u32 %v3988, 7
      %v3990 = vsub.s32 5, %v3989
      %v3991 = vrot.slane %v3933, %v3990
      %v3992 = vlaneseq
      %v3993 = vshrl.u32 %v3992, 7
      %v3994 = vsub.s32 6, %v3993
      %v3995 = vrot.slane %v3933, %v3994
      %v3996 = vlaneseq
      %v3997 = vshrl.u32 %v3996, 7
      %v3998 = vsub.s32 7, %v3997
      %v3999 = vrot.slane %v3933, %v3998
      %v4000 = vcombine.low %v3939, %v3943
      %v4001 = vcombine.low %v3947, %v3951
      %v4003 = vunpack.c.l.s4 1983009808
      %v4004 = vunpack.c.0.s8 %v4003
      %v4005 = vlaneseq
      %v4006 = vshrl.u32 %v4005, 7
      %v4007 = vsub.s32 %v4004, %v4006
      %v4008 = vrot.slane %v4000, %v4007
      %v4010 = vunpack.c.l.s4 1983009808
      %v4011 = vunpack.c.0.s8 %v4010
      %v4012 = vlaneseq
      %v4013 = vshrl.u32 %v4012, 7
      %v4014 = vsub.s32 %v4011, %v4013
      %v4015 = vrot.slane %v4001, %v4014
      %v4016 = vcombine.low %v4008, %v4015
      %v4017 = vcombine.low %v3955, %v3959
      %v4018 = vcombine.low %v3963, %v3967
      %v4020 = vunpack.c.l.s4 1983009808
      %v4021 = vunpack.c.0.s8 %v4020
      %v4022 = vlaneseq
      %v4023 = vshrl.u32 %v4022, 7
      %v4024 = vsub.s32 %v4021, %v4023
      %v4025 = vrot.slane %v4017, %v4024
      %v4027 = vunpack.c.l.s4 1983009808
      %v4028 = vunpack.c.0.s8 %v4027
      %v4029 = vlaneseq
      %v4030 = vshrl.u32 %v4029, 7
      %v4031 = vsub.s32 %v4028, %v4030
      %v4032 = vrot.slane %v4018, %v4031
      %v4033 = vcombine.low %v4025, %v4032
      %v4034 = vcombine.low %v3971, %v3975
      %v4035 = vcombine.low %v3979, %v3983
      %v4037 = vunpack.c.l.s4 1983009808
      %v4038 = vunpack.c.0.s8 %v4037
      %v4039 = vlaneseq
      %v4040 = vshrl.u32 %v4039, 7
      %v4041 = vsub.s32 %v4038, %v4040
      %v4042 = vrot.slane %v4034, %v4041
      %v4044 = vunpack.c.l.s4 1983009808
      %v4045 = vunpack.c.0.s8 %v4044
      %v4046 = vlaneseq
      %v4047 = vshrl.u32 %v4046, 7
      %v4048 = vsub.s32 %v4045, %v4047
      %v4049 = vrot.slane %v4035, %v4048
      %v4050 = vcombine.low %v4042, %v4049
      %v4051 = vcombine.low %v3987, %v3991
      %v4052 = vcombine.low %v3995, %v3999
      %v4054 = vunpack.c.l.s4 1983009808
      %v4055 = vunpack.c.0.s8 %v4054
      %v4056 = vlaneseq
      %v4057 = vshrl.u32 %v4056, 7
      %v4058 = vsub.s32 %v4055, %v4057
      %v4059 = vrot.slane %v4051, %v4058
      %v4061 = vunpack.c.l.s4 1983009808
      %v4062 = vunpack.c.0.s8 %v4061
      %v4063 = vlaneseq
      %v4064 = vshrl.u32 %v4063, 7
      %v4065 = vsub.s32 %v4062, %v4064
      %v4066 = vrot.slane %v4052, %v4065
      %v4067 = vcombine.low %v4059, %v4066
      %v4072 = vadd.f32 %v3928, %v4016
      %v4073 = vadd.f32 %v3929, %v4033
      %v4074 = vadd.f32 %v3930, %v4050
      %v4075 = vadd.f32 %v3931, %v4067
      %v4080 = vcombine.high %v4072, %v4072
      %v4082 = vunpack.c.l.s4 1983009808
      %v4083 = vunpack.c.0.s8 %v4082
      %v4084 = vlaneseq
      %v4085 = vshrl.u32 %v4084, 7
      %v4086 = vsub.s32 %v4083, %v4085
      %v4087 = vrot.slane %v4072, %v4086
      %v4089 = vunpack.c.l.s4 1983009808
      %v4090 = vunpack.c.0.s8 %v4089
      %v4091 = vlaneseq
      %v4092 = vshrl.u32 %v4091, 7
      %v4093 = vsub.s32 %v4090, %v4092
      %v4094 = vrot.slane %v4080, %v4093
      %v4095 = vcombine.high %v4087, %v4087
      %v4096 = vcombine.high %v4094, %v4094
      %v4097 = vcombine.high %v4073, %v4073
      %v4099 = vunpack.c.l.s4 1983009808
      %v4100 = vunpack.c.0.s8 %v4099
      %v4101 = vlaneseq
      %v4102 = vshrl.u32 %v4101, 7
      %v4103 = vsub.s32 %v4100, %v4102
      %v4104 = vrot.slane %v4073, %v4103
      %v4106 = vunpack.c.l.s4 1983009808
      %v4107 = vunpack.c.0.s8 %v4106
      %v4108 = vlaneseq
      %v4109 = vshrl.u32 %v4108, 7
      %v4110 = vsub.s32 %v4107, %v4109
      %v4111 = vrot.slane %v4097, %v4110
      %v4112 = vcombine.high %v4104, %v4104
      %v4113 = vcombine.high %v4111, %v4111
      %v4114 = vcombine.high %v4074, %v4074
      %v4116 = vunpack.c.l.s4 1983009808
      %v4117 = vunpack.c.0.s8 %v4116
      %v4118 = vlaneseq
      %v4119 = vshrl.u32 %v4118, 7
      %v4120 = vsub.s32 %v4117, %v4119
      %v4121 = vrot.slane %v4074, %v4120
      %v4123 = vunpack.c.l.s4 1983009808
      %v4124 = vunpack.c.0.s8 %v4123
      %v4125 = vlaneseq
      %v4126 = vshrl.u32 %v4125, 7
      %v4127 = vsub.s32 %v4124, %v4126
      %v4128 = vrot.slane %v4114, %v4127
      %v4129 = vcombine.high %v4121, %v4121
      %v4130 = vcombine.high %v4128, %v4128
      %v4131 = vcombine.high %v4075, %v4075
      %v4133 = vunpack.c.l.s4 1983009808
      %v4134 = vunpack.c.0.s8 %v4133
      %v4135 = vlaneseq
      %v4136 = vshrl.u32 %v4135, 7
      %v4137 = vsub.s32 %v4134, %v4136
      %v4138 = vrot.slane %v4075, %v4137
      %v4140 = vunpack.c.l.s4 1983009808
      %v4141 = vunpack.c.0.s8 %v4140
      %v4142 = vlaneseq
      %v4143 = vshrl.u32 %v4142, 7
      %v4144 = vsub.s32 %v4141, %v4143
      %v4145 = vrot.slane %v4131, %v4144
      %v4146 = vcombine.high %v4138, %v4138
      %v4147 = vcombine.high %v4145, %v4145
      %v4164 = vpack.c.bf16 %v4087, %v4087
      %v4165 = vpack.c.bf16 %v4095, %v4095
      %v4166 = vpack.c.bf16 %v4094, %v4094
      %v4167 = vpack.c.bf16 %v4096, %v4096
      %v4168 = vpack.c.bf16 %v4104, %v4104
      %v4169 = vpack.c.bf16 %v4112, %v4112
      %v4170 = vpack.c.bf16 %v4111, %v4111
      %v4171 = vpack.c.bf16 %v4113, %v4113
      %v4172 = vpack.c.bf16 %v4121, %v4121
      %v4173 = vpack.c.bf16 %v4129, %v4129
      %v4174 = vpack.c.bf16 %v4128, %v4128
      %v4175 = vpack.c.bf16 %v4130, %v4130
      %v4176 = vpack.c.bf16 %v4138, %v4138
      %v4177 = vpack.c.bf16 %v4146, %v4146
      %v4178 = vpack.c.bf16 %v4145, %v4145
      %v4179 = vpack.c.bf16 %v4147, %v4147
      %v4180 = vld [vmem:[#allocation14] sm:$0xff]
      %v4181 = vld [vmem:[#allocation14 + $0x8] sm:$0xff]
      %v4182 = vld [vmem:[#allocation14 + $0x10] sm:$0xff]
      %v4183 = vld [vmem:[#allocation14 + $0x18] sm:$0xff]
      %v4184 = vld [vmem:[#allocation14 + $0x20] sm:$0xff]
      %v4185 = vld [vmem:[#allocation14 + $0x28] sm:$0xff]
      %v4186 = vld [vmem:[#allocation14 + $0x30] sm:$0xff]
      %v4187 = vld [vmem:[#allocation14 + $0x38] sm:$0xff]
      %v4188 = vld [vmem:[#allocation14 + $0x40] sm:$0xff]
      %v4189 = vld [vmem:[#allocation14 + $0x48] sm:$0xff]
      %v4190 = vld [vmem:[#allocation14 + $0x50] sm:$0xff]
      %v4191 = vld [vmem:[#allocation14 + $0x58] sm:$0xff]
      %v4192 = vld [vmem:[#allocation14 + $0x60] sm:$0xff]
      %v4193 = vld [vmem:[#allocation14 + $0x68] sm:$0xff]
      %v4194 = vld [vmem:[#allocation14 + $0x70] sm:$0xff]
      %v4195 = vld [vmem:[#allocation14 + $0x78] sm:$0xff]
      %v4196 = vld [vmem:[#allocation14 + $0x80] sm:$0xff]
      %v4197 = vld [vmem:[#allocation14 + $0x88] sm:$0xff]
      %v4198 = vld [vmem:[#allocation14 + $0x90] sm:$0xff]
      %v4199 = vld [vmem:[#allocation14 + $0x98] sm:$0xff]
      %v4200 = vld [vmem:[#allocation14 + $0xa0] sm:$0xff]
      %v4201 = vld [vmem:[#allocation14 + $0xa8] sm:$0xff]
      %v4202 = vld [vmem:[#allocation14 + $0xb0] sm:$0xff]
      %v4203 = vld [vmem:[#allocation14 + $0xb8] sm:$0xff]
      %v4204 = vld [vmem:[#allocation14 + $0xc0] sm:$0xff]
      %v4205 = vld [vmem:[#allocation14 + $0xc8] sm:$0xff]
      %v4206 = vld [vmem:[#allocation14 + $0xd0] sm:$0xff]
      %v4207 = vld [vmem:[#allocation14 + $0xd8] sm:$0xff]
      %v4208 = vld [vmem:[#allocation14 + $0xe0] sm:$0xff]
      %v4209 = vld [vmem:[#allocation14 + $0xe8] sm:$0xff]
      %v4210 = vld [vmem:[#allocation14 + $0xf0] sm:$0xff]
      %v4211 = vld [vmem:[#allocation14 + $0xf8] sm:$0xff]
      %v4212 = vld [vmem:[#allocation14 + $0x100] sm:$0xff]
      %v4213 = vld [vmem:[#allocation14 + $0x108] sm:$0xff]
      %v4214 = vld [vmem:[#allocation14 + $0x110] sm:$0xff]
      %v4215 = vld [vmem:[#allocation14 + $0x118] sm:$0xff]
      %v4216 = vld [vmem:[#allocation14 + $0x120] sm:$0xff]
      %v4217 = vld [vmem:[#allocation14 + $0x128] sm:$0xff]
      %v4218 = vld [vmem:[#allocation14 + $0x130] sm:$0xff]
      %v4219 = vld [vmem:[#allocation14 + $0x138] sm:$0xff]
      %v4220 = vld [vmem:[#allocation14 + $0x140] sm:$0xff]
      %v4221 = vld [vmem:[#allocation14 + $0x148] sm:$0xff]
      %v4222 = vld [vmem:[#allocation14 + $0x150] sm:$0xff]
      %v4223 = vld [vmem:[#allocation14 + $0x158] sm:$0xff]
      %v4224 = vld [vmem:[#allocation14 + $0x160] sm:$0xff]
      %v4225 = vld [vmem:[#allocation14 + $0x168] sm:$0xff]
      %v4226 = vld [vmem:[#allocation14 + $0x170] sm:$0xff]
      %v4227 = vld [vmem:[#allocation14 + $0x178] sm:$0xff]
      %v4228 = vld [vmem:[#allocation14 + $0x180] sm:$0xff]
      %v4229 = vld [vmem:[#allocation14 + $0x188] sm:$0xff]
      %v4230 = vld [vmem:[#allocation14 + $0x190] sm:$0xff]
      %v4231 = vld [vmem:[#allocation14 + $0x198] sm:$0xff]
      %v4232 = vld [vmem:[#allocation14 + $0x1a0] sm:$0xff]
      %v4233 = vld [vmem:[#allocation14 + $0x1a8] sm:$0xff]
      %v4234 = vld [vmem:[#allocation14 + $0x1b0] sm:$0xff]
      %v4235 = vld [vmem:[#allocation14 + $0x1b8] sm:$0xff]
      %v4236 = vld [vmem:[#allocation14 + $0x1c0] sm:$0xff]
      %v4237 = vld [vmem:[#allocation14 + $0x1c8] sm:$0xff]
      %v4238 = vld [vmem:[#allocation14 + $0x1d0] sm:$0xff]
      %v4239 = vld [vmem:[#allocation14 + $0x1d8] sm:$0xff]
      %v4240 = vld [vmem:[#allocation14 + $0x1e0] sm:$0xff]
      %v4241 = vld [vmem:[#allocation14 + $0x1e8] sm:$0xff]
      %v4242 = vld [vmem:[#allocation14 + $0x1f0] sm:$0xff]
      %v4243 = vld [vmem:[#allocation14 + $0x1f8] sm:$0xff]
      %v4244 = vld [vmem:[#allocation14 + $0x200] sm:$0xff]
      %v4245 = vld [vmem:[#allocation14 + $0x208] sm:$0xff]
      %v4246 = vld [vmem:[#allocation14 + $0x210] sm:$0xff]
      %v4247 = vld [vmem:[#allocation14 + $0x218] sm:$0xff]
      %v4248 = vld [vmem:[#allocation14 + $0x220] sm:$0xff]
      %v4249 = vld [vmem:[#allocation14 + $0x228] sm:$0xff]
      %v4250 = vld [vmem:[#allocation14 + $0x230] sm:$0xff]
      %v4251 = vld [vmem:[#allocation14 + $0x238] sm:$0xff]
      %v4252 = vld [vmem:[#allocation14 + $0x240] sm:$0xff]
      %v4253 = vld [vmem:[#allocation14 + $0x248] sm:$0xff]
      %v4254 = vld [vmem:[#allocation14 + $0x250] sm:$0xff]
      %v4255 = vld [vmem:[#allocation14 + $0x258] sm:$0xff]
      %v4256 = vld [vmem:[#allocation14 + $0x260] sm:$0xff]
      %v4257 = vld [vmem:[#allocation14 + $0x268] sm:$0xff]
      %v4258 = vld [vmem:[#allocation14 + $0x270] sm:$0xff]
      %v4259 = vld [vmem:[#allocation14 + $0x278] sm:$0xff]
      %v4260 = vld [vmem:[#allocation14 + $0x280] sm:$0xff]
      %v4261 = vld [vmem:[#allocation14 + $0x288] sm:$0xff]
      %v4262 = vld [vmem:[#allocation14 + $0x290] sm:$0xff]
      %v4263 = vld [vmem:[#allocation14 + $0x298] sm:$0xff]
      %v4264 = vld [vmem:[#allocation14 + $0x2a0] sm:$0xff]
      %v4265 = vld [vmem:[#allocation14 + $0x2a8] sm:$0xff]
      %v4266 = vld [vmem:[#allocation14 + $0x2b0] sm:$0xff]
      %v4267 = vld [vmem:[#allocation14 + $0x2b8] sm:$0xff]
      %v4268 = vld [vmem:[#allocation14 + $0x2c0] sm:$0xff]
      %v4269 = vld [vmem:[#allocation14 + $0x2c8] sm:$0xff]
      %v4270 = vld [vmem:[#allocation14 + $0x2d0] sm:$0xff]
      %v4271 = vld [vmem:[#allocation14 + $0x2d8] sm:$0xff]
      %v4272 = vld [vmem:[#allocation14 + $0x2e0] sm:$0xff]
      %v4273 = vld [vmem:[#allocation14 + $0x2e8] sm:$0xff]
      %v4274 = vld [vmem:[#allocation14 + $0x2f0] sm:$0xff]
      %v4275 = vld [vmem:[#allocation14 + $0x2f8] sm:$0xff]
      %v4276 = vld [vmem:[#allocation14 + $0x300] sm:$0xff]
      %v4277 = vld [vmem:[#allocation14 + $0x308] sm:$0xff]
      %v4278 = vld [vmem:[#allocation14 + $0x310] sm:$0xff]
      %v4279 = vld [vmem:[#allocation14 + $0x318] sm:$0xff]
      %v4280 = vld [vmem:[#allocation14 + $0x320] sm:$0xff]
      %v4281 = vld [vmem:[#allocation14 + $0x328] sm:$0xff]
      %v4282 = vld [vmem:[#allocation14 + $0x330] sm:$0xff]
      %v4283 = vld [vmem:[#allocation14 + $0x338] sm:$0xff]
      %v4284 = vld [vmem:[#allocation14 + $0x340] sm:$0xff]
      %v4285 = vld [vmem:[#allocation14 + $0x348] sm:$0xff]
      %v4286 = vld [vmem:[#allocation14 + $0x350] sm:$0xff]
      %v4287 = vld [vmem:[#allocation14 + $0x358] sm:$0xff]
      %v4288 = vld [vmem:[#allocation14 + $0x360] sm:$0xff]
      %v4289 = vld [vmem:[#allocation14 + $0x368] sm:$0xff]
      %v4290 = vld [vmem:[#allocation14 + $0x370] sm:$0xff]
      %v4291 = vld [vmem:[#allocation14 + $0x378] sm:$0xff]
      %v4292 = vld [vmem:[#allocation14 + $0x380] sm:$0xff]
      %v4293 = vld [vmem:[#allocation14 + $0x388] sm:$0xff]
      %v4294 = vld [vmem:[#allocation14 + $0x390] sm:$0xff]
      %v4295 = vld [vmem:[#allocation14 + $0x398] sm:$0xff]
      %v4296 = vld [vmem:[#allocation14 + $0x3a0] sm:$0xff]
      %v4297 = vld [vmem:[#allocation14 + $0x3a8] sm:$0xff]
      %v4298 = vld [vmem:[#allocation14 + $0x3b0] sm:$0xff]
      %v4299 = vld [vmem:[#allocation14 + $0x3b8] sm:$0xff]
      %v4300 = vld [vmem:[#allocation14 + $0x3c0] sm:$0xff]
      %v4301 = vld [vmem:[#allocation14 + $0x3c8] sm:$0xff]
      %v4302 = vld [vmem:[#allocation14 + $0x3d0] sm:$0xff]
      %v4303 = vld [vmem:[#allocation14 + $0x3d8] sm:$0xff]
      %v4304 = vld [vmem:[#allocation14 + $0x3e0] sm:$0xff]
      %v4305 = vld [vmem:[#allocation14 + $0x3e8] sm:$0xff]
      %v4306 = vld [vmem:[#allocation14 + $0x3f0] sm:$0xff]
      %v4307 = vld [vmem:[#allocation14 + $0x3f8] sm:$0xff]
      %v4308 = vld [vmem:[#allocation14 + $0x400] sm:$0xff]
      %v4309 = vld [vmem:[#allocation14 + $0x408] sm:$0xff]
      %v4310 = vld [vmem:[#allocation14 + $0x410] sm:$0xff]
      %v4311 = vld [vmem:[#allocation14 + $0x418] sm:$0xff]
      %v4312 = vld [vmem:[#allocation14 + $0x420] sm:$0xff]
      %v4313 = vld [vmem:[#allocation14 + $0x428] sm:$0xff]
      %v4314 = vld [vmem:[#allocation14 + $0x430] sm:$0xff]
      %v4315 = vld [vmem:[#allocation14 + $0x438] sm:$0xff]
      %v4316 = vld [vmem:[#allocation14 + $0x440] sm:$0xff]
      %v4317 = vld [vmem:[#allocation14 + $0x448] sm:$0xff]
      %v4318 = vld [vmem:[#allocation14 + $0x450] sm:$0xff]
      %v4319 = vld [vmem:[#allocation14 + $0x458] sm:$0xff]
      %v4320 = vld [vmem:[#allocation14 + $0x460] sm:$0xff]
      %v4321 = vld [vmem:[#allocation14 + $0x468] sm:$0xff]
      %v4322 = vld [vmem:[#allocation14 + $0x470] sm:$0xff]
      %v4323 = vld [vmem:[#allocation14 + $0x478] sm:$0xff]
      %v4324 = vld [vmem:[#allocation14 + $0x480] sm:$0xff]
      %v4325 = vld [vmem:[#allocation14 + $0x488] sm:$0xff]
      %v4326 = vld [vmem:[#allocation14 + $0x490] sm:$0xff]
      %v4327 = vld [vmem:[#allocation14 + $0x498] sm:$0xff]
      %v4328 = vld [vmem:[#allocation14 + $0x4a0] sm:$0xff]
      %v4329 = vld [vmem:[#allocation14 + $0x4a8] sm:$0xff]
      %v4330 = vld [vmem:[#allocation14 + $0x4b0] sm:$0xff]
      %v4331 = vld [vmem:[#allocation14 + $0x4b8] sm:$0xff]
      %v4332 = vld [vmem:[#allocation14 + $0x4c0] sm:$0xff]
      %v4333 = vld [vmem:[#allocation14 + $0x4c8] sm:$0xff]
      %v4334 = vld [vmem:[#allocation14 + $0x4d0] sm:$0xff]
      %v4335 = vld [vmem:[#allocation14 + $0x4d8] sm:$0xff]
      %v4336 = vld [vmem:[#allocation14 + $0x4e0] sm:$0xff]
      %v4337 = vld [vmem:[#allocation14 + $0x4e8] sm:$0xff]
      %v4338 = vld [vmem:[#allocation14 + $0x4f0] sm:$0xff]
      %v4339 = vld [vmem:[#allocation14 + $0x4f8] sm:$0xff]
      %v4340 = vld [vmem:[#allocation14 + $0x500] sm:$0xff]
      %v4341 = vld [vmem:[#allocation14 + $0x508] sm:$0xff]
      %v4342 = vld [vmem:[#allocation14 + $0x510] sm:$0xff]
      %v4343 = vld [vmem:[#allocation14 + $0x518] sm:$0xff]
      %v4344 = vld [vmem:[#allocation14 + $0x520] sm:$0xff]
      %v4345 = vld [vmem:[#allocation14 + $0x528] sm:$0xff]
      %v4346 = vld [vmem:[#allocation14 + $0x530] sm:$0xff]
      %v4347 = vld [vmem:[#allocation14 + $0x538] sm:$0xff]
      %v4348 = vld [vmem:[#allocation14 + $0x540] sm:$0xff]
      %v4349 = vld [vmem:[#allocation14 + $0x548] sm:$0xff]
      %v4350 = vld [vmem:[#allocation14 + $0x550] sm:$0xff]
      %v4351 = vld [vmem:[#allocation14 + $0x558] sm:$0xff]
      %v4352 = vld [vmem:[#allocation14 + $0x560] sm:$0xff]
      %v4353 = vld [vmem:[#allocation14 + $0x568] sm:$0xff]
      %v4354 = vld [vmem:[#allocation14 + $0x570] sm:$0xff]
      %v4355 = vld [vmem:[#allocation14 + $0x578] sm:$0xff]
      %v4356 = vld [vmem:[#allocation14 + $0x580] sm:$0xff]
      %v4357 = vld [vmem:[#allocation14 + $0x588] sm:$0xff]
      %v4358 = vld [vmem:[#allocation14 + $0x590] sm:$0xff]
      %v4359 = vld [vmem:[#allocation14 + $0x598] sm:$0xff]
      %v4360 = vld [vmem:[#allocation14 + $0x5a0] sm:$0xff]
      %v4361 = vld [vmem:[#allocation14 + $0x5a8] sm:$0xff]
      %v4362 = vld [vmem:[#allocation14 + $0x5b0] sm:$0xff]
      %v4363 = vld [vmem:[#allocation14 + $0x5b8] sm:$0xff]
      %v4364 = vld [vmem:[#allocation14 + $0x5c0] sm:$0xff]
      %v4365 = vld [vmem:[#allocation14 + $0x5c8] sm:$0xff]
      %v4366 = vld [vmem:[#allocation14 + $0x5d0] sm:$0xff]
      %v4367 = vld [vmem:[#allocation14 + $0x5d8] sm:$0xff]
      %v4368 = vld [vmem:[#allocation14 + $0x5e0] sm:$0xff]
      %v4369 = vld [vmem:[#allocation14 + $0x5e8] sm:$0xff]
      %v4370 = vld [vmem:[#allocation14 + $0x5f0] sm:$0xff]
      %v4371 = vld [vmem:[#allocation14 + $0x5f8] sm:$0xff]
      %v4372 = vld [vmem:[#allocation14 + $0x600] sm:$0xff]
      %v4373 = vld [vmem:[#allocation14 + $0x608] sm:$0xff]
      %v4374 = vld [vmem:[#allocation14 + $0x610] sm:$0xff]
      %v4375 = vld [vmem:[#allocation14 + $0x618] sm:$0xff]
      %v4376 = vld [vmem:[#allocation14 + $0x620] sm:$0xff]
      %v4377 = vld [vmem:[#allocation14 + $0x628] sm:$0xff]
      %v4378 = vld [vmem:[#allocation14 + $0x630] sm:$0xff]
      %v4379 = vld [vmem:[#allocation14 + $0x638] sm:$0xff]
      %v4380 = vld [vmem:[#allocation14 + $0x640] sm:$0xff]
      %v4381 = vld [vmem:[#allocation14 + $0x648] sm:$0xff]
      %v4382 = vld [vmem:[#allocation14 + $0x650] sm:$0xff]
      %v4383 = vld [vmem:[#allocation14 + $0x658] sm:$0xff]
      %v4384 = vld [vmem:[#allocation14 + $0x660] sm:$0xff]
      %v4385 = vld [vmem:[#allocation14 + $0x668] sm:$0xff]
      %v4386 = vld [vmem:[#allocation14 + $0x670] sm:$0xff]
      %v4387 = vld [vmem:[#allocation14 + $0x678] sm:$0xff]
      %v4388 = vld [vmem:[#allocation14 + $0x680] sm:$0xff]
      %v4389 = vld [vmem:[#allocation14 + $0x688] sm:$0xff]
      %v4390 = vld [vmem:[#allocation14 + $0x690] sm:$0xff]
      %v4391 = vld [vmem:[#allocation14 + $0x698] sm:$0xff]
      %v4392 = vld [vmem:[#allocation14 + $0x6a0] sm:$0xff]
      %v4393 = vld [vmem:[#allocation14 + $0x6a8] sm:$0xff]
      %v4394 = vld [vmem:[#allocation14 + $0x6b0] sm:$0xff]
      %v4395 = vld [vmem:[#allocation14 + $0x6b8] sm:$0xff]
      %v4396 = vld [vmem:[#allocation14 + $0x6c0] sm:$0xff]
      %v4397 = vld [vmem:[#allocation14 + $0x6c8] sm:$0xff]
      %v4398 = vld [vmem:[#allocation14 + $0x6d0] sm:$0xff]
      %v4399 = vld [vmem:[#allocation14 + $0x6d8] sm:$0xff]
      %v4400 = vld [vmem:[#allocation14 + $0x6e0] sm:$0xff]
      %v4401 = vld [vmem:[#allocation14 + $0x6e8] sm:$0xff]
      %v4402 = vld [vmem:[#allocation14 + $0x6f0] sm:$0xff]
      %v4403 = vld [vmem:[#allocation14 + $0x6f8] sm:$0xff]
      %v4404 = vld [vmem:[#allocation14 + $0x700] sm:$0xff]
      %v4405 = vld [vmem:[#allocation14 + $0x708] sm:$0xff]
      %v4406 = vld [vmem:[#allocation14 + $0x710] sm:$0xff]
      %v4407 = vld [vmem:[#allocation14 + $0x718] sm:$0xff]
      %v4408 = vld [vmem:[#allocation14 + $0x720] sm:$0xff]
      %v4409 = vld [vmem:[#allocation14 + $0x728] sm:$0xff]
      %v4410 = vld [vmem:[#allocation14 + $0x730] sm:$0xff]
      %v4411 = vld [vmem:[#allocation14 + $0x738] sm:$0xff]
      %v4412 = vld [vmem:[#allocation14 + $0x740] sm:$0xff]
      %v4413 = vld [vmem:[#allocation14 + $0x748] sm:$0xff]
      %v4414 = vld [vmem:[#allocation14 + $0x750] sm:$0xff]
      %v4415 = vld [vmem:[#allocation14 + $0x758] sm:$0xff]
      %v4416 = vld [vmem:[#allocation14 + $0x760] sm:$0xff]
      %v4417 = vld [vmem:[#allocation14 + $0x768] sm:$0xff]
      %v4418 = vld [vmem:[#allocation14 + $0x770] sm:$0xff]
      %v4419 = vld [vmem:[#allocation14 + $0x778] sm:$0xff]
      %v4420 = vld [vmem:[#allocation14 + $0x780] sm:$0xff]
      %v4421 = vld [vmem:[#allocation14 + $0x788] sm:$0xff]
      %v4422 = vld [vmem:[#allocation14 + $0x790] sm:$0xff]
      %v4423 = vld [vmem:[#allocation14 + $0x798] sm:$0xff]
      %v4424 = vld [vmem:[#allocation14 + $0x7a0] sm:$0xff]
      %v4425 = vld [vmem:[#allocation14 + $0x7a8] sm:$0xff]
      %v4426 = vld [vmem:[#allocation14 + $0x7b0] sm:$0xff]
      %v4427 = vld [vmem:[#allocation14 + $0x7b8] sm:$0xff]
      %v4428 = vld [vmem:[#allocation14 + $0x7c0] sm:$0xff]
      %v4429 = vld [vmem:[#allocation14 + $0x7c8] sm:$0xff]
      %v4430 = vld [vmem:[#allocation14 + $0x7d0] sm:$0xff]
      %v4431 = vld [vmem:[#allocation14 + $0x7d8] sm:$0xff]
      %v4432 = vld [vmem:[#allocation14 + $0x7e0] sm:$0xff]
      %v4433 = vld [vmem:[#allocation14 + $0x7e8] sm:$0xff]
      %v4434 = vld [vmem:[#allocation14 + $0x7f0] sm:$0xff]
      %v4435 = vld [vmem:[#allocation14 + $0x7f8] sm:$0xff]
      %v4436 = vld [vmem:[#allocation14 + $0x800] sm:$0xff]
      %v4437 = vld [vmem:[#allocation14 + $0x808] sm:$0xff]
      %v4438 = vld [vmem:[#allocation14 + $0x810] sm:$0xff]
      %v4439 = vld [vmem:[#allocation14 + $0x818] sm:$0xff]
      %v4440 = vld [vmem:[#allocation14 + $0x820] sm:$0xff]
      %v4441 = vld [vmem:[#allocation14 + $0x828] sm:$0xff]
      %v4442 = vld [vmem:[#allocation14 + $0x830] sm:$0xff]
      %v4443 = vld [vmem:[#allocation14 + $0x838] sm:$0xff]
      %v4444 = vld [vmem:[#allocation14 + $0x840] sm:$0xff]
      %v4445 = vld [vmem:[#allocation14 + $0x848] sm:$0xff]
      %v4446 = vld [vmem:[#allocation14 + $0x850] sm:$0xff]
      %v4447 = vld [vmem:[#allocation14 + $0x858] sm:$0xff]
      %v4448 = vld [vmem:[#allocation14 + $0x860] sm:$0xff]
      %v4449 = vld [vmem:[#allocation14 + $0x868] sm:$0xff]
      %v4450 = vld [vmem:[#allocation14 + $0x870] sm:$0xff]
      %v4451 = vld [vmem:[#allocation14 + $0x878] sm:$0xff]
      %v4452 = vld [vmem:[#allocation14 + $0x880] sm:$0xff]
      %v4453 = vld [vmem:[#allocation14 + $0x888] sm:$0xff]
      %v4454 = vld [vmem:[#allocation14 + $0x890] sm:$0xff]
      %v4455 = vld [vmem:[#allocation14 + $0x898] sm:$0xff]
      %v4456 = vld [vmem:[#allocation14 + $0x8a0] sm:$0xff]
      %v4457 = vld [vmem:[#allocation14 + $0x8a8] sm:$0xff]
      %v4458 = vld [vmem:[#allocation14 + $0x8b0] sm:$0xff]
      %v4459 = vld [vmem:[#allocation14 + $0x8b8] sm:$0xff]
      %v4460 = vld [vmem:[#allocation14 + $0x8c0] sm:$0xff]
      %v4461 = vld [vmem:[#allocation14 + $0x8c8] sm:$0xff]
      %v4462 = vld [vmem:[#allocation14 + $0x8d0] sm:$0xff]
      %v4463 = vld [vmem:[#allocation14 + $0x8d8] sm:$0xff]
      %v4464 = vld [vmem:[#allocation14 + $0x8e0] sm:$0xff]
      %v4465 = vld [vmem:[#allocation14 + $0x8e8] sm:$0xff]
      %v4466 = vld [vmem:[#allocation14 + $0x8f0] sm:$0xff]
      %v4467 = vld [vmem:[#allocation14 + $0x8f8] sm:$0xff]
      %v4468 = vld [vmem:[#allocation14 + $0x900] sm:$0xff]
      %v4469 = vld [vmem:[#allocation14 + $0x908] sm:$0xff]
      %v4470 = vld [vmem:[#allocation14 + $0x910] sm:$0xff]
      %v4471 = vld [vmem:[#allocation14 + $0x918] sm:$0xff]
      %v4472 = vld [vmem:[#allocation14 + $0x920] sm:$0xff]
      %v4473 = vld [vmem:[#allocation14 + $0x928] sm:$0xff]
      %v4474 = vld [vmem:[#allocation14 + $0x930] sm:$0xff]
      %v4475 = vld [vmem:[#allocation14 + $0x938] sm:$0xff]
      %v4476 = vld [vmem:[#allocation14 + $0x940] sm:$0xff]
      %v4477 = vld [vmem:[#allocation14 + $0x948] sm:$0xff]
      %v4478 = vld [vmem:[#allocation14 + $0x950] sm:$0xff]
      %v4479 = vld [vmem:[#allocation14 + $0x958] sm:$0xff]
      %v4480 = vld [vmem:[#allocation14 + $0x960] sm:$0xff]
      %v4481 = vld [vmem:[#allocation14 + $0x968] sm:$0xff]
      %v4482 = vld [vmem:[#allocation14 + $0x970] sm:$0xff]
      %v4483 = vld [vmem:[#allocation14 + $0x978] sm:$0xff]
      %v4484 = vld [vmem:[#allocation14 + $0x980] sm:$0xff]
      %v4485 = vld [vmem:[#allocation14 + $0x988] sm:$0xff]
      %v4486 = vld [vmem:[#allocation14 + $0x990] sm:$0xff]
      %v4487 = vld [vmem:[#allocation14 + $0x998] sm:$0xff]
      %v4488 = vld [vmem:[#allocation14 + $0x9a0] sm:$0xff]
      %v4489 = vld [vmem:[#allocation14 + $0x9a8] sm:$0xff]
      %v4490 = vld [vmem:[#allocation14 + $0x9b0] sm:$0xff]
      %v4491 = vld [vmem:[#allocation14 + $0x9b8] sm:$0xff]
      %v4492 = vld [vmem:[#allocation14 + $0x9c0] sm:$0xff]
      %v4493 = vld [vmem:[#allocation14 + $0x9c8] sm:$0xff]
      %v4494 = vld [vmem:[#allocation14 + $0x9d0] sm:$0xff]
      %v4495 = vld [vmem:[#allocation14 + $0x9d8] sm:$0xff]
      %v4496 = vld [vmem:[#allocation14 + $0x9e0] sm:$0xff]
      %v4497 = vld [vmem:[#allocation14 + $0x9e8] sm:$0xff]
      %v4498 = vld [vmem:[#allocation14 + $0x9f0] sm:$0xff]
      %v4499 = vld [vmem:[#allocation14 + $0x9f8] sm:$0xff]
      %v4500 = vld [vmem:[#allocation14 + $0xa00] sm:$0xff]
      %v4501 = vld [vmem:[#allocation14 + $0xa08] sm:$0xff]
      %v4502 = vld [vmem:[#allocation14 + $0xa10] sm:$0xff]
      %v4503 = vld [vmem:[#allocation14 + $0xa18] sm:$0xff]
      %v4504 = vld [vmem:[#allocation14 + $0xa20] sm:$0xff]
      %v4505 = vld [vmem:[#allocation14 + $0xa28] sm:$0xff]
      %v4506 = vld [vmem:[#allocation14 + $0xa30] sm:$0xff]
      %v4507 = vld [vmem:[#allocation14 + $0xa38] sm:$0xff]
      %v4508 = vld [vmem:[#allocation14 + $0xa40] sm:$0xff]
      %v4509 = vld [vmem:[#allocation14 + $0xa48] sm:$0xff]
      %v4510 = vld [vmem:[#allocation14 + $0xa50] sm:$0xff]
      %v4511 = vld [vmem:[#allocation14 + $0xa58] sm:$0xff]
      %v4512 = vld [vmem:[#allocation14 + $0xa60] sm:$0xff]
      %v4513 = vld [vmem:[#allocation14 + $0xa68] sm:$0xff]
      %v4514 = vld [vmem:[#allocation14 + $0xa70] sm:$0xff]
      %v4515 = vld [vmem:[#allocation14 + $0xa78] sm:$0xff]
      %v4516 = vld [vmem:[#allocation14 + $0xa80] sm:$0xff]
      %v4517 = vld [vmem:[#allocation14 + $0xa88] sm:$0xff]
      %v4518 = vld [vmem:[#allocation14 + $0xa90] sm:$0xff]
      %v4519 = vld [vmem:[#allocation14 + $0xa98] sm:$0xff]
      %v4520 = vld [vmem:[#allocation14 + $0xaa0] sm:$0xff]
      %v4521 = vld [vmem:[#allocation14 + $0xaa8] sm:$0xff]
      %v4522 = vld [vmem:[#allocation14 + $0xab0] sm:$0xff]
      %v4523 = vld [vmem:[#allocation14 + $0xab8] sm:$0xff]
      %v4524 = vld [vmem:[#allocation14 + $0xac0] sm:$0xff]
      %v4525 = vld [vmem:[#allocation14 + $0xac8] sm:$0xff]
      %v4526 = vld [vmem:[#allocation14 + $0xad0] sm:$0xff]
      %v4527 = vld [vmem:[#allocation14 + $0xad8] sm:$0xff]
      %v4528 = vld [vmem:[#allocation14 + $0xae0] sm:$0xff]
      %v4529 = vld [vmem:[#allocation14 + $0xae8] sm:$0xff]
      %v4530 = vld [vmem:[#allocation14 + $0xaf0] sm:$0xff]
      %v4531 = vld [vmem:[#allocation14 + $0xaf8] sm:$0xff]
      %v4532 = vld [vmem:[#allocation14 + $0xb00] sm:$0xff]
      %v4533 = vld [vmem:[#allocation14 + $0xb08] sm:$0xff]
      %v4534 = vld [vmem:[#allocation14 + $0xb10] sm:$0xff]
      %v4535 = vld [vmem:[#allocation14 + $0xb18] sm:$0xff]
      %v4536 = vld [vmem:[#allocation14 + $0xb20] sm:$0xff]
      %v4537 = vld [vmem:[#allocation14 + $0xb28] sm:$0xff]
      %v4538 = vld [vmem:[#allocation14 + $0xb30] sm:$0xff]
      %v4539 = vld [vmem:[#allocation14 + $0xb38] sm:$0xff]
      %v4540 = vld [vmem:[#allocation14 + $0xb40] sm:$0xff]
      %v4541 = vld [vmem:[#allocation14 + $0xb48] sm:$0xff]
      %v4542 = vld [vmem:[#allocation14 + $0xb50] sm:$0xff]
      %v4543 = vld [vmem:[#allocation14 + $0xb58] sm:$0xff]
      %v4544 = vld [vmem:[#allocation14 + $0xb60] sm:$0xff]
      %v4545 = vld [vmem:[#allocation14 + $0xb68] sm:$0xff]
      %v4546 = vld [vmem:[#allocation14 + $0xb70] sm:$0xff]
      %v4547 = vld [vmem:[#allocation14 + $0xb78] sm:$0xff]
      %v4548 = vld [vmem:[#allocation14 + $0xb80] sm:$0xff]
      %v4549 = vld [vmem:[#allocation14 + $0xb88] sm:$0xff]
      %v4550 = vld [vmem:[#allocation14 + $0xb90] sm:$0xff]
      %v4551 = vld [vmem:[#allocation14 + $0xb98] sm:$0xff]
      %v4552 = vld [vmem:[#allocation14 + $0xba0] sm:$0xff]
      %v4553 = vld [vmem:[#allocation14 + $0xba8] sm:$0xff]
      %v4554 = vld [vmem:[#allocation14 + $0xbb0] sm:$0xff]
      %v4555 = vld [vmem:[#allocation14 + $0xbb8] sm:$0xff]
      %v4556 = vld [vmem:[#allocation14 + $0xbc0] sm:$0xff]
      %v4557 = vld [vmem:[#allocation14 + $0xbc8] sm:$0xff]
      %v4558 = vld [vmem:[#allocation14 + $0xbd0] sm:$0xff]
      %v4559 = vld [vmem:[#allocation14 + $0xbd8] sm:$0xff]
      %v4560 = vld [vmem:[#allocation14 + $0xbe0] sm:$0xff]
      %v4561 = vld [vmem:[#allocation14 + $0xbe8] sm:$0xff]
      %v4562 = vld [vmem:[#allocation14 + $0xbf0] sm:$0xff]
      %v4563 = vld [vmem:[#allocation14 + $0xbf8] sm:$0xff]
      %v4564 = vld [vmem:[#allocation14 + $0xc00] sm:$0xff]
      %v4565 = vld [vmem:[#allocation14 + $0xc08] sm:$0xff]
      %v4566 = vld [vmem:[#allocation14 + $0xc10] sm:$0xff]
      %v4567 = vld [vmem:[#allocation14 + $0xc18] sm:$0xff]
      %v4568 = vld [vmem:[#allocation14 + $0xc20] sm:$0xff]
      %v4569 = vld [vmem:[#allocation14 + $0xc28] sm:$0xff]
      %v4570 = vld [vmem:[#allocation14 + $0xc30] sm:$0xff]
      %v4571 = vld [vmem:[#allocation14 + $0xc38] sm:$0xff]
      %v4572 = vld [vmem:[#allocation14 + $0xc40] sm:$0xff]
      %v4573 = vld [vmem:[#allocation14 + $0xc48] sm:$0xff]
      %v4574 = vld [vmem:[#allocation14 + $0xc50] sm:$0xff]
      %v4575 = vld [vmem:[#allocation14 + $0xc58] sm:$0xff]
      %v4576 = vld [vmem:[#allocation14 + $0xc60] sm:$0xff]
      %v4577 = vld [vmem:[#allocation14 + $0xc68] sm:$0xff]
      %v4578 = vld [vmem:[#allocation14 + $0xc70] sm:$0xff]
      %v4579 = vld [vmem:[#allocation14 + $0xc78] sm:$0xff]
      %v4580 = vld [vmem:[#allocation14 + $0xc80] sm:$0xff]
      %v4581 = vld [vmem:[#allocation14 + $0xc88] sm:$0xff]
      %v4582 = vld [vmem:[#allocation14 + $0xc90] sm:$0xff]
      %v4583 = vld [vmem:[#allocation14 + $0xc98] sm:$0xff]
      %v4584 = vld [vmem:[#allocation14 + $0xca0] sm:$0xff]
      %v4585 = vld [vmem:[#allocation14 + $0xca8] sm:$0xff]
      %v4586 = vld [vmem:[#allocation14 + $0xcb0] sm:$0xff]
      %v4587 = vld [vmem:[#allocation14 + $0xcb8] sm:$0xff]
      %v4588 = vld [vmem:[#allocation14 + $0xcc0] sm:$0xff]
      %v4589 = vld [vmem:[#allocation14 + $0xcc8] sm:$0xff]
      %v4590 = vld [vmem:[#allocation14 + $0xcd0] sm:$0xff]
      %v4591 = vld [vmem:[#allocation14 + $0xcd8] sm:$0xff]
      %v4592 = vld [vmem:[#allocation14 + $0xce0] sm:$0xff]
      %v4593 = vld [vmem:[#allocation14 + $0xce8] sm:$0xff]
      %v4594 = vld [vmem:[#allocation14 + $0xcf0] sm:$0xff]
      %v4595 = vld [vmem:[#allocation14 + $0xcf8] sm:$0xff]
      %v4596 = vld [vmem:[#allocation14 + $0xd00] sm:$0xff]
      %v4597 = vld [vmem:[#allocation14 + $0xd08] sm:$0xff]
      %v4598 = vld [vmem:[#allocation14 + $0xd10] sm:$0xff]
      %v4599 = vld [vmem:[#allocation14 + $0xd18] sm:$0xff]
      %v4600 = vld [vmem:[#allocation14 + $0xd20] sm:$0xff]
      %v4601 = vld [vmem:[#allocation14 + $0xd28] sm:$0xff]
      %v4602 = vld [vmem:[#allocation14 + $0xd30] sm:$0xff]
      %v4603 = vld [vmem:[#allocation14 + $0xd38] sm:$0xff]
      %v4604 = vld [vmem:[#allocation14 + $0xd40] sm:$0xff]
      %v4605 = vld [vmem:[#allocation14 + $0xd48] sm:$0xff]
      %v4606 = vld [vmem:[#allocation14 + $0xd50] sm:$0xff]
      %v4607 = vld [vmem:[#allocation14 + $0xd58] sm:$0xff]
      %v4608 = vld [vmem:[#allocation14 + $0xd60] sm:$0xff]
      %v4609 = vld [vmem:[#allocation14 + $0xd68] sm:$0xff]
      %v4610 = vld [vmem:[#allocation14 + $0xd70] sm:$0xff]
      %v4611 = vld [vmem:[#allocation14 + $0xd78] sm:$0xff]
      %v4612 = vld [vmem:[#allocation14 + $0xd80] sm:$0xff]
      %v4613 = vld [vmem:[#allocation14 + $0xd88] sm:$0xff]
      %v4614 = vld [vmem:[#allocation14 + $0xd90] sm:$0xff]
      %v4615 = vld [vmem:[#allocation14 + $0xd98] sm:$0xff]
      %v4616 = vld [vmem:[#allocation14 + $0xda0] sm:$0xff]
      %v4617 = vld [vmem:[#allocation14 + $0xda8] sm:$0xff]
      %v4618 = vld [vmem:[#allocation14 + $0xdb0] sm:$0xff]
      %v4619 = vld [vmem:[#allocation14 + $0xdb8] sm:$0xff]
      %v4620 = vld [vmem:[#allocation14 + $0xdc0] sm:$0xff]
      %v4621 = vld [vmem:[#allocation14 + $0xdc8] sm:$0xff]
      %v4622 = vld [vmem:[#allocation14 + $0xdd0] sm:$0xff]
      %v4623 = vld [vmem:[#allocation14 + $0xdd8] sm:$0xff]
      %v4624 = vld [vmem:[#allocation14 + $0xde0] sm:$0xff]
      %v4625 = vld [vmem:[#allocation14 + $0xde8] sm:$0xff]
      %v4626 = vld [vmem:[#allocation14 + $0xdf0] sm:$0xff]
      %v4627 = vld [vmem:[#allocation14 + $0xdf8] sm:$0xff]
      %v4628 = vld [vmem:[#allocation14 + $0xe00] sm:$0xff]
      %v4629 = vld [vmem:[#allocation14 + $0xe08] sm:$0xff]
      %v4630 = vld [vmem:[#allocation14 + $0xe10] sm:$0xff]
      %v4631 = vld [vmem:[#allocation14 + $0xe18] sm:$0xff]
      %v4632 = vld [vmem:[#allocation14 + $0xe20] sm:$0xff]
      %v4633 = vld [vmem:[#allocation14 + $0xe28] sm:$0xff]
      %v4634 = vld [vmem:[#allocation14 + $0xe30] sm:$0xff]
      %v4635 = vld [vmem:[#allocation14 + $0xe38] sm:$0xff]
      %v4636 = vld [vmem:[#allocation14 + $0xe40] sm:$0xff]
      %v4637 = vld [vmem:[#allocation14 + $0xe48] sm:$0xff]
      %v4638 = vld [vmem:[#allocation14 + $0xe50] sm:$0xff]
      %v4639 = vld [vmem:[#allocation14 + $0xe58] sm:$0xff]
      %v4640 = vld [vmem:[#allocation14 + $0xe60] sm:$0xff]
      %v4641 = vld [vmem:[#allocation14 + $0xe68] sm:$0xff]
      %v4642 = vld [vmem:[#allocation14 + $0xe70] sm:$0xff]
      %v4643 = vld [vmem:[#allocation14 + $0xe78] sm:$0xff]
      %v4644 = vld [vmem:[#allocation14 + $0xe80] sm:$0xff]
      %v4645 = vld [vmem:[#allocation14 + $0xe88] sm:$0xff]
      %v4646 = vld [vmem:[#allocation14 + $0xe90] sm:$0xff]
      %v4647 = vld [vmem:[#allocation14 + $0xe98] sm:$0xff]
      %v4648 = vld [vmem:[#allocation14 + $0xea0] sm:$0xff]
      %v4649 = vld [vmem:[#allocation14 + $0xea8] sm:$0xff]
      %v4650 = vld [vmem:[#allocation14 + $0xeb0] sm:$0xff]
      %v4651 = vld [vmem:[#allocation14 + $0xeb8] sm:$0xff]
      %v4652 = vld [vmem:[#allocation14 + $0xec0] sm:$0xff]
      %v4653 = vld [vmem:[#allocation14 + $0xec8] sm:$0xff]
      %v4654 = vld [vmem:[#allocation14 + $0xed0] sm:$0xff]
      %v4655 = vld [vmem:[#allocation14 + $0xed8] sm:$0xff]
      %v4656 = vld [vmem:[#allocation14 + $0xee0] sm:$0xff]
      %v4657 = vld [vmem:[#allocation14 + $0xee8] sm:$0xff]
      %v4658 = vld [vmem:[#allocation14 + $0xef0] sm:$0xff]
      %v4659 = vld [vmem:[#allocation14 + $0xef8] sm:$0xff]
      %v4660 = vld [vmem:[#allocation14 + $0xf00] sm:$0xff]
      %v4661 = vld [vmem:[#allocation14 + $0xf08] sm:$0xff]
      %v4662 = vld [vmem:[#allocation14 + $0xf10] sm:$0xff]
      %v4663 = vld [vmem:[#allocation14 + $0xf18] sm:$0xff]
      %v4664 = vld [vmem:[#allocation14 + $0xf20] sm:$0xff]
      %v4665 = vld [vmem:[#allocation14 + $0xf28] sm:$0xff]
      %v4666 = vld [vmem:[#allocation14 + $0xf30] sm:$0xff]
      %v4667 = vld [vmem:[#allocation14 + $0xf38] sm:$0xff]
      %v4668 = vld [vmem:[#allocation14 + $0xf40] sm:$0xff]
      %v4669 = vld [vmem:[#allocation14 + $0xf48] sm:$0xff]
      %v4670 = vld [vmem:[#allocation14 + $0xf50] sm:$0xff]
      %v4671 = vld [vmem:[#allocation14 + $0xf58] sm:$0xff]
      %v4672 = vld [vmem:[#allocation14 + $0xf60] sm:$0xff]
      %v4673 = vld [vmem:[#allocation14 + $0xf68] sm:$0xff]
      %v4674 = vld [vmem:[#allocation14 + $0xf70] sm:$0xff]
      %v4675 = vld [vmem:[#allocation14 + $0xf78] sm:$0xff]
      %v4676 = vld [vmem:[#allocation14 + $0xf80] sm:$0xff]
      %v4677 = vld [vmem:[#allocation14 + $0xf88] sm:$0xff]
      %v4678 = vld [vmem:[#allocation14 + $0xf90] sm:$0xff]
      %v4679 = vld [vmem:[#allocation14 + $0xf98] sm:$0xff]
      %v4680 = vld [vmem:[#allocation14 + $0xfa0] sm:$0xff]
      %v4681 = vld [vmem:[#allocation14 + $0xfa8] sm:$0xff]
      %v4682 = vld [vmem:[#allocation14 + $0xfb0] sm:$0xff]
      %v4683 = vld [vmem:[#allocation14 + $0xfb8] sm:$0xff]
      %v4684 = vld [vmem:[#allocation14 + $0xfc0] sm:$0xff]
      %v4685 = vld [vmem:[#allocation14 + $0xfc8] sm:$0xff]
      %v4686 = vld [vmem:[#allocation14 + $0xfd0] sm:$0xff]
      %v4687 = vld [vmem:[#allocation14 + $0xfd8] sm:$0xff]
      %v4688 = vld [vmem:[#allocation14 + $0xfe0] sm:$0xff]
      %v4689 = vld [vmem:[#allocation14 + $0xfe8] sm:$0xff]
      %v4690 = vld [vmem:[#allocation14 + $0xff0] sm:$0xff]
      %v4691 = vld [vmem:[#allocation14 + $0xff8] sm:$0xff]
      %v4692 = vld [vmem:[#allocation15] sm:$0xf]
      %v4694 = vlaneseq
      %v4695 = vshrl.u32 %v4694, 7
      %v4696 = vsub.s32 0, %v4695
      %v4697 = vrot.slane %v4692, %v4696
      %v4698 = vlaneseq
      %v4699 = vshrl.u32 %v4698, 7
      %v4700 = vsub.s32 1, %v4699
      %v4701 = vrot.slane %v4692, %v4700
      %v4702 = vlaneseq
      %v4703 = vshrl.u32 %v4702, 7
      %v4704 = vsub.s32 2, %v4703
      %v4705 = vrot.slane %v4692, %v4704
      %v4706 = vlaneseq
      %v4707 = vshrl.u32 %v4706, 7
      %v4708 = vsub.s32 3, %v4707
      %v4709 = vrot.slane %v4692, %v4708
      %v5226 = vunpack.c.l.b16 %v4180
      %v5227 = vunpack.c.h.b16 %v4180
      %v5228 = vunpack.c.l.b16 %v4181
      %v5229 = vunpack.c.h.b16 %v4181
      %v5230 = vunpack.c.l.b16 %v4182
      %v5231 = vunpack.c.h.b16 %v4182
      %v5232 = vunpack.c.l.b16 %v4183
      %v5233 = vunpack.c.h.b16 %v4183
      %v5234 = vunpack.c.l.b16 %v4184
      %v5235 = vunpack.c.h.b16 %v4184
      %v5236 = vunpack.c.l.b16 %v4185
      %v5237 = vunpack.c.h.b16 %v4185
      %v5238 = vunpack.c.l.b16 %v4186
      %v5239 = vunpack.c.h.b16 %v4186
      %v5240 = vunpack.c.l.b16 %v4187
      %v5241 = vunpack.c.h.b16 %v4187
      %v5242 = vunpack.c.l.b16 %v4188
      %v5243 = vunpack.c.h.b16 %v4188
      %v5244 = vunpack.c.l.b16 %v4189
      %v5245 = vunpack.c.h.b16 %v4189
      %v5246 = vunpack.c.l.b16 %v4190
      %v5247 = vunpack.c.h.b16 %v4190
      %v5248 = vunpack.c.l.b16 %v4191
      %v5249 = vunpack.c.h.b16 %v4191
      %v5250 = vunpack.c.l.b16 %v4192
      %v5251 = vunpack.c.h.b16 %v4192
      %v5252 = vunpack.c.l.b16 %v4193
      %v5253 = vunpack.c.h.b16 %v4193
      %v5254 = vunpack.c.l.b16 %v4194
      %v5255 = vunpack.c.h.b16 %v4194
      %v5256 = vunpack.c.l.b16 %v4195
      %v5257 = vunpack.c.h.b16 %v4195
      %v5258 = vunpack.c.l.b16 %v4196
      %v5259 = vunpack.c.h.b16 %v4196
      %v5260 = vunpack.c.l.b16 %v4197
      %v5261 = vunpack.c.h.b16 %v4197
      %v5262 = vunpack.c.l.b16 %v4198
      %v5263 = vunpack.c.h.b16 %v4198
      %v5264 = vunpack.c.l.b16 %v4199
      %v5265 = vunpack.c.h.b16 %v4199
      %v5266 = vunpack.c.l.b16 %v4200
      %v5267 = vunpack.c.h.b16 %v4200
      %v5268 = vunpack.c.l.b16 %v4201
      %v5269 = vunpack.c.h.b16 %v4201
      %v5270 = vunpack.c.l.b16 %v4202
      %v5271 = vunpack.c.h.b16 %v4202
      %v5272 = vunpack.c.l.b16 %v4203
      %v5273 = vunpack.c.h.b16 %v4203
      %v5274 = vunpack.c.l.b16 %v4204
      %v5275 = vunpack.c.h.b16 %v4204
      %v5276 = vunpack.c.l.b16 %v4205
      %v5277 = vunpack.c.h.b16 %v4205
      %v5278 = vunpack.c.l.b16 %v4206
      %v5279 = vunpack.c.h.b16 %v4206
      %v5280 = vunpack.c.l.b16 %v4207
      %v5281 = vunpack.c.h.b16 %v4207
      %v5282 = vunpack.c.l.b16 %v4208
      %v5283 = vunpack.c.h.b16 %v4208
      %v5284 = vunpack.c.l.b16 %v4209
      %v5285 = vunpack.c.h.b16 %v4209
      %v5286 = vunpack.c.l.b16 %v4210
      %v5287 = vunpack.c.h.b16 %v4210
      %v5288 = vunpack.c.l.b16 %v4211
      %v5289 = vunpack.c.h.b16 %v4211
      %v5290 = vunpack.c.l.b16 %v4212
      %v5291 = vunpack.c.h.b16 %v4212
      %v5292 = vunpack.c.l.b16 %v4213
      %v5293 = vunpack.c.h.b16 %v4213
      %v5294 = vunpack.c.l.b16 %v4214
      %v5295 = vunpack.c.h.b16 %v4214
      %v5296 = vunpack.c.l.b16 %v4215
      %v5297 = vunpack.c.h.b16 %v4215
      %v5298 = vunpack.c.l.b16 %v4216
      %v5299 = vunpack.c.h.b16 %v4216
      %v5300 = vunpack.c.l.b16 %v4217
      %v5301 = vunpack.c.h.b16 %v4217
      %v5302 = vunpack.c.l.b16 %v4218
      %v5303 = vunpack.c.h.b16 %v4218
      %v5304 = vunpack.c.l.b16 %v4219
      %v5305 = vunpack.c.h.b16 %v4219
      %v5306 = vunpack.c.l.b16 %v4220
      %v5307 = vunpack.c.h.b16 %v4220
      %v5308 = vunpack.c.l.b16 %v4221
      %v5309 = vunpack.c.h.b16 %v4221
      %v5310 = vunpack.c.l.b16 %v4222
      %v5311 = vunpack.c.h.b16 %v4222
      %v5312 = vunpack.c.l.b16 %v4223
      %v5313 = vunpack.c.h.b16 %v4223
      %v5314 = vunpack.c.l.b16 %v4224
      %v5315 = vunpack.c.h.b16 %v4224
      %v5316 = vunpack.c.l.b16 %v4225
      %v5317 = vunpack.c.h.b16 %v4225
      %v5318 = vunpack.c.l.b16 %v4226
      %v5319 = vunpack.c.h.b16 %v4226
      %v5320 = vunpack.c.l.b16 %v4227
      %v5321 = vunpack.c.h.b16 %v4227
      %v5322 = vunpack.c.l.b16 %v4228
      %v5323 = vunpack.c.h.b16 %v4228
      %v5324 = vunpack.c.l.b16 %v4229
      %v5325 = vunpack.c.h.b16 %v4229
      %v5326 = vunpack.c.l.b16 %v4230
      %v5327 = vunpack.c.h.b16 %v4230
      %v5328 = vunpack.c.l.b16 %v4231
      %v5329 = vunpack.c.h.b16 %v4231
      %v5330 = vunpack.c.l.b16 %v4232
      %v5331 = vunpack.c.h.b16 %v4232
      %v5332 = vunpack.c.l.b16 %v4233
      %v5333 = vunpack.c.h.b16 %v4233
      %v5334 = vunpack.c.l.b16 %v4234
      %v5335 = vunpack.c.h.b16 %v4234
      %v5336 = vunpack.c.l.b16 %v4235
      %v5337 = vunpack.c.h.b16 %v4235
      %v5338 = vunpack.c.l.b16 %v4236
      %v5339 = vunpack.c.h.b16 %v4236
      %v5340 = vunpack.c.l.b16 %v4237
      %v5341 = vunpack.c.h.b16 %v4237
      %v5342 = vunpack.c.l.b16 %v4238
      %v5343 = vunpack.c.h.b16 %v4238
      %v5344 = vunpack.c.l.b16 %v4239
      %v5345 = vunpack.c.h.b16 %v4239
      %v5346 = vunpack.c.l.b16 %v4240
      %v5347 = vunpack.c.h.b16 %v4240
      %v5348 = vunpack.c.l.b16 %v4241
      %v5349 = vunpack.c.h.b16 %v4241
      %v5350 = vunpack.c.l.b16 %v4242
      %v5351 = vunpack.c.h.b16 %v4242
      %v5352 = vunpack.c.l.b16 %v4243
      %v5353 = vunpack.c.h.b16 %v4243
      %v5354 = vunpack.c.l.b16 %v4244
      %v5355 = vunpack.c.h.b16 %v4244
      %v5356 = vunpack.c.l.b16 %v4245
      %v5357 = vunpack.c.h.b16 %v4245
      %v5358 = vunpack.c.l.b16 %v4246
      %v5359 = vunpack.c.h.b16 %v4246
      %v5360 = vunpack.c.l.b16 %v4247
      %v5361 = vunpack.c.h.b16 %v4247
      %v5362 = vunpack.c.l.b16 %v4248
      %v5363 = vunpack.c.h.b16 %v4248
      %v5364 = vunpack.c.l.b16 %v4249
      %v5365 = vunpack.c.h.b16 %v4249
      %v5366 = vunpack.c.l.b16 %v4250
      %v5367 = vunpack.c.h.b16 %v4250
      %v5368 = vunpack.c.l.b16 %v4251
      %v5369 = vunpack.c.h.b16 %v4251
      %v5370 = vunpack.c.l.b16 %v4252
      %v5371 = vunpack.c.h.b16 %v4252
      %v5372 = vunpack.c.l.b16 %v4253
      %v5373 = vunpack.c.h.b16 %v4253
      %v5374 = vunpack.c.l.b16 %v4254
      %v5375 = vunpack.c.h.b16 %v4254
      %v5376 = vunpack.c.l.b16 %v4255
      %v5377 = vunpack.c.h.b16 %v4255
      %v5378 = vunpack.c.l.b16 %v4256
      %v5379 = vunpack.c.h.b16 %v4256
      %v5380 = vunpack.c.l.b16 %v4257
      %v5381 = vunpack.c.h.b16 %v4257
      %v5382 = vunpack.c.l.b16 %v4258
      %v5383 = vunpack.c.h.b16 %v4258
      %v5384 = vunpack.c.l.b16 %v4259
      %v5385 = vunpack.c.h.b16 %v4259
      %v5386 = vunpack.c.l.b16 %v4260
      %v5387 = vunpack.c.h.b16 %v4260
      %v5388 = vunpack.c.l.b16 %v4261
      %v5389 = vunpack.c.h.b16 %v4261
      %v5390 = vunpack.c.l.b16 %v4262
      %v5391 = vunpack.c.h.b16 %v4262
      %v5392 = vunpack.c.l.b16 %v4263
      %v5393 = vunpack.c.h.b16 %v4263
      %v5394 = vunpack.c.l.b16 %v4264
      %v5395 = vunpack.c.h.b16 %v4264
      %v5396 = vunpack.c.l.b16 %v4265
      %v5397 = vunpack.c.h.b16 %v4265
      %v5398 = vunpack.c.l.b16 %v4266
      %v5399 = vunpack.c.h.b16 %v4266
      %v5400 = vunpack.c.l.b16 %v4267
      %v5401 = vunpack.c.h.b16 %v4267
      %v5402 = vunpack.c.l.b16 %v4268
      %v5403 = vunpack.c.h.b16 %v4268
      %v5404 = vunpack.c.l.b16 %v4269
      %v5405 = vunpack.c.h.b16 %v4269
      %v5406 = vunpack.c.l.b16 %v4270
      %v5407 = vunpack.c.h.b16 %v4270
      %v5408 = vunpack.c.l.b16 %v4271
      %v5409 = vunpack.c.h.b16 %v4271
      %v5410 = vunpack.c.l.b16 %v4272
      %v5411 = vunpack.c.h.b16 %v4272
      %v5412 = vunpack.c.l.b16 %v4273
      %v5413 = vunpack.c.h.b16 %v4273
      %v5414 = vunpack.c.l.b16 %v4274
      %v5415 = vunpack.c.h.b16 %v4274
      %v5416 = vunpack.c.l.b16 %v4275
      %v5417 = vunpack.c.h.b16 %v4275
      %v5418 = vunpack.c.l.b16 %v4276
      %v5419 = vunpack.c.h.b16 %v4276
      %v5420 = vunpack.c.l.b16 %v4277
      %v5421 = vunpack.c.h.b16 %v4277
      %v5422 = vunpack.c.l.b16 %v4278
      %v5423 = vunpack.c.h.b16 %v4278
      %v5424 = vunpack.c.l.b16 %v4279
      %v5425 = vunpack.c.h.b16 %v4279
      %v5426 = vunpack.c.l.b16 %v4280
      %v5427 = vunpack.c.h.b16 %v4280
      %v5428 = vunpack.c.l.b16 %v4281
      %v5429 = vunpack.c.h.b16 %v4281
      %v5430 = vunpack.c.l.b16 %v4282
      %v5431 = vunpack.c.h.b16 %v4282
      %v5432 = vunpack.c.l.b16 %v4283
      %v5433 = vunpack.c.h.b16 %v4283
      %v5434 = vunpack.c.l.b16 %v4284
      %v5435 = vunpack.c.h.b16 %v4284
      %v5436 = vunpack.c.l.b16 %v4285
      %v5437 = vunpack.c.h.b16 %v4285
      %v5438 = vunpack.c.l.b16 %v4286
      %v5439 = vunpack.c.h.b16 %v4286
      %v5440 = vunpack.c.l.b16 %v4287
      %v5441 = vunpack.c.h.b16 %v4287
      %v5442 = vunpack.c.l.b16 %v4288
      %v5443 = vunpack.c.h.b16 %v4288
      %v5444 = vunpack.c.l.b16 %v4289
      %v5445 = vunpack.c.h.b16 %v4289
      %v5446 = vunpack.c.l.b16 %v4290
      %v5447 = vunpack.c.h.b16 %v4290
      %v5448 = vunpack.c.l.b16 %v4291
      %v5449 = vunpack.c.h.b16 %v4291
      %v5450 = vunpack.c.l.b16 %v4292
      %v5451 = vunpack.c.h.b16 %v4292
      %v5452 = vunpack.c.l.b16 %v4293
      %v5453 = vunpack.c.h.b16 %v4293
      %v5454 = vunpack.c.l.b16 %v4294
      %v5455 = vunpack.c.h.b16 %v4294
      %v5456 = vunpack.c.l.b16 %v4295
      %v5457 = vunpack.c.h.b16 %v4295
      %v5458 = vunpack.c.l.b16 %v4296
      %v5459 = vunpack.c.h.b16 %v4296
      %v5460 = vunpack.c.l.b16 %v4297
      %v5461 = vunpack.c.h.b16 %v4297
      %v5462 = vunpack.c.l.b16 %v4298
      %v5463 = vunpack.c.h.b16 %v4298
      %v5464 = vunpack.c.l.b16 %v4299
      %v5465 = vunpack.c.h.b16 %v4299
      %v5466 = vunpack.c.l.b16 %v4300
      %v5467 = vunpack.c.h.b16 %v4300
      %v5468 = vunpack.c.l.b16 %v4301
      %v5469 = vunpack.c.h.b16 %v4301
      %v5470 = vunpack.c.l.b16 %v4302
      %v5471 = vunpack.c.h.b16 %v4302
      %v5472 = vunpack.c.l.b16 %v4303
      %v5473 = vunpack.c.h.b16 %v4303
      %v5474 = vunpack.c.l.b16 %v4304
      %v5475 = vunpack.c.h.b16 %v4304
      %v5476 = vunpack.c.l.b16 %v4305
      %v5477 = vunpack.c.h.b16 %v4305
      %v5478 = vunpack.c.l.b16 %v4306
      %v5479 = vunpack.c.h.b16 %v4306
      %v5480 = vunpack.c.l.b16 %v4307
      %v5481 = vunpack.c.h.b16 %v4307
      %v5482 = vunpack.c.l.b16 %v4308
      %v5483 = vunpack.c.h.b16 %v4308
      %v5484 = vunpack.c.l.b16 %v4309
      %v5485 = vunpack.c.h.b16 %v4309
      %v5486 = vunpack.c.l.b16 %v4310
      %v5487 = vunpack.c.h.b16 %v4310
      %v5488 = vunpack.c.l.b16 %v4311
      %v5489 = vunpack.c.h.b16 %v4311
      %v5490 = vunpack.c.l.b16 %v4312
      %v5491 = vunpack.c.h.b16 %v4312
      %v5492 = vunpack.c.l.b16 %v4313
      %v5493 = vunpack.c.h.b16 %v4313
      %v5494 = vunpack.c.l.b16 %v4314
      %v5495 = vunpack.c.h.b16 %v4314
      %v5496 = vunpack.c.l.b16 %v4315
      %v5497 = vunpack.c.h.b16 %v4315
      %v5498 = vunpack.c.l.b16 %v4316
      %v5499 = vunpack.c.h.b16 %v4316
      %v5500 = vunpack.c.l.b16 %v4317
      %v5501 = vunpack.c.h.b16 %v4317
      %v5502 = vunpack.c.l.b16 %v4318
      %v5503 = vunpack.c.h.b16 %v4318
      %v5504 = vunpack.c.l.b16 %v4319
      %v5505 = vunpack.c.h.b16 %v4319
      %v5506 = vunpack.c.l.b16 %v4320
      %v5507 = vunpack.c.h.b16 %v4320
      %v5508 = vunpack.c.l.b16 %v4321
      %v5509 = vunpack.c.h.b16 %v4321
      %v5510 = vunpack.c.l.b16 %v4322
      %v5511 = vunpack.c.h.b16 %v4322
      %v5512 = vunpack.c.l.b16 %v4323
      %v5513 = vunpack.c.h.b16 %v4323
      %v5514 = vunpack.c.l.b16 %v4324
      %v5515 = vunpack.c.h.b16 %v4324
      %v5516 = vunpack.c.l.b16 %v4325
      %v5517 = vunpack.c.h.b16 %v4325
      %v5518 = vunpack.c.l.b16 %v4326
      %v5519 = vunpack.c.h.b16 %v4326
      %v5520 = vunpack.c.l.b16 %v4327
      %v5521 = vunpack.c.h.b16 %v4327
      %v5522 = vunpack.c.l.b16 %v4328
      %v5523 = vunpack.c.h.b16 %v4328
      %v5524 = vunpack.c.l.b16 %v4329
      %v5525 = vunpack.c.h.b16 %v4329
      %v5526 = vunpack.c.l.b16 %v4330
      %v5527 = vunpack.c.h.b16 %v4330
      %v5528 = vunpack.c.l.b16 %v4331
      %v5529 = vunpack.c.h.b16 %v4331
      %v5530 = vunpack.c.l.b16 %v4332
      %v5531 = vunpack.c.h.b16 %v4332
      %v5532 = vunpack.c.l.b16 %v4333
      %v5533 = vunpack.c.h.b16 %v4333
      %v5534 = vunpack.c.l.b16 %v4334
      %v5535 = vunpack.c.h.b16 %v4334
      %v5536 = vunpack.c.l.b16 %v4335
      %v5537 = vunpack.c.h.b16 %v4335
      %v5538 = vunpack.c.l.b16 %v4336
      %v5539 = vunpack.c.h.b16 %v4336
      %v5540 = vunpack.c.l.b16 %v4337
      %v5541 = vunpack.c.h.b16 %v4337
      %v5542 = vunpack.c.l.b16 %v4338
      %v5543 = vunpack.c.h.b16 %v4338
      %v5544 = vunpack.c.l.b16 %v4339
      %v5545 = vunpack.c.h.b16 %v4339
      %v5546 = vunpack.c.l.b16 %v4340
      %v5547 = vunpack.c.h.b16 %v4340
      %v5548 = vunpack.c.l.b16 %v4341
      %v5549 = vunpack.c.h.b16 %v4341
      %v5550 = vunpack.c.l.b16 %v4342
      %v5551 = vunpack.c.h.b16 %v4342
      %v5552 = vunpack.c.l.b16 %v4343
      %v5553 = vunpack.c.h.b16 %v4343
      %v5554 = vunpack.c.l.b16 %v4344
      %v5555 = vunpack.c.h.b16 %v4344
      %v5556 = vunpack.c.l.b16 %v4345
      %v5557 = vunpack.c.h.b16 %v4345
      %v5558 = vunpack.c.l.b16 %v4346
      %v5559 = vunpack.c.h.b16 %v4346
      %v5560 = vunpack.c.l.b16 %v4347
      %v5561 = vunpack.c.h.b16 %v4347
      %v5562 = vunpack.c.l.b16 %v4348
      %v5563 = vunpack.c.h.b16 %v4348
      %v5564 = vunpack.c.l.b16 %v4349
      %v5565 = vunpack.c.h.b16 %v4349
      %v5566 = vunpack.c.l.b16 %v4350
      %v5567 = vunpack.c.h.b16 %v4350
      %v5568 = vunpack.c.l.b16 %v4351
      %v5569 = vunpack.c.h.b16 %v4351
      %v5570 = vunpack.c.l.b16 %v4352
      %v5571 = vunpack.c.h.b16 %v4352
      %v5572 = vunpack.c.l.b16 %v4353
      %v5573 = vunpack.c.h.b16 %v4353
      %v5574 = vunpack.c.l.b16 %v4354
      %v5575 = vunpack.c.h.b16 %v4354
      %v5576 = vunpack.c.l.b16 %v4355
      %v5577 = vunpack.c.h.b16 %v4355
      %v5578 = vunpack.c.l.b16 %v4356
      %v5579 = vunpack.c.h.b16 %v4356
      %v5580 = vunpack.c.l.b16 %v4357
      %v5581 = vunpack.c.h.b16 %v4357
      %v5582 = vunpack.c.l.b16 %v4358
      %v5583 = vunpack.c.h.b16 %v4358
      %v5584 = vunpack.c.l.b16 %v4359
      %v5585 = vunpack.c.h.b16 %v4359
      %v5586 = vunpack.c.l.b16 %v4360
      %v5587 = vunpack.c.h.b16 %v4360
      %v5588 = vunpack.c.l.b16 %v4361
      %v5589 = vunpack.c.h.b16 %v4361
      %v5590 = vunpack.c.l.b16 %v4362
      %v5591 = vunpack.c.h.b16 %v4362
      %v5592 = vunpack.c.l.b16 %v4363
      %v5593 = vunpack.c.h.b16 %v4363
      %v5594 = vunpack.c.l.b16 %v4364
      %v5595 = vunpack.c.h.b16 %v4364
      %v5596 = vunpack.c.l.b16 %v4365
      %v5597 = vunpack.c.h.b16 %v4365
      %v5598 = vunpack.c.l.b16 %v4366
      %v5599 = vunpack.c.h.b16 %v4366
      %v5600 = vunpack.c.l.b16 %v4367
      %v5601 = vunpack.c.h.b16 %v4367
      %v5602 = vunpack.c.l.b16 %v4368
      %v5603 = vunpack.c.h.b16 %v4368
      %v5604 = vunpack.c.l.b16 %v4369
      %v5605 = vunpack.c.h.b16 %v4369
      %v5606 = vunpack.c.l.b16 %v4370
      %v5607 = vunpack.c.h.b16 %v4370
      %v5608 = vunpack.c.l.b16 %v4371
      %v5609 = vunpack.c.h.b16 %v4371
      %v5610 = vunpack.c.l.b16 %v4372
      %v5611 = vunpack.c.h.b16 %v4372
      %v5612 = vunpack.c.l.b16 %v4373
      %v5613 = vunpack.c.h.b16 %v4373
      %v5614 = vunpack.c.l.b16 %v4374
      %v5615 = vunpack.c.h.b16 %v4374
      %v5616 = vunpack.c.l.b16 %v4375
      %v5617 = vunpack.c.h.b16 %v4375
      %v5618 = vunpack.c.l.b16 %v4376
      %v5619 = vunpack.c.h.b16 %v4376
      %v5620 = vunpack.c.l.b16 %v4377
      %v5621 = vunpack.c.h.b16 %v4377
      %v5622 = vunpack.c.l.b16 %v4378
      %v5623 = vunpack.c.h.b16 %v4378
      %v5624 = vunpack.c.l.b16 %v4379
      %v5625 = vunpack.c.h.b16 %v4379
      %v5626 = vunpack.c.l.b16 %v4380
      %v5627 = vunpack.c.h.b16 %v4380
      %v5628 = vunpack.c.l.b16 %v4381
      %v5629 = vunpack.c.h.b16 %v4381
      %v5630 = vunpack.c.l.b16 %v4382
      %v5631 = vunpack.c.h.b16 %v4382
      %v5632 = vunpack.c.l.b16 %v4383
      %v5633 = vunpack.c.h.b16 %v4383
      %v5634 = vunpack.c.l.b16 %v4384
      %v5635 = vunpack.c.h.b16 %v4384
      %v5636 = vunpack.c.l.b16 %v4385
      %v5637 = vunpack.c.h.b16 %v4385
      %v5638 = vunpack.c.l.b16 %v4386
      %v5639 = vunpack.c.h.b16 %v4386
      %v5640 = vunpack.c.l.b16 %v4387
      %v5641 = vunpack.c.h.b16 %v4387
      %v5642 = vunpack.c.l.b16 %v4388
      %v5643 = vunpack.c.h.b16 %v4388
      %v5644 = vunpack.c.l.b16 %v4389
      %v5645 = vunpack.c.h.b16 %v4389
      %v5646 = vunpack.c.l.b16 %v4390
      %v5647 = vunpack.c.h.b16 %v4390
      %v5648 = vunpack.c.l.b16 %v4391
      %v5649 = vunpack.c.h.b16 %v4391
      %v5650 = vunpack.c.l.b16 %v4392
      %v5651 = vunpack.c.h.b16 %v4392
      %v5652 = vunpack.c.l.b16 %v4393
      %v5653 = vunpack.c.h.b16 %v4393
      %v5654 = vunpack.c.l.b16 %v4394
      %v5655 = vunpack.c.h.b16 %v4394
      %v5656 = vunpack.c.l.b16 %v4395
      %v5657 = vunpack.c.h.b16 %v4395
      %v5658 = vunpack.c.l.b16 %v4396
      %v5659 = vunpack.c.h.b16 %v4396
      %v5660 = vunpack.c.l.b16 %v4397
      %v5661 = vunpack.c.h.b16 %v4397
      %v5662 = vunpack.c.l.b16 %v4398
      %v5663 = vunpack.c.h.b16 %v4398
      %v5664 = vunpack.c.l.b16 %v4399
      %v5665 = vunpack.c.h.b16 %v4399
      %v5666 = vunpack.c.l.b16 %v4400
      %v5667 = vunpack.c.h.b16 %v4400
      %v5668 = vunpack.c.l.b16 %v4401
      %v5669 = vunpack.c.h.b16 %v4401
      %v5670 = vunpack.c.l.b16 %v4402
      %v5671 = vunpack.c.h.b16 %v4402
      %v5672 = vunpack.c.l.b16 %v4403
      %v5673 = vunpack.c.h.b16 %v4403
      %v5674 = vunpack.c.l.b16 %v4404
      %v5675 = vunpack.c.h.b16 %v4404
      %v5676 = vunpack.c.l.b16 %v4405
      %v5677 = vunpack.c.h.b16 %v4405
      %v5678 = vunpack.c.l.b16 %v4406
      %v5679 = vunpack.c.h.b16 %v4406
      %v5680 = vunpack.c.l.b16 %v4407
      %v5681 = vunpack.c.h.b16 %v4407
      %v5682 = vunpack.c.l.b16 %v4408
      %v5683 = vunpack.c.h.b16 %v4408
      %v5684 = vunpack.c.l.b16 %v4409
      %v5685 = vunpack.c.h.b16 %v4409
      %v5686 = vunpack.c.l.b16 %v4410
      %v5687 = vunpack.c.h.b16 %v4410
      %v5688 = vunpack.c.l.b16 %v4411
      %v5689 = vunpack.c.h.b16 %v4411
      %v5690 = vunpack.c.l.b16 %v4412
      %v5691 = vunpack.c.h.b16 %v4412
      %v5692 = vunpack.c.l.b16 %v4413
      %v5693 = vunpack.c.h.b16 %v4413
      %v5694 = vunpack.c.l.b16 %v4414
      %v5695 = vunpack.c.h.b16 %v4414
      %v5696 = vunpack.c.l.b16 %v4415
      %v5697 = vunpack.c.h.b16 %v4415
      %v5698 = vunpack.c.l.b16 %v4416
      %v5699 = vunpack.c.h.b16 %v4416
      %v5700 = vunpack.c.l.b16 %v4417
      %v5701 = vunpack.c.h.b16 %v4417
      %v5702 = vunpack.c.l.b16 %v4418
      %v5703 = vunpack.c.h.b16 %v4418
      %v5704 = vunpack.c.l.b16 %v4419
      %v5705 = vunpack.c.h.b16 %v4419
      %v5706 = vunpack.c.l.b16 %v4420
      %v5707 = vunpack.c.h.b16 %v4420
      %v5708 = vunpack.c.l.b16 %v4421
      %v5709 = vunpack.c.h.b16 %v4421
      %v5710 = vunpack.c.l.b16 %v4422
      %v5711 = vunpack.c.h.b16 %v4422
      %v5712 = vunpack.c.l.b16 %v4423
      %v5713 = vunpack.c.h.b16 %v4423
      %v5714 = vunpack.c.l.b16 %v4424
      %v5715 = vunpack.c.h.b16 %v4424
      %v5716 = vunpack.c.l.b16 %v4425
      %v5717 = vunpack.c.h.b16 %v4425
      %v5718 = vunpack.c.l.b16 %v4426
      %v5719 = vunpack.c.h.b16 %v4426
      %v5720 = vunpack.c.l.b16 %v4427
      %v5721 = vunpack.c.h.b16 %v4427
      %v5722 = vunpack.c.l.b16 %v4428
      %v5723 = vunpack.c.h.b16 %v4428
      %v5724 = vunpack.c.l.b16 %v4429
      %v5725 = vunpack.c.h.b16 %v4429
      %v5726 = vunpack.c.l.b16 %v4430
      %v5727 = vunpack.c.h.b16 %v4430
      %v5728 = vunpack.c.l.b16 %v4431
      %v5729 = vunpack.c.h.b16 %v4431
      %v5730 = vunpack.c.l.b16 %v4432
      %v5731 = vunpack.c.h.b16 %v4432
      %v5732 = vunpack.c.l.b16 %v4433
      %v5733 = vunpack.c.h.b16 %v4433
      %v5734 = vunpack.c.l.b16 %v4434
      %v5735 = vunpack.c.h.b16 %v4434
      %v5736 = vunpack.c.l.b16 %v4435
      %v5737 = vunpack.c.h.b16 %v4435
      %v5738 = vunpack.c.l.b16 %v4436
      %v5739 = vunpack.c.h.b16 %v4436
      %v5740 = vunpack.c.l.b16 %v4437
      %v5741 = vunpack.c.h.b16 %v4437
      %v5742 = vunpack.c.l.b16 %v4438
      %v5743 = vunpack.c.h.b16 %v4438
      %v5744 = vunpack.c.l.b16 %v4439
      %v5745 = vunpack.c.h.b16 %v4439
      %v5746 = vunpack.c.l.b16 %v4440
      %v5747 = vunpack.c.h.b16 %v4440
      %v5748 = vunpack.c.l.b16 %v4441
      %v5749 = vunpack.c.h.b16 %v4441
      %v5750 = vunpack.c.l.b16 %v4442
      %v5751 = vunpack.c.h.b16 %v4442
      %v5752 = vunpack.c.l.b16 %v4443
      %v5753 = vunpack.c.h.b16 %v4443
      %v5754 = vunpack.c.l.b16 %v4444
      %v5755 = vunpack.c.h.b16 %v4444
      %v5756 = vunpack.c.l.b16 %v4445
      %v5757 = vunpack.c.h.b16 %v4445
      %v5758 = vunpack.c.l.b16 %v4446
      %v5759 = vunpack.c.h.b16 %v4446
      %v5760 = vunpack.c.l.b16 %v4447
      %v5761 = vunpack.c.h.b16 %v4447
      %v5762 = vunpack.c.l.b16 %v4448
      %v5763 = vunpack.c.h.b16 %v4448
      %v5764 = vunpack.c.l.b16 %v4449
      %v5765 = vunpack.c.h.b16 %v4449
      %v5766 = vunpack.c.l.b16 %v4450
      %v5767 = vunpack.c.h.b16 %v4450
      %v5768 = vunpack.c.l.b16 %v4451
      %v5769 = vunpack.c.h.b16 %v4451
      %v5770 = vunpack.c.l.b16 %v4452
      %v5771 = vunpack.c.h.b16 %v4452
      %v5772 = vunpack.c.l.b16 %v4453
      %v5773 = vunpack.c.h.b16 %v4453
      %v5774 = vunpack.c.l.b16 %v4454
      %v5775 = vunpack.c.h.b16 %v4454
      %v5776 = vunpack.c.l.b16 %v4455
      %v5777 = vunpack.c.h.b16 %v4455
      %v5778 = vunpack.c.l.b16 %v4456
      %v5779 = vunpack.c.h.b16 %v4456
      %v5780 = vunpack.c.l.b16 %v4457
      %v5781 = vunpack.c.h.b16 %v4457
      %v5782 = vunpack.c.l.b16 %v4458
      %v5783 = vunpack.c.h.b16 %v4458
      %v5784 = vunpack.c.l.b16 %v4459
      %v5785 = vunpack.c.h.b16 %v4459
      %v5786 = vunpack.c.l.b16 %v4460
      %v5787 = vunpack.c.h.b16 %v4460
      %v5788 = vunpack.c.l.b16 %v4461
      %v5789 = vunpack.c.h.b16 %v4461
      %v5790 = vunpack.c.l.b16 %v4462
      %v5791 = vunpack.c.h.b16 %v4462
      %v5792 = vunpack.c.l.b16 %v4463
      %v5793 = vunpack.c.h.b16 %v4463
      %v5794 = vunpack.c.l.b16 %v4464
      %v5795 = vunpack.c.h.b16 %v4464
      %v5796 = vunpack.c.l.b16 %v4465
      %v5797 = vunpack.c.h.b16 %v4465
      %v5798 = vunpack.c.l.b16 %v4466
      %v5799 = vunpack.c.h.b16 %v4466
      %v5800 = vunpack.c.l.b16 %v4467
      %v5801 = vunpack.c.h.b16 %v4467
      %v5802 = vunpack.c.l.b16 %v4468
      %v5803 = vunpack.c.h.b16 %v4468
      %v5804 = vunpack.c.l.b16 %v4469
      %v5805 = vunpack.c.h.b16 %v4469
      %v5806 = vunpack.c.l.b16 %v4470
      %v5807 = vunpack.c.h.b16 %v4470
      %v5808 = vunpack.c.l.b16 %v4471
      %v5809 = vunpack.c.h.b16 %v4471
      %v5810 = vunpack.c.l.b16 %v4472
      %v5811 = vunpack.c.h.b16 %v4472
      %v5812 = vunpack.c.l.b16 %v4473
      %v5813 = vunpack.c.h.b16 %v4473
      %v5814 = vunpack.c.l.b16 %v4474
      %v5815 = vunpack.c.h.b16 %v4474
      %v5816 = vunpack.c.l.b16 %v4475
      %v5817 = vunpack.c.h.b16 %v4475
      %v5818 = vunpack.c.l.b16 %v4476
      %v5819 = vunpack.c.h.b16 %v4476
      %v5820 = vunpack.c.l.b16 %v4477
      %v5821 = vunpack.c.h.b16 %v4477
      %v5822 = vunpack.c.l.b16 %v4478
      %v5823 = vunpack.c.h.b16 %v4478
      %v5824 = vunpack.c.l.b16 %v4479
      %v5825 = vunpack.c.h.b16 %v4479
      %v5826 = vunpack.c.l.b16 %v4480
      %v5827 = vunpack.c.h.b16 %v4480
      %v5828 = vunpack.c.l.b16 %v4481
      %v5829 = vunpack.c.h.b16 %v4481
      %v5830 = vunpack.c.l.b16 %v4482
      %v5831 = vunpack.c.h.b16 %v4482
      %v5832 = vunpack.c.l.b16 %v4483
      %v5833 = vunpack.c.h.b16 %v4483
      %v5834 = vunpack.c.l.b16 %v4484
      %v5835 = vunpack.c.h.b16 %v4484
      %v5836 = vunpack.c.l.b16 %v4485
      %v5837 = vunpack.c.h.b16 %v4485
      %v5838 = vunpack.c.l.b16 %v4486
      %v5839 = vunpack.c.h.b16 %v4486
      %v5840 = vunpack.c.l.b16 %v4487
      %v5841 = vunpack.c.h.b16 %v4487
      %v5842 = vunpack.c.l.b16 %v4488
      %v5843 = vunpack.c.h.b16 %v4488
      %v5844 = vunpack.c.l.b16 %v4489
      %v5845 = vunpack.c.h.b16 %v4489
      %v5846 = vunpack.c.l.b16 %v4490
      %v5847 = vunpack.c.h.b16 %v4490
      %v5848 = vunpack.c.l.b16 %v4491
      %v5849 = vunpack.c.h.b16 %v4491
      %v5850 = vunpack.c.l.b16 %v4492
      %v5851 = vunpack.c.h.b16 %v4492
      %v5852 = vunpack.c.l.b16 %v4493
      %v5853 = vunpack.c.h.b16 %v4493
      %v5854 = vunpack.c.l.b16 %v4494
      %v5855 = vunpack.c.h.b16 %v4494
      %v5856 = vunpack.c.l.b16 %v4495
      %v5857 = vunpack.c.h.b16 %v4495
      %v5858 = vunpack.c.l.b16 %v4496
      %v5859 = vunpack.c.h.b16 %v4496
      %v5860 = vunpack.c.l.b16 %v4497
      %v5861 = vunpack.c.h.b16 %v4497
      %v5862 = vunpack.c.l.b16 %v4498
      %v5863 = vunpack.c.h.b16 %v4498
      %v5864 = vunpack.c.l.b16 %v4499
      %v5865 = vunpack.c.h.b16 %v4499
      %v5866 = vunpack.c.l.b16 %v4500
      %v5867 = vunpack.c.h.b16 %v4500
      %v5868 = vunpack.c.l.b16 %v4501
      %v5869 = vunpack.c.h.b16 %v4501
      %v5870 = vunpack.c.l.b16 %v4502
      %v5871 = vunpack.c.h.b16 %v4502
      %v5872 = vunpack.c.l.b16 %v4503
      %v5873 = vunpack.c.h.b16 %v4503
      %v5874 = vunpack.c.l.b16 %v4504
      %v5875 = vunpack.c.h.b16 %v4504
      %v5876 = vunpack.c.l.b16 %v4505
      %v5877 = vunpack.c.h.b16 %v4505
      %v5878 = vunpack.c.l.b16 %v4506
      %v5879 = vunpack.c.h.b16 %v4506
      %v5880 = vunpack.c.l.b16 %v4507
      %v5881 = vunpack.c.h.b16 %v4507
      %v5882 = vunpack.c.l.b16 %v4508
      %v5883 = vunpack.c.h.b16 %v4508
      %v5884 = vunpack.c.l.b16 %v4509
      %v5885 = vunpack.c.h.b16 %v4509
      %v5886 = vunpack.c.l.b16 %v4510
      %v5887 = vunpack.c.h.b16 %v4510
      %v5888 = vunpack.c.l.b16 %v4511
      %v5889 = vunpack.c.h.b16 %v4511
      %v5890 = vunpack.c.l.b16 %v4512
      %v5891 = vunpack.c.h.b16 %v4512
      %v5892 = vunpack.c.l.b16 %v4513
      %v5893 = vunpack.c.h.b16 %v4513
      %v5894 = vunpack.c.l.b16 %v4514
      %v5895 = vunpack.c.h.b16 %v4514
      %v5896 = vunpack.c.l.b16 %v4515
      %v5897 = vunpack.c.h.b16 %v4515
      %v5898 = vunpack.c.l.b16 %v4516
      %v5899 = vunpack.c.h.b16 %v4516
      %v5900 = vunpack.c.l.b16 %v4517
      %v5901 = vunpack.c.h.b16 %v4517
      %v5902 = vunpack.c.l.b16 %v4518
      %v5903 = vunpack.c.h.b16 %v4518
      %v5904 = vunpack.c.l.b16 %v4519
      %v5905 = vunpack.c.h.b16 %v4519
      %v5906 = vunpack.c.l.b16 %v4520
      %v5907 = vunpack.c.h.b16 %v4520
      %v5908 = vunpack.c.l.b16 %v4521
      %v5909 = vunpack.c.h.b16 %v4521
      %v5910 = vunpack.c.l.b16 %v4522
      %v5911 = vunpack.c.h.b16 %v4522
      %v5912 = vunpack.c.l.b16 %v4523
      %v5913 = vunpack.c.h.b16 %v4523
      %v5914 = vunpack.c.l.b16 %v4524
      %v5915 = vunpack.c.h.b16 %v4524
      %v5916 = vunpack.c.l.b16 %v4525
      %v5917 = vunpack.c.h.b16 %v4525
      %v5918 = vunpack.c.l.b16 %v4526
      %v5919 = vunpack.c.h.b16 %v4526
      %v5920 = vunpack.c.l.b16 %v4527
      %v5921 = vunpack.c.h.b16 %v4527
      %v5922 = vunpack.c.l.b16 %v4528
      %v5923 = vunpack.c.h.b16 %v4528
      %v5924 = vunpack.c.l.b16 %v4529
      %v5925 = vunpack.c.h.b16 %v4529
      %v5926 = vunpack.c.l.b16 %v4530
      %v5927 = vunpack.c.h.b16 %v4530
      %v5928 = vunpack.c.l.b16 %v4531
      %v5929 = vunpack.c.h.b16 %v4531
      %v5930 = vunpack.c.l.b16 %v4532
      %v5931 = vunpack.c.h.b16 %v4532
      %v5932 = vunpack.c.l.b16 %v4533
      %v5933 = vunpack.c.h.b16 %v4533
      %v5934 = vunpack.c.l.b16 %v4534
      %v5935 = vunpack.c.h.b16 %v4534
      %v5936 = vunpack.c.l.b16 %v4535
      %v5937 = vunpack.c.h.b16 %v4535
      %v5938 = vunpack.c.l.b16 %v4536
      %v5939 = vunpack.c.h.b16 %v4536
      %v5940 = vunpack.c.l.b16 %v4537
      %v5941 = vunpack.c.h.b16 %v4537
      %v5942 = vunpack.c.l.b16 %v4538
      %v5943 = vunpack.c.h.b16 %v4538
      %v5944 = vunpack.c.l.b16 %v4539
      %v5945 = vunpack.c.h.b16 %v4539
      %v5946 = vunpack.c.l.b16 %v4540
      %v5947 = vunpack.c.h.b16 %v4540
      %v5948 = vunpack.c.l.b16 %v4541
      %v5949 = vunpack.c.h.b16 %v4541
      %v5950 = vunpack.c.l.b16 %v4542
      %v5951 = vunpack.c.h.b16 %v4542
      %v5952 = vunpack.c.l.b16 %v4543
      %v5953 = vunpack.c.h.b16 %v4543
      %v5954 = vunpack.c.l.b16 %v4544
      %v5955 = vunpack.c.h.b16 %v4544
      %v5956 = vunpack.c.l.b16 %v4545
      %v5957 = vunpack.c.h.b16 %v4545
      %v5958 = vunpack.c.l.b16 %v4546
      %v5959 = vunpack.c.h.b16 %v4546
      %v5960 = vunpack.c.l.b16 %v4547
      %v5961 = vunpack.c.h.b16 %v4547
      %v5962 = vunpack.c.l.b16 %v4548
      %v5963 = vunpack.c.h.b16 %v4548
      %v5964 = vunpack.c.l.b16 %v4549
      %v5965 = vunpack.c.h.b16 %v4549
      %v5966 = vunpack.c.l.b16 %v4550
      %v5967 = vunpack.c.h.b16 %v4550
      %v5968 = vunpack.c.l.b16 %v4551
      %v5969 = vunpack.c.h.b16 %v4551
      %v5970 = vunpack.c.l.b16 %v4552
      %v5971 = vunpack.c.h.b16 %v4552
      %v5972 = vunpack.c.l.b16 %v4553
      %v5973 = vunpack.c.h.b16 %v4553
      %v5974 = vunpack.c.l.b16 %v4554
      %v5975 = vunpack.c.h.b16 %v4554
      %v5976 = vunpack.c.l.b16 %v4555
      %v5977 = vunpack.c.h.b16 %v4555
      %v5978 = vunpack.c.l.b16 %v4556
      %v5979 = vunpack.c.h.b16 %v4556
      %v5980 = vunpack.c.l.b16 %v4557
      %v5981 = vunpack.c.h.b16 %v4557
      %v5982 = vunpack.c.l.b16 %v4558
      %v5983 = vunpack.c.h.b16 %v4558
      %v5984 = vunpack.c.l.b16 %v4559
      %v5985 = vunpack.c.h.b16 %v4559
      %v5986 = vunpack.c.l.b16 %v4560
      %v5987 = vunpack.c.h.b16 %v4560
      %v5988 = vunpack.c.l.b16 %v4561
      %v5989 = vunpack.c.h.b16 %v4561
      %v5990 = vunpack.c.l.b16 %v4562
      %v5991 = vunpack.c.h.b16 %v4562
      %v5992 = vunpack.c.l.b16 %v4563
      %v5993 = vunpack.c.h.b16 %v4563
      %v5994 = vunpack.c.l.b16 %v4564
      %v5995 = vunpack.c.h.b16 %v4564
      %v5996 = vunpack.c.l.b16 %v4565
      %v5997 = vunpack.c.h.b16 %v4565
      %v5998 = vunpack.c.l.b16 %v4566
      %v5999 = vunpack.c.h.b16 %v4566
      %v6000 = vunpack.c.l.b16 %v4567
      %v6001 = vunpack.c.h.b16 %v4567
      %v6002 = vunpack.c.l.b16 %v4568
      %v6003 = vunpack.c.h.b16 %v4568
      %v6004 = vunpack.c.l.b16 %v4569
      %v6005 = vunpack.c.h.b16 %v4569
      %v6006 = vunpack.c.l.b16 %v4570
      %v6007 = vunpack.c.h.b16 %v4570
      %v6008 = vunpack.c.l.b16 %v4571
      %v6009 = vunpack.c.h.b16 %v4571
      %v6010 = vunpack.c.l.b16 %v4572
      %v6011 = vunpack.c.h.b16 %v4572
      %v6012 = vunpack.c.l.b16 %v4573
      %v6013 = vunpack.c.h.b16 %v4573
      %v6014 = vunpack.c.l.b16 %v4574
      %v6015 = vunpack.c.h.b16 %v4574
      %v6016 = vunpack.c.l.b16 %v4575
      %v6017 = vunpack.c.h.b16 %v4575
      %v6018 = vunpack.c.l.b16 %v4576
      %v6019 = vunpack.c.h.b16 %v4576
      %v6020 = vunpack.c.l.b16 %v4577
      %v6021 = vunpack.c.h.b16 %v4577
      %v6022 = vunpack.c.l.b16 %v4578
      %v6023 = vunpack.c.h.b16 %v4578
      %v6024 = vunpack.c.l.b16 %v4579
      %v6025 = vunpack.c.h.b16 %v4579
      %v6026 = vunpack.c.l.b16 %v4580
      %v6027 = vunpack.c.h.b16 %v4580
      %v6028 = vunpack.c.l.b16 %v4581
      %v6029 = vunpack.c.h.b16 %v4581
      %v6030 = vunpack.c.l.b16 %v4582
      %v6031 = vunpack.c.h.b16 %v4582
      %v6032 = vunpack.c.l.b16 %v4583
      %v6033 = vunpack.c.h.b16 %v4583
      %v6034 = vunpack.c.l.b16 %v4584
      %v6035 = vunpack.c.h.b16 %v4584
      %v6036 = vunpack.c.l.b16 %v4585
      %v6037 = vunpack.c.h.b16 %v4585
      %v6038 = vunpack.c.l.b16 %v4586
      %v6039 = vunpack.c.h.b16 %v4586
      %v6040 = vunpack.c.l.b16 %v4587
      %v6041 = vunpack.c.h.b16 %v4587
      %v6042 = vunpack.c.l.b16 %v4588
      %v6043 = vunpack.c.h.b16 %v4588
      %v6044 = vunpack.c.l.b16 %v4589
      %v6045 = vunpack.c.h.b16 %v4589
      %v6046 = vunpack.c.l.b16 %v4590
      %v6047 = vunpack.c.h.b16 %v4590
      %v6048 = vunpack.c.l.b16 %v4591
      %v6049 = vunpack.c.h.b16 %v4591
      %v6050 = vunpack.c.l.b16 %v4592
      %v6051 = vunpack.c.h.b16 %v4592
      %v6052 = vunpack.c.l.b16 %v4593
      %v6053 = vunpack.c.h.b16 %v4593
      %v6054 = vunpack.c.l.b16 %v4594
      %v6055 = vunpack.c.h.b16 %v4594
      %v6056 = vunpack.c.l.b16 %v4595
      %v6057 = vunpack.c.h.b16 %v4595
      %v6058 = vunpack.c.l.b16 %v4596
      %v6059 = vunpack.c.h.b16 %v4596
      %v6060 = vunpack.c.l.b16 %v4597
      %v6061 = vunpack.c.h.b16 %v4597
      %v6062 = vunpack.c.l.b16 %v4598
      %v6063 = vunpack.c.h.b16 %v4598
      %v6064 = vunpack.c.l.b16 %v4599
      %v6065 = vunpack.c.h.b16 %v4599
      %v6066 = vunpack.c.l.b16 %v4600
      %v6067 = vunpack.c.h.b16 %v4600
      %v6068 = vunpack.c.l.b16 %v4601
      %v6069 = vunpack.c.h.b16 %v4601
      %v6070 = vunpack.c.l.b16 %v4602
      %v6071 = vunpack.c.h.b16 %v4602
      %v6072 = vunpack.c.l.b16 %v4603
      %v6073 = vunpack.c.h.b16 %v4603
      %v6074 = vunpack.c.l.b16 %v4604
      %v6075 = vunpack.c.h.b16 %v4604
      %v6076 = vunpack.c.l.b16 %v4605
      %v6077 = vunpack.c.h.b16 %v4605
      %v6078 = vunpack.c.l.b16 %v4606
      %v6079 = vunpack.c.h.b16 %v4606
      %v6080 = vunpack.c.l.b16 %v4607
      %v6081 = vunpack.c.h.b16 %v4607
      %v6082 = vunpack.c.l.b16 %v4608
      %v6083 = vunpack.c.h.b16 %v4608
      %v6084 = vunpack.c.l.b16 %v4609
      %v6085 = vunpack.c.h.b16 %v4609
      %v6086 = vunpack.c.l.b16 %v4610
      %v6087 = vunpack.c.h.b16 %v4610
      %v6088 = vunpack.c.l.b16 %v4611
      %v6089 = vunpack.c.h.b16 %v4611
      %v6090 = vunpack.c.l.b16 %v4612
      %v6091 = vunpack.c.h.b16 %v4612
      %v6092 = vunpack.c.l.b16 %v4613
      %v6093 = vunpack.c.h.b16 %v4613
      %v6094 = vunpack.c.l.b16 %v4614
      %v6095 = vunpack.c.h.b16 %v4614
      %v6096 = vunpack.c.l.b16 %v4615
      %v6097 = vunpack.c.h.b16 %v4615
      %v6098 = vunpack.c.l.b16 %v4616
      %v6099 = vunpack.c.h.b16 %v4616
      %v6100 = vunpack.c.l.b16 %v4617
      %v6101 = vunpack.c.h.b16 %v4617
      %v6102 = vunpack.c.l.b16 %v4618
      %v6103 = vunpack.c.h.b16 %v4618
      %v6104 = vunpack.c.l.b16 %v4619
      %v6105 = vunpack.c.h.b16 %v4619
      %v6106 = vunpack.c.l.b16 %v4620
      %v6107 = vunpack.c.h.b16 %v4620
      %v6108 = vunpack.c.l.b16 %v4621
      %v6109 = vunpack.c.h.b16 %v4621
      %v6110 = vunpack.c.l.b16 %v4622
      %v6111 = vunpack.c.h.b16 %v4622
      %v6112 = vunpack.c.l.b16 %v4623
      %v6113 = vunpack.c.h.b16 %v4623
      %v6114 = vunpack.c.l.b16 %v4624
      %v6115 = vunpack.c.h.b16 %v4624
      %v6116 = vunpack.c.l.b16 %v4625
      %v6117 = vunpack.c.h.b16 %v4625
      %v6118 = vunpack.c.l.b16 %v4626
      %v6119 = vunpack.c.h.b16 %v4626
      %v6120 = vunpack.c.l.b16 %v4627
      %v6121 = vunpack.c.h.b16 %v4627
      %v6122 = vunpack.c.l.b16 %v4628
      %v6123 = vunpack.c.h.b16 %v4628
      %v6124 = vunpack.c.l.b16 %v4629
      %v6125 = vunpack.c.h.b16 %v4629
      %v6126 = vunpack.c.l.b16 %v4630
      %v6127 = vunpack.c.h.b16 %v4630
      %v6128 = vunpack.c.l.b16 %v4631
      %v6129 = vunpack.c.h.b16 %v4631
      %v6130 = vunpack.c.l.b16 %v4632
      %v6131 = vunpack.c.h.b16 %v4632
      %v6132 = vunpack.c.l.b16 %v4633
      %v6133 = vunpack.c.h.b16 %v4633
      %v6134 = vunpack.c.l.b16 %v4634
      %v6135 = vunpack.c.h.b16 %v4634
      %v6136 = vunpack.c.l.b16 %v4635
      %v6137 = vunpack.c.h.b16 %v4635
      %v6138 = vunpack.c.l.b16 %v4636
      %v6139 = vunpack.c.h.b16 %v4636
      %v6140 = vunpack.c.l.b16 %v4637
      %v6141 = vunpack.c.h.b16 %v4637
      %v6142 = vunpack.c.l.b16 %v4638
      %v6143 = vunpack.c.h.b16 %v4638
      %v6144 = vunpack.c.l.b16 %v4639
      %v6145 = vunpack.c.h.b16 %v4639
      %v6146 = vunpack.c.l.b16 %v4640
      %v6147 = vunpack.c.h.b16 %v4640
      %v6148 = vunpack.c.l.b16 %v4641
      %v6149 = vunpack.c.h.b16 %v4641
      %v6150 = vunpack.c.l.b16 %v4642
      %v6151 = vunpack.c.h.b16 %v4642
      %v6152 = vunpack.c.l.b16 %v4643
      %v6153 = vunpack.c.h.b16 %v4643
      %v6154 = vunpack.c.l.b16 %v4644
      %v6155 = vunpack.c.h.b16 %v4644
      %v6156 = vunpack.c.l.b16 %v4645
      %v6157 = vunpack.c.h.b16 %v4645
      %v6158 = vunpack.c.l.b16 %v4646
      %v6159 = vunpack.c.h.b16 %v4646
      %v6160 = vunpack.c.l.b16 %v4647
      %v6161 = vunpack.c.h.b16 %v4647
      %v6162 = vunpack.c.l.b16 %v4648
      %v6163 = vunpack.c.h.b16 %v4648
      %v6164 = vunpack.c.l.b16 %v4649
      %v6165 = vunpack.c.h.b16 %v4649
      %v6166 = vunpack.c.l.b16 %v4650
      %v6167 = vunpack.c.h.b16 %v4650
      %v6168 = vunpack.c.l.b16 %v4651
      %v6169 = vunpack.c.h.b16 %v4651
      %v6170 = vunpack.c.l.b16 %v4652
      %v6171 = vunpack.c.h.b16 %v4652
      %v6172 = vunpack.c.l.b16 %v4653
      %v6173 = vunpack.c.h.b16 %v4653
      %v6174 = vunpack.c.l.b16 %v4654
      %v6175 = vunpack.c.h.b16 %v4654
      %v6176 = vunpack.c.l.b16 %v4655
      %v6177 = vunpack.c.h.b16 %v4655
      %v6178 = vunpack.c.l.b16 %v4656
      %v6179 = vunpack.c.h.b16 %v4656
      %v6180 = vunpack.c.l.b16 %v4657
      %v6181 = vunpack.c.h.b16 %v4657
      %v6182 = vunpack.c.l.b16 %v4658
      %v6183 = vunpack.c.h.b16 %v4658
      %v6184 = vunpack.c.l.b16 %v4659
      %v6185 = vunpack.c.h.b16 %v4659
      %v6186 = vunpack.c.l.b16 %v4660
      %v6187 = vunpack.c.h.b16 %v4660
      %v6188 = vunpack.c.l.b16 %v4661
      %v6189 = vunpack.c.h.b16 %v4661
      %v6190 = vunpack.c.l.b16 %v4662
      %v6191 = vunpack.c.h.b16 %v4662
      %v6192 = vunpack.c.l.b16 %v4663
      %v6193 = vunpack.c.h.b16 %v4663
      %v6194 = vunpack.c.l.b16 %v4664
      %v6195 = vunpack.c.h.b16 %v4664
      %v6196 = vunpack.c.l.b16 %v4665
      %v6197 = vunpack.c.h.b16 %v4665
      %v6198 = vunpack.c.l.b16 %v4666
      %v6199 = vunpack.c.h.b16 %v4666
      %v6200 = vunpack.c.l.b16 %v4667
      %v6201 = vunpack.c.h.b16 %v4667
      %v6202 = vunpack.c.l.b16 %v4668
      %v6203 = vunpack.c.h.b16 %v4668
      %v6204 = vunpack.c.l.b16 %v4669
      %v6205 = vunpack.c.h.b16 %v4669
      %v6206 = vunpack.c.l.b16 %v4670
      %v6207 = vunpack.c.h.b16 %v4670
      %v6208 = vunpack.c.l.b16 %v4671
      %v6209 = vunpack.c.h.b16 %v4671
      %v6210 = vunpack.c.l.b16 %v4672
      %v6211 = vunpack.c.h.b16 %v4672
      %v6212 = vunpack.c.l.b16 %v4673
      %v6213 = vunpack.c.h.b16 %v4673
      %v6214 = vunpack.c.l.b16 %v4674
      %v6215 = vunpack.c.h.b16 %v4674
      %v6216 = vunpack.c.l.b16 %v4675
      %v6217 = vunpack.c.h.b16 %v4675
      %v6218 = vunpack.c.l.b16 %v4676
      %v6219 = vunpack.c.h.b16 %v4676
      %v6220 = vunpack.c.l.b16 %v4677
      %v6221 = vunpack.c.h.b16 %v4677
      %v6222 = vunpack.c.l.b16 %v4678
      %v6223 = vunpack.c.h.b16 %v4678
      %v6224 = vunpack.c.l.b16 %v4679
      %v6225 = vunpack.c.h.b16 %v4679
      %v6226 = vunpack.c.l.b16 %v4680
      %v6227 = vunpack.c.h.b16 %v4680
      %v6228 = vunpack.c.l.b16 %v4681
      %v6229 = vunpack.c.h.b16 %v4681
      %v6230 = vunpack.c.l.b16 %v4682
      %v6231 = vunpack.c.h.b16 %v4682
      %v6232 = vunpack.c.l.b16 %v4683
      %v6233 = vunpack.c.h.b16 %v4683
      %v6234 = vunpack.c.l.b16 %v4684
      %v6235 = vunpack.c.h.b16 %v4684
      %v6236 = vunpack.c.l.b16 %v4685
      %v6237 = vunpack.c.h.b16 %v4685
      %v6238 = vunpack.c.l.b16 %v4686
      %v6239 = vunpack.c.h.b16 %v4686
      %v6240 = vunpack.c.l.b16 %v4687
      %v6241 = vunpack.c.h.b16 %v4687
      %v6242 = vunpack.c.l.b16 %v4688
      %v6243 = vunpack.c.h.b16 %v4688
      %v6244 = vunpack.c.l.b16 %v4689
      %v6245 = vunpack.c.h.b16 %v4689
      %v6246 = vunpack.c.l.b16 %v4690
      %v6247 = vunpack.c.h.b16 %v4690
      %v6248 = vunpack.c.l.b16 %v4691
      %v6249 = vunpack.c.h.b16 %v4691
      %v6250 = vpack.c.b16 %v5230, %v5226
      %v6251 = vpack.c.b16 %v5231, %v5227
      %v6252 = vpack.c.b16 %v5232, %v5228
      %v6253 = vpack.c.b16 %v5233, %v5229
      %v6254 = vpack.c.b16 %v5238, %v5234
      %v6255 = vpack.c.b16 %v5239, %v5235
      %v6256 = vpack.c.b16 %v5240, %v5236
      %v6257 = vpack.c.b16 %v5241, %v5237
      %v6258 = vpack.c.b16 %v5246, %v5242
      %v6259 = vpack.c.b16 %v5247, %v5243
      %v6260 = vpack.c.b16 %v5248, %v5244
      %v6261 = vpack.c.b16 %v5249, %v5245
      %v6262 = vpack.c.b16 %v5254, %v5250
      %v6263 = vpack.c.b16 %v5255, %v5251
      %v6264 = vpack.c.b16 %v5256, %v5252
      %v6265 = vpack.c.b16 %v5257, %v5253
      %v6266 = vpack.c.b16 %v5262, %v5258
      %v6267 = vpack.c.b16 %v5263, %v5259
      %v6268 = vpack.c.b16 %v5264, %v5260
      %v6269 = vpack.c.b16 %v5265, %v5261
      %v6270 = vpack.c.b16 %v5270, %v5266
      %v6271 = vpack.c.b16 %v5271, %v5267
      %v6272 = vpack.c.b16 %v5272, %v5268
      %v6273 = vpack.c.b16 %v5273, %v5269
      %v6274 = vpack.c.b16 %v5278, %v5274
      %v6275 = vpack.c.b16 %v5279, %v5275
      %v6276 = vpack.c.b16 %v5280, %v5276
      %v6277 = vpack.c.b16 %v5281, %v5277
      %v6278 = vpack.c.b16 %v5286, %v5282
      %v6279 = vpack.c.b16 %v5287, %v5283
      %v6280 = vpack.c.b16 %v5288, %v5284
      %v6281 = vpack.c.b16 %v5289, %v5285
      %v6282 = vpack.c.b16 %v5294, %v5290
      %v6283 = vpack.c.b16 %v5295, %v5291
      %v6284 = vpack.c.b16 %v5296, %v5292
      %v6285 = vpack.c.b16 %v5297, %v5293
      %v6286 = vpack.c.b16 %v5302, %v5298
      %v6287 = vpack.c.b16 %v5303, %v5299
      %v6288 = vpack.c.b16 %v5304, %v5300
      %v6289 = vpack.c.b16 %v5305, %v5301
      %v6290 = vpack.c.b16 %v5310, %v5306
      %v6291 = vpack.c.b16 %v5311, %v5307
      %v6292 = vpack.c.b16 %v5312, %v5308
      %v6293 = vpack.c.b16 %v5313, %v5309
      %v6294 = vpack.c.b16 %v5318, %v5314
      %v6295 = vpack.c.b16 %v5319, %v5315
      %v6296 = vpack.c.b16 %v5320, %v5316
      %v6297 = vpack.c.b16 %v5321, %v5317
      %v6298 = vpack.c.b16 %v5326, %v5322
      %v6299 = vpack.c.b16 %v5327, %v5323
      %v6300 = vpack.c.b16 %v5328, %v5324
      %v6301 = vpack.c.b16 %v5329, %v5325
      %v6302 = vpack.c.b16 %v5334, %v5330
      %v6303 = vpack.c.b16 %v5335, %v5331
      %v6304 = vpack.c.b16 %v5336, %v5332
      %v6305 = vpack.c.b16 %v5337, %v5333
      %v6306 = vpack.c.b16 %v5342, %v5338
      %v6307 = vpack.c.b16 %v5343, %v5339
      %v6308 = vpack.c.b16 %v5344, %v5340
      %v6309 = vpack.c.b16 %v5345, %v5341
      %v6310 = vpack.c.b16 %v5350, %v5346
      %v6311 = vpack.c.b16 %v5351, %v5347
      %v6312 = vpack.c.b16 %v5352, %v5348
      %v6313 = vpack.c.b16 %v5353, %v5349
      %v6314 = vpack.c.b16 %v5358, %v5354
      %v6315 = vpack.c.b16 %v5359, %v5355
      %v6316 = vpack.c.b16 %v5360, %v5356
      %v6317 = vpack.c.b16 %v5361, %v5357
      %v6318 = vpack.c.b16 %v5366, %v5362
      %v6319 = vpack.c.b16 %v5367, %v5363
      %v6320 = vpack.c.b16 %v5368, %v5364
      %v6321 = vpack.c.b16 %v5369, %v5365
      %v6322 = vpack.c.b16 %v5374, %v5370
      %v6323 = vpack.c.b16 %v5375, %v5371
      %v6324 = vpack.c.b16 %v5376, %v5372
      %v6325 = vpack.c.b16 %v5377, %v5373
      %v6326 = vpack.c.b16 %v5382, %v5378
      %v6327 = vpack.c.b16 %v5383, %v5379
      %v6328 = vpack.c.b16 %v5384, %v5380
      %v6329 = vpack.c.b16 %v5385, %v5381
      %v6330 = vpack.c.b16 %v5390, %v5386
      %v6331 = vpack.c.b16 %v5391, %v5387
      %v6332 = vpack.c.b16 %v5392, %v5388
      %v6333 = vpack.c.b16 %v5393, %v5389
      %v6334 = vpack.c.b16 %v5398, %v5394
      %v6335 = vpack.c.b16 %v5399, %v5395
      %v6336 = vpack.c.b16 %v5400, %v5396
      %v6337 = vpack.c.b16 %v5401, %v5397
      %v6338 = vpack.c.b16 %v5406, %v5402
      %v6339 = vpack.c.b16 %v5407, %v5403
      %v6340 = vpack.c.b16 %v5408, %v5404
      %v6341 = vpack.c.b16 %v5409, %v5405
      %v6342 = vpack.c.b16 %v5414, %v5410
      %v6343 = vpack.c.b16 %v5415, %v5411
      %v6344 = vpack.c.b16 %v5416, %v5412
      %v6345 = vpack.c.b16 %v5417, %v5413
      %v6346 = vpack.c.b16 %v5422, %v5418
      %v6347 = vpack.c.b16 %v5423, %v5419
      %v6348 = vpack.c.b16 %v5424, %v5420
      %v6349 = vpack.c.b16 %v5425, %v5421
      %v6350 = vpack.c.b16 %v5430, %v5426
      %v6351 = vpack.c.b16 %v5431, %v5427
      %v6352 = vpack.c.b16 %v5432, %v5428
      %v6353 = vpack.c.b16 %v5433, %v5429
      %v6354 = vpack.c.b16 %v5438, %v5434
      %v6355 = vpack.c.b16 %v5439, %v5435
      %v6356 = vpack.c.b16 %v5440, %v5436
      %v6357 = vpack.c.b16 %v5441, %v5437
      %v6358 = vpack.c.b16 %v5446, %v5442
      %v6359 = vpack.c.b16 %v5447, %v5443
      %v6360 = vpack.c.b16 %v5448, %v5444
      %v6361 = vpack.c.b16 %v5449, %v5445
      %v6362 = vpack.c.b16 %v5454, %v5450
      %v6363 = vpack.c.b16 %v5455, %v5451
      %v6364 = vpack.c.b16 %v5456, %v5452
      %v6365 = vpack.c.b16 %v5457, %v5453
      %v6366 = vpack.c.b16 %v5462, %v5458
      %v6367 = vpack.c.b16 %v5463, %v5459
      %v6368 = vpack.c.b16 %v5464, %v5460
      %v6369 = vpack.c.b16 %v5465, %v5461
      %v6370 = vpack.c.b16 %v5470, %v5466
      %v6371 = vpack.c.b16 %v5471, %v5467
      %v6372 = vpack.c.b16 %v5472, %v5468
      %v6373 = vpack.c.b16 %v5473, %v5469
      %v6374 = vpack.c.b16 %v5478, %v5474
      %v6375 = vpack.c.b16 %v5479, %v5475
      %v6376 = vpack.c.b16 %v5480, %v5476
      %v6377 = vpack.c.b16 %v5481, %v5477
      %v6378 = vpack.c.b16 %v5486, %v5482
      %v6379 = vpack.c.b16 %v5487, %v5483
      %v6380 = vpack.c.b16 %v5488, %v5484
      %v6381 = vpack.c.b16 %v5489, %v5485
      %v6382 = vpack.c.b16 %v5494, %v5490
      %v6383 = vpack.c.b16 %v5495, %v5491
      %v6384 = vpack.c.b16 %v5496, %v5492
      %v6385 = vpack.c.b16 %v5497, %v5493
      %v6386 = vpack.c.b16 %v5502, %v5498
      %v6387 = vpack.c.b16 %v5503, %v5499
      %v6388 = vpack.c.b16 %v5504, %v5500
      %v6389 = vpack.c.b16 %v5505, %v5501
      %v6390 = vpack.c.b16 %v5510, %v5506
      %v6391 = vpack.c.b16 %v5511, %v5507
      %v6392 = vpack.c.b16 %v5512, %v5508
      %v6393 = vpack.c.b16 %v5513, %v5509
      %v6394 = vpack.c.b16 %v5518, %v5514
      %v6395 = vpack.c.b16 %v5519, %v5515
      %v6396 = vpack.c.b16 %v5520, %v5516
      %v6397 = vpack.c.b16 %v5521, %v5517
      %v6398 = vpack.c.b16 %v5526, %v5522
      %v6399 = vpack.c.b16 %v5527, %v5523
      %v6400 = vpack.c.b16 %v5528, %v5524
      %v6401 = vpack.c.b16 %v5529, %v5525
      %v6402 = vpack.c.b16 %v5534, %v5530
      %v6403 = vpack.c.b16 %v5535, %v5531
      %v6404 = vpack.c.b16 %v5536, %v5532
      %v6405 = vpack.c.b16 %v5537, %v5533
      %v6406 = vpack.c.b16 %v5542, %v5538
      %v6407 = vpack.c.b16 %v5543, %v5539
      %v6408 = vpack.c.b16 %v5544, %v5540
      %v6409 = vpack.c.b16 %v5545, %v5541
      %v6410 = vpack.c.b16 %v5550, %v5546
      %v6411 = vpack.c.b16 %v5551, %v5547
      %v6412 = vpack.c.b16 %v5552, %v5548
      %v6413 = vpack.c.b16 %v5553, %v5549
      %v6414 = vpack.c.b16 %v5558, %v5554
      %v6415 = vpack.c.b16 %v5559, %v5555
      %v6416 = vpack.c.b16 %v5560, %v5556
      %v6417 = vpack.c.b16 %v5561, %v5557
      %v6418 = vpack.c.b16 %v5566, %v5562
      %v6419 = vpack.c.b16 %v5567, %v5563
      %v6420 = vpack.c.b16 %v5568, %v5564
      %v6421 = vpack.c.b16 %v5569, %v5565
      %v6422 = vpack.c.b16 %v5574, %v5570
      %v6423 = vpack.c.b16 %v5575, %v5571
      %v6424 = vpack.c.b16 %v5576, %v5572
      %v6425 = vpack.c.b16 %v5577, %v5573
      %v6426 = vpack.c.b16 %v5582, %v5578
      %v6427 = vpack.c.b16 %v5583, %v5579
      %v6428 = vpack.c.b16 %v5584, %v5580
      %v6429 = vpack.c.b16 %v5585, %v5581
      %v6430 = vpack.c.b16 %v5590, %v5586
      %v6431 = vpack.c.b16 %v5591, %v5587
      %v6432 = vpack.c.b16 %v5592, %v5588
      %v6433 = vpack.c.b16 %v5593, %v5589
      %v6434 = vpack.c.b16 %v5598, %v5594
      %v6435 = vpack.c.b16 %v5599, %v5595
      %v6436 = vpack.c.b16 %v5600, %v5596
      %v6437 = vpack.c.b16 %v5601, %v5597
      %v6438 = vpack.c.b16 %v5606, %v5602
      %v6439 = vpack.c.b16 %v5607, %v5603
      %v6440 = vpack.c.b16 %v5608, %v5604
      %v6441 = vpack.c.b16 %v5609, %v5605
      %v6442 = vpack.c.b16 %v5614, %v5610
      %v6443 = vpack.c.b16 %v5615, %v5611
      %v6444 = vpack.c.b16 %v5616, %v5612
      %v6445 = vpack.c.b16 %v5617, %v5613
      %v6446 = vpack.c.b16 %v5622, %v5618
      %v6447 = vpack.c.b16 %v5623, %v5619
      %v6448 = vpack.c.b16 %v5624, %v5620
      %v6449 = vpack.c.b16 %v5625, %v5621
      %v6450 = vpack.c.b16 %v5630, %v5626
      %v6451 = vpack.c.b16 %v5631, %v5627
      %v6452 = vpack.c.b16 %v5632, %v5628
      %v6453 = vpack.c.b16 %v5633, %v5629
      %v6454 = vpack.c.b16 %v5638, %v5634
      %v6455 = vpack.c.b16 %v5639, %v5635
      %v6456 = vpack.c.b16 %v5640, %v5636
      %v6457 = vpack.c.b16 %v5641, %v5637
      %v6458 = vpack.c.b16 %v5646, %v5642
      %v6459 = vpack.c.b16 %v5647, %v5643
      %v6460 = vpack.c.b16 %v5648, %v5644
      %v6461 = vpack.c.b16 %v5649, %v5645
      %v6462 = vpack.c.b16 %v5654, %v5650
      %v6463 = vpack.c.b16 %v5655, %v5651
      %v6464 = vpack.c.b16 %v5656, %v5652
      %v6465 = vpack.c.b16 %v5657, %v5653
      %v6466 = vpack.c.b16 %v5662, %v5658
      %v6467 = vpack.c.b16 %v5663, %v5659
      %v6468 = vpack.c.b16 %v5664, %v5660
      %v6469 = vpack.c.b16 %v5665, %v5661
      %v6470 = vpack.c.b16 %v5670, %v5666
      %v6471 = vpack.c.b16 %v5671, %v5667
      %v6472 = vpack.c.b16 %v5672, %v5668
      %v6473 = vpack.c.b16 %v5673, %v5669
      %v6474 = vpack.c.b16 %v5678, %v5674
      %v6475 = vpack.c.b16 %v5679, %v5675
      %v6476 = vpack.c.b16 %v5680, %v5676
      %v6477 = vpack.c.b16 %v5681, %v5677
      %v6478 = vpack.c.b16 %v5686, %v5682
      %v6479 = vpack.c.b16 %v5687, %v5683
      %v6480 = vpack.c.b16 %v5688, %v5684
      %v6481 = vpack.c.b16 %v5689, %v5685
      %v6482 = vpack.c.b16 %v5694, %v5690
      %v6483 = vpack.c.b16 %v5695, %v5691
      %v6484 = vpack.c.b16 %v5696, %v5692
      %v6485 = vpack.c.b16 %v5697, %v5693
      %v6486 = vpack.c.b16 %v5702, %v5698
      %v6487 = vpack.c.b16 %v5703, %v5699
      %v6488 = vpack.c.b16 %v5704, %v5700
      %v6489 = vpack.c.b16 %v5705, %v5701
      %v6490 = vpack.c.b16 %v5710, %v5706
      %v6491 = vpack.c.b16 %v5711, %v5707
      %v6492 = vpack.c.b16 %v5712, %v5708
      %v6493 = vpack.c.b16 %v5713, %v5709
      %v6494 = vpack.c.b16 %v5718, %v5714
      %v6495 = vpack.c.b16 %v5719, %v5715
      %v6496 = vpack.c.b16 %v5720, %v5716
      %v6497 = vpack.c.b16 %v5721, %v5717
      %v6498 = vpack.c.b16 %v5726, %v5722
      %v6499 = vpack.c.b16 %v5727, %v5723
      %v6500 = vpack.c.b16 %v5728, %v5724
      %v6501 = vpack.c.b16 %v5729, %v5725
      %v6502 = vpack.c.b16 %v5734, %v5730
      %v6503 = vpack.c.b16 %v5735, %v5731
      %v6504 = vpack.c.b16 %v5736, %v5732
      %v6505 = vpack.c.b16 %v5737, %v5733
      %v6506 = vpack.c.b16 %v5742, %v5738
      %v6507 = vpack.c.b16 %v5743, %v5739
      %v6508 = vpack.c.b16 %v5744, %v5740
      %v6509 = vpack.c.b16 %v5745, %v5741
      %v6510 = vpack.c.b16 %v5750, %v5746
      %v6511 = vpack.c.b16 %v5751, %v5747
      %v6512 = vpack.c.b16 %v5752, %v5748
      %v6513 = vpack.c.b16 %v5753, %v5749
      %v6514 = vpack.c.b16 %v5758, %v5754
      %v6515 = vpack.c.b16 %v5759, %v5755
      %v6516 = vpack.c.b16 %v5760, %v5756
      %v6517 = vpack.c.b16 %v5761, %v5757
      %v6518 = vpack.c.b16 %v5766, %v5762
      %v6519 = vpack.c.b16 %v5767, %v5763
      %v6520 = vpack.c.b16 %v5768, %v5764
      %v6521 = vpack.c.b16 %v5769, %v5765
      %v6522 = vpack.c.b16 %v5774, %v5770
      %v6523 = vpack.c.b16 %v5775, %v5771
      %v6524 = vpack.c.b16 %v5776, %v5772
      %v6525 = vpack.c.b16 %v5777, %v5773
      %v6526 = vpack.c.b16 %v5782, %v5778
      %v6527 = vpack.c.b16 %v5783, %v5779
      %v6528 = vpack.c.b16 %v5784, %v5780
      %v6529 = vpack.c.b16 %v5785, %v5781
      %v6530 = vpack.c.b16 %v5790, %v5786
      %v6531 = vpack.c.b16 %v5791, %v5787
      %v6532 = vpack.c.b16 %v5792, %v5788
      %v6533 = vpack.c.b16 %v5793, %v5789
      %v6534 = vpack.c.b16 %v5798, %v5794
      %v6535 = vpack.c.b16 %v5799, %v5795
      %v6536 = vpack.c.b16 %v5800, %v5796
      %v6537 = vpack.c.b16 %v5801, %v5797
      %v6538 = vpack.c.b16 %v5806, %v5802
      %v6539 = vpack.c.b16 %v5807, %v5803
      %v6540 = vpack.c.b16 %v5808, %v5804
      %v6541 = vpack.c.b16 %v5809, %v5805
      %v6542 = vpack.c.b16 %v5814, %v5810
      %v6543 = vpack.c.b16 %v5815, %v5811
      %v6544 = vpack.c.b16 %v5816, %v5812
      %v6545 = vpack.c.b16 %v5817, %v5813
      %v6546 = vpack.c.b16 %v5822, %v5818
      %v6547 = vpack.c.b16 %v5823, %v5819
      %v6548 = vpack.c.b16 %v5824, %v5820
      %v6549 = vpack.c.b16 %v5825, %v5821
      %v6550 = vpack.c.b16 %v5830, %v5826
      %v6551 = vpack.c.b16 %v5831, %v5827
      %v6552 = vpack.c.b16 %v5832, %v5828
      %v6553 = vpack.c.b16 %v5833, %v5829
      %v6554 = vpack.c.b16 %v5838, %v5834
      %v6555 = vpack.c.b16 %v5839, %v5835
      %v6556 = vpack.c.b16 %v5840, %v5836
      %v6557 = vpack.c.b16 %v5841, %v5837
      %v6558 = vpack.c.b16 %v5846, %v5842
      %v6559 = vpack.c.b16 %v5847, %v5843
      %v6560 = vpack.c.b16 %v5848, %v5844
      %v6561 = vpack.c.b16 %v5849, %v5845
      %v6562 = vpack.c.b16 %v5854, %v5850
      %v6563 = vpack.c.b16 %v5855, %v5851
      %v6564 = vpack.c.b16 %v5856, %v5852
      %v6565 = vpack.c.b16 %v5857, %v5853
      %v6566 = vpack.c.b16 %v5862, %v5858
      %v6567 = vpack.c.b16 %v5863, %v5859
      %v6568 = vpack.c.b16 %v5864, %v5860
      %v6569 = vpack.c.b16 %v5865, %v5861
      %v6570 = vpack.c.b16 %v5870, %v5866
      %v6571 = vpack.c.b16 %v5871, %v5867
      %v6572 = vpack.c.b16 %v5872, %v5868
      %v6573 = vpack.c.b16 %v5873, %v5869
      %v6574 = vpack.c.b16 %v5878, %v5874
      %v6575 = vpack.c.b16 %v5879, %v5875
      %v6576 = vpack.c.b16 %v5880, %v5876
      %v6577 = vpack.c.b16 %v5881, %v5877
      %v6578 = vpack.c.b16 %v5886, %v5882
      %v6579 = vpack.c.b16 %v5887, %v5883
      %v6580 = vpack.c.b16 %v5888, %v5884
      %v6581 = vpack.c.b16 %v5889, %v5885
      %v6582 = vpack.c.b16 %v5894, %v5890
      %v6583 = vpack.c.b16 %v5895, %v5891
      %v6584 = vpack.c.b16 %v5896, %v5892
      %v6585 = vpack.c.b16 %v5897, %v5893
      %v6586 = vpack.c.b16 %v5902, %v5898
      %v6587 = vpack.c.b16 %v5903, %v5899
      %v6588 = vpack.c.b16 %v5904, %v5900
      %v6589 = vpack.c.b16 %v5905, %v5901
      %v6590 = vpack.c.b16 %v5910, %v5906
      %v6591 = vpack.c.b16 %v5911, %v5907
      %v6592 = vpack.c.b16 %v5912, %v5908
      %v6593 = vpack.c.b16 %v5913, %v5909
      %v6594 = vpack.c.b16 %v5918, %v5914
      %v6595 = vpack.c.b16 %v5919, %v5915
      %v6596 = vpack.c.b16 %v5920, %v5916
      %v6597 = vpack.c.b16 %v5921, %v5917
      %v6598 = vpack.c.b16 %v5926, %v5922
      %v6599 = vpack.c.b16 %v5927, %v5923
      %v6600 = vpack.c.b16 %v5928, %v5924
      %v6601 = vpack.c.b16 %v5929, %v5925
      %v6602 = vpack.c.b16 %v5934, %v5930
      %v6603 = vpack.c.b16 %v5935, %v5931
      %v6604 = vpack.c.b16 %v5936, %v5932
      %v6605 = vpack.c.b16 %v5937, %v5933
      %v6606 = vpack.c.b16 %v5942, %v5938
      %v6607 = vpack.c.b16 %v5943, %v5939
      %v6608 = vpack.c.b16 %v5944, %v5940
      %v6609 = vpack.c.b16 %v5945, %v5941
      %v6610 = vpack.c.b16 %v5950, %v5946
      %v6611 = vpack.c.b16 %v5951, %v5947
      %v6612 = vpack.c.b16 %v5952, %v5948
      %v6613 = vpack.c.b16 %v5953, %v5949
      %v6614 = vpack.c.b16 %v5958, %v5954
      %v6615 = vpack.c.b16 %v5959, %v5955
      %v6616 = vpack.c.b16 %v5960, %v5956
      %v6617 = vpack.c.b16 %v5961, %v5957
      %v6618 = vpack.c.b16 %v5966, %v5962
      %v6619 = vpack.c.b16 %v5967, %v5963
      %v6620 = vpack.c.b16 %v5968, %v5964
      %v6621 = vpack.c.b16 %v5969, %v5965
      %v6622 = vpack.c.b16 %v5974, %v5970
      %v6623 = vpack.c.b16 %v5975, %v5971
      %v6624 = vpack.c.b16 %v5976, %v5972
      %v6625 = vpack.c.b16 %v5977, %v5973
      %v6626 = vpack.c.b16 %v5982, %v5978
      %v6627 = vpack.c.b16 %v5983, %v5979
      %v6628 = vpack.c.b16 %v5984, %v5980
      %v6629 = vpack.c.b16 %v5985, %v5981
      %v6630 = vpack.c.b16 %v5990, %v5986
      %v6631 = vpack.c.b16 %v5991, %v5987
      %v6632 = vpack.c.b16 %v5992, %v5988
      %v6633 = vpack.c.b16 %v5993, %v5989
      %v6634 = vpack.c.b16 %v5998, %v5994
      %v6635 = vpack.c.b16 %v5999, %v5995
      %v6636 = vpack.c.b16 %v6000, %v5996
      %v6637 = vpack.c.b16 %v6001, %v5997
      %v6638 = vpack.c.b16 %v6006, %v6002
      %v6639 = vpack.c.b16 %v6007, %v6003
      %v6640 = vpack.c.b16 %v6008, %v6004
      %v6641 = vpack.c.b16 %v6009, %v6005
      %v6642 = vpack.c.b16 %v6014, %v6010
      %v6643 = vpack.c.b16 %v6015, %v6011
      %v6644 = vpack.c.b16 %v6016, %v6012
      %v6645 = vpack.c.b16 %v6017, %v6013
      %v6646 = vpack.c.b16 %v6022, %v6018
      %v6647 = vpack.c.b16 %v6023, %v6019
      %v6648 = vpack.c.b16 %v6024, %v6020
      %v6649 = vpack.c.b16 %v6025, %v6021
      %v6650 = vpack.c.b16 %v6030, %v6026
      %v6651 = vpack.c.b16 %v6031, %v6027
      %v6652 = vpack.c.b16 %v6032, %v6028
      %v6653 = vpack.c.b16 %v6033, %v6029
      %v6654 = vpack.c.b16 %v6038, %v6034
      %v6655 = vpack.c.b16 %v6039, %v6035
      %v6656 = vpack.c.b16 %v6040, %v6036
      %v6657 = vpack.c.b16 %v6041, %v6037
      %v6658 = vpack.c.b16 %v6046, %v6042
      %v6659 = vpack.c.b16 %v6047, %v6043
      %v6660 = vpack.c.b16 %v6048, %v6044
      %v6661 = vpack.c.b16 %v6049, %v6045
      %v6662 = vpack.c.b16 %v6054, %v6050
      %v6663 = vpack.c.b16 %v6055, %v6051
      %v6664 = vpack.c.b16 %v6056, %v6052
      %v6665 = vpack.c.b16 %v6057, %v6053
      %v6666 = vpack.c.b16 %v6062, %v6058
      %v6667 = vpack.c.b16 %v6063, %v6059
      %v6668 = vpack.c.b16 %v6064, %v6060
      %v6669 = vpack.c.b16 %v6065, %v6061
      %v6670 = vpack.c.b16 %v6070, %v6066
      %v6671 = vpack.c.b16 %v6071, %v6067
      %v6672 = vpack.c.b16 %v6072, %v6068
      %v6673 = vpack.c.b16 %v6073, %v6069
      %v6674 = vpack.c.b16 %v6078, %v6074
      %v6675 = vpack.c.b16 %v6079, %v6075
      %v6676 = vpack.c.b16 %v6080, %v6076
      %v6677 = vpack.c.b16 %v6081, %v6077
      %v6678 = vpack.c.b16 %v6086, %v6082
      %v6679 = vpack.c.b16 %v6087, %v6083
      %v6680 = vpack.c.b16 %v6088, %v6084
      %v6681 = vpack.c.b16 %v6089, %v6085
      %v6682 = vpack.c.b16 %v6094, %v6090
      %v6683 = vpack.c.b16 %v6095, %v6091
      %v6684 = vpack.c.b16 %v6096, %v6092
      %v6685 = vpack.c.b16 %v6097, %v6093
      %v6686 = vpack.c.b16 %v6102, %v6098
      %v6687 = vpack.c.b16 %v6103, %v6099
      %v6688 = vpack.c.b16 %v6104, %v6100
      %v6689 = vpack.c.b16 %v6105, %v6101
      %v6690 = vpack.c.b16 %v6110, %v6106
      %v6691 = vpack.c.b16 %v6111, %v6107
      %v6692 = vpack.c.b16 %v6112, %v6108
      %v6693 = vpack.c.b16 %v6113, %v6109
      %v6694 = vpack.c.b16 %v6118, %v6114
      %v6695 = vpack.c.b16 %v6119, %v6115
      %v6696 = vpack.c.b16 %v6120, %v6116
      %v6697 = vpack.c.b16 %v6121, %v6117
      %v6698 = vpack.c.b16 %v6126, %v6122
      %v6699 = vpack.c.b16 %v6127, %v6123
      %v6700 = vpack.c.b16 %v6128, %v6124
      %v6701 = vpack.c.b16 %v6129, %v6125
      %v6702 = vpack.c.b16 %v6134, %v6130
      %v6703 = vpack.c.b16 %v6135, %v6131
      %v6704 = vpack.c.b16 %v6136, %v6132
      %v6705 = vpack.c.b16 %v6137, %v6133
      %v6706 = vpack.c.b16 %v6142, %v6138
      %v6707 = vpack.c.b16 %v6143, %v6139
      %v6708 = vpack.c.b16 %v6144, %v6140
      %v6709 = vpack.c.b16 %v6145, %v6141
      %v6710 = vpack.c.b16 %v6150, %v6146
      %v6711 = vpack.c.b16 %v6151, %v6147
      %v6712 = vpack.c.b16 %v6152, %v6148
      %v6713 = vpack.c.b16 %v6153, %v6149
      %v6714 = vpack.c.b16 %v6158, %v6154
      %v6715 = vpack.c.b16 %v6159, %v6155
      %v6716 = vpack.c.b16 %v6160, %v6156
      %v6717 = vpack.c.b16 %v6161, %v6157
      %v6718 = vpack.c.b16 %v6166, %v6162
      %v6719 = vpack.c.b16 %v6167, %v6163
      %v6720 = vpack.c.b16 %v6168, %v6164
      %v6721 = vpack.c.b16 %v6169, %v6165
      %v6722 = vpack.c.b16 %v6174, %v6170
      %v6723 = vpack.c.b16 %v6175, %v6171
      %v6724 = vpack.c.b16 %v6176, %v6172
      %v6725 = vpack.c.b16 %v6177, %v6173
      %v6726 = vpack.c.b16 %v6182, %v6178
      %v6727 = vpack.c.b16 %v6183, %v6179
      %v6728 = vpack.c.b16 %v6184, %v6180
      %v6729 = vpack.c.b16 %v6185, %v6181
      %v6730 = vpack.c.b16 %v6190, %v6186
      %v6731 = vpack.c.b16 %v6191, %v6187
      %v6732 = vpack.c.b16 %v6192, %v6188
      %v6733 = vpack.c.b16 %v6193, %v6189
      %v6734 = vpack.c.b16 %v6198, %v6194
      %v6735 = vpack.c.b16 %v6199, %v6195
      %v6736 = vpack.c.b16 %v6200, %v6196
      %v6737 = vpack.c.b16 %v6201, %v6197
      %v6738 = vpack.c.b16 %v6206, %v6202
      %v6739 = vpack.c.b16 %v6207, %v6203
      %v6740 = vpack.c.b16 %v6208, %v6204
      %v6741 = vpack.c.b16 %v6209, %v6205
      %v6742 = vpack.c.b16 %v6214, %v6210
      %v6743 = vpack.c.b16 %v6215, %v6211
      %v6744 = vpack.c.b16 %v6216, %v6212
      %v6745 = vpack.c.b16 %v6217, %v6213
      %v6746 = vpack.c.b16 %v6222, %v6218
      %v6747 = vpack.c.b16 %v6223, %v6219
      %v6748 = vpack.c.b16 %v6224, %v6220
      %v6749 = vpack.c.b16 %v6225, %v6221
      %v6750 = vpack.c.b16 %v6230, %v6226
      %v6751 = vpack.c.b16 %v6231, %v6227
      %v6752 = vpack.c.b16 %v6232, %v6228
      %v6753 = vpack.c.b16 %v6233, %v6229
      %v6754 = vpack.c.b16 %v6238, %v6234
      %v6755 = vpack.c.b16 %v6239, %v6235
      %v6756 = vpack.c.b16 %v6240, %v6236
      %v6757 = vpack.c.b16 %v6241, %v6237
      %v6758 = vpack.c.b16 %v6246, %v6242
      %v6759 = vpack.c.b16 %v6247, %v6243
      %v6760 = vpack.c.b16 %v6248, %v6244
      %v6761 = vpack.c.b16 %v6249, %v6245
      %7274 = vmatprep.subr.bf16.mxu0 %v6279
      %7275 = vmatpush1.bf16.msra.mxu0 %v6278
      %7276 = vmatprep.subr.bf16.mxu0 %v6275
      %7277 = vmatpush1.bf16.msra.mxu0 %v6274
      %7278 = vmatprep.subr.bf16.mxu0 %v6271
      %7279 = vmatpush1.bf16.msra.mxu0 %v6270
      %7280 = vmatprep.subr.bf16.mxu0 %v6267
      %7281 = vmatpush1.bf16.msra.mxu0 %v6266
      %7282 = vmatprep.subr.bf16.mxu0 %v6263
      %7283 = vmatpush1.bf16.msra.mxu0 %v6262
      %7284 = vmatprep.subr.bf16.mxu0 %v6259
      %7285 = vmatpush1.bf16.msra.mxu0 %v6258
      %7286 = vmatprep.subr.bf16.mxu0 %v6255
      %7287 = vmatpush1.bf16.msra.mxu0 %v6254
      %7288 = vmatprep.subr.bf16.mxu0 %v6251
      %7289 = vmatpush1.bf16.msra.mxu0 %v6250
      %7290 = vmatprep.subr.bf16.mxu0 %v6311
      %7291 = vmatpush2.bf16.msra.mxu0 %v6310
      %7292 = vmatprep.subr.bf16.mxu0 %v6307
      %7293 = vmatpush2.bf16.msra.mxu0 %v6306
      %7294 = vmatprep.subr.bf16.mxu0 %v6303
      %7295 = vmatpush2.bf16.msra.mxu0 %v6302
      %7296 = vmatprep.subr.bf16.mxu0 %v6299
      %7297 = vmatpush2.bf16.msra.mxu0 %v6298
      %7298 = vmatprep.subr.bf16.mxu0 %v6295
      %7299 = vmatpush2.bf16.msra.mxu0 %v6294
      %7300 = vmatprep.subr.bf16.mxu0 %v6291
      %7301 = vmatpush2.bf16.msra.mxu0 %v6290
      %7302 = vmatprep.subr.bf16.mxu0 %v6287
      %7303 = vmatpush2.bf16.msra.mxu0 %v6286
      %7304 = vmatprep.subr.bf16.mxu0 %v6283
      %7305 = vmatpush2.bf16.msra.mxu0 %v6282
      %7306 = vmatprep.mubr.bf16.mxu0 %v4165
      %7307 = vmatmul.mubr.bf16.gmra.mxu0 %v4164
      %v7308 = vpop.f32.mrf.mxu0
      %v7309 = vadd.f32 %v4697, %v7308
      %v7310 = vpop.f32.mrf.mxu0
      %v7311 = vadd.f32 %v4701, %v7310
      %v7312 = vpop.f32.mrf.mxu0
      %v7313 = vpop.f32.mrf.mxu0
      %7314 = vdwg.mxu0
      %7315 = vmatprep.subr.bf16.mxu0 %v6343
      %7316 = vmatpush1.bf16.msra.mxu0 %v6342
      %7317 = vmatprep.subr.bf16.mxu0 %v6339
      %7318 = vmatpush1.bf16.msra.mxu0 %v6338
      %7319 = vmatprep.subr.bf16.mxu0 %v6335
      %7320 = vmatpush1.bf16.msra.mxu0 %v6334
      %7321 = vmatprep.subr.bf16.mxu0 %v6331
      %7322 = vmatpush1.bf16.msra.mxu0 %v6330
      %7323 = vmatprep.subr.bf16.mxu0 %v6327
      %7324 = vmatpush1.bf16.msra.mxu0 %v6326
      %7325 = vmatprep.subr.bf16.mxu0 %v6323
      %7326 = vmatpush1.bf16.msra.mxu0 %v6322
      %7327 = vmatprep.subr.bf16.mxu0 %v6319
      %7328 = vmatpush1.bf16.msra.mxu0 %v6318
      %7329 = vmatprep.subr.bf16.mxu0 %v6315
      %7330 = vmatpush1.bf16.msra.mxu0 %v6314
      %7331 = vmatprep.subr.bf16.mxu0 %v6375
      %7332 = vmatpush2.bf16.msra.mxu0 %v6374
      %7333 = vmatprep.subr.bf16.mxu0 %v6371
      %7334 = vmatpush2.bf16.msra.mxu0 %v6370
      %7335 = vmatprep.subr.bf16.mxu0 %v6367
      %7336 = vmatpush2.bf16.msra.mxu0 %v6366
      %7337 = vmatprep.subr.bf16.mxu0 %v6363
      %7338 = vmatpush2.bf16.msra.mxu0 %v6362
      %7339 = vmatprep.subr.bf16.mxu0 %v6359
      %7340 = vmatpush2.bf16.msra.mxu0 %v6358
      %7341 = vmatprep.subr.bf16.mxu0 %v6355
      %7342 = vmatpush2.bf16.msra.mxu0 %v6354
      %7343 = vmatprep.subr.bf16.mxu0 %v6351
      %7344 = vmatpush2.bf16.msra.mxu0 %v6350
      %7345 = vmatprep.subr.bf16.mxu0 %v6347
      %7346 = vmatpush2.bf16.msra.mxu0 %v6346
      %7347 = vmatprep.mubr.bf16.mxu0 %v4167
      %7348 = vmatmul.mubr.bf16.gmra.mxu0 %v4166
      %v7349 = vpop.f32.mrf.mxu0
      %v7350 = vadd.f32 %v7309, %v7349
      %v7351 = vpop.f32.mrf.mxu0
      %v7352 = vadd.f32 %v7311, %v7351
      %v7353 = vpop.f32.mrf.mxu0
      %v7354 = vpop.f32.mrf.mxu0
      %7355 = vdwg.mxu0
      %7356 = vmatprep.subr.bf16.mxu0 %v6407
      %7357 = vmatpush1.bf16.msra.mxu0 %v6406
      %7358 = vmatprep.subr.bf16.mxu0 %v6403
      %7359 = vmatpush1.bf16.msra.mxu0 %v6402
      %7360 = vmatprep.subr.bf16.mxu0 %v6399
      %7361 = vmatpush1.bf16.msra.mxu0 %v6398
      %7362 = vmatprep.subr.bf16.mxu0 %v6395
      %7363 = vmatpush1.bf16.msra.mxu0 %v6394
      %7364 = vmatprep.subr.bf16.mxu0 %v6391
      %7365 = vmatpush1.bf16.msra.mxu0 %v6390
      %7366 = vmatprep.subr.bf16.mxu0 %v6387
      %7367 = vmatpush1.bf16.msra.mxu0 %v6386
      %7368 = vmatprep.subr.bf16.mxu0 %v6383
      %7369 = vmatpush1.bf16.msra.mxu0 %v6382
      %7370 = vmatprep.subr.bf16.mxu0 %v6379
      %7371 = vmatpush1.bf16.msra.mxu0 %v6378
      %7372 = vmatprep.subr.bf16.mxu0 %v6439
      %7373 = vmatpush2.bf16.msra.mxu0 %v6438
      %7374 = vmatprep.subr.bf16.mxu0 %v6435
      %7375 = vmatpush2.bf16.msra.mxu0 %v6434
      %7376 = vmatprep.subr.bf16.mxu0 %v6431
      %7377 = vmatpush2.bf16.msra.mxu0 %v6430
      %7378 = vmatprep.subr.bf16.mxu0 %v6427
      %7379 = vmatpush2.bf16.msra.mxu0 %v6426
      %7380 = vmatprep.subr.bf16.mxu0 %v6423
      %7381 = vmatpush2.bf16.msra.mxu0 %v6422
      %7382 = vmatprep.subr.bf16.mxu0 %v6419
      %7383 = vmatpush2.bf16.msra.mxu0 %v6418
      %7384 = vmatprep.subr.bf16.mxu0 %v6415
      %7385 = vmatpush2.bf16.msra.mxu0 %v6414
      %7386 = vmatprep.subr.bf16.mxu0 %v6411
      %7387 = vmatpush2.bf16.msra.mxu0 %v6410
      %7388 = vmatprep.mubr.bf16.mxu0 %v4169
      %7389 = vmatmul.mubr.bf16.gmra.mxu0 %v4168
      %v7390 = vpop.f32.mrf.mxu0
      %v7391 = vadd.f32 %v7350, %v7390
      %v7392 = vpop.f32.mrf.mxu0
      %v7393 = vadd.f32 %v7352, %v7392
      %v7394 = vpop.f32.mrf.mxu0
      %v7395 = vpop.f32.mrf.mxu0
      %7396 = vdwg.mxu0
      %7397 = vmatprep.subr.bf16.mxu0 %v6471
      %7398 = vmatpush1.bf16.msra.mxu0 %v6470
      %7399 = vmatprep.subr.bf16.mxu0 %v6467
      %7400 = vmatpush1.bf16.msra.mxu0 %v6466
      %7401 = vmatprep.subr.bf16.mxu0 %v6463
      %7402 = vmatpush1.bf16.msra.mxu0 %v6462
      %7403 = vmatprep.subr.bf16.mxu0 %v6459
      %7404 = vmatpush1.bf16.msra.mxu0 %v6458
      %7405 = vmatprep.subr.bf16.mxu0 %v6455
      %7406 = vmatpush1.bf16.msra.mxu0 %v6454
      %7407 = vmatprep.subr.bf16.mxu0 %v6451
      %7408 = vmatpush1.bf16.msra.mxu0 %v6450
      %7409 = vmatprep.subr.bf16.mxu0 %v6447
      %7410 = vmatpush1.bf16.msra.mxu0 %v6446
      %7411 = vmatprep.subr.bf16.mxu0 %v6443
      %7412 = vmatpush1.bf16.msra.mxu0 %v6442
      %7413 = vmatprep.subr.bf16.mxu0 %v6503
      %7414 = vmatpush2.bf16.msra.mxu0 %v6502
      %7415 = vmatprep.subr.bf16.mxu0 %v6499
      %7416 = vmatpush2.bf16.msra.mxu0 %v6498
      %7417 = vmatprep.subr.bf16.mxu0 %v6495
      %7418 = vmatpush2.bf16.msra.mxu0 %v6494
      %7419 = vmatprep.subr.bf16.mxu0 %v6491
      %7420 = vmatpush2.bf16.msra.mxu0 %v6490
      %7421 = vmatprep.subr.bf16.mxu0 %v6487
      %7422 = vmatpush2.bf16.msra.mxu0 %v6486
      %7423 = vmatprep.subr.bf16.mxu0 %v6483
      %7424 = vmatpush2.bf16.msra.mxu0 %v6482
      %7425 = vmatprep.subr.bf16.mxu0 %v6479
      %7426 = vmatpush2.bf16.msra.mxu0 %v6478
      %7427 = vmatprep.subr.bf16.mxu0 %v6475
      %7428 = vmatpush2.bf16.msra.mxu0 %v6474
      %7429 = vmatprep.mubr.bf16.mxu0 %v4171
      %7430 = vmatmul.mubr.bf16.gmra.mxu0 %v4170
      %v7431 = vpop.f32.mrf.mxu0
      %v7432 = vadd.f32 %v7391, %v7431
      %v7433 = vpop.f32.mrf.mxu0
      %v7434 = vadd.f32 %v7393, %v7433
      %v7435 = vpop.f32.mrf.mxu0
      %v7436 = vpop.f32.mrf.mxu0
      %7437 = vdwg.mxu0
      %7438 = vmatprep.subr.bf16.mxu0 %v6535
      %7439 = vmatpush1.bf16.msra.mxu0 %v6534
      %7440 = vmatprep.subr.bf16.mxu0 %v6531
      %7441 = vmatpush1.bf16.msra.mxu0 %v6530
      %7442 = vmatprep.subr.bf16.mxu0 %v6527
      %7443 = vmatpush1.bf16.msra.mxu0 %v6526
      %7444 = vmatprep.subr.bf16.mxu0 %v6523
      %7445 = vmatpush1.bf16.msra.mxu0 %v6522
      %7446 = vmatprep.subr.bf16.mxu0 %v6519
      %7447 = vmatpush1.bf16.msra.mxu0 %v6518
      %7448 = vmatprep.subr.bf16.mxu0 %v6515
      %7449 = vmatpush1.bf16.msra.mxu0 %v6514
      %7450 = vmatprep.subr.bf16.mxu0 %v6511
      %7451 = vmatpush1.bf16.msra.mxu0 %v6510
      %7452 = vmatprep.subr.bf16.mxu0 %v6507
      %7453 = vmatpush1.bf16.msra.mxu0 %v6506
      %7454 = vmatprep.subr.bf16.mxu0 %v6567
      %7455 = vmatpush2.bf16.msra.mxu0 %v6566
      %7456 = vmatprep.subr.bf16.mxu0 %v6563
      %7457 = vmatpush2.bf16.msra.mxu0 %v6562
      %7458 = vmatprep.subr.bf16.mxu0 %v6559
      %7459 = vmatpush2.bf16.msra.mxu0 %v6558
      %7460 = vmatprep.subr.bf16.mxu0 %v6555
      %7461 = vmatpush2.bf16.msra.mxu0 %v6554
      %7462 = vmatprep.subr.bf16.mxu0 %v6551
      %7463 = vmatpush2.bf16.msra.mxu0 %v6550
      %7464 = vmatprep.subr.bf16.mxu0 %v6547
      %7465 = vmatpush2.bf16.msra.mxu0 %v6546
      %7466 = vmatprep.subr.bf16.mxu0 %v6543
      %7467 = vmatpush2.bf16.msra.mxu0 %v6542
      %7468 = vmatprep.subr.bf16.mxu0 %v6539
      %7469 = vmatpush2.bf16.msra.mxu0 %v6538
      %7470 = vmatprep.mubr.bf16.mxu0 %v4173
      %7471 = vmatmul.mubr.bf16.gmra.mxu0 %v4172
      %v7472 = vpop.f32.mrf.mxu0
      %v7473 = vadd.f32 %v7432, %v7472
      %v7474 = vpop.f32.mrf.mxu0
      %v7475 = vadd.f32 %v7434, %v7474
      %v7476 = vpop.f32.mrf.mxu0
      %v7477 = vpop.f32.mrf.mxu0
      %7478 = vdwg.mxu0
      %7479 = vmatprep.subr.bf16.mxu0 %v6599
      %7480 = vmatpush1.bf16.msra.mxu0 %v6598
      %7481 = vmatprep.subr.bf16.mxu0 %v6595
      %7482 = vmatpush1.bf16.msra.mxu0 %v6594
      %7483 = vmatprep.subr.bf16.mxu0 %v6591
      %7484 = vmatpush1.bf16.msra.mxu0 %v6590
      %7485 = vmatprep.subr.bf16.mxu0 %v6587
      %7486 = vmatpush1.bf16.msra.mxu0 %v6586
      %7487 = vmatprep.subr.bf16.mxu0 %v6583
      %7488 = vmatpush1.bf16.msra.mxu0 %v6582
      %7489 = vmatprep.subr.bf16.mxu0 %v6579
      %7490 = vmatpush1.bf16.msra.mxu0 %v6578
      %7491 = vmatprep.subr.bf16.mxu0 %v6575
      %7492 = vmatpush1.bf16.msra.mxu0 %v6574
      %7493 = vmatprep.subr.bf16.mxu0 %v6571
      %7494 = vmatpush1.bf16.msra.mxu0 %v6570
      %7495 = vmatprep.subr.bf16.mxu0 %v6631
      %7496 = vmatpush2.bf16.msra.mxu0 %v6630
      %7497 = vmatprep.subr.bf16.mxu0 %v6627
      %7498 = vmatpush2.bf16.msra.mxu0 %v6626
      %7499 = vmatprep.subr.bf16.mxu0 %v6623
      %7500 = vmatpush2.bf16.msra.mxu0 %v6622
      %7501 = vmatprep.subr.bf16.mxu0 %v6619
      %7502 = vmatpush2.bf16.msra.mxu0 %v6618
      %7503 = vmatprep.subr.bf16.mxu0 %v6615
      %7504 = vmatpush2.bf16.msra.mxu0 %v6614
      %7505 = vmatprep.subr.bf16.mxu0 %v6611
      %7506 = vmatpush2.bf16.msra.mxu0 %v6610
      %7507 = vmatprep.subr.bf16.mxu0 %v6607
      %7508 = vmatpush2.bf16.msra.mxu0 %v6606
      %7509 = vmatprep.subr.bf16.mxu0 %v6603
      %7510 = vmatpush2.bf16.msra.mxu0 %v6602
      %7511 = vmatprep.mubr.bf16.mxu0 %v4175
      %7512 = vmatmul.mubr.bf16.gmra.mxu0 %v4174
      %v7513 = vpop.f32.mrf.mxu0
      %v7514 = vadd.f32 %v7473, %v7513
      %v7515 = vpop.f32.mrf.mxu0
      %v7516 = vadd.f32 %v7475, %v7515
      %v7517 = vpop.f32.mrf.mxu0
      %v7518 = vpop.f32.mrf.mxu0
      %7519 = vdwg.mxu0
      %7520 = vmatprep.subr.bf16.mxu0 %v6663
      %7521 = vmatpush1.bf16.msra.mxu0 %v6662
      %7522 = vmatprep.subr.bf16.mxu0 %v6659
      %7523 = vmatpush1.bf16.msra.mxu0 %v6658
      %7524 = vmatprep.subr.bf16.mxu0 %v6655
      %7525 = vmatpush1.bf16.msra.mxu0 %v6654
      %7526 = vmatprep.subr.bf16.mxu0 %v6651
      %7527 = vmatpush1.bf16.msra.mxu0 %v6650
      %7528 = vmatprep.subr.bf16.mxu0 %v6647
      %7529 = vmatpush1.bf16.msra.mxu0 %v6646
      %7530 = vmatprep.subr.bf16.mxu0 %v6643
      %7531 = vmatpush1.bf16.msra.mxu0 %v6642
      %7532 = vmatprep.subr.bf16.mxu0 %v6639
      %7533 = vmatpush1.bf16.msra.mxu0 %v6638
      %7534 = vmatprep.subr.bf16.mxu0 %v6635
      %7535 = vmatpush1.bf16.msra.mxu0 %v6634
      %7536 = vmatprep.subr.bf16.mxu0 %v6695
      %7537 = vmatpush2.bf16.msra.mxu0 %v6694
      %7538 = vmatprep.subr.bf16.mxu0 %v6691
      %7539 = vmatpush2.bf16.msra.mxu0 %v6690
      %7540 = vmatprep.subr.bf16.mxu0 %v6687
      %7541 = vmatpush2.bf16.msra.mxu0 %v6686
      %7542 = vmatprep.subr.bf16.mxu0 %v6683
      %7543 = vmatpush2.bf16.msra.mxu0 %v6682
      %7544 = vmatprep.subr.bf16.mxu0 %v6679
      %7545 = vmatpush2.bf16.msra.mxu0 %v6678
      %7546 = vmatprep.subr.bf16.mxu0 %v6675
      %7547 = vmatpush2.bf16.msra.mxu0 %v6674
      %7548 = vmatprep.subr.bf16.mxu0 %v6671
      %7549 = vmatpush2.bf16.msra.mxu0 %v6670
      %7550 = vmatprep.subr.bf16.mxu0 %v6667
      %7551 = vmatpush2.bf16.msra.mxu0 %v6666
      %7552 = vmatprep.mubr.bf16.mxu0 %v4177
      %7553 = vmatmul.mubr.bf16.gmra.mxu0 %v4176
      %v7554 = vpop.f32.mrf.mxu0
      %v7555 = vadd.f32 %v7514, %v7554
      %v7556 = vpop.f32.mrf.mxu0
      %v7557 = vadd.f32 %v7516, %v7556
      %v7558 = vpop.f32.mrf.mxu0
      %v7559 = vpop.f32.mrf.mxu0
      %7560 = vdwg.mxu0
      %7561 = vmatprep.subr.bf16.mxu0 %v6727
      %7562 = vmatpush1.bf16.msra.mxu0 %v6726
      %7563 = vmatprep.subr.bf16.mxu0 %v6723
      %7564 = vmatpush1.bf16.msra.mxu0 %v6722
      %7565 = vmatprep.subr.bf16.mxu0 %v6719
      %7566 = vmatpush1.bf16.msra.mxu0 %v6718
      %7567 = vmatprep.subr.bf16.mxu0 %v6715
      %7568 = vmatpush1.bf16.msra.mxu0 %v6714
      %7569 = vmatprep.subr.bf16.mxu0 %v6711
      %7570 = vmatpush1.bf16.msra.mxu0 %v6710
      %7571 = vmatprep.subr.bf16.mxu0 %v6707
      %7572 = vmatpush1.bf16.msra.mxu0 %v6706
      %7573 = vmatprep.subr.bf16.mxu0 %v6703
      %7574 = vmatpush1.bf16.msra.mxu0 %v6702
      %7575 = vmatprep.subr.bf16.mxu0 %v6699
      %7576 = vmatpush1.bf16.msra.mxu0 %v6698
      %7577 = vmatprep.subr.bf16.mxu0 %v6759
      %7578 = vmatpush2.bf16.msra.mxu0 %v6758
      %7579 = vmatprep.subr.bf16.mxu0 %v6755
      %7580 = vmatpush2.bf16.msra.mxu0 %v6754
      %7581 = vmatprep.subr.bf16.mxu0 %v6751
      %7582 = vmatpush2.bf16.msra.mxu0 %v6750
      %7583 = vmatprep.subr.bf16.mxu0 %v6747
      %7584 = vmatpush2.bf16.msra.mxu0 %v6746
      %7585 = vmatprep.subr.bf16.mxu0 %v6743
      %7586 = vmatpush2.bf16.msra.mxu0 %v6742
      %7587 = vmatprep.subr.bf16.mxu0 %v6739
      %7588 = vmatpush2.bf16.msra.mxu0 %v6738
      %7589 = vmatprep.subr.bf16.mxu0 %v6735
      %7590 = vmatpush2.bf16.msra.mxu0 %v6734
      %7591 = vmatprep.subr.bf16.mxu0 %v6731
      %7592 = vmatpush2.bf16.msra.mxu0 %v6730
      %7593 = vmatprep.mubr.bf16.mxu0 %v4179
      %7594 = vmatmul.mubr.bf16.gmra.mxu0 %v4178
      %v7595 = vpop.f32.mrf.mxu0
      %v7596 = vadd.f32 %v7555, %v7595
      %v7597 = vpop.f32.mrf.mxu0
      %v7598 = vadd.f32 %v7557, %v7597
      %v7599 = vpop.f32.mrf.mxu0
      %v7600 = vpop.f32.mrf.mxu0
      %7601 = vdwg.mxu0
      %7602 = vmatprep.subr.bf16.mxu0 %v6281
      %7603 = vmatpush1.bf16.msra.mxu0 %v6280
      %7604 = vmatprep.subr.bf16.mxu0 %v6277
      %7605 = vmatpush1.bf16.msra.mxu0 %v6276
      %7606 = vmatprep.subr.bf16.mxu0 %v6273
      %7607 = vmatpush1.bf16.msra.mxu0 %v6272
      %7608 = vmatprep.subr.bf16.mxu0 %v6269
      %7609 = vmatpush1.bf16.msra.mxu0 %v6268
      %7610 = vmatprep.subr.bf16.mxu0 %v6265
      %7611 = vmatpush1.bf16.msra.mxu0 %v6264
      %7612 = vmatprep.subr.bf16.mxu0 %v6261
      %7613 = vmatpush1.bf16.msra.mxu0 %v6260
      %7614 = vmatprep.subr.bf16.mxu0 %v6257
      %7615 = vmatpush1.bf16.msra.mxu0 %v6256
      %7616 = vmatprep.subr.bf16.mxu0 %v6253
      %7617 = vmatpush1.bf16.msra.mxu0 %v6252
      %7618 = vmatprep.subr.bf16.mxu0 %v6313
      %7619 = vmatpush2.bf16.msra.mxu0 %v6312
      %7620 = vmatprep.subr.bf16.mxu0 %v6309
      %7621 = vmatpush2.bf16.msra.mxu0 %v6308
      %7622 = vmatprep.subr.bf16.mxu0 %v6305
      %7623 = vmatpush2.bf16.msra.mxu0 %v6304
      %7624 = vmatprep.subr.bf16.mxu0 %v6301
      %7625 = vmatpush2.bf16.msra.mxu0 %v6300
      %7626 = vmatprep.subr.bf16.mxu0 %v6297
      %7627 = vmatpush2.bf16.msra.mxu0 %v6296
      %7628 = vmatprep.subr.bf16.mxu0 %v6293
      %7629 = vmatpush2.bf16.msra.mxu0 %v6292
      %7630 = vmatprep.subr.bf16.mxu0 %v6289
      %7631 = vmatpush2.bf16.msra.mxu0 %v6288
      %7632 = vmatprep.subr.bf16.mxu0 %v6285
      %7633 = vmatpush2.bf16.msra.mxu0 %v6284
      %7634 = vmatprep.mubr.bf16.mxu0 %v4165
      %7635 = vmatmul.mubr.bf16.gmra.mxu0 %v4164
      %v7636 = vpop.f32.mrf.mxu0
      %v7637 = vadd.f32 %v4705, %v7636
      %v7638 = vpop.f32.mrf.mxu0
      %v7639 = vadd.f32 %v4709, %v7638
      %v7640 = vpop.f32.mrf.mxu0
      %v7641 = vpop.f32.mrf.mxu0
      %7642 = vdwg.mxu0
      %7643 = vmatprep.subr.bf16.mxu0 %v6345
      %7644 = vmatpush1.bf16.msra.mxu0 %v6344
      %7645 = vmatprep.subr.bf16.mxu0 %v6341
      %7646 = vmatpush1.bf16.msra.mxu0 %v6340
      %7647 = vmatprep.subr.bf16.mxu0 %v6337
      %7648 = vmatpush1.bf16.msra.mxu0 %v6336
      %7649 = vmatprep.subr.bf16.mxu0 %v6333
      %7650 = vmatpush1.bf16.msra.mxu0 %v6332
      %7651 = vmatprep.subr.bf16.mxu0 %v6329
      %7652 = vmatpush1.bf16.msra.mxu0 %v6328
      %7653 = vmatprep.subr.bf16.mxu0 %v6325
      %7654 = vmatpush1.bf16.msra.mxu0 %v6324
      %7655 = vmatprep.subr.bf16.mxu0 %v6321
      %7656 = vmatpush1.bf16.msra.mxu0 %v6320
      %7657 = vmatprep.subr.bf16.mxu0 %v6317
      %7658 = vmatpush1.bf16.msra.mxu0 %v6316
      %7659 = vmatprep.subr.bf16.mxu0 %v6377
      %7660 = vmatpush2.bf16.msra.mxu0 %v6376
      %7661 = vmatprep.subr.bf16.mxu0 %v6373
      %7662 = vmatpush2.bf16.msra.mxu0 %v6372
      %7663 = vmatprep.subr.bf16.mxu0 %v6369
      %7664 = vmatpush2.bf16.msra.mxu0 %v6368
      %7665 = vmatprep.subr.bf16.mxu0 %v6365
      %7666 = vmatpush2.bf16.msra.mxu0 %v6364
      %7667 = vmatprep.subr.bf16.mxu0 %v6361
      %7668 = vmatpush2.bf16.msra.mxu0 %v6360
      %7669 = vmatprep.subr.bf16.mxu0 %v6357
      %7670 = vmatpush2.bf16.msra.mxu0 %v6356
      %7671 = vmatprep.subr.bf16.mxu0 %v6353
      %7672 = vmatpush2.bf16.msra.mxu0 %v6352
      %7673 = vmatprep.subr.bf16.mxu0 %v6349
      %7674 = vmatpush2.bf16.msra.mxu0 %v6348
      %7675 = vmatprep.mubr.bf16.mxu0 %v4167
      %7676 = vmatmul.mubr.bf16.gmra.mxu0 %v4166
      %v7677 = vpop.f32.mrf.mxu0
      %v7678 = vadd.f32 %v7637, %v7677
      %v7679 = vpop.f32.mrf.mxu0
      %v7680 = vadd.f32 %v7639, %v7679
      %v7681 = vpop.f32.mrf.mxu0
      %v7682 = vpop.f32.mrf.mxu0
      %7683 = vdwg.mxu0
      %7684 = vmatprep.subr.bf16.mxu0 %v6409
      %7685 = vmatpush1.bf16.msra.mxu0 %v6408
      %7686 = vmatprep.subr.bf16.mxu0 %v6405
      %7687 = vmatpush1.bf16.msra.mxu0 %v6404
      %7688 = vmatprep.subr.bf16.mxu0 %v6401
      %7689 = vmatpush1.bf16.msra.mxu0 %v6400
      %7690 = vmatprep.subr.bf16.mxu0 %v6397
      %7691 = vmatpush1.bf16.msra.mxu0 %v6396
      %7692 = vmatprep.subr.bf16.mxu0 %v6393
      %7693 = vmatpush1.bf16.msra.mxu0 %v6392
      %7694 = vmatprep.subr.bf16.mxu0 %v6389
      %7695 = vmatpush1.bf16.msra.mxu0 %v6388
      %7696 = vmatprep.subr.bf16.mxu0 %v6385
      %7697 = vmatpush1.bf16.msra.mxu0 %v6384
      %7698 = vmatprep.subr.bf16.mxu0 %v6381
      %7699 = vmatpush1.bf16.msra.mxu0 %v6380
      %7700 = vmatprep.subr.bf16.mxu0 %v6441
      %7701 = vmatpush2.bf16.msra.mxu0 %v6440
      %7702 = vmatprep.subr.bf16.mxu0 %v6437
      %7703 = vmatpush2.bf16.msra.mxu0 %v6436
      %7704 = vmatprep.subr.bf16.mxu0 %v6433
      %7705 = vmatpush2.bf16.msra.mxu0 %v6432
      %7706 = vmatprep.subr.bf16.mxu0 %v6429
      %7707 = vmatpush2.bf16.msra.mxu0 %v6428
      %7708 = vmatprep.subr.bf16.mxu0 %v6425
      %7709 = vmatpush2.bf16.msra.mxu0 %v6424
      %7710 = vmatprep.subr.bf16.mxu0 %v6421
      %7711 = vmatpush2.bf16.msra.mxu0 %v6420
      %7712 = vmatprep.subr.bf16.mxu0 %v6417
      %7713 = vmatpush2.bf16.msra.mxu0 %v6416
      %7714 = vmatprep.subr.bf16.mxu0 %v6413
      %7715 = vmatpush2.bf16.msra.mxu0 %v6412
      %7716 = vmatprep.mubr.bf16.mxu0 %v4169
      %7717 = vmatmul.mubr.bf16.gmra.mxu0 %v4168
      %v7718 = vpop.f32.mrf.mxu0
      %v7719 = vadd.f32 %v7678, %v7718
      %v7720 = vpop.f32.mrf.mxu0
      %v7721 = vadd.f32 %v7680, %v7720
      %v7722 = vpop.f32.mrf.mxu0
      %v7723 = vpop.f32.mrf.mxu0
      %7724 = vdwg.mxu0
      %7725 = vmatprep.subr.bf16.mxu0 %v6473
      %7726 = vmatpush1.bf16.msra.mxu0 %v6472
      %7727 = vmatprep.subr.bf16.mxu0 %v6469
      %7728 = vmatpush1.bf16.msra.mxu0 %v6468
      %7729 = vmatprep.subr.bf16.mxu0 %v6465
      %7730 = vmatpush1.bf16.msra.mxu0 %v6464
      %7731 = vmatprep.subr.bf16.mxu0 %v6461
      %7732 = vmatpush1.bf16.msra.mxu0 %v6460
      %7733 = vmatprep.subr.bf16.mxu0 %v6457
      %7734 = vmatpush1.bf16.msra.mxu0 %v6456
      %7735 = vmatprep.subr.bf16.mxu0 %v6453
      %7736 = vmatpush1.bf16.msra.mxu0 %v6452
      %7737 = vmatprep.subr.bf16.mxu0 %v6449
      %7738 = vmatpush1.bf16.msra.mxu0 %v6448
      %7739 = vmatprep.subr.bf16.mxu0 %v6445
      %7740 = vmatpush1.bf16.msra.mxu0 %v6444
      %7741 = vmatprep.subr.bf16.mxu0 %v6505
      %7742 = vmatpush2.bf16.msra.mxu0 %v6504
      %7743 = vmatprep.subr.bf16.mxu0 %v6501
      %7744 = vmatpush2.bf16.msra.mxu0 %v6500
      %7745 = vmatprep.subr.bf16.mxu0 %v6497
      %7746 = vmatpush2.bf16.msra.mxu0 %v6496
      %7747 = vmatprep.subr.bf16.mxu0 %v6493
      %7748 = vmatpush2.bf16.msra.mxu0 %v6492
      %7749 = vmatprep.subr.bf16.mxu0 %v6489
      %7750 = vmatpush2.bf16.msra.mxu0 %v6488
      %7751 = vmatprep.subr.bf16.mxu0 %v6485
      %7752 = vmatpush2.bf16.msra.mxu0 %v6484
      %7753 = vmatprep.subr.bf16.mxu0 %v6481
      %7754 = vmatpush2.bf16.msra.mxu0 %v6480
      %7755 = vmatprep.subr.bf16.mxu0 %v6477
      %7756 = vmatpush2.bf16.msra.mxu0 %v6476
      %7757 = vmatprep.mubr.bf16.mxu0 %v4171
      %7758 = vmatmul.mubr.bf16.gmra.mxu0 %v4170
      %v7759 = vpop.f32.mrf.mxu0
      %v7760 = vadd.f32 %v7719, %v7759
      %v7761 = vpop.f32.mrf.mxu0
      %v7762 = vadd.f32 %v7721, %v7761
      %v7763 = vpop.f32.mrf.mxu0
      %v7764 = vpop.f32.mrf.mxu0
      %7765 = vdwg.mxu0
      %7766 = vmatprep.subr.bf16.mxu0 %v6537
      %7767 = vmatpush1.bf16.msra.mxu0 %v6536
      %7768 = vmatprep.subr.bf16.mxu0 %v6533
      %7769 = vmatpush1.bf16.msra.mxu0 %v6532
      %7770 = vmatprep.subr.bf16.mxu0 %v6529
      %7771 = vmatpush1.bf16.msra.mxu0 %v6528
      %7772 = vmatprep.subr.bf16.mxu0 %v6525
      %7773 = vmatpush1.bf16.msra.mxu0 %v6524
      %7774 = vmatprep.subr.bf16.mxu0 %v6521
      %7775 = vmatpush1.bf16.msra.mxu0 %v6520
      %7776 = vmatprep.subr.bf16.mxu0 %v6517
      %7777 = vmatpush1.bf16.msra.mxu0 %v6516
      %7778 = vmatprep.subr.bf16.mxu0 %v6513
      %7779 = vmatpush1.bf16.msra.mxu0 %v6512
      %7780 = vmatprep.subr.bf16.mxu0 %v6509
      %7781 = vmatpush1.bf16.msra.mxu0 %v6508
      %7782 = vmatprep.subr.bf16.mxu0 %v6569
      %7783 = vmatpush2.bf16.msra.mxu0 %v6568
      %7784 = vmatprep.subr.bf16.mxu0 %v6565
      %7785 = vmatpush2.bf16.msra.mxu0 %v6564
      %7786 = vmatprep.subr.bf16.mxu0 %v6561
      %7787 = vmatpush2.bf16.msra.mxu0 %v6560
      %7788 = vmatprep.subr.bf16.mxu0 %v6557
      %7789 = vmatpush2.bf16.msra.mxu0 %v6556
      %7790 = vmatprep.subr.bf16.mxu0 %v6553
      %7791 = vmatpush2.bf16.msra.mxu0 %v6552
      %7792 = vmatprep.subr.bf16.mxu0 %v6549
      %7793 = vmatpush2.bf16.msra.mxu0 %v6548
      %7794 = vmatprep.subr.bf16.mxu0 %v6545
      %7795 = vmatpush2.bf16.msra.mxu0 %v6544
      %7796 = vmatprep.subr.bf16.mxu0 %v6541
      %7797 = vmatpush2.bf16.msra.mxu0 %v6540
      %7798 = vmatprep.mubr.bf16.mxu0 %v4173
      %7799 = vmatmul.mubr.bf16.gmra.mxu0 %v4172
      %v7800 = vpop.f32.mrf.mxu0
      %v7801 = vadd.f32 %v7760, %v7800
      %v7802 = vpop.f32.mrf.mxu0
      %v7803 = vadd.f32 %v7762, %v7802
      %v7804 = vpop.f32.mrf.mxu0
      %v7805 = vpop.f32.mrf.mxu0
      %7806 = vdwg.mxu0
      %7807 = vmatprep.subr.bf16.mxu0 %v6601
      %7808 = vmatpush1.bf16.msra.mxu0 %v6600
      %7809 = vmatprep.subr.bf16.mxu0 %v6597
      %7810 = vmatpush1.bf16.msra.mxu0 %v6596
      %7811 = vmatprep.subr.bf16.mxu0 %v6593
      %7812 = vmatpush1.bf16.msra.mxu0 %v6592
      %7813 = vmatprep.subr.bf16.mxu0 %v6589
      %7814 = vmatpush1.bf16.msra.mxu0 %v6588
      %7815 = vmatprep.subr.bf16.mxu0 %v6585
      %7816 = vmatpush1.bf16.msra.mxu0 %v6584
      %7817 = vmatprep.subr.bf16.mxu0 %v6581
      %7818 = vmatpush1.bf16.msra.mxu0 %v6580
      %7819 = vmatprep.subr.bf16.mxu0 %v6577
      %7820 = vmatpush1.bf16.msra.mxu0 %v6576
      %7821 = vmatprep.subr.bf16.mxu0 %v6573
      %7822 = vmatpush1.bf16.msra.mxu0 %v6572
      %7823 = vmatprep.subr.bf16.mxu0 %v6633
      %7824 = vmatpush2.bf16.msra.mxu0 %v6632
      %7825 = vmatprep.subr.bf16.mxu0 %v6629
      %7826 = vmatpush2.bf16.msra.mxu0 %v6628
      %7827 = vmatprep.subr.bf16.mxu0 %v6625
      %7828 = vmatpush2.bf16.msra.mxu0 %v6624
      %7829 = vmatprep.subr.bf16.mxu0 %v6621
      %7830 = vmatpush2.bf16.msra.mxu0 %v6620
      %7831 = vmatprep.subr.bf16.mxu0 %v6617
      %7832 = vmatpush2.bf16.msra.mxu0 %v6616
      %7833 = vmatprep.subr.bf16.mxu0 %v6613
      %7834 = vmatpush2.bf16.msra.mxu0 %v6612
      %7835 = vmatprep.subr.bf16.mxu0 %v6609
      %7836 = vmatpush2.bf16.msra.mxu0 %v6608
      %7837 = vmatprep.subr.bf16.mxu0 %v6605
      %7838 = vmatpush2.bf16.msra.mxu0 %v6604
      %7839 = vmatprep.mubr.bf16.mxu0 %v4175
      %7840 = vmatmul.mubr.bf16.gmra.mxu0 %v4174
      %v7841 = vpop.f32.mrf.mxu0
      %v7842 = vadd.f32 %v7801, %v7841
      %v7843 = vpop.f32.mrf.mxu0
      %v7844 = vadd.f32 %v7803, %v7843
      %v7845 = vpop.f32.mrf.mxu0
      %v7846 = vpop.f32.mrf.mxu0
      %7847 = vdwg.mxu0
      %7848 = vmatprep.subr.bf16.mxu0 %v6665
      %7849 = vmatpush1.bf16.msra.mxu0 %v6664
      %7850 = vmatprep.subr.bf16.mxu0 %v6661
      %7851 = vmatpush1.bf16.msra.mxu0 %v6660
      %7852 = vmatprep.subr.bf16.mxu0 %v6657
      %7853 = vmatpush1.bf16.msra.mxu0 %v6656
      %7854 = vmatprep.subr.bf16.mxu0 %v6653
      %7855 = vmatpush1.bf16.msra.mxu0 %v6652
      %7856 = vmatprep.subr.bf16.mxu0 %v6649
      %7857 = vmatpush1.bf16.msra.mxu0 %v6648
      %7858 = vmatprep.subr.bf16.mxu0 %v6645
      %7859 = vmatpush1.bf16.msra.mxu0 %v6644
      %7860 = vmatprep.subr.bf16.mxu0 %v6641
      %7861 = vmatpush1.bf16.msra.mxu0 %v6640
      %7862 = vmatprep.subr.bf16.mxu0 %v6637
      %7863 = vmatpush1.bf16.msra.mxu0 %v6636
      %7864 = vmatprep.subr.bf16.mxu0 %v6697
      %7865 = vmatpush2.bf16.msra.mxu0 %v6696
      %7866 = vmatprep.subr.bf16.mxu0 %v6693
      %7867 = vmatpush2.bf16.msra.mxu0 %v6692
      %7868 = vmatprep.subr.bf16.mxu0 %v6689
      %7869 = vmatpush2.bf16.msra.mxu0 %v6688
      %7870 = vmatprep.subr.bf16.mxu0 %v6685
      %7871 = vmatpush2.bf16.msra.mxu0 %v6684
      %7872 = vmatprep.subr.bf16.mxu0 %v6681
      %7873 = vmatpush2.bf16.msra.mxu0 %v6680
      %7874 = vmatprep.subr.bf16.mxu0 %v6677
      %7875 = vmatpush2.bf16.msra.mxu0 %v6676
      %7876 = vmatprep.subr.bf16.mxu0 %v6673
      %7877 = vmatpush2.bf16.msra.mxu0 %v6672
      %7878 = vmatprep.subr.bf16.mxu0 %v6669
      %7879 = vmatpush2.bf16.msra.mxu0 %v6668
      %7880 = vmatprep.mubr.bf16.mxu0 %v4177
      %7881 = vmatmul.mubr.bf16.gmra.mxu0 %v4176
      %v7882 = vpop.f32.mrf.mxu0
      %v7883 = vadd.f32 %v7842, %v7882
      %v7884 = vpop.f32.mrf.mxu0
      %v7885 = vadd.f32 %v7844, %v7884
      %v7886 = vpop.f32.mrf.mxu0
      %v7887 = vpop.f32.mrf.mxu0
      %7888 = vdwg.mxu0
      %7889 = vmatprep.subr.bf16.mxu0 %v6729
      %7890 = vmatpush1.bf16.msra.mxu0 %v6728
      %7891 = vmatprep.subr.bf16.mxu0 %v6725
      %7892 = vmatpush1.bf16.msra.mxu0 %v6724
      %7893 = vmatprep.subr.bf16.mxu0 %v6721
      %7894 = vmatpush1.bf16.msra.mxu0 %v6720
      %7895 = vmatprep.subr.bf16.mxu0 %v6717
      %7896 = vmatpush1.bf16.msra.mxu0 %v6716
      %7897 = vmatprep.subr.bf16.mxu0 %v6713
      %7898 = vmatpush1.bf16.msra.mxu0 %v6712
      %7899 = vmatprep.subr.bf16.mxu0 %v6709
      %7900 = vmatpush1.bf16.msra.mxu0 %v6708
      %7901 = vmatprep.subr.bf16.mxu0 %v6705
      %7902 = vmatpush1.bf16.msra.mxu0 %v6704
      %7903 = vmatprep.subr.bf16.mxu0 %v6701
      %7904 = vmatpush1.bf16.msra.mxu0 %v6700
      %7905 = vmatprep.subr.bf16.mxu0 %v6761
      %7906 = vmatpush2.bf16.msra.mxu0 %v6760
      %7907 = vmatprep.subr.bf16.mxu0 %v6757
      %7908 = vmatpush2.bf16.msra.mxu0 %v6756
      %7909 = vmatprep.subr.bf16.mxu0 %v6753
      %7910 = vmatpush2.bf16.msra.mxu0 %v6752
      %7911 = vmatprep.subr.bf16.mxu0 %v6749
      %7912 = vmatpush2.bf16.msra.mxu0 %v6748
      %7913 = vmatprep.subr.bf16.mxu0 %v6745
      %7914 = vmatpush2.bf16.msra.mxu0 %v6744
      %7915 = vmatprep.subr.bf16.mxu0 %v6741
      %7916 = vmatpush2.bf16.msra.mxu0 %v6740
      %7917 = vmatprep.subr.bf16.mxu0 %v6737
      %7918 = vmatpush2.bf16.msra.mxu0 %v6736
      %7919 = vmatprep.subr.bf16.mxu0 %v6733
      %7920 = vmatpush2.bf16.msra.mxu0 %v6732
      %7921 = vmatprep.mubr.bf16.mxu0 %v4179
      %7922 = vmatmul.mubr.bf16.gmra.mxu0 %v4178
      %v7923 = vpop.f32.mrf.mxu0
      %v7924 = vadd.f32 %v7883, %v7923
      %v7925 = vpop.f32.mrf.mxu0
      %v7926 = vadd.f32 %v7885, %v7925
      %v7927 = vpop.f32.mrf.mxu0
      %v7928 = vpop.f32.mrf.mxu0
      %7929 = vdwg.mxu0
      %v7930 = vmax.f32 %v7596, 0.0
      %v7931 = vmax.f32 %v7598, 0.0
      %v7932 = vmax.f32 %v7924, 0.0
      %v7933 = vmax.f32 %v7926, 0.0
      %v7934 = vpack.c.bf16 %v7930, %v7930
      %v7935 = vpack.c.bf16 %v7931, %v7931
      %v7936 = vpack.c.bf16 %v7932, %v7932
      %v7937 = vpack.c.bf16 %v7933, %v7933
      %v7938 = vld [vmem:[#allocation17] sm:$0xff]
      %v7939 = vld [vmem:[#allocation17 + $0x8] sm:$0xff]
      %v7940 = vld [vmem:[#allocation17 + $0x10] sm:$0xff]
      %v7941 = vld [vmem:[#allocation17 + $0x18] sm:$0xff]
      %v7942 = vld [vmem:[#allocation17 + $0x20] sm:$0xff]
      %v7943 = vld [vmem:[#allocation17 + $0x28] sm:$0xff]
      %v7944 = vld [vmem:[#allocation17 + $0x30] sm:$0xff]
      %v7945 = vld [vmem:[#allocation17 + $0x38] sm:$0xff]
      %v7946 = vld [vmem:[#allocation17 + $0x40] sm:$0xff]
      %v7947 = vld [vmem:[#allocation17 + $0x48] sm:$0xff]
      %v7948 = vld [vmem:[#allocation17 + $0x50] sm:$0xff]
      %v7949 = vld [vmem:[#allocation17 + $0x58] sm:$0xff]
      %v7950 = vld [vmem:[#allocation17 + $0x60] sm:$0xff]
      %v7951 = vld [vmem:[#allocation17 + $0x68] sm:$0xff]
      %v7952 = vld [vmem:[#allocation17 + $0x70] sm:$0xff]
      %v7953 = vld [vmem:[#allocation17 + $0x78] sm:$0xff]
      %v7954 = vld [vmem:[#allocation17 + $0x80] sm:$0xff]
      %v7955 = vld [vmem:[#allocation17 + $0x88] sm:$0xff]
      %v7956 = vld [vmem:[#allocation17 + $0x90] sm:$0xff]
      %v7957 = vld [vmem:[#allocation17 + $0x98] sm:$0xff]
      %v7958 = vld [vmem:[#allocation17 + $0xa0] sm:$0xff]
      %v7959 = vld [vmem:[#allocation17 + $0xa8] sm:$0xff]
      %v7960 = vld [vmem:[#allocation17 + $0xb0] sm:$0xff]
      %v7961 = vld [vmem:[#allocation17 + $0xb8] sm:$0xff]
      %v7962 = vld [vmem:[#allocation17 + $0xc0] sm:$0xff]
      %v7963 = vld [vmem:[#allocation17 + $0xc8] sm:$0xff]
      %v7964 = vld [vmem:[#allocation17 + $0xd0] sm:$0xff]
      %v7965 = vld [vmem:[#allocation17 + $0xd8] sm:$0xff]
      %v7966 = vld [vmem:[#allocation17 + $0xe0] sm:$0xff]
      %v7967 = vld [vmem:[#allocation17 + $0xe8] sm:$0xff]
      %v7968 = vld [vmem:[#allocation17 + $0xf0] sm:$0xff]
      %v7969 = vld [vmem:[#allocation17 + $0xf8] sm:$0xff]
      %v7970 = vld [vmem:[#allocation17 + $0x100] sm:$0xff]
      %v7971 = vld [vmem:[#allocation17 + $0x108] sm:$0xff]
      %v7972 = vld [vmem:[#allocation17 + $0x110] sm:$0xff]
      %v7973 = vld [vmem:[#allocation17 + $0x118] sm:$0xff]
      %v7974 = vld [vmem:[#allocation17 + $0x120] sm:$0xff]
      %v7975 = vld [vmem:[#allocation17 + $0x128] sm:$0xff]
      %v7976 = vld [vmem:[#allocation17 + $0x130] sm:$0xff]
      %v7977 = vld [vmem:[#allocation17 + $0x138] sm:$0xff]
      %v7978 = vld [vmem:[#allocation17 + $0x140] sm:$0xff]
      %v7979 = vld [vmem:[#allocation17 + $0x148] sm:$0xff]
      %v7980 = vld [vmem:[#allocation17 + $0x150] sm:$0xff]
      %v7981 = vld [vmem:[#allocation17 + $0x158] sm:$0xff]
      %v7982 = vld [vmem:[#allocation17 + $0x160] sm:$0xff]
      %v7983 = vld [vmem:[#allocation17 + $0x168] sm:$0xff]
      %v7984 = vld [vmem:[#allocation17 + $0x170] sm:$0xff]
      %v7985 = vld [vmem:[#allocation17 + $0x178] sm:$0xff]
      %v7986 = vld [vmem:[#allocation17 + $0x180] sm:$0xff]
      %v7987 = vld [vmem:[#allocation17 + $0x188] sm:$0xff]
      %v7988 = vld [vmem:[#allocation17 + $0x190] sm:$0xff]
      %v7989 = vld [vmem:[#allocation17 + $0x198] sm:$0xff]
      %v7990 = vld [vmem:[#allocation17 + $0x1a0] sm:$0xff]
      %v7991 = vld [vmem:[#allocation17 + $0x1a8] sm:$0xff]
      %v7992 = vld [vmem:[#allocation17 + $0x1b0] sm:$0xff]
      %v7993 = vld [vmem:[#allocation17 + $0x1b8] sm:$0xff]
      %v7994 = vld [vmem:[#allocation17 + $0x1c0] sm:$0xff]
      %v7995 = vld [vmem:[#allocation17 + $0x1c8] sm:$0xff]
      %v7996 = vld [vmem:[#allocation17 + $0x1d0] sm:$0xff]
      %v7997 = vld [vmem:[#allocation17 + $0x1d8] sm:$0xff]
      %v7998 = vld [vmem:[#allocation17 + $0x1e0] sm:$0xff]
      %v7999 = vld [vmem:[#allocation17 + $0x1e8] sm:$0xff]
      %v8000 = vld [vmem:[#allocation17 + $0x1f0] sm:$0xff]
      %v8001 = vld [vmem:[#allocation17 + $0x1f8] sm:$0xff]
      %v8002 = vld [vmem:[#allocation18] sm:$0x3]
      %v8004 = vlaneseq
      %v8005 = vshrl.u32 %v8004, 7
      %v8006 = vsub.s32 0, %v8005
      %v8007 = vrot.slane %v8002, %v8006
      %v8008 = vlaneseq
      %v8009 = vshrl.u32 %v8008, 7
      %v8010 = vsub.s32 1, %v8009
      %v8011 = vrot.slane %v8002, %v8010
      %v8078 = vunpack.c.l.b16 %v7938
      %v8079 = vunpack.c.h.b16 %v7938
      %v8080 = vunpack.c.l.b16 %v7939
      %v8081 = vunpack.c.h.b16 %v7939
      %v8082 = vunpack.c.l.b16 %v7940
      %v8083 = vunpack.c.h.b16 %v7940
      %v8084 = vunpack.c.l.b16 %v7941
      %v8085 = vunpack.c.h.b16 %v7941
      %v8086 = vunpack.c.l.b16 %v7942
      %v8087 = vunpack.c.h.b16 %v7942
      %v8088 = vunpack.c.l.b16 %v7943
      %v8089 = vunpack.c.h.b16 %v7943
      %v8090 = vunpack.c.l.b16 %v7944
      %v8091 = vunpack.c.h.b16 %v7944
      %v8092 = vunpack.c.l.b16 %v7945
      %v8093 = vunpack.c.h.b16 %v7945
      %v8094 = vunpack.c.l.b16 %v7946
      %v8095 = vunpack.c.h.b16 %v7946
      %v8096 = vunpack.c.l.b16 %v7947
      %v8097 = vunpack.c.h.b16 %v7947
      %v8098 = vunpack.c.l.b16 %v7948
      %v8099 = vunpack.c.h.b16 %v7948
      %v8100 = vunpack.c.l.b16 %v7949
      %v8101 = vunpack.c.h.b16 %v7949
      %v8102 = vunpack.c.l.b16 %v7950
      %v8103 = vunpack.c.h.b16 %v7950
      %v8104 = vunpack.c.l.b16 %v7951
      %v8105 = vunpack.c.h.b16 %v7951
      %v8106 = vunpack.c.l.b16 %v7952
      %v8107 = vunpack.c.h.b16 %v7952
      %v8108 = vunpack.c.l.b16 %v7953
      %v8109 = vunpack.c.h.b16 %v7953
      %v8110 = vunpack.c.l.b16 %v7954
      %v8111 = vunpack.c.h.b16 %v7954
      %v8112 = vunpack.c.l.b16 %v7955
      %v8113 = vunpack.c.h.b16 %v7955
      %v8114 = vunpack.c.l.b16 %v7956
      %v8115 = vunpack.c.h.b16 %v7956
      %v8116 = vunpack.c.l.b16 %v7957
      %v8117 = vunpack.c.h.b16 %v7957
      %v8118 = vunpack.c.l.b16 %v7958
      %v8119 = vunpack.c.h.b16 %v7958
      %v8120 = vunpack.c.l.b16 %v7959
      %v8121 = vunpack.c.h.b16 %v7959
      %v8122 = vunpack.c.l.b16 %v7960
      %v8123 = vunpack.c.h.b16 %v7960
      %v8124 = vunpack.c.l.b16 %v7961
      %v8125 = vunpack.c.h.b16 %v7961
      %v8126 = vunpack.c.l.b16 %v7962
      %v8127 = vunpack.c.h.b16 %v7962
      %v8128 = vunpack.c.l.b16 %v7963
      %v8129 = vunpack.c.h.b16 %v7963
      %v8130 = vunpack.c.l.b16 %v7964
      %v8131 = vunpack.c.h.b16 %v7964
      %v8132 = vunpack.c.l.b16 %v7965
      %v8133 = vunpack.c.h.b16 %v7965
      %v8134 = vunpack.c.l.b16 %v7966
      %v8135 = vunpack.c.h.b16 %v7966
      %v8136 = vunpack.c.l.b16 %v7967
      %v8137 = vunpack.c.h.b16 %v7967
      %v8138 = vunpack.c.l.b16 %v7968
      %v8139 = vunpack.c.h.b16 %v7968
      %v8140 = vunpack.c.l.b16 %v7969
      %v8141 = vunpack.c.h.b16 %v7969
      %v8142 = vunpack.c.l.b16 %v7970
      %v8143 = vunpack.c.h.b16 %v7970
      %v8144 = vunpack.c.l.b16 %v7971
      %v8145 = vunpack.c.h.b16 %v7971
      %v8146 = vunpack.c.l.b16 %v7972
      %v8147 = vunpack.c.h.b16 %v7972
      %v8148 = vunpack.c.l.b16 %v7973
      %v8149 = vunpack.c.h.b16 %v7973
      %v8150 = vunpack.c.l.b16 %v7974
      %v8151 = vunpack.c.h.b16 %v7974
      %v8152 = vunpack.c.l.b16 %v7975
      %v8153 = vunpack.c.h.b16 %v7975
      %v8154 = vunpack.c.l.b16 %v7976
      %v8155 = vunpack.c.h.b16 %v7976
      %v8156 = vunpack.c.l.b16 %v7977
      %v8157 = vunpack.c.h.b16 %v7977
      %v8158 = vunpack.c.l.b16 %v7978
      %v8159 = vunpack.c.h.b16 %v7978
      %v8160 = vunpack.c.l.b16 %v7979
      %v8161 = vunpack.c.h.b16 %v7979
      %v8162 = vunpack.c.l.b16 %v7980
      %v8163 = vunpack.c.h.b16 %v7980
      %v8164 = vunpack.c.l.b16 %v7981
      %v8165 = vunpack.c.h.b16 %v7981
      %v8166 = vunpack.c.l.b16 %v7982
      %v8167 = vunpack.c.h.b16 %v7982
      %v8168 = vunpack.c.l.b16 %v7983
      %v8169 = vunpack.c.h.b16 %v7983
      %v8170 = vunpack.c.l.b16 %v7984
      %v8171 = vunpack.c.h.b16 %v7984
      %v8172 = vunpack.c.l.b16 %v7985
      %v8173 = vunpack.c.h.b16 %v7985
      %v8174 = vunpack.c.l.b16 %v7986
      %v8175 = vunpack.c.h.b16 %v7986
      %v8176 = vunpack.c.l.b16 %v7987
      %v8177 = vunpack.c.h.b16 %v7987
      %v8178 = vunpack.c.l.b16 %v7988
      %v8179 = vunpack.c.h.b16 %v7988
      %v8180 = vunpack.c.l.b16 %v7989
      %v8181 = vunpack.c.h.b16 %v7989
      %v8182 = vunpack.c.l.b16 %v7990
      %v8183 = vunpack.c.h.b16 %v7990
      %v8184 = vunpack.c.l.b16 %v7991
      %v8185 = vunpack.c.h.b16 %v7991
      %v8186 = vunpack.c.l.b16 %v7992
      %v8187 = vunpack.c.h.b16 %v7992
      %v8188 = vunpack.c.l.b16 %v7993
      %v8189 = vunpack.c.h.b16 %v7993
      %v8190 = vunpack.c.l.b16 %v7994
      %v8191 = vunpack.c.h.b16 %v7994
      %v8192 = vunpack.c.l.b16 %v7995
      %v8193 = vunpack.c.h.b16 %v7995
      %v8194 = vunpack.c.l.b16 %v7996
      %v8195 = vunpack.c.h.b16 %v7996
      %v8196 = vunpack.c.l.b16 %v7997
      %v8197 = vunpack.c.h.b16 %v7997
      %v8198 = vunpack.c.l.b16 %v7998
      %v8199 = vunpack.c.h.b16 %v7998
      %v8200 = vunpack.c.l.b16 %v7999
      %v8201 = vunpack.c.h.b16 %v7999
      %v8202 = vunpack.c.l.b16 %v8000
      %v8203 = vunpack.c.h.b16 %v8000
      %v8204 = vunpack.c.l.b16 %v8001
      %v8205 = vunpack.c.h.b16 %v8001
      %v8206 = vpack.c.b16 %v8080, %v8078
      %v8207 = vpack.c.b16 %v8081, %v8079
      %v8208 = vpack.c.b16 %v8084, %v8082
      %v8209 = vpack.c.b16 %v8085, %v8083
      %v8210 = vpack.c.b16 %v8088, %v8086
      %v8211 = vpack.c.b16 %v8089, %v8087
      %v8212 = vpack.c.b16 %v8092, %v8090
      %v8213 = vpack.c.b16 %v8093, %v8091
      %v8214 = vpack.c.b16 %v8096, %v8094
      %v8215 = vpack.c.b16 %v8097, %v8095
      %v8216 = vpack.c.b16 %v8100, %v8098
      %v8217 = vpack.c.b16 %v8101, %v8099
      %v8218 = vpack.c.b16 %v8104, %v8102
      %v8219 = vpack.c.b16 %v8105, %v8103
      %v8220 = vpack.c.b16 %v8108, %v8106
      %v8221 = vpack.c.b16 %v8109, %v8107
      %v8222 = vpack.c.b16 %v8112, %v8110
      %v8223 = vpack.c.b16 %v8113, %v8111
      %v8224 = vpack.c.b16 %v8116, %v8114
      %v8225 = vpack.c.b16 %v8117, %v8115
      %v8226 = vpack.c.b16 %v8120, %v8118
      %v8227 = vpack.c.b16 %v8121, %v8119
      %v8228 = vpack.c.b16 %v8124, %v8122
      %v8229 = vpack.c.b16 %v8125, %v8123
      %v8230 = vpack.c.b16 %v8128, %v8126
      %v8231 = vpack.c.b16 %v8129, %v8127
      %v8232 = vpack.c.b16 %v8132, %v8130
      %v8233 = vpack.c.b16 %v8133, %v8131
      %v8234 = vpack.c.b16 %v8136, %v8134
      %v8235 = vpack.c.b16 %v8137, %v8135
      %v8236 = vpack.c.b16 %v8140, %v8138
      %v8237 = vpack.c.b16 %v8141, %v8139
      %v8238 = vpack.c.b16 %v8144, %v8142
      %v8239 = vpack.c.b16 %v8145, %v8143
      %v8240 = vpack.c.b16 %v8148, %v8146
      %v8241 = vpack.c.b16 %v8149, %v8147
      %v8242 = vpack.c.b16 %v8152, %v8150
      %v8243 = vpack.c.b16 %v8153, %v8151
      %v8244 = vpack.c.b16 %v8156, %v8154
      %v8245 = vpack.c.b16 %v8157, %v8155
      %v8246 = vpack.c.b16 %v8160, %v8158
      %v8247 = vpack.c.b16 %v8161, %v8159
      %v8248 = vpack.c.b16 %v8164, %v8162
      %v8249 = vpack.c.b16 %v8165, %v8163
      %v8250 = vpack.c.b16 %v8168, %v8166
      %v8251 = vpack.c.b16 %v8169, %v8167
      %v8252 = vpack.c.b16 %v8172, %v8170
      %v8253 = vpack.c.b16 %v8173, %v8171
      %v8254 = vpack.c.b16 %v8176, %v8174
      %v8255 = vpack.c.b16 %v8177, %v8175
      %v8256 = vpack.c.b16 %v8180, %v8178
      %v8257 = vpack.c.b16 %v8181, %v8179
      %v8258 = vpack.c.b16 %v8184, %v8182
      %v8259 = vpack.c.b16 %v8185, %v8183
      %v8260 = vpack.c.b16 %v8188, %v8186
      %v8261 = vpack.c.b16 %v8189, %v8187
      %v8262 = vpack.c.b16 %v8192, %v8190
      %v8263 = vpack.c.b16 %v8193, %v8191
      %v8264 = vpack.c.b16 %v8196, %v8194
      %v8265 = vpack.c.b16 %v8197, %v8195
      %v8266 = vpack.c.b16 %v8200, %v8198
      %v8267 = vpack.c.b16 %v8201, %v8199
      %v8268 = vpack.c.b16 %v8204, %v8202
      %v8269 = vpack.c.b16 %v8205, %v8203
      %8334 = vmatprep.subr.bf16.mxu0 %v8221
      %8335 = vmatpush1.bf16.msra.mxu0 %v8220
      %8336 = vmatprep.subr.bf16.mxu0 %v8219
      %8337 = vmatpush1.bf16.msra.mxu0 %v8218
      %8338 = vmatprep.subr.bf16.mxu0 %v8217
      %8339 = vmatpush1.bf16.msra.mxu0 %v8216
      %8340 = vmatprep.subr.bf16.mxu0 %v8215
      %8341 = vmatpush1.bf16.msra.mxu0 %v8214
      %8342 = vmatprep.subr.bf16.mxu0 %v8213
      %8343 = vmatpush1.bf16.msra.mxu0 %v8212
      %8344 = vmatprep.subr.bf16.mxu0 %v8211
      %8345 = vmatpush1.bf16.msra.mxu0 %v8210
      %8346 = vmatprep.subr.bf16.mxu0 %v8209
      %8347 = vmatpush1.bf16.msra.mxu0 %v8208
      %8348 = vmatprep.subr.bf16.mxu0 %v8207
      %8349 = vmatpush1.bf16.msra.mxu0 %v8206
      %8350 = vmatprep.subr.bf16.mxu0 %v8237
      %8351 = vmatpush2.bf16.msra.mxu0 %v8236
      %8352 = vmatprep.subr.bf16.mxu0 %v8235
      %8353 = vmatpush2.bf16.msra.mxu0 %v8234
      %8354 = vmatprep.subr.bf16.mxu0 %v8233
      %8355 = vmatpush2.bf16.msra.mxu0 %v8232
      %8356 = vmatprep.subr.bf16.mxu0 %v8231
      %8357 = vmatpush2.bf16.msra.mxu0 %v8230
      %8358 = vmatprep.subr.bf16.mxu0 %v8229
      %8359 = vmatpush2.bf16.msra.mxu0 %v8228
      %8360 = vmatprep.subr.bf16.mxu0 %v8227
      %8361 = vmatpush2.bf16.msra.mxu0 %v8226
      %8362 = vmatprep.subr.bf16.mxu0 %v8225
      %8363 = vmatpush2.bf16.msra.mxu0 %v8224
      %8364 = vmatprep.subr.bf16.mxu0 %v8223
      %8365 = vmatpush2.bf16.msra.mxu0 %v8222
      %8366 = vmatprep.mubr.bf16.mxu0 %v7935
      %8367 = vmatmul.mubr.bf16.gmra.mxu0 %v7934
      %v8368 = vpop.f32.mrf.mxu0
      %v8369 = vadd.f32 %v8007, %v8368
      %v8370 = vpop.f32.mrf.mxu0
      %v8371 = vadd.f32 %v8011, %v8370
      %v8372 = vpop.f32.mrf.mxu0
      %v8373 = vpop.f32.mrf.mxu0
      %8374 = vdwg.mxu0
      %8375 = vmatprep.subr.bf16.mxu0 %v8253
      %8376 = vmatpush1.bf16.msra.mxu0 %v8252
      %8377 = vmatprep.subr.bf16.mxu0 %v8251
      %8378 = vmatpush1.bf16.msra.mxu0 %v8250
      %8379 = vmatprep.subr.bf16.mxu0 %v8249
      %8380 = vmatpush1.bf16.msra.mxu0 %v8248
      %8381 = vmatprep.subr.bf16.mxu0 %v8247
      %8382 = vmatpush1.bf16.msra.mxu0 %v8246
      %8383 = vmatprep.subr.bf16.mxu0 %v8245
      %8384 = vmatpush1.bf16.msra.mxu0 %v8244
      %8385 = vmatprep.subr.bf16.mxu0 %v8243
      %8386 = vmatpush1.bf16.msra.mxu0 %v8242
      %8387 = vmatprep.subr.bf16.mxu0 %v8241
      %8388 = vmatpush1.bf16.msra.mxu0 %v8240
      %8389 = vmatprep.subr.bf16.mxu0 %v8239
      %8390 = vmatpush1.bf16.msra.mxu0 %v8238
      %8391 = vmatprep.subr.bf16.mxu0 %v8269
      %8392 = vmatpush2.bf16.msra.mxu0 %v8268
      %8393 = vmatprep.subr.bf16.mxu0 %v8267
      %8394 = vmatpush2.bf16.msra.mxu0 %v8266
      %8395 = vmatprep.subr.bf16.mxu0 %v8265
      %8396 = vmatpush2.bf16.msra.mxu0 %v8264
      %8397 = vmatprep.subr.bf16.mxu0 %v8263
      %8398 = vmatpush2.bf16.msra.mxu0 %v8262
      %8399 = vmatprep.subr.bf16.mxu0 %v8261
      %8400 = vmatpush2.bf16.msra.mxu0 %v8260
      %8401 = vmatprep.subr.bf16.mxu0 %v8259
      %8402 = vmatpush2.bf16.msra.mxu0 %v8258
      %8403 = vmatprep.subr.bf16.mxu0 %v8257
      %8404 = vmatpush2.bf16.msra.mxu0 %v8256
      %8405 = vmatprep.subr.bf16.mxu0 %v8255
      %8406 = vmatpush2.bf16.msra.mxu0 %v8254
      %8407 = vmatprep.mubr.bf16.mxu0 %v7937
      %8408 = vmatmul.mubr.bf16.gmra.mxu0 %v7936
      %v8409 = vpop.f32.mrf.mxu0
      %v8410 = vadd.f32 %v8369, %v8409
      %v8411 = vpop.f32.mrf.mxu0
      %v8412 = vadd.f32 %v8371, %v8411
      %v8413 = vpop.f32.mrf.mxu0
      %v8414 = vpop.f32.mrf.mxu0
      %8415 = vdwg.mxu0
      %v8416 = vmax.f32 %v8410, 0.0
      %v8417 = vmax.f32 %v8412, 0.0
      %v8418 = vld [vmem:[%s11] sm:$0xff]
      %v8419 = vld [vmem:[%s11 + $0x8] sm:$0xff]
      %v8420 = vld [vmem:[%s11 + $0x10] sm:$0xff]
      %v8421 = vld [vmem:[%s11 + $0x18] sm:$0xff]
      %v8422 = vld [vmem:[%s11 + $0x20] sm:$0xff]
      %v8423 = vld [vmem:[%s11 + $0x28] sm:$0xff]
      %v8424 = vld [vmem:[%s11 + $0x30] sm:$0xff]
      %v8425 = vld [vmem:[%s11 + $0x38] sm:$0xff]
      %v8426 = vld [vmem:[%s11 + $0x40] sm:$0xff]
      %v8427 = vld [vmem:[%s11 + $0x48] sm:$0xff]
      %v8428 = vld [vmem:[%s11 + $0x50] sm:$0xff]
      %v8429 = vld [vmem:[%s11 + $0x58] sm:$0xff]
      %v8430 = vld [vmem:[%s11 + $0x60] sm:$0xff]
      %v8431 = vld [vmem:[%s11 + $0x68] sm:$0xff]
      %v8432 = vld [vmem:[%s11 + $0x70] sm:$0xff]
      %v8433 = vld [vmem:[%s11 + $0x78] sm:$0xff]
      %v8434 = vld [vmem:[%s11 + $0x80] sm:$0xff]
      %v8435 = vld [vmem:[%s11 + $0x88] sm:$0xff]
      %v8436 = vld [vmem:[%s11 + $0x90] sm:$0xff]
      %v8437 = vld [vmem:[%s11 + $0x98] sm:$0xff]
      %v8438 = vld [vmem:[%s11 + $0xa0] sm:$0xff]
      %v8439 = vld [vmem:[%s11 + $0xa8] sm:$0xff]
      %v8440 = vld [vmem:[%s11 + $0xb0] sm:$0xff]
      %v8441 = vld [vmem:[%s11 + $0xb8] sm:$0xff]
      %v8442 = vld [vmem:[%s11 + $0xc0] sm:$0xff]
      %v8443 = vld [vmem:[%s11 + $0xc8] sm:$0xff]
      %v8444 = vld [vmem:[%s11 + $0xd0] sm:$0xff]
      %v8445 = vld [vmem:[%s11 + $0xd8] sm:$0xff]
      %v8446 = vld [vmem:[%s11 + $0xe0] sm:$0xff]
      %v8447 = vld [vmem:[%s11 + $0xe8] sm:$0xff]
      %v8448 = vld [vmem:[%s11 + $0xf0] sm:$0xff]
      %v8449 = vld [vmem:[%s11 + $0xf8] sm:$0xff]
      %v8450 = vld [vmem:[#allocation20] sm:$0x1]
      %v8452 = vlaneseq
      %v8453 = vshrl.u32 %v8452, 7
      %v8454 = vsub.s32 0, %v8453
      %v8455 = vrot.slane %v8450, %v8454
      %8457 = vmatprep.subr.mxu0 0.0
      %8458 = vmatpush1.msra.mxu0 %v8433
      %8459 = vmatprep.subr.mxu0 0.0
      %8460 = vmatpush1.msra.mxu0 %v8432
      %8461 = vmatprep.subr.mxu0 0.0
      %8462 = vmatpush1.msra.mxu0 %v8431
      %8463 = vmatprep.subr.mxu0 0.0
      %8464 = vmatpush1.msra.mxu0 %v8430
      %8465 = vmatprep.subr.mxu0 0.0
      %8466 = vmatpush1.msra.mxu0 %v8429
      %8467 = vmatprep.subr.mxu0 0.0
      %8468 = vmatpush1.msra.mxu0 %v8428
      %8469 = vmatprep.subr.mxu0 0.0
      %8470 = vmatpush1.msra.mxu0 %v8427
      %8471 = vmatprep.subr.mxu0 0.0
      %8472 = vmatpush1.msra.mxu0 %v8426
      %8473 = vmatprep.subr.mxu0 0.0
      %8474 = vmatpush1.msra.mxu0 %v8425
      %8475 = vmatprep.subr.mxu0 0.0
      %8476 = vmatpush1.msra.mxu0 %v8424
      %8477 = vmatprep.subr.mxu0 0.0
      %8478 = vmatpush1.msra.mxu0 %v8423
      %8479 = vmatprep.subr.mxu0 0.0
      %8480 = vmatpush1.msra.mxu0 %v8422
      %8481 = vmatprep.subr.mxu0 0.0
      %8482 = vmatpush1.msra.mxu0 %v8421
      %8483 = vmatprep.subr.mxu0 0.0
      %8484 = vmatpush1.msra.mxu0 %v8420
      %8485 = vmatprep.subr.mxu0 0.0
      %8486 = vmatpush1.msra.mxu0 %v8419
      %8487 = vmatprep.subr.mxu0 0.0
      %8488 = vmatpush1.msra.mxu0 %v8418
      %8489 = vmatprep.subr.mxu0 0.0
      %8490 = vmatpush2.msra.mxu0 %v8449
      %8491 = vmatprep.subr.mxu0 0.0
      %8492 = vmatpush2.msra.mxu0 %v8448
      %8493 = vmatprep.subr.mxu0 0.0
      %8494 = vmatpush2.msra.mxu0 %v8447
      %8495 = vmatprep.subr.mxu0 0.0
      %8496 = vmatpush2.msra.mxu0 %v8446
      %8497 = vmatprep.subr.mxu0 0.0
      %8498 = vmatpush2.msra.mxu0 %v8445
      %8499 = vmatprep.subr.mxu0 0.0
      %8500 = vmatpush2.msra.mxu0 %v8444
      %8501 = vmatprep.subr.mxu0 0.0
      %8502 = vmatpush2.msra.mxu0 %v8443
      %8503 = vmatprep.subr.mxu0 0.0
      %8504 = vmatpush2.msra.mxu0 %v8442
      %8505 = vmatprep.subr.mxu0 0.0
      %8506 = vmatpush2.msra.mxu0 %v8441
      %8507 = vmatprep.subr.mxu0 0.0
      %8508 = vmatpush2.msra.mxu0 %v8440
      %8509 = vmatprep.subr.mxu0 0.0
      %8510 = vmatpush2.msra.mxu0 %v8439
      %8511 = vmatprep.subr.mxu0 0.0
      %8512 = vmatpush2.msra.mxu0 %v8438
      %8513 = vmatprep.subr.mxu0 0.0
      %8514 = vmatpush2.msra.mxu0 %v8437
      %8515 = vmatprep.subr.mxu0 0.0
      %8516 = vmatpush2.msra.mxu0 %v8436
      %8517 = vmatprep.subr.mxu0 0.0
      %8518 = vmatpush2.msra.mxu0 %v8435
      %8519 = vmatprep.subr.mxu0 0.0
      %8520 = vmatpush2.msra.mxu0 %v8434
      %8521 = vmatprep.mubr.f32.mxu0 %v8417
      %8522 = vmatmul.mubr.f32.gmra.mxu0 %v8416
      %v8523 = vpop.f32.mrf.mxu0
      %v8524 = vadd.f32 %v8455, %v8523
      %v8525 = vpop.f32.mrf.mxu0
      %8526 = vdwg.mxu0
      %v8527 = vlaneseq
      %v8528 = vand.u32 %v8527, 127
      %vm8529 = vcmp.eq.s32.totalorder %v8528, 0
      %v8530 = vxor.u32 %v8524, 2147483648
      %v8531 = vmul.f32 %v8530, 1.442695
      %v8532 = vpow.pop %v8531
      %v8533 = vadd.f32 %v8532, 1.0
      %v8534 = vrcp.pop %v8533
      %v8535 = vmul.f32 1.0, %v8534
      %v8536 = vsel %vm8529, %v8524, %v8535
      %vm8537 = vcmask 9216
      %8538 = vst.msk [vmem:[#allocation21] sm:$0x3] %vm8537, %v8536
    $region105: #{tpu_custom_call.1} parent=1 // pred_fallthru
      _
    // Predicated region
    $region106: #{tpu_custom_call.1} parent=1 // pred_check
      _
    $region107: #{tpu_custom_call.1} parent=1 // pred_check_branch
      %8540 = sbr.rel (0) target = $region109
    $region108: #{tpu_custom_call.1} parent=1 // pred_region
      %s8542 = ssub.s32 32, 32
      %8543 = vsyncadd [#allocation5], %s8542
      %s8545 = sshll.u32 [#allocation21], 4
      %s8546 = int_to_ptr.vmem [resolvable:$true] %s8545
      %8548 = dma.vmem_to_hbm [thread:$0]  %s8546, 32, %s13, [#allocation5]
    $region109: #{tpu_custom_call.1} parent=1 // pred_fallthru
      _
    // Predicated region
    $region110: #{tpu_custom_call.1} parent=1 // pred_check
      _
    $region111: #{tpu_custom_call.1} parent=1 // pred_check_branch
      %8550 = sbr.rel (0) target = $region113
    $region112: #{tpu_custom_call.1} parent=1 // pred_region
      %8551 = dma.done [#allocation5], 32
    $region113: #{tpu_custom_call.1} parent=1 // pred_fallthru
      _
    %8552 = vsyncpa [#allocation4], 1
    %8553 = vsyncpa [#allocation7], 1
    %8554 = vsyncpa [#allocation10], 1
    %8555 = vsyncpa [#allocation13], 1
    %8556 = vsyncpa [#allocation16], 1
    %8557 = vsyncpa [#allocation19], 1
    %8558 = vsyncpa [#allocation5], 1

</llo_original>
